<compile_context>
chip_gen: v6e
topology: v6e:2x2x1
jax: 0.10.0
libtpu: 0.0.40
codegen_flags: <defaults>
</compile_context>

<pallas_src>
import functools

import jax
import jax.numpy as jnp
from jax.experimental import pallas as pl
from jax.experimental.pallas import tpu as pltpu

LN_EPS = 1e-5                       # torch.nn.LayerNorm default


# ----------------------------------------------------------------------------
# Generation-aware scoped-VMEM limit.
# ----------------------------------------------------------------------------
def _vmem_limit_bytes():
    try:
        cap = int(pltpu.get_tpu_info().vmem_capacity_bytes)
    except Exception:
        cap = 64 * 1024 * 1024      # conservative (v7x) fallback
    return max(32 * 1024 * 1024, min(cap - 16 * 1024 * 1024, 100 * 1024 * 1024))


VMEM_LIMIT = _vmem_limit_bytes()


# ----------------------------------------------------------------------------
# Feature probes (run once, eagerly, at import): each compiles a trivial
# kernel; on any failure the corresponding optimization silently falls back to
# the baseline (known-good) path so the real kernels always compile and run.
# ----------------------------------------------------------------------------
def _probe_in_spec(spec):
    try:
        def k(x_ref, o_ref):
            o_ref[...] = x_ref[...] * 1.0
        y = pl.pallas_call(
            k,
            out_shape=jax.ShapeDtypeStruct((8, 128), jnp.float32),
            grid=(4,),
            in_specs=[spec],
            out_specs=pl.BlockSpec((8, 128), lambda i: (0, 0)),
        )(jnp.zeros((32, 128), jnp.float32))
        jax.block_until_ready(y)
        return True
    except Exception:
        return False


def _probe_buffered(nbuf, index_map):
    try:
        spec = pl.BlockSpec((8, 128), index_map, pipeline_mode=pl.Buffered(nbuf))
    except Exception:
        return False
    return _probe_in_spec(spec)


def _probe_dyn_lane_slice():
    # In-kernel dynamic (128-aligned) slice along the lane dim on bf16.
    try:
        def k(x_ref, o_ref):
            j = pl.multiple_of(pl.program_id(0) * 128, 128)
            o_ref[...] = x_ref[:, pl.ds(j, 128)]
        y = pl.pallas_call(
            k,
            out_shape=jax.ShapeDtypeStruct((8, 128), jnp.bfloat16),
            grid=(2,),
            in_specs=[pl.BlockSpec((8, 256), lambda i: (0, 0))],
            out_specs=pl.BlockSpec((8, 128), lambda i: (0, 0)),
        )(jnp.zeros((8, 256), jnp.bfloat16))
        jax.block_until_ready(y)
        return True
    except Exception:
        return False


_PIPE_B1_OK = _probe_buffered(1, lambda i: (0, 0))     # single-buffer consts
_PIPE_B3_OK = _probe_buffered(3, lambda i: (i, 0))     # deeper weight streaming
_DYN_LANE_SLICE_OK = _probe_dyn_lane_slice()


def _const_spec(block_shape, index_map):
    """Operands that only change on the subject axis (or never): single-buffered
    to reclaim VMEM; the one-DMA stall per subject is negligible."""
    if _PIPE_B1_OK:
        return pl.BlockSpec(block_shape, index_map, pipeline_mode=pl.Buffered(1))
    return pl.BlockSpec(block_shape, index_map)


def _stream_spec(block_shape, index_map, depth=2):
    """K-streamed weight tiles: deeper pipelining when VMEM allows (v5e/v6e)."""
    if depth > 2 and _PIPE_B3_OK and VMEM_LIMIT >= 96 * 1024 * 1024:
        return pl.BlockSpec(block_shape, index_map, pipeline_mode=pl.Buffered(depth))
    return pl.BlockSpec(block_shape, index_map)


# ----------------------------------------------------------------------------
# Small math helpers (f32 epilogue math — required on v5e, fine everywhere).
# ----------------------------------------------------------------------------
def _gelu(x):
    # TODO(synk): nn.GELU() defaults to the exact erf form; the tanh
    # approximation (guaranteed Mosaic lowering) differs by ~1e-3.
    return jax.nn.gelu(x, approximate=True)


def _layernorm(y, gamma, beta):
    # Two-pass statistics (centre, then square) per the correctness review.
    mu = jnp.mean(y, axis=-1, keepdims=True)
    yc = y - mu
    var = jnp.mean(yc * yc, axis=-1, keepdims=True)
    return yc * jax.lax.rsqrt(var + LN_EPS) * gamma + beta


def _pick_tile(k, target=512):
    """Largest multiple-of-128 divisor of k that is <= target, else k (full)."""
    best = k
    t = 128
    while t <= min(k, target):
        if k % t == 0:
            best = t
        t += 128
    return best


def _pick_bm(rows, cap):
    """Largest batch tile <= cap that divides `rows` and is sublane-friendly."""
    cap = min(cap, rows)
    for bm in range(cap, 0, -1):
        if rows % bm == 0 and (bm % 8 == 0 or bm == rows):
            return bm
    return rows


# ----------------------------------------------------------------------------
# Hoisted adapter down-projection (all subjects, one call):
#   down = ReLU(x @ Wd + bd)     -> (S, Bs, 128) bf16
# Grid: (subject, batch_tile, k_tile over in_dim).
# ----------------------------------------------------------------------------
def _adapter_down_kernel(sidx_ref, xk_ref, wd_ref, bd_ref, o_ref, acc_ref):
    k = pl.program_id(2)

    @pl.when(k == 0)
    def _():
        acc_ref[...] = jnp.zeros_like(acc_ref)

    acc_ref[...] += jnp.dot(xk_ref[...], wd_ref[...],
                            preferred_element_type=jnp.float32)

    @pl.when(k == pl.num_programs(2) - 1)
    def _():
        o_ref[...] = jnp.maximum(acc_ref[...] + bd_ref[...], 0.0).astype(o_ref.dtype)


# ----------------------------------------------------------------------------
# Fused embedder (all subjects, one call):
#   x + Adapter_up(down)  -> Linear(in_dim,h) -> LayerNorm(h) -> GELU -> Dropout
# Grid: (subject, batch_tile, k_tile over in_dim).
# ----------------------------------------------------------------------------
def _embedder_kernel(sidx_ref, xk_ref, down_ref, wu_ref, bu_ref, w_ref,
                     b_ref, g_ref, be_ref, o_ref, acc_ref):
    k = pl.program_id(2)

    @pl.when(k == 0)
    def _():
        acc_ref[...] = jnp.zeros_like(acc_ref)

    # Adapter up-projection restricted to this K tile + residual (scale = 1.0).
    up_k = jnp.dot(down_ref[...], wu_ref[...],
                   preferred_element_type=jnp.float32) + bu_ref[...]
    a_k = xk_ref[...].astype(jnp.float32) + up_k
    # K-tiled main Linear(in_dim -> h), f32 accumulation on the MXU.
    acc_ref[...] += jnp.dot(a_k.astype(jnp.bfloat16), w_ref[...],
                            preferred_element_type=jnp.float32)

    @pl.when(k == pl.num_programs(2) - 1)
    def _():
        y = _gelu(_layernorm(acc_ref[...] + b_ref[...], g_ref[...], be_ref[...]))
        o_ref[...] = y.astype(o_ref.dtype)          # Dropout(0.5): eval identity


def embedder_stage(x, p, subj_idx, *, bm, tk):
    G, Bs, D = x.shape
    H = p["w"].shape[-1]
    R = p["ad_wd"].shape[-1]
    assert Bs % bm == 0 and D % tk == 0
    ni, nk = Bs // bm, D // tk
    cparams = pltpu.CompilerParams(
        dimension_semantics=("parallel", "parallel", "arbitrary"),
        vmem_limit_bytes=VMEM_LIMIT)

    # Stage 1: hoisted adapter down-projection -> (G, Bs, R) bf16 (tiny).
    down = pl.pallas_call(
        _adapter_down_kernel,
        out_shape=jax.ShapeDtypeStruct((G, Bs, R), jnp.bfloat16),
        grid_spec=pltpu.PrefetchScalarGridSpec(
            num_scalar_prefetch=1,
            grid=(G, ni, nk),
            in_specs=[
                pl.BlockSpec((None, bm, tk), lambda s, i, k, m: (s, i, k)),
                pl.BlockSpec((None, tk, R), lambda s, i, k, m: (m[s], k, 0)),
                _const_spec((None, 1, R), lambda s, i, k, m: (m[s], 0, 0)),
            ],
            out_specs=pl.BlockSpec((None, bm, R), lambda s, i, k, m: (s, i, 0)),
            scratch_shapes=[pltpu.VMEM((bm, R), jnp.float32)]),
        compiler_params=cparams,
    )(subj_idx, x, p["ad_wd"], p["ad_bd"])

    # Stage 2: fused adapter-up + K-tiled Linear + LN/GELU epilogue.
    return pl.pallas_call(
        _embedder_kernel,
        out_shape=jax.ShapeDtypeStruct((G, Bs, H), jnp.bfloat16),
        grid_spec=pltpu.PrefetchScalarGridSpec(
            num_scalar_prefetch=1,
            grid=(G, ni, nk),
            in_specs=[
                pl.BlockSpec((None, bm, tk), lambda s, i, k, m: (s, i, k)),   # x K tile
                pl.BlockSpec((None, bm, R), lambda s, i, k, m: (s, i, 0)),    # down
                pl.BlockSpec((None, R, tk), lambda s, i, k, m: (m[s], 0, k)),  # adapter up W
                pl.BlockSpec((None, 1, tk), lambda s, i, k, m: (m[s], 0, k)),  # adapter up b
                _stream_spec((None, tk, H), lambda s, i, k, m: (m[s], k, 0), depth=3),
                _const_spec((None, 1, H), lambda s, i, k, m: (m[s], 0, 0)),   # main b
                _const_spec((None, 1, H), lambda s, i, k, m: (m[s], 0, 0)),   # LN gamma
                _const_spec((None, 1, H), lambda s, i, k, m: (m[s], 0, 0)),   # LN beta
            ],
            out_specs=pl.BlockSpec((None, bm, H), lambda s, i, k, m: (s, i, 0)),
            scratch_shapes=[pltpu.VMEM((bm, H), jnp.float32)]),
        compiler_params=cparams,
    )(subj_idx, x, down, p["ad_wu"], p["ad_bu"], p["w"], p["b"],
      p["gamma"], p["beta"])


# ----------------------------------------------------------------------------
# Fused builder (all subjects, one call):
#   Linear(h,in_dim) -> LayerNorm(in_dim) -> GELU -> Adapter(in_dim,128)
# Grid: (subject, batch_tile, k_tile over h).  Uses a smaller bm than the
# embedder because its accumulator / output rows are (bm, in_dim).
# ----------------------------------------------------------------------------
def _builder_kernel(sidx_ref, xk_ref, w_ref, b_ref, g_ref, be_ref,
                    wd_ref, bd_ref, wu_ref, bu_ref, o_ref, acc_ref):
    k = pl.program_id(2)

    @pl.when(k == 0)
    def _():
        acc_ref[...] = jnp.zeros_like(acc_ref)

    acc_ref[...] += jnp.dot(xk_ref[...], w_ref[...],
                            preferred_element_type=jnp.float32)

    @pl.when(k == pl.num_programs(2) - 1)
    def _():
        y = _gelu(_layernorm(acc_ref[...] + b_ref[...], g_ref[...], be_ref[...]))
        d = jnp.maximum(
            jnp.dot(y.astype(jnp.bfloat16), wd_ref[...],
                    preferred_element_type=jnp.float32) + bd_ref[...], 0.0)
        up = jnp.dot(d.astype(jnp.bfloat16), wu_ref[...],
                     preferred_element_type=jnp.float32) + bu_ref[...]
        o_ref[...] = (y + up).astype(o_ref.dtype)   # scale = 1.0 + residual


def builder_stage(x, p, subj_idx, *, bm, tk):
    G, Bs, H = x.shape
    D = p["w"].shape[-1]
    R = p["ad_wd"].shape[-1]
    assert Bs % bm == 0 and H % tk == 0
    ni, nk = Bs // bm, H // tk
    return pl.pallas_call(
        _builder_kernel,
        out_shape=jax.ShapeDtypeStruct((G, Bs, D), jnp.bfloat16),
        grid_spec=pltpu.PrefetchScalarGridSpec(
            num_scalar_prefetch=1,
            grid=(G, ni, nk),
            in_specs=[
                pl.BlockSpec((None, bm, tk), lambda s, i, k, m: (s, i, k)),
                # Streamed (tk, in_dim) weight tile stays double-buffered: this
                # is the DMA that hides HBM latency (a 3rd buffer is ~16 MB at
                # production sizes — too expensive).
                pl.BlockSpec((None, tk, D), lambda s, i, k, m: (m[s], k, 0)),
                _const_spec((None, 1, D), lambda s, i, k, m: (m[s], 0, 0)),   # main b
                _const_spec((None, 1, D), lambda s, i, k, m: (m[s], 0, 0)),   # LN gamma
                _const_spec((None, 1, D), lambda s, i, k, m: (m[s], 0, 0)),   # LN beta
                _const_spec((None, D, R), lambda s, i, k, m: (m[s], 0, 0)),   # adapter down W
                _const_spec((None, 1, R), lambda s, i, k, m: (m[s], 0, 0)),   # adapter down b
                _const_spec((None, R, D), lambda s, i, k, m: (m[s], 0, 0)),   # adapter up W
                _const_spec((None, 1, D), lambda s, i, k, m: (m[s], 0, 0)),   # adapter up b
            ],
            out_specs=pl.BlockSpec((None, bm, D), lambda s, i, k, m: (s, i, 0)),
            scratch_shapes=[pltpu.VMEM((bm, D), jnp.float32)]),
        compiler_params=pltpu.CompilerParams(
            dimension_semantics=("parallel", "parallel", "arbitrary"),
            vmem_limit_bytes=VMEM_LIMIT),
    )(subj_idx, x, p["w"], p["b"], p["gamma"], p["beta"],
      p["ad_wd"], p["ad_bd"], p["ad_wu"], p["ad_bu"])


# ----------------------------------------------------------------------------
# ResMLP block: x_out = GELU(LN(x @ W + b)) + x     (K-tiled, fused residual)
# x is read ONCE per row (full-row block); the K tile is sliced in-kernel.
# ----------------------------------------------------------------------------
def _resblock_kernel_sliced(xf_ref, w_ref, b_ref, g_ref, be_ref, o_ref,
                            acc_ref, *, tk):
    k = pl.program_id(1)

    @pl.when(k == 0)
    def _():
        acc_ref[...] = jnp.zeros_like(acc_ref)

    off = pl.multiple_of(k * tk, 128)
    xk = xf_ref[:, pl.ds(off, tk)]
    acc_ref[...] += jnp.dot(xk, w_ref[...], preferred_element_type=jnp.float32)

    @pl.when(k == pl.num_programs(1) - 1)
    def _():
        y = _gelu(_layernorm(acc_ref[...] + b_ref[...], g_ref[...], be_ref[...]))
        o_ref[...] = (y + xf_ref[...].astype(jnp.float32)).astype(o_ref.dtype)


def _resblock_kernel_dual(xk_ref, xf_ref, w_ref, b_ref, g_ref, be_ref, o_ref,
                          acc_ref):
    # Fallback path: x passed twice (separate K-tile and full-row residual).
    k = pl.program_id(1)

    @pl.when(k == 0)
    def _():
        acc_ref[...] = jnp.zeros_like(acc_ref)

    acc_ref[...] += jnp.dot(xk_ref[...], w_ref[...],
                            preferred_element_type=jnp.float32)

    @pl.when(k == pl.num_programs(1) - 1)
    def _():
        y = _gelu(_layernorm(acc_ref[...] + b_ref[...], g_ref[...], be_ref[...]))
        o_ref[...] = (y + xf_ref[...].astype(jnp.float32)).astype(o_ref.dtype)


def resmlp_block(x, p, *, bm, tk):
    B, H = x.shape
    assert B % bm == 0 and H % tk == 0
    ni, nk = B // bm, H // tk
    common = dict(
        out_shape=jax.ShapeDtypeStruct((B, H), jnp.bfloat16),
        grid=(ni, nk),
        out_specs=pl.BlockSpec((bm, H), lambda i, k: (i, 0)),
        scratch_shapes=[pltpu.VMEM((bm, H), jnp.float32)],
        compiler_params=pltpu.CompilerParams(
            dimension_semantics=("parallel", "arbitrary"),
            vmem_limit_bytes=VMEM_LIMIT))
    w_spec = _stream_spec((tk, H), lambda i, k: (k, 0), depth=3)
    b_spec = _const_spec((1, H), lambda i, k: (0, 0))
    g_spec = _const_spec((1, H), lambda i, k: (0, 0))
    be_spec = _const_spec((1, H), lambda i, k: (0, 0))
    if _DYN_LANE_SLICE_OK:
        return pl.pallas_call(
            functools.partial(_resblock_kernel_sliced, tk=tk),
            in_specs=[pl.BlockSpec((bm, H), lambda i, k: (i, 0)),
                      w_spec, b_spec, g_spec, be_spec],
            **common,
        )(x, p["w"], p["b"], p["gamma"], p["beta"])
    return pl.pallas_call(
        _resblock_kernel_dual,
        in_specs=[pl.BlockSpec((bm, tk), lambda i, k: (i, k)),
                  pl.BlockSpec((bm, H), lambda i, k: (i, 0)),
                  w_spec, b_spec, g_spec, be_spec],
        **common,
    )(x, x, p["w"], p["b"], p["gamma"], p["beta"])


# ----------------------------------------------------------------------------
# Fused heads: one K-tiled matmul on [W_img | W_txt], two (f32) outputs.
# ----------------------------------------------------------------------------
def _heads_kernel(xk_ref, w_ref, b_ref, oi_ref, ot_ref, acc_ref, *, n_img):
    k = pl.program_id(1)

    @pl.when(k == 0)
    def _():
        acc_ref[...] = jnp.zeros_like(acc_ref)

    acc_ref[...] += jnp.dot(xk_ref[...], w_ref[...],
                            preferred_element_type=jnp.float32)

    @pl.when(k == pl.num_programs(1) - 1)
    def _():
        y = acc_ref[...] + b_ref[...]
        oi_ref[...] = y[:, :n_img].astype(oi_ref.dtype)
        ot_ref[...] = y[:, n_img:].astype(ot_ref.dtype)


def heads(x, p, *, n_img, bm, tk):
    B, H = x.shape
    ncat = p["w"].shape[-1]
    n_txt = ncat - n_img
    assert B % bm == 0 and H % tk == 0
    ni, nk = B // bm, H // tk
    return pl.pallas_call(
        functools.partial(_heads_kernel, n_img=n_img),
        out_shape=(jax.ShapeDtypeStruct((B, n_img), jnp.float32),
                   jax.ShapeDtypeStruct((B, n_txt), jnp.float32)),
        grid=(ni, nk),
        in_specs=[
            pl.BlockSpec((bm, tk), lambda i, k: (i, k)),
            _stream_spec((tk, ncat), lambda i, k: (k, 0), depth=3),
            _const_spec((1, ncat), lambda i, k: (0, 0)),
        ],
        out_specs=(pl.BlockSpec((bm, n_img), lambda i, k: (i, 0)),
                   pl.BlockSpec((bm, n_txt), lambda i, k: (i, 0))),
        scratch_shapes=[pltpu.VMEM((bm, ncat), jnp.float32)],
        compiler_params=pltpu.CompilerParams(
            dimension_semantics=("parallel", "arbitrary"),
            vmem_limit_bytes=VMEM_LIMIT),
    )(x, p["w"], p["b"])


# ----------------------------------------------------------------------------
# MSE loss: grid-tiled reduction into a resident SMEM scalar accumulator.
# ----------------------------------------------------------------------------
def _mse_kernel(a_ref, b_ref, o_ref):
    @pl.when(pl.program_id(0) == 0)
    def _():
        o_ref[0, 0] = 0.0
    d = a_ref[...].astype(jnp.float32) - b_ref[...].astype(jnp.float32)
    o_ref[0, 0] += jnp.sum(d * d)


def mse_loss(a, b, *, bm):
    B, N = a.shape
    assert B % bm == 0
    out = pl.pallas_call(
        _mse_kernel,
        out_shape=jax.ShapeDtypeStruct((1, 1), jnp.float32),
        grid=(B // bm,),
        in_specs=[pl.BlockSpec((bm, N), lambda i: (i, 0)),
                  pl.BlockSpec((bm, N), lambda i: (i, 0))],
        out_specs=pl.BlockSpec((1, 1), lambda i: (0, 0),
                               memory_space=pltpu.MemorySpace.SMEM),
        compiler_params=pltpu.CompilerParams(
            dimension_semantics=("arbitrary",),
            vmem_limit_bytes=VMEM_LIMIT),
    )(a, b)
    return out[0, 0] / jnp.float32(B * N)


# ----------------------------------------------------------------------------
# Parameter construction (deterministic, synthetic — shapes match __init__).
# Weights bf16 (MXU operands); biases / LN params f32.
# ----------------------------------------------------------------------------
def _init_linear(key, fan_in, fan_out, w_dtype=jnp.bfloat16):
    kw, kb = jax.random.split(key)
    s = 1.0 / float(fan_in) ** 0.5
    w = jax.random.uniform(kw, (fan_in, fan_out), jnp.float32, -s, s).astype(w_dtype)
    b = jax.random.uniform(kb, (1, fan_out), jnp.float32, -s, s)
    return w, b


def _stack_subject(per_subj):
    return jax.tree_util.tree_map(lambda *xs: jnp.stack(xs, axis=0), *per_subj)


def init_params(key, *, in_dim, h, out_dim_image, out_dim_text, n_blocks,
                n_subj, bottleneck=128):
    # NOTE: lora init would zero up_proj; nonzero weights are used so the
    # adapter compute path is actually exercised.
    def one_embedder(k):
        k1, k2, k3 = jax.random.split(k, 3)
        wd, bd = _init_linear(k1, in_dim, bottleneck)
        wu, bu = _init_linear(k2, bottleneck, in_dim)
        w, b = _init_linear(k3, in_dim, h)
        return dict(ad_wd=wd, ad_bd=bd, ad_wu=wu, ad_bu=bu, w=w, b=b,
                    gamma=jnp.ones((1, h), jnp.float32),
                    beta=jnp.zeros((1, h), jnp.float32))

    def one_builder(k):
        k1, k2, k3 = jax.random.split(k, 3)
        w, b = _init_linear(k1, h, in_dim)
        wd, bd = _init_linear(k2, in_dim, bottleneck)
        wu, bu = _init_linear(k3, bottleneck, in_dim)
        return dict(w=w, b=b,
                    gamma=jnp.ones((1, in_dim), jnp.float32),
                    beta=jnp.zeros((1, in_dim), jnp.float32),
                    ad_wd=wd, ad_bd=bd, ad_wu=wu, ad_bu=bu)

    key, ke, kb = jax.random.split(key, 3)
    emb = _stack_subject([one_embedder(k) for k in jax.random.split(ke, n_subj)])
    bld = _stack_subject([one_builder(k) for k in jax.random.split(kb, n_subj)])

    translator = []
    for _ in range(n_blocks):
        key, k = jax.random.split(key)
        w, b = _init_linear(k, h, h)
        translator.append(dict(w=w, b=b,
                               gamma=jnp.ones((1, h), jnp.float32),
                               beta=jnp.zeros((1, h), jnp.float32)))

    key, ki, kt = jax.random.split(key, 3)
    wi, bi = _init_linear(ki, h, out_dim_image)
    wt, bt = _init_linear(kt, h, out_dim_text)
    heads_p = dict(w=jnp.concatenate([wi, wt], axis=1),
                   b=jnp.concatenate([bi, bt], axis=1))

    return {"embedder": emb, "builder": bld, "translator": translator,
            "heads": heads_p}


# ----------------------------------------------------------------------------
# Module-level forward.
# ----------------------------------------------------------------------------
def fmri_encoder_cross_forward(x, params, subj_list, *, n_img,
                               tk_in=None, tk_h=None,
                               bm_embed=None, bm_build=None, bm_mlp=None):
    # Pre-cast x to bf16 once: halves the HBM read of the (B, in_dim) input.
    x = jnp.squeeze(x).astype(jnp.bfloat16)
    S = len(subj_list)
    B, D = x.shape
    assert B % S == 0, "batch must split evenly across subjects (torch.chunk)"
    Bs = B // S
    H = params["embedder"]["w"].shape[-1]

    tk_in = _pick_tile(D) if tk_in is None else tk_in
    tk_h = _pick_tile(H) if tk_h is None else tk_h
    # Per-stage batch tiles (perf review): embedder / translator accumulators
    # are (bm, h) f32 -> bm can cover the whole batch (weight DMA'd once);
    # the builder accumulator is (bm, in_dim) f32 -> cap bm at 128.
    bm_embed = _pick_bm(Bs, 512) if bm_embed is None else bm_embed
    bm_build = _pick_bm(Bs, 128) if bm_build is None else bm_build
    bm_mlp = _pick_bm(S * Bs, 512) if bm_mlp is None else bm_mlp
    assert Bs % bm_embed == 0 and Bs % bm_build == 0 and (S * Bs) % bm_mlp == 0

    x = x.reshape(S, Bs, D)
    all_subj = jnp.arange(S, dtype=jnp.int32)

    # Per-subject embedder / builder: every subject handled in ONE pallas_call
    # via a subject grid axis + scalar-prefetch weight index.  bf16 activations.
    x_emb = embedder_stage(x, params["embedder"], all_subj, bm=bm_embed, tk=tk_in)
    x_rec = builder_stage(x_emb, params["builder"], all_subj, bm=bm_build, tk=tk_h)

    # adapting=True branch: (subj_a, subj_b) = (first, last)
    x_a = x_emb[0]                                   # (Bs, H) bf16
    sel_b = jnp.array([S - 1], dtype=jnp.int32)
    x_b = builder_stage(x_a[None], params["builder"], sel_b, bm=bm_build, tk=tk_h)[0]
    x_b = embedder_stage(x_b[None], params["embedder"], sel_b, bm=bm_embed, tk=tk_in)[0]
    loss_cyc = mse_loss(x_a, x_b, bm=bm_embed)

    x_cat = x_emb.reshape(S * Bs, H)
    # NOTE: x_rec stays bf16 (halves writeback HBM traffic); append
    # .astype(jnp.float32) here if strict dtype parity with PyTorch is needed.
    x_rec_out = x_rec.reshape(S * Bs, D)

    for blk in params["translator"]:
        x_cat = resmlp_block(x_cat, blk, bm=bm_mlp, tk=tk_h)

    x_image, x_text = heads(x_cat, params["heads"], n_img=n_img, bm=bm_mlp, tk=tk_h)
    # .reshape(len, -1) in the reference is a no-op for 2-D outputs.
    return x_image, x_text, x_rec_out, loss_cyc


# ----------------------------------------------------------------------------
if __name__ == "__main__":
    # Small shapes consistent with the module (all (8,128)-tile aligned).
    IN_DIM = 256          # fMRI voxel dim (15724 in the real model; pad->15872)
    H = 256               # hidden (4096 in the real model)
    OUT_IMG = 128         # 768 in the real model
    OUT_TXT = 128
    N_BLOCKS = 2
    SUBJ_LIST = [1, 2]
    B_PER_SUBJ = 8
    TK = 128              # contraction tile; exercises the K grid axis (512-1024 real)

    key = jax.random.PRNGKey(0)
    kx, kp = jax.random.split(key)
    x = jax.random.normal(kx, (B_PER_SUBJ * len(SUBJ_LIST), 1, IN_DIM), jnp.float32)

    params = init_params(kp, in_dim=IN_DIM, h=H, out_dim_image=OUT_IMG,
                         out_dim_text=OUT_TXT, n_blocks=N_BLOCKS,
                         n_subj=len(SUBJ_LIST))

    fwd = jax.jit(functools.partial(
        fmri_encoder_cross_forward, subj_list=SUBJ_LIST, n_img=OUT_IMG,
        tk_in=TK, tk_h=TK))

    x_image, x_text, x_rec, loss_cyc = fwd(x, params)
    jax.block_until_ready((x_image, x_text, x_rec, loss_cyc))

    assert x_image.shape == (16, OUT_IMG)
    assert x_text.shape == (16, OUT_TXT)
    assert x_rec.shape == (16, IN_DIM)
    assert loss_cyc.shape == ()
    assert all(bool(jnp.isfinite(v.astype(jnp.float32)).all())
               for v in (x_image, x_text, x_rec))
    assert bool(jnp.isfinite(loss_cyc))

    print("KERNEL_OK")
</pallas_src>

<mosaic_0001>
module attributes {stable_mosaic.version = 11 : i64} {
  func.func @k(%arg0: i32, %arg1: memref<8x128xf32, #tpu.memory_space<vmem>>, %arg2: memref<8x128xf32, #tpu.memory_space<vmem>>) attributes {dimension_semantics = [#tpu.dimension_semantics<arbitrary>], iteration_bounds = array<i64: 4>, scalar_prefetch = 0 : i64, scratch_operands = 0 : i64, tpu.core_type = #tpu.core_type<tc>, window_params = [{pipeline_mode = #tpu.pipeline_mode<synchronous>, transform_indices = @transform_0, window_bounds = array<i64: 8, 128>}, {pipeline_mode = #tpu.pipeline_mode<synchronous>, transform_indices = @transform_1, window_bounds = array<i64: 8, 128>}]} {
    %c0 = arith.constant 0 : index
    %c0_0 = arith.constant 0 : index
    %0 = vector.load %arg1[%c0, %c0_0] : memref<8x128xf32, #tpu.memory_space<vmem>>, vector<8x128xf32>
    %cst = arith.constant 1.000000e+00 : f32
    %1 = vector.broadcast %cst : f32 to vector<8x128xf32>
    %2 = arith.mulf %0, %1 : vector<8x128xf32>
    %c0_1 = arith.constant 0 : index
    %c0_2 = arith.constant 0 : index
    %3 = vector.load %arg2[%c0_1, %c0_2] : memref<8x128xf32, #tpu.memory_space<vmem>>, vector<8x128xf32>
    tpu.vector_store %arg2[%c0_1, %c0_2], %2 {strides = array<i32>} : memref<8x128xf32, #tpu.memory_space<vmem>>, vector<8x128xf32>,
    return
  }
  func.func @transform_0(%arg0: i32) -> (i32, i32) {
    %c0_i32 = arith.constant 0 : i32
    %c0_i32_0 = arith.constant 0 : i32
    %c0_i32_1 = arith.constant 0 : i32
    return %c0_i32, %c0_i32_0 : i32, i32
  }
  func.func @transform_1(%arg0: i32) -> (i32, i32) {
    %c0_i32 = arith.constant 0 : i32
    %c0_i32_0 = arith.constant 0 : i32
    %c0_i32_1 = arith.constant 0 : i32
    return %c0_i32, %c0_i32_0 : i32, i32
  }
}

module attributes {stable_mosaic.version = 11 : i64} {
  func.func @k(%arg0: i32, %arg1: memref<8x256xbf16, #tpu.memory_space<vmem>>, %arg2: memref<8x128xbf16, #tpu.memory_space<vmem>>) attributes {dimension_semantics = [#tpu.dimension_semantics<arbitrary>], iteration_bounds = array<i64: 2>, scalar_prefetch = 0 : i64, scratch_operands = 0 : i64, tpu.core_type = #tpu.core_type<tc>, window_params = [{pipeline_mode = #tpu.pipeline_mode<synchronous>, transform_indices = @transform_0, window_bounds = array<i64: 8, 256>}, {pipeline_mode = #tpu.pipeline_mode<synchronous>, transform_indices = @transform_1, window_bounds = array<i64: 8, 128>}]} {
    %c128_i32 = arith.constant 128 : i32
    %0 = arith.muli %arg0, %c128_i32 : i32
    %1 = tpu.assume_multiple %0, 128 : i32
    %c0 = arith.constant 0 : index
    %2 = arith.index_cast %1 : i32 to index
    %3 = vector.load %arg1[%c0, %2] : memref<8x256xbf16, #tpu.memory_space<vmem>>, vector<8x128xbf16>
    %c0_0 = arith.constant 0 : index
    %c0_1 = arith.constant 0 : index
    %4 = vector.load %arg2[%c0_0, %c0_1] : memref<8x128xbf16, #tpu.memory_space<vmem>>, vector<8x128xbf16>
    tpu.vector_store %arg2[%c0_0, %c0_1], %3 {strides = array<i32>} : memref<8x128xbf16, #tpu.memory_space<vmem>>, vector<8x128xbf16>,
    return
  }
  func.func @transform_0(%arg0: i32) -> (i32, i32) {
    %c0_i32 = arith.constant 0 : i32
    %c0_i32_0 = arith.constant 0 : i32
    %c0_i32_1 = arith.constant 0 : i32
    return %c0_i32, %c0_i32_0 : i32, i32
  }
  func.func @transform_1(%arg0: i32) -> (i32, i32) {
    %c0_i32 = arith.constant 0 : i32
    %c0_i32_0 = arith.constant 0 : i32
    %c0_i32_1 = arith.constant 0 : i32
    return %c0_i32, %c0_i32_0 : i32, i32
  }
}

module attributes {stable_mosaic.version = 11 : i64} {
  func.func @_adapter_down_kernel(%arg0: i32, %arg1: i32, %arg2: i32, %arg3: memref<2xi32, #tpu.memory_space<smem>>, %arg4: memref<1x8x128xbf16, #tpu.memory_space<vmem>>, %arg5: memref<1x128x128xbf16, #tpu.memory_space<vmem>>, %arg6: memref<1x1x128xf32, #tpu.memory_space<vmem>>, %arg7: memref<1x8x128xbf16, #tpu.memory_space<vmem>>, %arg8: memref<8x128xf32, #tpu.memory_space<vmem>>) attributes {dimension_semantics = [#tpu.dimension_semantics<parallel>, #tpu.dimension_semantics<parallel>, #tpu.dimension_semantics<arbitrary>], iteration_bounds = array<i64: 2, 1, 2>, scalar_prefetch = 1 : i64, scratch_operands = 1 : i64, tpu.core_type = #tpu.core_type<tc>, window_params = [{transform_indices = @transform_0, window_bounds = array<i64: 1, 8, 128>}, {transform_indices = @transform_1, window_bounds = array<i64: 1, 128, 128>}, {transform_indices = @transform_2, window_bounds = array<i64: 1, 1, 128>}, {transform_indices = @transform_3, window_bounds = array<i64: 1, 8, 128>}]} {
    %c0_i32 = arith.constant 0 : i32
    %0 = arith.cmpi eq, %arg2, %c0_i32 : i32
    %1 = arith.extui %0 : i1 to i32
    %c0_i32_0 = arith.constant 0 : i32
    %2 = arith.cmpi ne, %1, %c0_i32_0 : i32
    scf.if %2 {
      %cst_11 = arith.constant 0.000000e+00 : f32
      %14 = vector.broadcast %cst_11 : f32 to vector<8x128xf32>
      %c0_12 = arith.constant 0 : index
      %c0_13 = arith.constant 0 : index
      %15 = vector.load %arg8[%c0_12, %c0_13] : memref<8x128xf32, #tpu.memory_space<vmem>>, vector<8x128xf32>
      tpu.vector_store %arg8[%c0_12, %c0_13], %14 {strides = array<i32>} : memref<8x128xf32, #tpu.memory_space<vmem>>, vector<8x128xf32>,
    } else {
    }
    %c0 = arith.constant 0 : index
    %c0_1 = arith.constant 0 : index
    %3 = vector.load %arg8[%c0, %c0_1] : memref<8x128xf32, #tpu.memory_space<vmem>>, vector<8x128xf32>
    %c0_2 = arith.constant 0 : index
    %c0_3 = arith.constant 0 : index
    %c0_4 = arith.constant 0 : index
    %4 = vector.load %arg4[%c0_2, %c0_3, %c0_4] : memref<1x8x128xbf16, #tpu.memory_space<vmem>>, vector<1x8x128xbf16>
    %5 = vector.shape_cast %4 : vector<1x8x128xbf16> to vector<8x128xbf16>
    %c0_5 = arith.constant 0 : index
    %c0_6 = arith.constant 0 : index
    %c0_7 = arith.constant 0 : index
    %6 = vector.load %arg5[%c0_5, %c0_6, %c0_7] : memref<1x128x128xbf16, #tpu.memory_space<vmem>>, vector<1x128x128xbf16>
    %7 = vector.shape_cast %6 : vector<1x128x128xbf16> to vector<128x128xbf16>
    %cst = arith.constant dense<0.000000e+00> : vector<8x128xf32>
    %8 = tpu.matmul %5, %7, %cst {dimension_numbers = #tpu.dot_dimension_numbers<[1], [0], [0], [1], [0, 0, 1, 1], [], []>} : vector<8x128xbf16>, vector<128x128xbf16>, vector<8x128xf32> -> vector<8x128xf32>
    %9 = arith.addf %3, %8 : vector<8x128xf32>
    %c0_8 = arith.constant 0 : index
    %c0_9 = arith.constant 0 : index
    %10 = vector.load %arg8[%c0_8, %c0_9] : memref<8x128xf32, #tpu.memory_space<vmem>>, vector<8x128xf32>
    tpu.vector_store %arg8[%c0_8, %c0_9], %9 {strides = array<i32>} : memref<8x128xf32, #tpu.memory_space<vmem>>, vector<8x128xf32>,
    %c1_i32 = arith.constant 1 : i32
    %11 = arith.cmpi eq, %arg2, %c1_i32 : i32
    %12 = arith.extui %11 : i1 to i32
    %c0_i32_10 = arith.constant 0 : i32
    %13 = arith.cmpi ne, %12, %c0_i32_10 : i32
    scf.if %13 {
      %c0_11 = arith.constant 0 : index
      %c0_12 = arith.constant 0 : index
      %14 = vector.load %arg8[%c0_11, %c0_12] : memref<8x128xf32, #tpu.memory_space<vmem>>, vector<8x128xf32>
      %c0_13 = arith.constant 0 : index
      %c0_14 = arith.constant 0 : index
      %c0_15 = arith.constant 0 : index
      %15 = vector.load %arg6[%c0_13, %c0_14, %c0_15] : memref<1x1x128xf32, #tpu.memory_space<vmem>>, vector<1x1x128xf32>
      %16 = vector.shape_cast %15 : vector<1x1x128xf32> to vector<1x128xf32>
      %17 = vector.broadcast %16 : vector<1x128xf32> to vector<8x128xf32>
      %18 = arith.addf %14, %17 : vector<8x128xf32>
      %cst_16 = arith.constant 0.000000e+00 : f32
      %19 = vector.broadcast %cst_16 : f32 to vector<8x128xf32>
      %20 = arith.maximumf %18, %19 : vector<8x128xf32>
      %21 = arith.truncf %20 : vector<8x128xf32> to vector<8x128xbf16>
      %c0_17 = arith.constant 0 : index
      %c0_18 = arith.constant 0 : index
      %c0_19 = arith.constant 0 : index
      %22 = vector.load %arg7[%c0_17, %c0_18, %c0_19] : memref<1x8x128xbf16, #tpu.memory_space<vmem>>, vector<1x8x128xbf16>
      %23 = vector.shape_cast %22 : vector<1x8x128xbf16> to vector<8x128xbf16>
      %24 = vector.shape_cast %21 : vector<8x128xbf16> to vector<1x8x128xbf16>
      tpu.vector_store %arg7[%c0_17, %c0_18, %c0_19], %24 {strides = array<i32>} : memref<1x8x128xbf16, #tpu.memory_space<vmem>>, vector<1x8x128xbf16>,
    } else {
    }
    return
  }
  func.func @transform_0(%arg0: i32, %arg1: i32, %arg2: i32, %arg3: memref<2xi32, #tpu.memory_space<smem>>) -> (i32, i32, i32) {
    %c0_i32 = arith.constant 0 : i32
    return %arg0, %arg1, %arg2 : i32, i32, i32
  }
  func.func @transform_1(%arg0: i32, %arg1: i32, %arg2: i32, %arg3: memref<2xi32, #tpu.memory_space<smem>>) -> (i32, i32, i32) {
    %0 = arith.index_cast %arg0 : i32 to index
    %1 = memref.load %arg3[%0] : memref<2xi32, #tpu.memory_space<smem>>
    %c0_i32 = arith.constant 0 : i32
    %c0_i32_0 = arith.constant 0 : i32
    return %1, %arg2, %c0_i32 : i32, i32, i32
  }
  func.func @transform_2(%arg0: i32, %arg1: i32, %arg2: i32, %arg3: memref<2xi32, #tpu.memory_space<smem>>) -> (i32, i32, i32) {
    %0 = arith.index_cast %arg0 : i32 to index
    %1 = memref.load %arg3[%0] : memref<2xi32, #tpu.memory_space<smem>>
    %c0_i32 = arith.constant 0 : i32
    %c0_i32_0 = arith.constant 0 : i32
    %c0_i32_1 = arith.constant 0 : i32
    return %1, %c0_i32, %c0_i32_0 : i32, i32, i32
  }
  func.func @transform_3(%arg0: i32, %arg1: i32, %arg2: i32, %arg3: memref<2xi32, #tpu.memory_space<smem>>) -> (i32, i32, i32) {
    %c0_i32 = arith.constant 0 : i32
    %c0_i32_0 = arith.constant 0 : i32
    return %arg0, %arg1, %c0_i32 : i32, i32, i32
  }
}

module attributes {stable_mosaic.version = 11 : i64} {
  func.func @_embedder_kernel(%arg0: i32, %arg1: i32, %arg2: i32, %arg3: memref<2xi32, #tpu.memory_space<smem>>, %arg4: memref<1x8x128xbf16, #tpu.memory_space<vmem>>, %arg5: memref<1x8x128xbf16, #tpu.memory_space<vmem>>, %arg6: memref<1x128x128xbf16, #tpu.memory_space<vmem>>, %arg7: memref<1x1x128xf32, #tpu.memory_space<vmem>>, %arg8: memref<1x128x256xbf16, #tpu.memory_space<vmem>>, %arg9: memref<1x1x256xf32, #tpu.memory_space<vmem>>, %arg10: memref<1x1x256xf32, #tpu.memory_space<vmem>>, %arg11: memref<1x1x256xf32, #tpu.memory_space<vmem>>, %arg12: memref<1x8x256xbf16, #tpu.memory_space<vmem>>, %arg13: memref<8x256xf32, #tpu.memory_space<vmem>>) attributes {dimension_semantics = [#tpu.dimension_semantics<parallel>, #tpu.dimension_semantics<parallel>, #tpu.dimension_semantics<arbitrary>], iteration_bounds = array<i64: 2, 1, 2>, scalar_prefetch = 1 : i64, scratch_operands = 1 : i64, tpu.core_type = #tpu.core_type<tc>, window_params = [{transform_indices = @transform_0, window_bounds = array<i64: 1, 8, 128>}, {transform_indices = @transform_1, window_bounds = array<i64: 1, 8, 128>}, {transform_indices = @transform_2, window_bounds = array<i64: 1, 128, 128>}, {transform_indices = @transform_3, window_bounds = array<i64: 1, 1, 128>}, {transform_indices = @transform_4, window_bounds = array<i64: 1, 128, 256>}, {transform_indices = @transform_5, window_bounds = array<i64: 1, 1, 256>}, {transform_indices = @transform_6, window_bounds = array<i64: 1, 1, 256>}, {transform_indices = @transform_7, window_bounds = array<i64: 1, 1, 256>}, {transform_indices = @transform_8, window_bounds = array<i64: 1, 8, 256>}]} {
    %c0_i32 = arith.constant 0 : i32
    %0 = arith.cmpi eq, %arg2, %c0_i32 : i32
    %1 = arith.extui %0 : i1 to i32
    %c0_i32_0 = arith.constant 0 : i32
    %2 = arith.cmpi ne, %1, %c0_i32_0 : i32
    scf.if %2 {
      %cst_21 = arith.constant 0.000000e+00 : f32
      %26 = vector.broadcast %cst_21 : f32 to vector<8x256xf32>
      %c0_22 = arith.constant 0 : index
      %c0_23 = arith.constant 0 : index
      %27 = vector.load %arg13[%c0_22, %c0_23] : memref<8x256xf32, #tpu.memory_space<vmem>>, vector<8x256xf32>
      tpu.vector_store %arg13[%c0_22, %c0_23], %26 {strides = array<i32>} : memref<8x256xf32, #tpu.memory_space<vmem>>, vector<8x256xf32>,
    } else {
    }
    %c0 = arith.constant 0 : index
    %c0_1 = arith.constant 0 : index
    %c0_2 = arith.constant 0 : index
    %3 = vector.load %arg5[%c0, %c0_1, %c0_2] : memref<1x8x128xbf16, #tpu.memory_space<vmem>>, vector<1x8x128xbf16>
    %4 = vector.shape_cast %3 : vector<1x8x128xbf16> to vector<8x128xbf16>
    %c0_3 = arith.constant 0 : index
    %c0_4 = arith.constant 0 : index
    %c0_5 = arith.constant 0 : index
    %5 = vector.load %arg6[%c0_3, %c0_4, %c0_5] : memref<1x128x128xbf16, #tpu.memory_space<vmem>>, vector<1x128x128xbf16>
    %6 = vector.shape_cast %5 : vector<1x128x128xbf16> to vector<128x128xbf16>
    %cst = arith.constant dense<0.000000e+00> : vector<8x128xf32>
    %7 = tpu.matmul %4, %6, %cst {dimension_numbers = #tpu.dot_dimension_numbers<[1], [0], [0], [1], [0, 0, 1, 1], [], []>} : vector<8x128xbf16>, vector<128x128xbf16>, vector<8x128xf32> -> vector<8x128xf32>
    %c0_6 = arith.constant 0 : index
    %c0_7 = arith.constant 0 : index
    %c0_8 = arith.constant 0 : index
    %8 = vector.load %arg7[%c0_6, %c0_7, %c0_8] : memref<1x1x128xf32, #tpu.memory_space<vmem>>, vector<1x1x128xf32>
    %9 = vector.shape_cast %8 : vector<1x1x128xf32> to vector<1x128xf32>
    %10 = vector.broadcast %9 : vector<1x128xf32> to vector<8x128xf32>
    %11 = arith.addf %7, %10 : vector<8x128xf32>
    %c0_9 = arith.constant 0 : index
    %c0_10 = arith.constant 0 : index
    %c0_11 = arith.constant 0 : index
    %12 = vector.load %arg4[%c0_9, %c0_10, %c0_11] : memref<1x8x128xbf16, #tpu.memory_space<vmem>>, vector<1x8x128xbf16>
    %13 = vector.shape_cast %12 : vector<1x8x128xbf16> to vector<8x128xbf16>
    %14 = arith.extf %13 : vector<8x128xbf16> to vector<8x128xf32>
    %15 = arith.addf %14, %11 : vector<8x128xf32>
    %c0_12 = arith.constant 0 : index
    %c0_13 = arith.constant 0 : index
    %16 = vector.load %arg13[%c0_12, %c0_13] : memref<8x256xf32, #tpu.memory_space<vmem>>, vector<8x256xf32>
    %17 = arith.truncf %15 : vector<8x128xf32> to vector<8x128xbf16>
    %c0_14 = arith.constant 0 : index
    %c0_15 = arith.constant 0 : index
    %c0_16 = arith.constant 0 : index
    %18 = vector.load %arg8[%c0_14, %c0_15, %c0_16] : memref<1x128x256xbf16, #tpu.memory_space<vmem>>, vector<1x128x256xbf16>
    %19 = vector.shape_cast %18 : vector<1x128x256xbf16> to vector<128x256xbf16>
    %cst_17 = arith.constant dense<0.000000e+00> : vector<8x256xf32>
    %20 = tpu.matmul %17, %19, %cst_17 {dimension_numbers = #tpu.dot_dimension_numbers<[1], [0], [0], [1], [0, 0, 1, 1], [], []>} : vector<8x128xbf16>, vector<128x256xbf16>, vector<8x256xf32> -> vector<8x256xf32>
    %21 = arith.addf %16, %20 : vector<8x256xf32>
    %c0_18 = arith.constant 0 : index
    %c0_19 = arith.constant 0 : index
    %22 = vector.load %arg13[%c0_18, %c0_19] : memref<8x256xf32, #tpu.memory_space<vmem>>, vector<8x256xf32>
    tpu.vector_store %arg13[%c0_18, %c0_19], %21 {strides = array<i32>} : memref<8x256xf32, #tpu.memory_space<vmem>>, vector<8x256xf32>,
    %c1_i32 = arith.constant 1 : i32
    %23 = arith.cmpi eq, %arg2, %c1_i32 : i32
    %24 = arith.extui %23 : i1 to i32
    %c0_i32_20 = arith.constant 0 : i32
    %25 = arith.cmpi ne, %24, %c0_i32_20 : i32
    scf.if %25 {
      %c0_21 = arith.constant 0 : index
      %c0_22 = arith.constant 0 : index
      %26 = vector.load %arg13[%c0_21, %c0_22] : memref<8x256xf32, #tpu.memory_space<vmem>>, vector<8x256xf32>
      %c0_23 = arith.constant 0 : index
      %c0_24 = arith.constant 0 : index
      %c0_25 = arith.constant 0 : index
      %27 = vector.load %arg9[%c0_23, %c0_24, %c0_25] : memref<1x1x256xf32, #tpu.memory_space<vmem>>, vector<1x1x256xf32>
      %28 = vector.shape_cast %27 : vector<1x1x256xf32> to vector<1x256xf32>
      %29 = vector.broadcast %28 : vector<1x256xf32> to vector<8x256xf32>
      %30 = arith.addf %26, %29 : vector<8x256xf32>
      %c0_26 = arith.constant 0 : index
      %c0_27 = arith.constant 0 : index
      %c0_28 = arith.constant 0 : index
      %31 = vector.load %arg10[%c0_26, %c0_27, %c0_28] : memref<1x1x256xf32, #tpu.memory_space<vmem>>, vector<1x1x256xf32>
      %32 = vector.shape_cast %31 : vector<1x1x256xf32> to vector<1x256xf32>
      %c0_29 = arith.constant 0 : index
      %c0_30 = arith.constant 0 : index
      %c0_31 = arith.constant 0 : index
      %33 = vector.load %arg11[%c0_29, %c0_30, %c0_31] : memref<1x1x256xf32, #tpu.memory_space<vmem>>, vector<1x1x256xf32>
      %34 = vector.shape_cast %33 : vector<1x1x256xf32> to vector<1x256xf32>
      %cst_32 = arith.constant dense<0.000000e+00> : vector<8xf32>
      %35 = vector.multi_reduction <add>, %30, %cst_32 [1] : vector<8x256xf32> to vector<8xf32>
      %36 = vector.shape_cast %35 : vector<8xf32> to vector<8x1xf32>
      %cst_33 = arith.constant 2.560000e+02 : f32
      %37 = vector.broadcast %cst_33 : f32 to vector<8x1xf32>
      %38 = arith.divf %36, %37 : vector<8x1xf32>
      %39 = vector.broadcast %38 : vector<8x1xf32> to vector<8x256xf32>
      %40 = arith.subf %30, %39 : vector<8x256xf32>
      %41 = arith.mulf %40, %40 : vector<8x256xf32>
      %cst_34 = arith.constant dense<0.000000e+00> : vector<8xf32>
      %42 = vector.multi_reduction <add>, %41, %cst_34 [1] : vector<8x256xf32> to vector<8xf32>
      %43 = vector.shape_cast %42 : vector<8xf32> to vector<8x1xf32>
      %cst_35 = arith.constant 2.560000e+02 : f32
      %44 = vector.broadcast %cst_35 : f32 to vector<8x1xf32>
      %45 = arith.divf %43, %44 : vector<8x1xf32>
      %cst_36 = arith.constant 9.99999974E-6 : f32
      %46 = vector.broadcast %cst_36 : f32 to vector<8x1xf32>
      %47 = arith.addf %45, %46 : vector<8x1xf32>
      %48 = math.rsqrt %47 : vector<8x1xf32>
      %49 = vector.broadcast %48 : vector<8x1xf32> to vector<8x256xf32>
      %50 = arith.mulf %40, %49 : vector<8x256xf32>
      %51 = vector.broadcast %32 : vector<1x256xf32> to vector<8x256xf32>
      %52 = arith.mulf %50, %51 : vector<8x256xf32>
      %53 = vector.broadcast %34 : vector<1x256xf32> to vector<8x256xf32>
      %54 = arith.addf %52, %53 : vector<8x256xf32>
      %55 = arith.mulf %54, %54 : vector<8x256xf32>
      %56 = arith.mulf %54, %55 : vector<8x256xf32>
      %cst_37 = arith.constant 4.471500e-02 : f32
      %57 = vector.broadcast %cst_37 : f32 to vector<8x256xf32>
      %58 = arith.mulf %57, %56 : vector<8x256xf32>
      %59 = arith.addf %54, %58 : vector<8x256xf32>
      %cst_38 = arith.constant 0.797884583 : f32
      %60 = vector.broadcast %cst_38 : f32 to vector<8x256xf32>
      %61 = arith.mulf %60, %59 : vector<8x256xf32>
      %62 = math.tanh %61 : vector<8x256xf32>
      %cst_39 = arith.constant 1.000000e+00 : f32
      %63 = vector.broadcast %cst_39 : f32 to vector<8x256xf32>
      %64 = arith.addf %63, %62 : vector<8x256xf32>
      %cst_40 = arith.constant 5.000000e-01 : f32
      %65 = vector.broadcast %cst_40 : f32 to vector<8x256xf32>
      %66 = arith.mulf %65, %64 : vector<8x256xf32>
      %67 = arith.mulf %54, %66 : vector<8x256xf32>
      %68 = arith.truncf %67 : vector<8x256xf32> to vector<8x256xbf16>
      %c0_41 = arith.constant 0 : index
      %c0_42 = arith.constant 0 : index
      %c0_43 = arith.constant 0 : index
      %69 = vector.load %arg12[%c0_41, %c0_42, %c0_43] : memref<1x8x256xbf16, #tpu.memory_space<vmem>>, vector<1x8x256xbf16>
      %70 = vector.shape_cast %69 : vector<1x8x256xbf16> to vector<8x256xbf16>
      %71 = vector.shape_cast %68 : vector<8x256xbf16> to vector<1x8x256xbf16>
      tpu.vector_store %arg12[%c0_41, %c0_42, %c0_43], %71 {strides = array<i32>} : memref<1x8x256xbf16, #tpu.memory_space<vmem>>, vector<1x8x256xbf16>,
    } else {
    }
    return
  }
  func.func @transform_0(%arg0: i32, %arg1: i32, %arg2: i32, %arg3: memref<2xi32, #tpu.memory_space<smem>>) -> (i32, i32, i32) {
    %c0_i32 = arith.constant 0 : i32
    return %arg0, %arg1, %arg2 : i32, i32, i32
  }
  func.func @transform_1(%arg0: i32, %arg1: i32, %arg2: i32, %arg3: memref<2xi32, #tpu.memory_space<smem>>) -> (i32, i32, i32) {
    %c0_i32 = arith.constant 0 : i32
    %c0_i32_0 = arith.constant 0 : i32
    return %arg0, %arg1, %c0_i32 : i32, i32, i32
  }
  func.func @transform_2(%arg0: i32, %arg1: i32, %arg2: i32, %arg3: memref<2xi32, #tpu.memory_space<smem>>) -> (i32, i32, i32) {
    %0 = arith.index_cast %arg0 : i32 to index
    %1 = memref.load %arg3[%0] : memref<2xi32, #tpu.memory_space<smem>>
    %c0_i32 = arith.constant 0 : i32
    %c0_i32_0 = arith.constant 0 : i32
    return %1, %c0_i32, %arg2 : i32, i32, i32
  }
  func.func @transform_3(%arg0: i32, %arg1: i32, %arg2: i32, %arg3: memref<2xi32, #tpu.memory_space<smem>>) -> (i32, i32, i32) {
    %0 = arith.index_cast %arg0 : i32 to index
    %1 = memref.load %arg3[%0] : memref<2xi32, #tpu.memory_space<smem>>
    %c0_i32 = arith.constant 0 : i32
    %c0_i32_0 = arith.constant 0 : i32
    return %1, %c0_i32, %arg2 : i32, i32, i32
  }
  func.func @transform_4(%arg0: i32, %arg1: i32, %arg2: i32, %arg3: memref<2xi32, #tpu.memory_space<smem>>) -> (i32, i32, i32) {
    %0 = arith.index_cast %arg0 : i32 to index
    %1 = memref.load %arg3[%0] : memref<2xi32, #tpu.memory_space<smem>>
    %c0_i32 = arith.constant 0 : i32
    %c0_i32_0 = arith.constant 0 : i32
    return %1, %arg2, %c0_i32 : i32, i32, i32
  }
  func.func @transform_5(%arg0: i32, %arg1: i32, %arg2: i32, %arg3: memref<2xi32, #tpu.memory_space<smem>>) -> (i32, i32, i32) {
    %0 = arith.index_cast %arg0 : i32 to index
    %1 = memref.load %arg3[%0] : memref<2xi32, #tpu.memory_space<smem>>
    %c0_i32 = arith.constant 0 : i32
    %c0_i32_0 = arith.constant 0 : i32
    %c0_i32_1 = arith.constant 0 : i32
    return %1, %c0_i32, %c0_i32_0 : i32, i32, i32
  }
  func.func @transform_6(%arg0: i32, %arg1: i32, %arg2: i32, %arg3: memref<2xi32, #tpu.memory_space<smem>>) -> (i32, i32, i32) {
    %0 = arith.index_cast %arg0 : i32 to index
    %1 = memref.load %arg3[%0] : memref<2xi32, #tpu.memory_space<smem>>
    %c0_i32 = arith.constant 0 : i32
    %c0_i32_0 = arith.constant 0 : i32
    %c0_i32_1 = arith.constant 0 : i32
    return %1, %c0_i32, %c0_i32_0 : i32, i32, i32
  }
  func.func @transform_7(%arg0: i32, %arg1: i32, %arg2: i32, %arg3: memref<2xi32, #tpu.memory_space<smem>>) -> (i32, i32, i32) {
    %0 = arith.index_cast %arg0 : i32 to index
    %1 = memref.load %arg3[%0] : memref<2xi32, #tpu.memory_space<smem>>
    %c0_i32 = arith.constant 0 : i32
    %c0_i32_0 = arith.constant 0 : i32
    %c0_i32_1 = arith.constant 0 : i32
    return %1, %c0_i32, %c0_i32_0 : i32, i32, i32
  }
  func.func @transform_8(%arg0: i32, %arg1: i32, %arg2: i32, %arg3: memref<2xi32, #tpu.memory_space<smem>>) -> (i32, i32, i32) {
    %c0_i32 = arith.constant 0 : i32
    %c0_i32_0 = arith.constant 0 : i32
    return %arg0, %arg1, %c0_i32 : i32, i32, i32
  }
}

module attributes {stable_mosaic.version = 11 : i64} {
  func.func @_adapter_down_kernel(%arg0: i32, %arg1: i32, %arg2: i32, %arg3: memref<1xi32, #tpu.memory_space<smem>>, %arg4: memref<1x8x128xbf16, #tpu.memory_space<vmem>>, %arg5: memref<1x128x128xbf16, #tpu.memory_space<vmem>>, %arg6: memref<1x1x128xf32, #tpu.memory_space<vmem>>, %arg7: memref<1x8x128xbf16, #tpu.memory_space<vmem>>, %arg8: memref<8x128xf32, #tpu.memory_space<vmem>>) attributes {dimension_semantics = [#tpu.dimension_semantics<parallel>, #tpu.dimension_semantics<parallel>, #tpu.dimension_semantics<arbitrary>], iteration_bounds = array<i64: 1, 1, 2>, scalar_prefetch = 1 : i64, scratch_operands = 1 : i64, tpu.core_type = #tpu.core_type<tc>, window_params = [{transform_indices = @transform_0, window_bounds = array<i64: 1, 8, 128>}, {transform_indices = @transform_1, window_bounds = array<i64: 1, 128, 128>}, {transform_indices = @transform_2, window_bounds = array<i64: 1, 1, 128>}, {transform_indices = @transform_3, window_bounds = array<i64: 1, 8, 128>}]} {
    %c0_i32 = arith.constant 0 : i32
    %0 = arith.cmpi eq, %arg2, %c0_i32 : i32
    %1 = arith.extui %0 : i1 to i32
    %c0_i32_0 = arith.constant 0 : i32
    %2 = arith.cmpi ne, %1, %c0_i32_0 : i32
    scf.if %2 {
      %cst_11 = arith.constant 0.000000e+00 : f32
      %14 = vector.broadcast %cst_11 : f32 to vector<8x128xf32>
      %c0_12 = arith.constant 0 : index
      %c0_13 = arith.constant 0 : index
      %15 = vector.load %arg8[%c0_12, %c0_13] : memref<8x128xf32, #tpu.memory_space<vmem>>, vector<8x128xf32>
      tpu.vector_store %arg8[%c0_12, %c0_13], %14 {strides = array<i32>} : memref<8x128xf32, #tpu.memory_space<vmem>>, vector<8x128xf32>,
    } else {
    }
    %c0 = arith.constant 0 : index
    %c0_1 = arith.constant 0 : index
    %3 = vector.load %arg8[%c0, %c0_1] : memref<8x128xf32, #tpu.memory_space<vmem>>, vector<8x128xf32>
    %c0_2 = arith.constant 0 : index
    %c0_3 = arith.constant 0 : index
    %c0_4 = arith.constant 0 : index
    %4 = vector.load %arg4[%c0_2, %c0_3, %c0_4] : memref<1x8x128xbf16, #tpu.memory_space<vmem>>, vector<1x8x128xbf16>
    %5 = vector.shape_cast %4 : vector<1x8x128xbf16> to vector<8x128xbf16>
    %c0_5 = arith.constant 0 : index
    %c0_6 = arith.constant 0 : index
    %c0_7 = arith.constant 0 : index
    %6 = vector.load %arg5[%c0_5, %c0_6, %c0_7] : memref<1x128x128xbf16, #tpu.memory_space<vmem>>, vector<1x128x128xbf16>
    %7 = vector.shape_cast %6 : vector<1x128x128xbf16> to vector<128x128xbf16>
    %cst = arith.constant dense<0.000000e+00> : vector<8x128xf32>
    %8 = tpu.matmul %5, %7, %cst {dimension_numbers = #tpu.dot_dimension_numbers<[1], [0], [0], [1], [0, 0, 1, 1], [], []>} : vector<8x128xbf16>, vector<128x128xbf16>, vector<8x128xf32> -> vector<8x128xf32>
    %9 = arith.addf %3, %8 : vector<8x128xf32>
    %c0_8 = arith.constant 0 : index
    %c0_9 = arith.constant 0 : index
    %10 = vector.load %arg8[%c0_8, %c0_9] : memref<8x128xf32, #tpu.memory_space<vmem>>, vector<8x128xf32>
    tpu.vector_store %arg8[%c0_8, %c0_9], %9 {strides = array<i32>} : memref<8x128xf32, #tpu.memory_space<vmem>>, vector<8x128xf32>,
    %c1_i32 = arith.constant 1 : i32
    %11 = arith.cmpi eq, %arg2, %c1_i32 : i32
    %12 = arith.extui %11 : i1 to i32
    %c0_i32_10 = arith.constant 0 : i32
    %13 = arith.cmpi ne, %12, %c0_i32_10 : i32
    scf.if %13 {
      %c0_11 = arith.constant 0 : index
      %c0_12 = arith.constant 0 : index
      %14 = vector.load %arg8[%c0_11, %c0_12] : memref<8x128xf32, #tpu.memory_space<vmem>>, vector<8x128xf32>
      %c0_13 = arith.constant 0 : index
      %c0_14 = arith.constant 0 : index
      %c0_15 = arith.constant 0 : index
      %15 = vector.load %arg6[%c0_13, %c0_14, %c0_15] : memref<1x1x128xf32, #tpu.memory_space<vmem>>, vector<1x1x128xf32>
      %16 = vector.shape_cast %15 : vector<1x1x128xf32> to vector<1x128xf32>
      %17 = vector.broadcast %16 : vector<1x128xf32> to vector<8x128xf32>
      %18 = arith.addf %14, %17 : vector<8x128xf32>
      %cst_16 = arith.constant 0.000000e+00 : f32
      %19 = vector.broadcast %cst_16 : f32 to vector<8x128xf32>
      %20 = arith.maximumf %18, %19 : vector<8x128xf32>
      %21 = arith.truncf %20 : vector<8x128xf32> to vector<8x128xbf16>
      %c0_17 = arith.constant 0 : index
      %c0_18 = arith.constant 0 : index
      %c0_19 = arith.constant 0 : index
      %22 = vector.load %arg7[%c0_17, %c0_18, %c0_19] : memref<1x8x128xbf16, #tpu.memory_space<vmem>>, vector<1x8x128xbf16>
      %23 = vector.shape_cast %22 : vector<1x8x128xbf16> to vector<8x128xbf16>
      %24 = vector.shape_cast %21 : vector<8x128xbf16> to vector<1x8x128xbf16>
      tpu.vector_store %arg7[%c0_17, %c0_18, %c0_19], %24 {strides = array<i32>} : memref<1x8x128xbf16, #tpu.memory_space<vmem>>, vector<1x8x128xbf16>,
    } else {
    }
    return
  }
  func.func @transform_0(%arg0: i32, %arg1: i32, %arg2: i32, %arg3: memref<1xi32, #tpu.memory_space<smem>>) -> (i32, i32, i32) {
    %c0_i32 = arith.constant 0 : i32
    return %arg0, %arg1, %arg2 : i32, i32, i32
  }
  func.func @transform_1(%arg0: i32, %arg1: i32, %arg2: i32, %arg3: memref<1xi32, #tpu.memory_space<smem>>) -> (i32, i32, i32) {
    %0 = arith.index_cast %arg0 : i32 to index
    %1 = memref.load %arg3[%0] : memref<1xi32, #tpu.memory_space<smem>>
    %c0_i32 = arith.constant 0 : i32
    %c0_i32_0 = arith.constant 0 : i32
    return %1, %arg2, %c0_i32 : i32, i32, i32
  }
  func.func @transform_2(%arg0: i32, %arg1: i32, %arg2: i32, %arg3: memref<1xi32, #tpu.memory_space<smem>>) -> (i32, i32, i32) {
    %0 = arith.index_cast %arg0 : i32 to index
    %1 = memref.load %arg3[%0] : memref<1xi32, #tpu.memory_space<smem>>
    %c0_i32 = arith.constant 0 : i32
    %c0_i32_0 = arith.constant 0 : i32
    %c0_i32_1 = arith.constant 0 : i32
    return %1, %c0_i32, %c0_i32_0 : i32, i32, i32
  }
  func.func @transform_3(%arg0: i32, %arg1: i32, %arg2: i32, %arg3: memref<1xi32, #tpu.memory_space<smem>>) -> (i32, i32, i32) {
    %c0_i32 = arith.constant 0 : i32
    %c0_i32_0 = arith.constant 0 : i32
    return %arg0, %arg1, %c0_i32 : i32, i32, i32
  }
}

module attributes {stable_mosaic.version = 11 : i64} {
  func.func @_builder_kernel(%arg0: i32, %arg1: i32, %arg2: i32, %arg3: memref<1xi32, #tpu.memory_space<smem>>, %arg4: memref<1x8x128xbf16, #tpu.memory_space<vmem>>, %arg5: memref<1x128x256xbf16, #tpu.memory_space<vmem>>, %arg6: memref<1x1x256xf32, #tpu.memory_space<vmem>>, %arg7: memref<1x1x256xf32, #tpu.memory_space<vmem>>, %arg8: memref<1x1x256xf32, #tpu.memory_space<vmem>>, %arg9: memref<1x256x128xbf16, #tpu.memory_space<vmem>>, %arg10: memref<1x1x128xf32, #tpu.memory_space<vmem>>, %arg11: memref<1x128x256xbf16, #tpu.memory_space<vmem>>, %arg12: memref<1x1x256xf32, #tpu.memory_space<vmem>>, %arg13: memref<1x8x256xbf16, #tpu.memory_space<vmem>>, %arg14: memref<8x256xf32, #tpu.memory_space<vmem>>) attributes {dimension_semantics = [#tpu.dimension_semantics<parallel>, #tpu.dimension_semantics<parallel>, #tpu.dimension_semantics<arbitrary>], iteration_bounds = array<i64: 1, 1, 2>, scalar_prefetch = 1 : i64, scratch_operands = 1 : i64, tpu.core_type = #tpu.core_type<tc>, window_params = [{transform_indices = @transform_0, window_bounds = array<i64: 1, 8, 128>}, {transform_indices = @transform_1, window_bounds = array<i64: 1, 128, 256>}, {transform_indices = @transform_2, window_bounds = array<i64: 1, 1, 256>}, {transform_indices = @transform_3, window_bounds = array<i64: 1, 1, 256>}, {transform_indices = @transform_4, window_bounds = array<i64: 1, 1, 256>}, {transform_indices = @transform_5, window_bounds = array<i64: 1, 256, 128>}, {transform_indices = @transform_6, window_bounds = array<i64: 1, 1, 128>}, {transform_indices = @transform_7, window_bounds = array<i64: 1, 128, 256>}, {transform_indices = @transform_8, window_bounds = array<i64: 1, 1, 256>}, {transform_indices = @transform_9, window_bounds = array<i64: 1, 8, 256>}]} {
    %c0_i32 = arith.constant 0 : i32
    %0 = arith.cmpi eq, %arg2, %c0_i32 : i32
    %1 = arith.extui %0 : i1 to i32
    %c0_i32_0 = arith.constant 0 : i32
    %2 = arith.cmpi ne, %1, %c0_i32_0 : i32
    scf.if %2 {
      %cst_11 = arith.constant 0.000000e+00 : f32
      %14 = vector.broadcast %cst_11 : f32 to vector<8x256xf32>
      %c0_12 = arith.constant 0 : index
      %c0_13 = arith.constant 0 : index
      %15 = vector.load %arg14[%c0_12, %c0_13] : memref<8x256xf32, #tpu.memory_space<vmem>>, vector<8x256xf32>
      tpu.vector_store %arg14[%c0_12, %c0_13], %14 {strides = array<i32>} : memref<8x256xf32, #tpu.memory_space<vmem>>, vector<8x256xf32>,
    } else {
    }
    %c0 = arith.constant 0 : index
    %c0_1 = arith.constant 0 : index
    %3 = vector.load %arg14[%c0, %c0_1] : memref<8x256xf32, #tpu.memory_space<vmem>>, vector<8x256xf32>
    %c0_2 = arith.constant 0 : index
    %c0_3 = arith.constant 0 : index
    %c0_4 = arith.constant 0 : index
    %4 = vector.load %arg4[%c0_2, %c0_3, %c0_4] : memref<1x8x128xbf16, #tpu.memory_space<vmem>>, vector<1x8x128xbf16>
    %5 = vector.shape_cast %4 : vector<1x8x128xbf16> to vector<8x128xbf16>
    %c0_5 = arith.constant 0 : index
    %c0_6 = arith.constant 0 : index
    %c0_7 = arith.constant 0 : index
    %6 = vector.load %arg5[%c0_5, %c0_6, %c0_7] : memref<1x128x256xbf16, #tpu.memory_space<vmem>>, vector<1x128x256xbf16>
    %7 = vector.shape_cast %6 : vector<1x128x256xbf16> to vector<128x256xbf16>
    %cst = arith.constant dense<0.000000e+00> : vector<8x256xf32>
    %8 = tpu.matmul %5, %7, %cst {dimension_numbers = #tpu.dot_dimension_numbers<[1], [0], [0], [1], [0, 0, 1, 1], [], []>} : vector<8x128xbf16>, vector<128x256xbf16>, vector<8x256xf32> -> vector<8x256xf32>
    %9 = arith.addf %3, %8 : vector<8x256xf32>
    %c0_8 = arith.constant 0 : index
    %c0_9 = arith.constant 0 : index
    %10 = vector.load %arg14[%c0_8, %c0_9] : memref<8x256xf32, #tpu.memory_space<vmem>>, vector<8x256xf32>
    tpu.vector_store %arg14[%c0_8, %c0_9], %9 {strides = array<i32>} : memref<8x256xf32, #tpu.memory_space<vmem>>, vector<8x256xf32>,
    %c1_i32 = arith.constant 1 : i32
    %11 = arith.cmpi eq, %arg2, %c1_i32 : i32
    %12 = arith.extui %11 : i1 to i32
    %c0_i32_10 = arith.constant 0 : i32
    %13 = arith.cmpi ne, %12, %c0_i32_10 : i32
    scf.if %13 {
      %c0_11 = arith.constant 0 : index
      %c0_12 = arith.constant 0 : index
      %14 = vector.load %arg14[%c0_11, %c0_12] : memref<8x256xf32, #tpu.memory_space<vmem>>, vector<8x256xf32>
      %c0_13 = arith.constant 0 : index
      %c0_14 = arith.constant 0 : index
      %c0_15 = arith.constant 0 : index
      %15 = vector.load %arg6[%c0_13, %c0_14, %c0_15] : memref<1x1x256xf32, #tpu.memory_space<vmem>>, vector<1x1x256xf32>
      %16 = vector.shape_cast %15 : vector<1x1x256xf32> to vector<1x256xf32>
      %17 = vector.broadcast %16 : vector<1x256xf32> to vector<8x256xf32>
      %18 = arith.addf %14, %17 : vector<8x256xf32>
      %c0_16 = arith.constant 0 : index
      %c0_17 = arith.constant 0 : index
      %c0_18 = arith.constant 0 : index
      %19 = vector.load %arg7[%c0_16, %c0_17, %c0_18] : memref<1x1x256xf32, #tpu.memory_space<vmem>>, vector<1x1x256xf32>
      %20 = vector.shape_cast %19 : vector<1x1x256xf32> to vector<1x256xf32>
      %c0_19 = arith.constant 0 : index
      %c0_20 = arith.constant 0 : index
      %c0_21 = arith.constant 0 : index
      %21 = vector.load %arg8[%c0_19, %c0_20, %c0_21] : memref<1x1x256xf32, #tpu.memory_space<vmem>>, vector<1x1x256xf32>
      %22 = vector.shape_cast %21 : vector<1x1x256xf32> to vector<1x256xf32>
      %cst_22 = arith.constant dense<0.000000e+00> : vector<8xf32>
      %23 = vector.multi_reduction <add>, %18, %cst_22 [1] : vector<8x256xf32> to vector<8xf32>
      %24 = vector.shape_cast %23 : vector<8xf32> to vector<8x1xf32>
      %cst_23 = arith.constant 2.560000e+02 : f32
      %25 = vector.broadcast %cst_23 : f32 to vector<8x1xf32>
      %26 = arith.divf %24, %25 : vector<8x1xf32>
      %27 = vector.broadcast %26 : vector<8x1xf32> to vector<8x256xf32>
      %28 = arith.subf %18, %27 : vector<8x256xf32>
      %29 = arith.mulf %28, %28 : vector<8x256xf32>
      %cst_24 = arith.constant dense<0.000000e+00> : vector<8xf32>
      %30 = vector.multi_reduction <add>, %29, %cst_24 [1] : vector<8x256xf32> to vector<8xf32>
      %31 = vector.shape_cast %30 : vector<8xf32> to vector<8x1xf32>
      %cst_25 = arith.constant 2.560000e+02 : f32
      %32 = vector.broadcast %cst_25 : f32 to vector<8x1xf32>
      %33 = arith.divf %31, %32 : vector<8x1xf32>
      %cst_26 = arith.constant 9.99999974E-6 : f32
      %34 = vector.broadcast %cst_26 : f32 to vector<8x1xf32>
      %35 = arith.addf %33, %34 : vector<8x1xf32>
      %36 = math.rsqrt %35 : vector<8x1xf32>
      %37 = vector.broadcast %36 : vector<8x1xf32> to vector<8x256xf32>
      %38 = arith.mulf %28, %37 : vector<8x256xf32>
      %39 = vector.broadcast %20 : vector<1x256xf32> to vector<8x256xf32>
      %40 = arith.mulf %38, %39 : vector<8x256xf32>
      %41 = vector.broadcast %22 : vector<1x256xf32> to vector<8x256xf32>
      %42 = arith.addf %40, %41 : vector<8x256xf32>
      %43 = arith.mulf %42, %42 : vector<8x256xf32>
      %44 = arith.mulf %42, %43 : vector<8x256xf32>
      %cst_27 = arith.constant 4.471500e-02 : f32
      %45 = vector.broadcast %cst_27 : f32 to vector<8x256xf32>
      %46 = arith.mulf %45, %44 : vector<8x256xf32>
      %47 = arith.addf %42, %46 : vector<8x256xf32>
      %cst_28 = arith.constant 0.797884583 : f32
      %48 = vector.broadcast %cst_28 : f32 to vector<8x256xf32>
      %49 = arith.mulf %48, %47 : vector<8x256xf32>
      %50 = math.tanh %49 : vector<8x256xf32>
      %cst_29 = arith.constant 1.000000e+00 : f32
      %51 = vector.broadcast %cst_29 : f32 to vector<8x256xf32>
      %52 = arith.addf %51, %50 : vector<8x256xf32>
      %cst_30 = arith.constant 5.000000e-01 : f32
      %53 = vector.broadcast %cst_30 : f32 to vector<8x256xf32>
      %54 = arith.mulf %53, %52 : vector<8x256xf32>
      %55 = arith.mulf %42, %54 : vector<8x256xf32>
      %56 = arith.truncf %55 : vector<8x256xf32> to vector<8x256xbf16>
      %c0_31 = arith.constant 0 : index
      %c0_32 = arith.constant 0 : index
      %c0_33 = arith.constant 0 : index
      %57 = vector.load %arg9[%c0_31, %c0_32, %c0_33] : memref<1x256x128xbf16, #tpu.memory_space<vmem>>, vector<1x256x128xbf16>
      %58 = vector.shape_cast %57 : vector<1x256x128xbf16> to vector<256x128xbf16>
      %cst_34 = arith.constant dense<0.000000e+00> : vector<8x128xf32>
      %59 = tpu.matmul %56, %58, %cst_34 {dimension_numbers = #tpu.dot_dimension_numbers<[1], [0], [0], [1], [0, 0, 1, 1], [], []>} : vector<8x256xbf16>, vector<256x128xbf16>, vector<8x128xf32> -> vector<8x128xf32>
      %c0_35 = arith.constant 0 : index
      %c0_36 = arith.constant 0 : index
      %c0_37 = arith.constant 0 : index
      %60 = vector.load %arg10[%c0_35, %c0_36, %c0_37] : memref<1x1x128xf32, #tpu.memory_space<vmem>>, vector<1x1x128xf32>
      %61 = vector.shape_cast %60 : vector<1x1x128xf32> to vector<1x128xf32>
      %62 = vector.broadcast %61 : vector<1x128xf32> to vector<8x128xf32>
      %63 = arith.addf %59, %62 : vector<8x128xf32>
      %cst_38 = arith.constant 0.000000e+00 : f32
      %64 = vector.broadcast %cst_38 : f32 to vector<8x128xf32>
      %65 = arith.maximumf %63, %64 : vector<8x128xf32>
      %66 = arith.truncf %65 : vector<8x128xf32> to vector<8x128xbf16>
      %c0_39 = arith.constant 0 : index
      %c0_40 = arith.constant 0 : index
      %c0_41 = arith.constant 0 : index
      %67 = vector.load %arg11[%c0_39, %c0_40, %c0_41] : memref<1x128x256xbf16, #tpu.memory_space<vmem>>, vector<1x128x256xbf16>
      %68 = vector.shape_cast %67 : vector<1x128x256xbf16> to vector<128x256xbf16>
      %cst_42 = arith.constant dense<0.000000e+00> : vector<8x256xf32>
      %69 = tpu.matmul %66, %68, %cst_42 {dimension_numbers = #tpu.dot_dimension_numbers<[1], [0], [0], [1], [0, 0, 1, 1], [], []>} : vector<8x128xbf16>, vector<128x256xbf16>, vector<8x256xf32> -> vector<8x256xf32>
      %c0_43 = arith.constant 0 : index
      %c0_44 = arith.constant 0 : index
      %c0_45 = arith.constant 0 : index
      %70 = vector.load %arg12[%c0_43, %c0_44, %c0_45] : memref<1x1x256xf32, #tpu.memory_space<vmem>>, vector<1x1x256xf32>
      %71 = vector.shape_cast %70 : vector<1x1x256xf32> to vector<1x256xf32>
      %72 = vector.broadcast %71 : vector<1x256xf32> to vector<8x256xf32>
      %73 = arith.addf %69, %72 : vector<8x256xf32>
      %74 = arith.addf %55, %73 : vector<8x256xf32>
      %75 = arith.truncf %74 : vector<8x256xf32> to vector<8x256xbf16>
      %c0_46 = arith.constant 0 : index
      %c0_47 = arith.constant 0 : index
      %c0_48 = arith.constant 0 : index
      %76 = vector.load %arg13[%c0_46, %c0_47, %c0_48] : memref<1x8x256xbf16, #tpu.memory_space<vmem>>, vector<1x8x256xbf16>
      %77 = vector.shape_cast %76 : vector<1x8x256xbf16> to vector<8x256xbf16>
      %78 = vector.shape_cast %75 : vector<8x256xbf16> to vector<1x8x256xbf16>
      tpu.vector_store %arg13[%c0_46, %c0_47, %c0_48], %78 {strides = array<i32>} : memref<1x8x256xbf16, #tpu.memory_space<vmem>>, vector<1x8x256xbf16>,
    } else {
    }
    return
  }
  func.func @transform_0(%arg0: i32, %arg1: i32, %arg2: i32, %arg3: memref<1xi32, #tpu.memory_space<smem>>) -> (i32, i32, i32) {
    %c0_i32 = arith.constant 0 : i32
    return %arg0, %arg1, %arg2 : i32, i32, i32
  }
  func.func @transform_1(%arg0: i32, %arg1: i32, %arg2: i32, %arg3: memref<1xi32, #tpu.memory_space<smem>>) -> (i32, i32, i32) {
    %0 = arith.index_cast %arg0 : i32 to index
    %1 = memref.load %arg3[%0] : memref<1xi32, #tpu.memory_space<smem>>
    %c0_i32 = arith.constant 0 : i32
    %c0_i32_0 = arith.constant 0 : i32
    return %1, %arg2, %c0_i32 : i32, i32, i32
  }
  func.func @transform_2(%arg0: i32, %arg1: i32, %arg2: i32, %arg3: memref<1xi32, #tpu.memory_space<smem>>) -> (i32, i32, i32) {
    %0 = arith.index_cast %arg0 : i32 to index
    %1 = memref.load %arg3[%0] : memref<1xi32, #tpu.memory_space<smem>>
    %c0_i32 = arith.constant 0 : i32
    %c0_i32_0 = arith.constant 0 : i32
    %c0_i32_1 = arith.constant 0 : i32
    return %1, %c0_i32, %c0_i32_0 : i32, i32, i32
  }
  func.func @transform_3(%arg0: i32, %arg1: i32, %arg2: i32, %arg3: memref<1xi32, #tpu.memory_space<smem>>) -> (i32, i32, i32) {
    %0 = arith.index_cast %arg0 : i32 to index
    %1 = memref.load %arg3[%0] : memref<1xi32, #tpu.memory_space<smem>>
    %c0_i32 = arith.constant 0 : i32
    %c0_i32_0 = arith.constant 0 : i32
    %c0_i32_1 = arith.constant 0 : i32
    return %1, %c0_i32, %c0_i32_0 : i32, i32, i32
  }
  func.func @transform_4(%arg0: i32, %arg1: i32, %arg2: i32, %arg3: memref<1xi32, #tpu.memory_space<smem>>) -> (i32, i32, i32) {
    %0 = arith.index_cast %arg0 : i32 to index
    %1 = memref.load %arg3[%0] : memref<1xi32, #tpu.memory_space<smem>>
    %c0_i32 = arith.constant 0 : i32
    %c0_i32_0 = arith.constant 0 : i32
    %c0_i32_1 = arith.constant 0 : i32
    return %1, %c0_i32, %c0_i32_0 : i32, i32, i32
  }
  func.func @transform_5(%arg0: i32, %arg1: i32, %arg2: i32, %arg3: memref<1xi32, #tpu.memory_space<smem>>) -> (i32, i32, i32) {
    %0 = arith.index_cast %arg0 : i32 to index
    %1 = memref.load %arg3[%0] : memref<1xi32, #tpu.memory_space<smem>>
    %c0_i32 = arith.constant 0 : i32
    %c0_i32_0 = arith.constant 0 : i32
    %c0_i32_1 = arith.constant 0 : i32
    return %1, %c0_i32, %c0_i32_0 : i32, i32, i32
  }
  func.func @transform_6(%arg0: i32, %arg1: i32, %arg2: i32, %arg3: memref<1xi32, #tpu.memory_space<smem>>) -> (i32, i32, i32) {
    %0 = arith.index_cast %arg0 : i32 to index
    %1 = memref.load %arg3[%0] : memref<1xi32, #tpu.memory_space<smem>>
    %c0_i32 = arith.constant 0 : i32
    %c0_i32_0 = arith.constant 0 : i32
    %c0_i32_1 = arith.constant 0 : i32
    return %1, %c0_i32, %c0_i32_0 : i32, i32, i32
  }
  func.func @transform_7(%arg0: i32, %arg1: i32, %arg2: i32, %arg3: memref<1xi32, #tpu.memory_space<smem>>) -> (i32, i32, i32) {
    %0 = arith.index_cast %arg0 : i32 to index
    %1 = memref.load %arg3[%0] : memref<1xi32, #tpu.memory_space<smem>>
    %c0_i32 = arith.constant 0 : i32
    %c0_i32_0 = arith.constant 0 : i32
    %c0_i32_1 = arith.constant 0 : i32
    return %1, %c0_i32, %c0_i32_0 : i32, i32, i32
  }
  func.func @transform_8(%arg0: i32, %arg1: i32, %arg2: i32, %arg3: memref<1xi32, #tpu.memory_space<smem>>) -> (i32, i32, i32) {
    %0 = arith.index_cast %arg0 : i32 to index
    %1 = memref.load %arg3[%0] : memref<1xi32, #tpu.memory_space<smem>>
    %c0_i32 = arith.constant 0 : i32
    %c0_i32_0 = arith.constant 0 : i32
    %c0_i32_1 = arith.constant 0 : i32
    return %1, %c0_i32, %c0_i32_0 : i32, i32, i32
  }
  func.func @transform_9(%arg0: i32, %arg1: i32, %arg2: i32, %arg3: memref<1xi32, #tpu.memory_space<smem>>) -> (i32, i32, i32) {
    %c0_i32 = arith.constant 0 : i32
    %c0_i32_0 = arith.constant 0 : i32
    return %arg0, %arg1, %c0_i32 : i32, i32, i32
  }
}

module attributes {stable_mosaic.version = 11 : i64} {
  func.func @_embedder_kernel(%arg0: i32, %arg1: i32, %arg2: i32, %arg3: memref<1xi32, #tpu.memory_space<smem>>, %arg4: memref<1x8x128xbf16, #tpu.memory_space<vmem>>, %arg5: memref<1x8x128xbf16, #tpu.memory_space<vmem>>, %arg6: memref<1x128x128xbf16, #tpu.memory_space<vmem>>, %arg7: memref<1x1x128xf32, #tpu.memory_space<vmem>>, %arg8: memref<1x128x256xbf16, #tpu.memory_space<vmem>>, %arg9: memref<1x1x256xf32, #tpu.memory_space<vmem>>, %arg10: memref<1x1x256xf32, #tpu.memory_space<vmem>>, %arg11: memref<1x1x256xf32, #tpu.memory_space<vmem>>, %arg12: memref<1x8x256xbf16, #tpu.memory_space<vmem>>, %arg13: memref<8x256xf32, #tpu.memory_space<vmem>>) attributes {dimension_semantics = [#tpu.dimension_semantics<parallel>, #tpu.dimension_semantics<parallel>, #tpu.dimension_semantics<arbitrary>], iteration_bounds = array<i64: 1, 1, 2>, scalar_prefetch = 1 : i64, scratch_operands = 1 : i64, tpu.core_type = #tpu.core_type<tc>, window_params = [{transform_indices = @transform_0, window_bounds = array<i64: 1, 8, 128>}, {transform_indices = @transform_1, window_bounds = array<i64: 1, 8, 128>}, {transform_indices = @transform_2, window_bounds = array<i64: 1, 128, 128>}, {transform_indices = @transform_3, window_bounds = array<i64: 1, 1, 128>}, {transform_indices = @transform_4, window_bounds = array<i64: 1, 128, 256>}, {transform_indices = @transform_5, window_bounds = array<i64: 1, 1, 256>}, {transform_indices = @transform_6, window_bounds = array<i64: 1, 1, 256>}, {transform_indices = @transform_7, window_bounds = array<i64: 1, 1, 256>}, {transform_indices = @transform_8, window_bounds = array<i64: 1, 8, 256>}]} {
    %c0_i32 = arith.constant 0 : i32
    %0 = arith.cmpi eq, %arg2, %c0_i32 : i32
    %1 = arith.extui %0 : i1 to i32
    %c0_i32_0 = arith.constant 0 : i32
    %2 = arith.cmpi ne, %1, %c0_i32_0 : i32
    scf.if %2 {
      %cst_21 = arith.constant 0.000000e+00 : f32
      %26 = vector.broadcast %cst_21 : f32 to vector<8x256xf32>
      %c0_22 = arith.constant 0 : index
      %c0_23 = arith.constant 0 : index
      %27 = vector.load %arg13[%c0_22, %c0_23] : memref<8x256xf32, #tpu.memory_space<vmem>>, vector<8x256xf32>
      tpu.vector_store %arg13[%c0_22, %c0_23], %26 {strides = array<i32>} : memref<8x256xf32, #tpu.memory_space<vmem>>, vector<8x256xf32>,
    } else {
    }
    %c0 = arith.constant 0 : index
    %c0_1 = arith.constant 0 : index
    %c0_2 = arith.constant 0 : index
    %3 = vector.load %arg5[%c0, %c0_1, %c0_2] : memref<1x8x128xbf16, #tpu.memory_space<vmem>>, vector<1x8x128xbf16>
    %4 = vector.shape_cast %3 : vector<1x8x128xbf16> to vector<8x128xbf16>
    %c0_3 = arith.constant 0 : index
    %c0_4 = arith.constant 0 : index
    %c0_5 = arith.constant 0 : index
    %5 = vector.load %arg6[%c0_3, %c0_4, %c0_5] : memref<1x128x128xbf16, #tpu.memory_space<vmem>>, vector<1x128x128xbf16>
    %6 = vector.shape_cast %5 : vector<1x128x128xbf16> to vector<128x128xbf16>
    %cst = arith.constant dense<0.000000e+00> : vector<8x128xf32>
    %7 = tpu.matmul %4, %6, %cst {dimension_numbers = #tpu.dot_dimension_numbers<[1], [0], [0], [1], [0, 0, 1, 1], [], []>} : vector<8x128xbf16>, vector<128x128xbf16>, vector<8x128xf32> -> vector<8x128xf32>
    %c0_6 = arith.constant 0 : index
    %c0_7 = arith.constant 0 : index
    %c0_8 = arith.constant 0 : index
    %8 = vector.load %arg7[%c0_6, %c0_7, %c0_8] : memref<1x1x128xf32, #tpu.memory_space<vmem>>, vector<1x1x128xf32>
    %9 = vector.shape_cast %8 : vector<1x1x128xf32> to vector<1x128xf32>
    %10 = vector.broadcast %9 : vector<1x128xf32> to vector<8x128xf32>
    %11 = arith.addf %7, %10 : vector<8x128xf32>
    %c0_9 = arith.constant 0 : index
    %c0_10 = arith.constant 0 : index
    %c0_11 = arith.constant 0 : index
    %12 = vector.load %arg4[%c0_9, %c0_10, %c0_11] : memref<1x8x128xbf16, #tpu.memory_space<vmem>>, vector<1x8x128xbf16>
    %13 = vector.shape_cast %12 : vector<1x8x128xbf16> to vector<8x128xbf16>
    %14 = arith.extf %13 : vector<8x128xbf16> to vector<8x128xf32>
    %15 = arith.addf %14, %11 : vector<8x128xf32>
    %c0_12 = arith.constant 0 : index
    %c0_13 = arith.constant 0 : index
    %16 = vector.load %arg13[%c0_12, %c0_13] : memref<8x256xf32, #tpu.memory_space<vmem>>, vector<8x256xf32>
    %17 = arith.truncf %15 : vector<8x128xf32> to vector<8x128xbf16>
    %c0_14 = arith.constant 0 : index
    %c0_15 = arith.constant 0 : index
    %c0_16 = arith.constant 0 : index
    %18 = vector.load %arg8[%c0_14, %c0_15, %c0_16] : memref<1x128x256xbf16, #tpu.memory_space<vmem>>, vector<1x128x256xbf16>
    %19 = vector.shape_cast %18 : vector<1x128x256xbf16> to vector<128x256xbf16>
    %cst_17 = arith.constant dense<0.000000e+00> : vector<8x256xf32>
    %20 = tpu.matmul %17, %19, %cst_17 {dimension_numbers = #tpu.dot_dimension_numbers<[1], [0], [0], [1], [0, 0, 1, 1], [], []>} : vector<8x128xbf16>, vector<128x256xbf16>, vector<8x256xf32> -> vector<8x256xf32>
    %21 = arith.addf %16, %20 : vector<8x256xf32>
    %c0_18 = arith.constant 0 : index
    %c0_19 = arith.constant 0 : index
    %22 = vector.load %arg13[%c0_18, %c0_19] : memref<8x256xf32, #tpu.memory_space<vmem>>, vector<8x256xf32>
    tpu.vector_store %arg13[%c0_18, %c0_19], %21 {strides = array<i32>} : memref<8x256xf32, #tpu.memory_space<vmem>>, vector<8x256xf32>,
    %c1_i32 = arith.constant 1 : i32
    %23 = arith.cmpi eq, %arg2, %c1_i32 : i32
    %24 = arith.extui %23 : i1 to i32
    %c0_i32_20 = arith.constant 0 : i32
    %25 = arith.cmpi ne, %24, %c0_i32_20 : i32
    scf.if %25 {
      %c0_21 = arith.constant 0 : index
      %c0_22 = arith.constant 0 : index
      %26 = vector.load %arg13[%c0_21, %c0_22] : memref<8x256xf32, #tpu.memory_space<vmem>>, vector<8x256xf32>
      %c0_23 = arith.constant 0 : index
      %c0_24 = arith.constant 0 : index
      %c0_25 = arith.constant 0 : index
      %27 = vector.load %arg9[%c0_23, %c0_24, %c0_25] : memref<1x1x256xf32, #tpu.memory_space<vmem>>, vector<1x1x256xf32>
      %28 = vector.shape_cast %27 : vector<1x1x256xf32> to vector<1x256xf32>
      %29 = vector.broadcast %28 : vector<1x256xf32> to vector<8x256xf32>
      %30 = arith.addf %26, %29 : vector<8x256xf32>
      %c0_26 = arith.constant 0 : index
      %c0_27 = arith.constant 0 : index
      %c0_28 = arith.constant 0 : index
      %31 = vector.load %arg10[%c0_26, %c0_27, %c0_28] : memref<1x1x256xf32, #tpu.memory_space<vmem>>, vector<1x1x256xf32>
      %32 = vector.shape_cast %31 : vector<1x1x256xf32> to vector<1x256xf32>
      %c0_29 = arith.constant 0 : index
      %c0_30 = arith.constant 0 : index
      %c0_31 = arith.constant 0 : index
      %33 = vector.load %arg11[%c0_29, %c0_30, %c0_31] : memref<1x1x256xf32, #tpu.memory_space<vmem>>, vector<1x1x256xf32>
      %34 = vector.shape_cast %33 : vector<1x1x256xf32> to vector<1x256xf32>
      %cst_32 = arith.constant dense<0.000000e+00> : vector<8xf32>
      %35 = vector.multi_reduction <add>, %30, %cst_32 [1] : vector<8x256xf32> to vector<8xf32>
      %36 = vector.shape_cast %35 : vector<8xf32> to vector<8x1xf32>
      %cst_33 = arith.constant 2.560000e+02 : f32
      %37 = vector.broadcast %cst_33 : f32 to vector<8x1xf32>
      %38 = arith.divf %36, %37 : vector<8x1xf32>
      %39 = vector.broadcast %38 : vector<8x1xf32> to vector<8x256xf32>
      %40 = arith.subf %30, %39 : vector<8x256xf32>
      %41 = arith.mulf %40, %40 : vector<8x256xf32>
      %cst_34 = arith.constant dense<0.000000e+00> : vector<8xf32>
      %42 = vector.multi_reduction <add>, %41, %cst_34 [1] : vector<8x256xf32> to vector<8xf32>
      %43 = vector.shape_cast %42 : vector<8xf32> to vector<8x1xf32>
      %cst_35 = arith.constant 2.560000e+02 : f32
      %44 = vector.broadcast %cst_35 : f32 to vector<8x1xf32>
      %45 = arith.divf %43, %44 : vector<8x1xf32>
      %cst_36 = arith.constant 9.99999974E-6 : f32
      %46 = vector.broadcast %cst_36 : f32 to vector<8x1xf32>
      %47 = arith.addf %45, %46 : vector<8x1xf32>
      %48 = math.rsqrt %47 : vector<8x1xf32>
      %49 = vector.broadcast %48 : vector<8x1xf32> to vector<8x256xf32>
      %50 = arith.mulf %40, %49 : vector<8x256xf32>
      %51 = vector.broadcast %32 : vector<1x256xf32> to vector<8x256xf32>
      %52 = arith.mulf %50, %51 : vector<8x256xf32>
      %53 = vector.broadcast %34 : vector<1x256xf32> to vector<8x256xf32>
      %54 = arith.addf %52, %53 : vector<8x256xf32>
      %55 = arith.mulf %54, %54 : vector<8x256xf32>
      %56 = arith.mulf %54, %55 : vector<8x256xf32>
      %cst_37 = arith.constant 4.471500e-02 : f32
      %57 = vector.broadcast %cst_37 : f32 to vector<8x256xf32>
      %58 = arith.mulf %57, %56 : vector<8x256xf32>
      %59 = arith.addf %54, %58 : vector<8x256xf32>
      %cst_38 = arith.constant 0.797884583 : f32
      %60 = vector.broadcast %cst_38 : f32 to vector<8x256xf32>
      %61 = arith.mulf %60, %59 : vector<8x256xf32>
      %62 = math.tanh %61 : vector<8x256xf32>
      %cst_39 = arith.constant 1.000000e+00 : f32
      %63 = vector.broadcast %cst_39 : f32 to vector<8x256xf32>
      %64 = arith.addf %63, %62 : vector<8x256xf32>
      %cst_40 = arith.constant 5.000000e-01 : f32
      %65 = vector.broadcast %cst_40 : f32 to vector<8x256xf32>
      %66 = arith.mulf %65, %64 : vector<8x256xf32>
      %67 = arith.mulf %54, %66 : vector<8x256xf32>
      %68 = arith.truncf %67 : vector<8x256xf32> to vector<8x256xbf16>
      %c0_41 = arith.constant 0 : index
      %c0_42 = arith.constant 0 : index
      %c0_43 = arith.constant 0 : index
      %69 = vector.load %arg12[%c0_41, %c0_42, %c0_43] : memref<1x8x256xbf16, #tpu.memory_space<vmem>>, vector<1x8x256xbf16>
      %70 = vector.shape_cast %69 : vector<1x8x256xbf16> to vector<8x256xbf16>
      %71 = vector.shape_cast %68 : vector<8x256xbf16> to vector<1x8x256xbf16>
      tpu.vector_store %arg12[%c0_41, %c0_42, %c0_43], %71 {strides = array<i32>} : memref<1x8x256xbf16, #tpu.memory_space<vmem>>, vector<1x8x256xbf16>,
    } else {
    }
    return
  }
  func.func @transform_0(%arg0: i32, %arg1: i32, %arg2: i32, %arg3: memref<1xi32, #tpu.memory_space<smem>>) -> (i32, i32, i32) {
    %c0_i32 = arith.constant 0 : i32
    return %arg0, %arg1, %arg2 : i32, i32, i32
  }
  func.func @transform_1(%arg0: i32, %arg1: i32, %arg2: i32, %arg3: memref<1xi32, #tpu.memory_space<smem>>) -> (i32, i32, i32) {
    %c0_i32 = arith.constant 0 : i32
    %c0_i32_0 = arith.constant 0 : i32
    return %arg0, %arg1, %c0_i32 : i32, i32, i32
  }
  func.func @transform_2(%arg0: i32, %arg1: i32, %arg2: i32, %arg3: memref<1xi32, #tpu.memory_space<smem>>) -> (i32, i32, i32) {
    %0 = arith.index_cast %arg0 : i32 to index
    %1 = memref.load %arg3[%0] : memref<1xi32, #tpu.memory_space<smem>>
    %c0_i32 = arith.constant 0 : i32
    %c0_i32_0 = arith.constant 0 : i32
    return %1, %c0_i32, %arg2 : i32, i32, i32
  }
  func.func @transform_3(%arg0: i32, %arg1: i32, %arg2: i32, %arg3: memref<1xi32, #tpu.memory_space<smem>>) -> (i32, i32, i32) {
    %0 = arith.index_cast %arg0 : i32 to index
    %1 = memref.load %arg3[%0] : memref<1xi32, #tpu.memory_space<smem>>
    %c0_i32 = arith.constant 0 : i32
    %c0_i32_0 = arith.constant 0 : i32
    return %1, %c0_i32, %arg2 : i32, i32, i32
  }
  func.func @transform_4(%arg0: i32, %arg1: i32, %arg2: i32, %arg3: memref<1xi32, #tpu.memory_space<smem>>) -> (i32, i32, i32) {
    %0 = arith.index_cast %arg0 : i32 to index
    %1 = memref.load %arg3[%0] : memref<1xi32, #tpu.memory_space<smem>>
    %c0_i32 = arith.constant 0 : i32
    %c0_i32_0 = arith.constant 0 : i32
    return %1, %arg2, %c0_i32 : i32, i32, i32
  }
  func.func @transform_5(%arg0: i32, %arg1: i32, %arg2: i32, %arg3: memref<1xi32, #tpu.memory_space<smem>>) -> (i32, i32, i32) {
    %0 = arith.index_cast %arg0 : i32 to index
    %1 = memref.load %arg3[%0] : memref<1xi32, #tpu.memory_space<smem>>
    %c0_i32 = arith.constant 0 : i32
    %c0_i32_0 = arith.constant 0 : i32
    %c0_i32_1 = arith.constant 0 : i32
    return %1, %c0_i32, %c0_i32_0 : i32, i32, i32
  }
  func.func @transform_6(%arg0: i32, %arg1: i32, %arg2: i32, %arg3: memref<1xi32, #tpu.memory_space<smem>>) -> (i32, i32, i32) {
    %0 = arith.index_cast %arg0 : i32 to index
    %1 = memref.load %arg3[%0] : memref<1xi32, #tpu.memory_space<smem>>
    %c0_i32 = arith.constant 0 : i32
    %c0_i32_0 = arith.constant 0 : i32
    %c0_i32_1 = arith.constant 0 : i32
    return %1, %c0_i32, %c0_i32_0 : i32, i32, i32
  }
  func.func @transform_7(%arg0: i32, %arg1: i32, %arg2: i32, %arg3: memref<1xi32, #tpu.memory_space<smem>>) -> (i32, i32, i32) {
    %0 = arith.index_cast %arg0 : i32 to index
    %1 = memref.load %arg3[%0] : memref<1xi32, #tpu.memory_space<smem>>
    %c0_i32 = arith.constant 0 : i32
    %c0_i32_0 = arith.constant 0 : i32
    %c0_i32_1 = arith.constant 0 : i32
    return %1, %c0_i32, %c0_i32_0 : i32, i32, i32
  }
  func.func @transform_8(%arg0: i32, %arg1: i32, %arg2: i32, %arg3: memref<1xi32, #tpu.memory_space<smem>>) -> (i32, i32, i32) {
    %c0_i32 = arith.constant 0 : i32
    %c0_i32_0 = arith.constant 0 : i32
    return %arg0, %arg1, %c0_i32 : i32, i32, i32
  }
}

module attributes {stable_mosaic.version = 11 : i64} {
  func.func @_mse_kernel(%arg0: i32, %arg1: memref<8x256xbf16, #tpu.memory_space<vmem>>, %arg2: memref<8x256xbf16, #tpu.memory_space<vmem>>, %arg3: memref<1x1xf32, #tpu.memory_space<smem>>) attributes {dimension_semantics = [#tpu.dimension_semantics<arbitrary>], iteration_bounds = array<i64: 1>, scalar_prefetch = 0 : i64, scratch_operands = 0 : i64, tpu.core_type = #tpu.core_type<tc>, window_params = [{transform_indices = @transform_0, window_bounds = array<i64: 8, 256>}, {transform_indices = @transform_1, window_bounds = array<i64: 8, 256>}, {transform_indices = @transform_2, window_bounds = array<i64: 1, 1>}]} {
    %c0_i32 = arith.constant 0 : i32
    %0 = arith.cmpi eq, %arg0, %c0_i32 : i32
    %1 = arith.extui %0 : i1 to i32
    %c0_i32_0 = arith.constant 0 : i32
    %2 = arith.cmpi ne, %1, %c0_i32_0 : i32
    scf.if %2 {
      %cst_8 = arith.constant 0.000000e+00 : f32
      %c0_9 = arith.constant 0 : index
      %c0_10 = arith.constant 0 : index
      %16 = memref.load %arg3[%c0_9, %c0_10] : memref<1x1xf32, #tpu.memory_space<smem>>
      memref.store %cst_8, %arg3[%c0_9, %c0_10] : memref<1x1xf32, #tpu.memory_space<smem>>
    } else {
    }
    %c0 = arith.constant 0 : index
    %c0_1 = arith.constant 0 : index
    %3 = vector.load %arg1[%c0, %c0_1] : memref<8x256xbf16, #tpu.memory_space<vmem>>, vector<8x256xbf16>
    %4 = arith.extf %3 : vector<8x256xbf16> to vector<8x256xf32>
    %c0_2 = arith.constant 0 : index
    %c0_3 = arith.constant 0 : index
    %5 = vector.load %arg2[%c0_2, %c0_3] : memref<8x256xbf16, #tpu.memory_space<vmem>>, vector<8x256xbf16>
    %6 = arith.extf %5 : vector<8x256xbf16> to vector<8x256xf32>
    %7 = arith.subf %4, %6 : vector<8x256xf32>
    %c0_4 = arith.constant 0 : index
    %c0_5 = arith.constant 0 : index
    %8 = memref.load %arg3[%c0_4, %c0_5] : memref<1x1xf32, #tpu.memory_space<smem>>
    %9 = arith.mulf %7, %7 : vector<8x256xf32>
    %10 = vector.shape_cast %9 : vector<8x256xf32> to vector<1x8x256xf32>
    %cst = arith.constant dense<0.000000e+00> : vector<1xf32>
    %11 = vector.multi_reduction <add>, %10, %cst [1, 2] : vector<1x8x256xf32> to vector<1xf32>
    %12 = vector.shape_cast %11 : vector<1xf32> to vector<1x1x1xf32>
    %13 = vector.extract %12[0, 0, 0] : f32 from vector<1x1x1xf32>
    %14 = arith.addf %8, %13 : f32
    %c0_6 = arith.constant 0 : index
    %c0_7 = arith.constant 0 : index
    %15 = memref.load %arg3[%c0_6, %c0_7] : memref<1x1xf32, #tpu.memory_space<smem>>
    memref.store %14, %arg3[%c0_6, %c0_7] : memref<1x1xf32, #tpu.memory_space<smem>>
    return
  }
  func.func @transform_0(%arg0: i32) -> (i32, i32) {
    %c0_i32 = arith.constant 0 : i32
    %c0_i32_0 = arith.constant 0 : i32
    return %arg0, %c0_i32 : i32, i32
  }
  func.func @transform_1(%arg0: i32) -> (i32, i32) {
    %c0_i32 = arith.constant 0 : i32
    %c0_i32_0 = arith.constant 0 : i32
    return %arg0, %c0_i32 : i32, i32
  }
  func.func @transform_2(%arg0: i32) -> (i32, i32) {
    %c0_i32 = arith.constant 0 : i32
    %c0_i32_0 = arith.constant 0 : i32
    %c0_i32_1 = arith.constant 0 : i32
    return %c0_i32, %c0_i32_0 : i32, i32
  }
}

module attributes {stable_mosaic.version = 11 : i64} {
  func.func @_builder_kernel(%arg0: i32, %arg1: i32, %arg2: i32, %arg3: memref<2xi32, #tpu.memory_space<smem>>, %arg4: memref<1x8x128xbf16, #tpu.memory_space<vmem>>, %arg5: memref<1x128x256xbf16, #tpu.memory_space<vmem>>, %arg6: memref<1x1x256xf32, #tpu.memory_space<vmem>>, %arg7: memref<1x1x256xf32, #tpu.memory_space<vmem>>, %arg8: memref<1x1x256xf32, #tpu.memory_space<vmem>>, %arg9: memref<1x256x128xbf16, #tpu.memory_space<vmem>>, %arg10: memref<1x1x128xf32, #tpu.memory_space<vmem>>, %arg11: memref<1x128x256xbf16, #tpu.memory_space<vmem>>, %arg12: memref<1x1x256xf32, #tpu.memory_space<vmem>>, %arg13: memref<1x8x256xbf16, #tpu.memory_space<vmem>>, %arg14: memref<8x256xf32, #tpu.memory_space<vmem>>) attributes {dimension_semantics = [#tpu.dimension_semantics<parallel>, #tpu.dimension_semantics<parallel>, #tpu.dimension_semantics<arbitrary>], iteration_bounds = array<i64: 2, 1, 2>, scalar_prefetch = 1 : i64, scratch_operands = 1 : i64, tpu.core_type = #tpu.core_type<tc>, window_params = [{transform_indices = @transform_0, window_bounds = array<i64: 1, 8, 128>}, {transform_indices = @transform_1, window_bounds = array<i64: 1, 128, 256>}, {transform_indices = @transform_2, window_bounds = array<i64: 1, 1, 256>}, {transform_indices = @transform_3, window_bounds = array<i64: 1, 1, 256>}, {transform_indices = @transform_4, window_bounds = array<i64: 1, 1, 256>}, {transform_indices = @transform_5, window_bounds = array<i64: 1, 256, 128>}, {transform_indices = @transform_6, window_bounds = array<i64: 1, 1, 128>}, {transform_indices = @transform_7, window_bounds = array<i64: 1, 128, 256>}, {transform_indices = @transform_8, window_bounds = array<i64: 1, 1, 256>}, {transform_indices = @transform_9, window_bounds = array<i64: 1, 8, 256>}]} {
    %c0_i32 = arith.constant 0 : i32
    %0 = arith.cmpi eq, %arg2, %c0_i32 : i32
    %1 = arith.extui %0 : i1 to i32
    %c0_i32_0 = arith.constant 0 : i32
    %2 = arith.cmpi ne, %1, %c0_i32_0 : i32
    scf.if %2 {
      %cst_11 = arith.constant 0.000000e+00 : f32
      %14 = vector.broadcast %cst_11 : f32 to vector<8x256xf32>
      %c0_12 = arith.constant 0 : index
      %c0_13 = arith.constant 0 : index
      %15 = vector.load %arg14[%c0_12, %c0_13] : memref<8x256xf32, #tpu.memory_space<vmem>>, vector<8x256xf32>
      tpu.vector_store %arg14[%c0_12, %c0_13], %14 {strides = array<i32>} : memref<8x256xf32, #tpu.memory_space<vmem>>, vector<8x256xf32>,
    } else {
    }
    %c0 = arith.constant 0 : index
    %c0_1 = arith.constant 0 : index
    %3 = vector.load %arg14[%c0, %c0_1] : memref<8x256xf32, #tpu.memory_space<vmem>>, vector<8x256xf32>
    %c0_2 = arith.constant 0 : index
    %c0_3 = arith.constant 0 : index
    %c0_4 = arith.constant 0 : index
    %4 = vector.load %arg4[%c0_2, %c0_3, %c0_4] : memref<1x8x128xbf16, #tpu.memory_space<vmem>>, vector<1x8x128xbf16>
    %5 = vector.shape_cast %4 : vector<1x8x128xbf16> to vector<8x128xbf16>
    %c0_5 = arith.constant 0 : index
    %c0_6 = arith.constant 0 : index
    %c0_7 = arith.constant 0 : index
    %6 = vector.load %arg5[%c0_5, %c0_6, %c0_7] : memref<1x128x256xbf16, #tpu.memory_space<vmem>>, vector<1x128x256xbf16>
    %7 = vector.shape_cast %6 : vector<1x128x256xbf16> to vector<128x256xbf16>
    %cst = arith.constant dense<0.000000e+00> : vector<8x256xf32>
    %8 = tpu.matmul %5, %7, %cst {dimension_numbers = #tpu.dot_dimension_numbers<[1], [0], [0], [1], [0, 0, 1, 1], [], []>} : vector<8x128xbf16>, vector<128x256xbf16>, vector<8x256xf32> -> vector<8x256xf32>
    %9 = arith.addf %3, %8 : vector<8x256xf32>
    %c0_8 = arith.constant 0 : index
    %c0_9 = arith.constant 0 : index
    %10 = vector.load %arg14[%c0_8, %c0_9] : memref<8x256xf32, #tpu.memory_space<vmem>>, vector<8x256xf32>
    tpu.vector_store %arg14[%c0_8, %c0_9], %9 {strides = array<i32>} : memref<8x256xf32, #tpu.memory_space<vmem>>, vector<8x256xf32>,
    %c1_i32 = arith.constant 1 : i32
    %11 = arith.cmpi eq, %arg2, %c1_i32 : i32
    %12 = arith.extui %11 : i1 to i32
    %c0_i32_10 = arith.constant 0 : i32
    %13 = arith.cmpi ne, %12, %c0_i32_10 : i32
    scf.if %13 {
      %c0_11 = arith.constant 0 : index
      %c0_12 = arith.constant 0 : index
      %14 = vector.load %arg14[%c0_11, %c0_12] : memref<8x256xf32, #tpu.memory_space<vmem>>, vector<8x256xf32>
      %c0_13 = arith.constant 0 : index
      %c0_14 = arith.constant 0 : index
      %c0_15 = arith.constant 0 : index
      %15 = vector.load %arg6[%c0_13, %c0_14, %c0_15] : memref<1x1x256xf32, #tpu.memory_space<vmem>>, vector<1x1x256xf32>
      %16 = vector.shape_cast %15 : vector<1x1x256xf32> to vector<1x256xf32>
      %17 = vector.broadcast %16 : vector<1x256xf32> to vector<8x256xf32>
      %18 = arith.addf %14, %17 : vector<8x256xf32>
      %c0_16 = arith.constant 0 : index
      %c0_17 = arith.constant 0 : index
      %c0_18 = arith.constant 0 : index
      %19 = vector.load %arg7[%c0_16, %c0_17, %c0_18] : memref<1x1x256xf32, #tpu.memory_space<vmem>>, vector<1x1x256xf32>
      %20 = vector.shape_cast %19 : vector<1x1x256xf32> to vector<1x256xf32>
      %c0_19 = arith.constant 0 : index
      %c0_20 = arith.constant 0 : index
      %c0_21 = arith.constant 0 : index
      %21 = vector.load %arg8[%c0_19, %c0_20, %c0_21] : memref<1x1x256xf32, #tpu.memory_space<vmem>>, vector<1x1x256xf32>
      %22 = vector.shape_cast %21 : vector<1x1x256xf32> to vector<1x256xf32>
      %cst_22 = arith.constant dense<0.000000e+00> : vector<8xf32>
      %23 = vector.multi_reduction <add>, %18, %cst_22 [1] : vector<8x256xf32> to vector<8xf32>
      %24 = vector.shape_cast %23 : vector<8xf32> to vector<8x1xf32>
      %cst_23 = arith.constant 2.560000e+02 : f32
      %25 = vector.broadcast %cst_23 : f32 to vector<8x1xf32>
      %26 = arith.divf %24, %25 : vector<8x1xf32>
      %27 = vector.broadcast %26 : vector<8x1xf32> to vector<8x256xf32>
      %28 = arith.subf %18, %27 : vector<8x256xf32>
      %29 = arith.mulf %28, %28 : vector<8x256xf32>
      %cst_24 = arith.constant dense<0.000000e+00> : vector<8xf32>
      %30 = vector.multi_reduction <add>, %29, %cst_24 [1] : vector<8x256xf32> to vector<8xf32>
      %31 = vector.shape_cast %30 : vector<8xf32> to vector<8x1xf32>
      %cst_25 = arith.constant 2.560000e+02 : f32
      %32 = vector.broadcast %cst_25 : f32 to vector<8x1xf32>
      %33 = arith.divf %31, %32 : vector<8x1xf32>
      %cst_26 = arith.constant 9.99999974E-6 : f32
      %34 = vector.broadcast %cst_26 : f32 to vector<8x1xf32>
      %35 = arith.addf %33, %34 : vector<8x1xf32>
      %36 = math.rsqrt %35 : vector<8x1xf32>
      %37 = vector.broadcast %36 : vector<8x1xf32> to vector<8x256xf32>
      %38 = arith.mulf %28, %37 : vector<8x256xf32>
      %39 = vector.broadcast %20 : vector<1x256xf32> to vector<8x256xf32>
      %40 = arith.mulf %38, %39 : vector<8x256xf32>
      %41 = vector.broadcast %22 : vector<1x256xf32> to vector<8x256xf32>
      %42 = arith.addf %40, %41 : vector<8x256xf32>
      %43 = arith.mulf %42, %42 : vector<8x256xf32>
      %44 = arith.mulf %42, %43 : vector<8x256xf32>
      %cst_27 = arith.constant 4.471500e-02 : f32
      %45 = vector.broadcast %cst_27 : f32 to vector<8x256xf32>
      %46 = arith.mulf %45, %44 : vector<8x256xf32>
      %47 = arith.addf %42, %46 : vector<8x256xf32>
      %cst_28 = arith.constant 0.797884583 : f32
      %48 = vector.broadcast %cst_28 : f32 to vector<8x256xf32>
      %49 = arith.mulf %48, %47 : vector<8x256xf32>
      %50 = math.tanh %49 : vector<8x256xf32>
      %cst_29 = arith.constant 1.000000e+00 : f32
      %51 = vector.broadcast %cst_29 : f32 to vector<8x256xf32>
      %52 = arith.addf %51, %50 : vector<8x256xf32>
      %cst_30 = arith.constant 5.000000e-01 : f32
      %53 = vector.broadcast %cst_30 : f32 to vector<8x256xf32>
      %54 = arith.mulf %53, %52 : vector<8x256xf32>
      %55 = arith.mulf %42, %54 : vector<8x256xf32>
      %56 = arith.truncf %55 : vector<8x256xf32> to vector<8x256xbf16>
      %c0_31 = arith.constant 0 : index
      %c0_32 = arith.constant 0 : index
      %c0_33 = arith.constant 0 : index
      %57 = vector.load %arg9[%c0_31, %c0_32, %c0_33] : memref<1x256x128xbf16, #tpu.memory_space<vmem>>, vector<1x256x128xbf16>
      %58 = vector.shape_cast %57 : vector<1x256x128xbf16> to vector<256x128xbf16>
      %cst_34 = arith.constant dense<0.000000e+00> : vector<8x128xf32>
      %59 = tpu.matmul %56, %58, %cst_34 {dimension_numbers = #tpu.dot_dimension_numbers<[1], [0], [0], [1], [0, 0, 1, 1], [], []>} : vector<8x256xbf16>, vector<256x128xbf16>, vector<8x128xf32> -> vector<8x128xf32>
      %c0_35 = arith.constant 0 : index
      %c0_36 = arith.constant 0 : index
      %c0_37 = arith.constant 0 : index
      %60 = vector.load %arg10[%c0_35, %c0_36, %c0_37] : memref<1x1x128xf32, #tpu.memory_space<vmem>>, vector<1x1x128xf32>
      %61 = vector.shape_cast %60 : vector<1x1x128xf32> to vector<1x128xf32>
      %62 = vector.broadcast %61 : vector<1x128xf32> to vector<8x128xf32>
      %63 = arith.addf %59, %62 : vector<8x128xf32>
      %cst_38 = arith.constant 0.000000e+00 : f32
      %64 = vector.broadcast %cst_38 : f32 to vector<8x128xf32>
      %65 = arith.maximumf %63, %64 : vector<8x128xf32>
      %66 = arith.truncf %65 : vector<8x128xf32> to vector<8x128xbf16>
      %c0_39 = arith.constant 0 : index
      %c0_40 = arith.constant 0 : index
      %c0_41 = arith.constant 0 : index
      %67 = vector.load %arg11[%c0_39, %c0_40, %c0_41] : memref<1x128x256xbf16, #tpu.memory_space<vmem>>, vector<1x128x256xbf16>
      %68 = vector.shape_cast %67 : vector<1x128x256xbf16> to vector<128x256xbf16>
      %cst_42 = arith.constant dense<0.000000e+00> : vector<8x256xf32>
      %69 = tpu.matmul %66, %68, %cst_42 {dimension_numbers = #tpu.dot_dimension_numbers<[1], [0], [0], [1], [0, 0, 1, 1], [], []>} : vector<8x128xbf16>, vector<128x256xbf16>, vector<8x256xf32> -> vector<8x256xf32>
      %c0_43 = arith.constant 0 : index
      %c0_44 = arith.constant 0 : index
      %c0_45 = arith.constant 0 : index
      %70 = vector.load %arg12[%c0_43, %c0_44, %c0_45] : memref<1x1x256xf32, #tpu.memory_space<vmem>>, vector<1x1x256xf32>
      %71 = vector.shape_cast %70 : vector<1x1x256xf32> to vector<1x256xf32>
      %72 = vector.broadcast %71 : vector<1x256xf32> to vector<8x256xf32>
      %73 = arith.addf %69, %72 : vector<8x256xf32>
      %74 = arith.addf %55, %73 : vector<8x256xf32>
      %75 = arith.truncf %74 : vector<8x256xf32> to vector<8x256xbf16>
      %c0_46 = arith.constant 0 : index
      %c0_47 = arith.constant 0 : index
      %c0_48 = arith.constant 0 : index
      %76 = vector.load %arg13[%c0_46, %c0_47, %c0_48] : memref<1x8x256xbf16, #tpu.memory_space<vmem>>, vector<1x8x256xbf16>
      %77 = vector.shape_cast %76 : vector<1x8x256xbf16> to vector<8x256xbf16>
      %78 = vector.shape_cast %75 : vector<8x256xbf16> to vector<1x8x256xbf16>
      tpu.vector_store %arg13[%c0_46, %c0_47, %c0_48], %78 {strides = array<i32>} : memref<1x8x256xbf16, #tpu.memory_space<vmem>>, vector<1x8x256xbf16>,
    } else {
    }
    return
  }
  func.func @transform_0(%arg0: i32, %arg1: i32, %arg2: i32, %arg3: memref<2xi32, #tpu.memory_space<smem>>) -> (i32, i32, i32) {
    %c0_i32 = arith.constant 0 : i32
    return %arg0, %arg1, %arg2 : i32, i32, i32
  }
  func.func @transform_1(%arg0: i32, %arg1: i32, %arg2: i32, %arg3: memref<2xi32, #tpu.memory_space<smem>>) -> (i32, i32, i32) {
    %0 = arith.index_cast %arg0 : i32 to index
    %1 = memref.load %arg3[%0] : memref<2xi32, #tpu.memory_space<smem>>
    %c0_i32 = arith.constant 0 : i32
    %c0_i32_0 = arith.constant 0 : i32
    return %1, %arg2, %c0_i32 : i32, i32, i32
  }
  func.func @transform_2(%arg0: i32, %arg1: i32, %arg2: i32, %arg3: memref<2xi32, #tpu.memory_space<smem>>) -> (i32, i32, i32) {
    %0 = arith.index_cast %arg0 : i32 to index
    %1 = memref.load %arg3[%0] : memref<2xi32, #tpu.memory_space<smem>>
    %c0_i32 = arith.constant 0 : i32
    %c0_i32_0 = arith.constant 0 : i32
    %c0_i32_1 = arith.constant 0 : i32
    return %1, %c0_i32, %c0_i32_0 : i32, i32, i32
  }
  func.func @transform_3(%arg0: i32, %arg1: i32, %arg2: i32, %arg3: memref<2xi32, #tpu.memory_space<smem>>) -> (i32, i32, i32) {
    %0 = arith.index_cast %arg0 : i32 to index
    %1 = memref.load %arg3[%0] : memref<2xi32, #tpu.memory_space<smem>>
    %c0_i32 = arith.constant 0 : i32
    %c0_i32_0 = arith.constant 0 : i32
    %c0_i32_1 = arith.constant 0 : i32
    return %1, %c0_i32, %c0_i32_0 : i32, i32, i32
  }
  func.func @transform_4(%arg0: i32, %arg1: i32, %arg2: i32, %arg3: memref<2xi32, #tpu.memory_space<smem>>) -> (i32, i32, i32) {
    %0 = arith.index_cast %arg0 : i32 to index
    %1 = memref.load %arg3[%0] : memref<2xi32, #tpu.memory_space<smem>>
    %c0_i32 = arith.constant 0 : i32
    %c0_i32_0 = arith.constant 0 : i32
    %c0_i32_1 = arith.constant 0 : i32
    return %1, %c0_i32, %c0_i32_0 : i32, i32, i32
  }
  func.func @transform_5(%arg0: i32, %arg1: i32, %arg2: i32, %arg3: memref<2xi32, #tpu.memory_space<smem>>) -> (i32, i32, i32) {
    %0 = arith.index_cast %arg0 : i32 to index
    %1 = memref.load %arg3[%0] : memref<2xi32, #tpu.memory_space<smem>>
    %c0_i32 = arith.constant 0 : i32
    %c0_i32_0 = arith.constant 0 : i32
    %c0_i32_1 = arith.constant 0 : i32
    return %1, %c0_i32, %c0_i32_0 : i32, i32, i32
  }
  func.func @transform_6(%arg0: i32, %arg1: i32, %arg2: i32, %arg3: memref<2xi32, #tpu.memory_space<smem>>) -> (i32, i32, i32) {
    %0 = arith.index_cast %arg0 : i32 to index
    %1 = memref.load %arg3[%0] : memref<2xi32, #tpu.memory_space<smem>>
    %c0_i32 = arith.constant 0 : i32
    %c0_i32_0 = arith.constant 0 : i32
    %c0_i32_1 = arith.constant 0 : i32
    return %1, %c0_i32, %c0_i32_0 : i32, i32, i32
  }
  func.func @transform_7(%arg0: i32, %arg1: i32, %arg2: i32, %arg3: memref<2xi32, #tpu.memory_space<smem>>) -> (i32, i32, i32) {
    %0 = arith.index_cast %arg0 : i32 to index
    %1 = memref.load %arg3[%0] : memref<2xi32, #tpu.memory_space<smem>>
    %c0_i32 = arith.constant 0 : i32
    %c0_i32_0 = arith.constant 0 : i32
    %c0_i32_1 = arith.constant 0 : i32
    return %1, %c0_i32, %c0_i32_0 : i32, i32, i32
  }
  func.func @transform_8(%arg0: i32, %arg1: i32, %arg2: i32, %arg3: memref<2xi32, #tpu.memory_space<smem>>) -> (i32, i32, i32) {
    %0 = arith.index_cast %arg0 : i32 to index
    %1 = memref.load %arg3[%0] : memref<2xi32, #tpu.memory_space<smem>>
    %c0_i32 = arith.constant 0 : i32
    %c0_i32_0 = arith.constant 0 : i32
    %c0_i32_1 = arith.constant 0 : i32
    return %1, %c0_i32, %c0_i32_0 : i32, i32, i32
  }
  func.func @transform_9(%arg0: i32, %arg1: i32, %arg2: i32, %arg3: memref<2xi32, #tpu.memory_space<smem>>) -> (i32, i32, i32) {
    %c0_i32 = arith.constant 0 : i32
    %c0_i32_0 = arith.constant 0 : i32
    return %arg0, %arg1, %c0_i32 : i32, i32, i32
  }
}

module attributes {stable_mosaic.version = 11 : i64} {
  func.func @_resblock_kernel_dual(%arg0: i32, %arg1: i32, %arg2: memref<16x128xbf16, #tpu.memory_space<vmem>>, %arg3: memref<16x256xbf16, #tpu.memory_space<vmem>>, %arg4: memref<128x256xbf16, #tpu.memory_space<vmem>>, %arg5: memref<1x256xf32, #tpu.memory_space<vmem>>, %arg6: memref<1x256xf32, #tpu.memory_space<vmem>>, %arg7: memref<1x256xf32, #tpu.memory_space<vmem>>, %arg8: memref<16x256xbf16, #tpu.memory_space<vmem>>, %arg9: memref<16x256xf32, #tpu.memory_space<vmem>>) attributes {dimension_semantics = [#tpu.dimension_semantics<parallel>, #tpu.dimension_semantics<arbitrary>], iteration_bounds = array<i64: 1, 2>, scalar_prefetch = 0 : i64, scratch_operands = 1 : i64, tpu.core_type = #tpu.core_type<tc>, window_params = [{transform_indices = @transform_0, window_bounds = array<i64: 16, 128>}, {transform_indices = @transform_1, window_bounds = array<i64: 16, 256>}, {transform_indices = @transform_2, window_bounds = array<i64: 128, 256>}, {pipeline_mode = #tpu.pipeline_mode<synchronous>, transform_indices = @transform_3, window_bounds = array<i64: 1, 256>}, {pipeline_mode = #tpu.pipeline_mode<synchronous>, transform_indices = @transform_4, window_bounds = array<i64: 1, 256>}, {pipeline_mode = #tpu.pipeline_mode<synchronous>, transform_indices = @transform_5, window_bounds = array<i64: 1, 256>}, {transform_indices = @transform_6, window_bounds = array<i64: 16, 256>}]} {
    %c0_i32 = arith.constant 0 : i32
    %0 = arith.cmpi eq, %arg1, %c0_i32 : i32
    %1 = arith.extui %0 : i1 to i32
    %c0_i32_0 = arith.constant 0 : i32
    %2 = arith.cmpi ne, %1, %c0_i32_0 : i32
    scf.if %2 {
      %cst_9 = arith.constant 0.000000e+00 : f32
      %12 = vector.broadcast %cst_9 : f32 to vector<16x256xf32>
      %c0_10 = arith.constant 0 : index
      %c0_11 = arith.constant 0 : index
      %13 = vector.load %arg9[%c0_10, %c0_11] : memref<16x256xf32, #tpu.memory_space<vmem>>, vector<16x256xf32>
      tpu.vector_store %arg9[%c0_10, %c0_11], %12 {strides = array<i32>} : memref<16x256xf32, #tpu.memory_space<vmem>>, vector<16x256xf32>,
    } else {
    }
    %c0 = arith.constant 0 : index
    %c0_1 = arith.constant 0 : index
    %3 = vector.load %arg9[%c0, %c0_1] : memref<16x256xf32, #tpu.memory_space<vmem>>, vector<16x256xf32>
    %c0_2 = arith.constant 0 : index
    %c0_3 = arith.constant 0 : index
    %4 = vector.load %arg2[%c0_2, %c0_3] : memref<16x128xbf16, #tpu.memory_space<vmem>>, vector<16x128xbf16>
    %c0_4 = arith.constant 0 : index
    %c0_5 = arith.constant 0 : index
    %5 = vector.load %arg4[%c0_4, %c0_5] : memref<128x256xbf16, #tpu.memory_space<vmem>>, vector<128x256xbf16>
    %cst = arith.constant dense<0.000000e+00> : vector<16x256xf32>
    %6 = tpu.matmul %4, %5, %cst {dimension_numbers = #tpu.dot_dimension_numbers<[1], [0], [0], [1], [0, 0, 1, 1], [], []>} : vector<16x128xbf16>, vector<128x256xbf16>, vector<16x256xf32> -> vector<16x256xf32>
    %7 = arith.addf %3, %6 : vector<16x256xf32>
    %c0_6 = arith.constant 0 : index
    %c0_7 = arith.constant 0 : index
    %8 = vector.load %arg9[%c0_6, %c0_7] : memref<16x256xf32, #tpu.memory_space<vmem>>, vector<16x256xf32>
    tpu.vector_store %arg9[%c0_6, %c0_7], %7 {strides = array<i32>} : memref<16x256xf32, #tpu.memory_space<vmem>>, vector<16x256xf32>,
    %c1_i32 = arith.constant 1 : i32
    %9 = arith.cmpi eq, %arg1, %c1_i32 : i32
    %10 = arith.extui %9 : i1 to i32
    %c0_i32_8 = arith.constant 0 : i32
    %11 = arith.cmpi ne, %10, %c0_i32_8 : i32
    scf.if %11 {
      %c0_9 = arith.constant 0 : index
      %c0_10 = arith.constant 0 : index
      %12 = vector.load %arg9[%c0_9, %c0_10] : memref<16x256xf32, #tpu.memory_space<vmem>>, vector<16x256xf32>
      %c0_11 = arith.constant 0 : index
      %c0_12 = arith.constant 0 : index
      %13 = vector.load %arg5[%c0_11, %c0_12] : memref<1x256xf32, #tpu.memory_space<vmem>>, vector<1x256xf32>
      %14 = vector.broadcast %13 : vector<1x256xf32> to vector<16x256xf32>
      %15 = arith.addf %12, %14 : vector<16x256xf32>
      %c0_13 = arith.constant 0 : index
      %c0_14 = arith.constant 0 : index
      %16 = vector.load %arg6[%c0_13, %c0_14] : memref<1x256xf32, #tpu.memory_space<vmem>>, vector<1x256xf32>
      %c0_15 = arith.constant 0 : index
      %c0_16 = arith.constant 0 : index
      %17 = vector.load %arg7[%c0_15, %c0_16] : memref<1x256xf32, #tpu.memory_space<vmem>>, vector<1x256xf32>
      %cst_17 = arith.constant dense<0.000000e+00> : vector<16xf32>
      %18 = vector.multi_reduction <add>, %15, %cst_17 [1] : vector<16x256xf32> to vector<16xf32>
      %19 = vector.shape_cast %18 : vector<16xf32> to vector<16x1xf32>
      %cst_18 = arith.constant 2.560000e+02 : f32
      %20 = vector.broadcast %cst_18 : f32 to vector<16x1xf32>
      %21 = arith.divf %19, %20 : vector<16x1xf32>
      %22 = vector.broadcast %21 : vector<16x1xf32> to vector<16x256xf32>
      %23 = arith.subf %15, %22 : vector<16x256xf32>
      %24 = arith.mulf %23, %23 : vector<16x256xf32>
      %cst_19 = arith.constant dense<0.000000e+00> : vector<16xf32>
      %25 = vector.multi_reduction <add>, %24, %cst_19 [1] : vector<16x256xf32> to vector<16xf32>
      %26 = vector.shape_cast %25 : vector<16xf32> to vector<16x1xf32>
      %cst_20 = arith.constant 2.560000e+02 : f32
      %27 = vector.broadcast %cst_20 : f32 to vector<16x1xf32>
      %28 = arith.divf %26, %27 : vector<16x1xf32>
      %cst_21 = arith.constant 9.99999974E-6 : f32
      %29 = vector.broadcast %cst_21 : f32 to vector<16x1xf32>
      %30 = arith.addf %28, %29 : vector<16x1xf32>
      %31 = math.rsqrt %30 : vector<16x1xf32>
      %32 = vector.broadcast %31 : vector<16x1xf32> to vector<16x256xf32>
      %33 = arith.mulf %23, %32 : vector<16x256xf32>
      %34 = vector.broadcast %16 : vector<1x256xf32> to vector<16x256xf32>
      %35 = arith.mulf %33, %34 : vector<16x256xf32>
      %36 = vector.broadcast %17 : vector<1x256xf32> to vector<16x256xf32>
      %37 = arith.addf %35, %36 : vector<16x256xf32>
      %38 = arith.mulf %37, %37 : vector<16x256xf32>
      %39 = arith.mulf %37, %38 : vector<16x256xf32>
      %cst_22 = arith.constant 4.471500e-02 : f32
      %40 = vector.broadcast %cst_22 : f32 to vector<16x256xf32>
      %41 = arith.mulf %40, %39 : vector<16x256xf32>
      %42 = arith.addf %37, %41 : vector<16x256xf32>
      %cst_23 = arith.constant 0.797884583 : f32
      %43 = vector.broadcast %cst_23 : f32 to vector<16x256xf32>
      %44 = arith.mulf %43, %42 : vector<16x256xf32>
      %45 = math.tanh %44 : vector<16x256xf32>
      %cst_24 = arith.constant 1.000000e+00 : f32
      %46 = vector.broadcast %cst_24 : f32 to vector<16x256xf32>
      %47 = arith.addf %46, %45 : vector<16x256xf32>
      %cst_25 = arith.constant 5.000000e-01 : f32
      %48 = vector.broadcast %cst_25 : f32 to vector<16x256xf32>
      %49 = arith.mulf %48, %47 : vector<16x256xf32>
      %50 = arith.mulf %37, %49 : vector<16x256xf32>
      %c0_26 = arith.constant 0 : index
      %c0_27 = arith.constant 0 : index
      %51 = vector.load %arg3[%c0_26, %c0_27] : memref<16x256xbf16, #tpu.memory_space<vmem>>, vector<16x256xbf16>
      %52 = arith.extf %51 : vector<16x256xbf16> to vector<16x256xf32>
      %53 = arith.addf %50, %52 : vector<16x256xf32>
      %54 = arith.truncf %53 : vector<16x256xf32> to vector<16x256xbf16>
      %c0_28 = arith.constant 0 : index
      %c0_29 = arith.constant 0 : index
      %55 = vector.load %arg8[%c0_28, %c0_29] : memref<16x256xbf16, #tpu.memory_space<vmem>>, vector<16x256xbf16>
      tpu.vector_store %arg8[%c0_28, %c0_29], %54 {strides = array<i32>} : memref<16x256xbf16, #tpu.memory_space<vmem>>, vector<16x256xbf16>,
    } else {
    }
    return
  }
  func.func @transform_0(%arg0: i32, %arg1: i32) -> (i32, i32) {
    %c0_i32 = arith.constant 0 : i32
    return %arg0, %arg1 : i32, i32
  }
  func.func @transform_1(%arg0: i32, %arg1: i32) -> (i32, i32) {
    %c0_i32 = arith.constant 0 : i32
    %c0_i32_0 = arith.constant 0 : i32
    return %arg0, %c0_i32 : i32, i32
  }
  func.func @transform_2(%arg0: i32, %arg1: i32) -> (i32, i32) {
    %c0_i32 = arith.constant 0 : i32
    %c0_i32_0 = arith.constant 0 : i32
    return %arg1, %c0_i32 : i32, i32
  }
  func.func @transform_3(%arg0: i32, %arg1: i32) -> (i32, i32) {
    %c0_i32 = arith.constant 0 : i32
    %c0_i32_0 = arith.constant 0 : i32
    %c0_i32_1 = arith.constant 0 : i32
    return %c0_i32, %c0_i32_0 : i32, i32
  }
  func.func @transform_4(%arg0: i32, %arg1: i32) -> (i32, i32) {
    %c0_i32 = arith.constant 0 : i32
    %c0_i32_0 = arith.constant 0 : i32
    %c0_i32_1 = arith.constant 0 : i32
    return %c0_i32, %c0_i32_0 : i32, i32
  }
  func.func @transform_5(%arg0: i32, %arg1: i32) -> (i32, i32) {
    %c0_i32 = arith.constant 0 : i32
    %c0_i32_0 = arith.constant 0 : i32
    %c0_i32_1 = arith.constant 0 : i32
    return %c0_i32, %c0_i32_0 : i32, i32
  }
  func.func @transform_6(%arg0: i32, %arg1: i32) -> (i32, i32) {
    %c0_i32 = arith.constant 0 : i32
    %c0_i32_0 = arith.constant 0 : i32
    return %arg0, %c0_i32 : i32, i32
  }
}

module attributes {stable_mosaic.version = 11 : i64} {
  func.func @_heads_kernel(%arg0: i32, %arg1: i32, %arg2: memref<16x128xbf16, #tpu.memory_space<vmem>>, %arg3: memref<128x256xbf16, #tpu.memory_space<vmem>>, %arg4: memref<1x256xf32, #tpu.memory_space<vmem>>, %arg5: memref<16x128xf32, #tpu.memory_space<vmem>>, %arg6: memref<16x128xf32, #tpu.memory_space<vmem>>, %arg7: memref<16x256xf32, #tpu.memory_space<vmem>>) attributes {dimension_semantics = [#tpu.dimension_semantics<parallel>, #tpu.dimension_semantics<arbitrary>], iteration_bounds = array<i64: 1, 2>, scalar_prefetch = 0 : i64, scratch_operands = 1 : i64, tpu.core_type = #tpu.core_type<tc>, window_params = [{transform_indices = @transform_0, window_bounds = array<i64: 16, 128>}, {transform_indices = @transform_1, window_bounds = array<i64: 128, 256>}, {pipeline_mode = #tpu.pipeline_mode<synchronous>, transform_indices = @transform_2, window_bounds = array<i64: 1, 256>}, {transform_indices = @transform_3, window_bounds = array<i64: 16, 128>}, {transform_indices = @transform_4, window_bounds = array<i64: 16, 128>}]} {
    %c0_i32 = arith.constant 0 : i32
    %0 = arith.cmpi eq, %arg1, %c0_i32 : i32
    %1 = arith.extui %0 : i1 to i32
    %c0_i32_0 = arith.constant 0 : i32
    %2 = arith.cmpi ne, %1, %c0_i32_0 : i32
    scf.if %2 {
      %cst_9 = arith.constant 0.000000e+00 : f32
      %12 = vector.broadcast %cst_9 : f32 to vector<16x256xf32>
      %c0_10 = arith.constant 0 : index
      %c0_11 = arith.constant 0 : index
      %13 = vector.load %arg7[%c0_10, %c0_11] : memref<16x256xf32, #tpu.memory_space<vmem>>, vector<16x256xf32>
      tpu.vector_store %arg7[%c0_10, %c0_11], %12 {strides = array<i32>} : memref<16x256xf32, #tpu.memory_space<vmem>>, vector<16x256xf32>,
    } else {
    }
    %c0 = arith.constant 0 : index
    %c0_1 = arith.constant 0 : index
    %3 = vector.load %arg7[%c0, %c0_1] : memref<16x256xf32, #tpu.memory_space<vmem>>, vector<16x256xf32>
    %c0_2 = arith.constant 0 : index
    %c0_3 = arith.constant 0 : index
    %4 = vector.load %arg2[%c0_2, %c0_3] : memref<16x128xbf16, #tpu.memory_space<vmem>>, vector<16x128xbf16>
    %c0_4 = arith.constant 0 : index
    %c0_5 = arith.constant 0 : index
    %5 = vector.load %arg3[%c0_4, %c0_5] : memref<128x256xbf16, #tpu.memory_space<vmem>>, vector<128x256xbf16>
    %cst = arith.constant dense<0.000000e+00> : vector<16x256xf32>
    %6 = tpu.matmul %4, %5, %cst {dimension_numbers = #tpu.dot_dimension_numbers<[1], [0], [0], [1], [0, 0, 1, 1], [], []>} : vector<16x128xbf16>, vector<128x256xbf16>, vector<16x256xf32> -> vector<16x256xf32>
    %7 = arith.addf %3, %6 : vector<16x256xf32>
    %c0_6 = arith.constant 0 : index
    %c0_7 = arith.constant 0 : index
    %8 = vector.load %arg7[%c0_6, %c0_7] : memref<16x256xf32, #tpu.memory_space<vmem>>, vector<16x256xf32>
    tpu.vector_store %arg7[%c0_6, %c0_7], %7 {strides = array<i32>} : memref<16x256xf32, #tpu.memory_space<vmem>>, vector<16x256xf32>,
    %c1_i32 = arith.constant 1 : i32
    %9 = arith.cmpi eq, %arg1, %c1_i32 : i32
    %10 = arith.extui %9 : i1 to i32
    %c0_i32_8 = arith.constant 0 : i32
    %11 = arith.cmpi ne, %10, %c0_i32_8 : i32
    scf.if %11 {
      %c0_9 = arith.constant 0 : index
      %c0_10 = arith.constant 0 : index
      %12 = vector.load %arg7[%c0_9, %c0_10] : memref<16x256xf32, #tpu.memory_space<vmem>>, vector<16x256xf32>
      %c0_11 = arith.constant 0 : index
      %c0_12 = arith.constant 0 : index
      %13 = vector.load %arg4[%c0_11, %c0_12] : memref<1x256xf32, #tpu.memory_space<vmem>>, vector<1x256xf32>
      %14 = vector.broadcast %13 : vector<1x256xf32> to vector<16x256xf32>
      %15 = arith.addf %12, %14 : vector<16x256xf32>
      %16 = vector.extract_strided_slice %15 {offsets = [0, 0], sizes = [16, 128], strides = [1, 1]} : vector<16x256xf32> to vector<16x128xf32>
      %c0_13 = arith.constant 0 : index
      %c0_14 = arith.constant 0 : index
      %17 = vector.load %arg5[%c0_13, %c0_14] : memref<16x128xf32, #tpu.memory_space<vmem>>, vector<16x128xf32>
      tpu.vector_store %arg5[%c0_13, %c0_14], %16 {strides = array<i32>} : memref<16x128xf32, #tpu.memory_space<vmem>>, vector<16x128xf32>,
      %18 = vector.extract_strided_slice %15 {offsets = [0, 128], sizes = [16, 128], strides = [1, 1]} : vector<16x256xf32> to vector<16x128xf32>
      %c0_15 = arith.constant 0 : index
      %c0_16 = arith.constant 0 : index
      %19 = vector.load %arg6[%c0_15, %c0_16] : memref<16x128xf32, #tpu.memory_space<vmem>>, vector<16x128xf32>
      tpu.vector_store %arg6[%c0_15, %c0_16], %18 {strides = array<i32>} : memref<16x128xf32, #tpu.memory_space<vmem>>, vector<16x128xf32>,
    } else {
    }
    return
  }
  func.func @transform_0(%arg0: i32, %arg1: i32) -> (i32, i32) {
    %c0_i32 = arith.constant 0 : i32
    return %arg0, %arg1 : i32, i32
  }
  func.func @transform_1(%arg0: i32, %arg1: i32) -> (i32, i32) {
    %c0_i32 = arith.constant 0 : i32
    %c0_i32_0 = arith.constant 0 : i32
    return %arg1, %c0_i32 : i32, i32
  }
  func.func @transform_2(%arg0: i32, %arg1: i32) -> (i32, i32) {
    %c0_i32 = arith.constant 0 : i32
    %c0_i32_0 = arith.constant 0 : i32
    %c0_i32_1 = arith.constant 0 : i32
    return %c0_i32, %c0_i32_0 : i32, i32
  }
  func.func @transform_3(%arg0: i32, %arg1: i32) -> (i32, i32) {
    %c0_i32 = arith.constant 0 : i32
    %c0_i32_0 = arith.constant 0 : i32
    return %arg0, %c0_i32 : i32, i32
  }
  func.func @transform_4(%arg0: i32, %arg1: i32) -> (i32, i32) {
    %c0_i32 = arith.constant 0 : i32
    %c0_i32_0 = arith.constant 0 : i32
    return %arg0, %c0_i32 : i32, i32
  }
}

</mosaic_0001>

<llo_original>
// kernel: tpu_custom_call.1
$region0: #{tpu_custom_call.1}
  #allocation0 [shape = 'u32[]', space=smem, size = 0x4, offset = 0x4, fixed_abs, tag = 'smem constant byte address 0x4 - core index']
  #allocation1 [shape = 'u32[144,128]{1,0:T(1,128)}', space=vmem, size = 0x12000, scoped, tag = 'internal scratch']
  %s0 = inlined_call_operand.hbm [shape: f32[32,128], index: 0, kind: input, shape index: {}]
  %s1 = inlined_call_operand.hbm [shape: f32[8,128], index: 1, kind: output, shape index: {}]
  %s2 = sld [smem:[#allocation0]]
  $region41: #{tpu_custom_call.1} parent=0
    _
  %s4 = ssub.s32 1, %s2
  %s5 = scalar_select 0, %s4, %s2
  $region1: #{tpu_custom_call.1} parent=0
    #allocation2 [shape = 'u8[4096]{0}', space=vmem, size = 0x1000, scoped, tag = 'input window, operand 0, single buffered']
    #allocation3 [shape = 's32[2]{0}', space=sflag, size = 0x8, scoped, tag = 'scoped memory for tpu_custom_call.1']
    #allocation4 [shape = 's32[2]{0}', space=sflag, size = 0x8, scoped, tag = 'scoped memory for tpu_custom_call.1']
    #allocation5 [shape = 'u8[4096]{0}', space=vmem, size = 0x1000, scoped, tag = 'output window, operand 0, single buffered']
    %6 = vsyncpa [#allocation3], 0
    %7 = vsyncpa [#allocation4], 0
    loop: start=0, step=1, limit=6
    $region2: #{tpu_custom_call.1} parent=1 // loop_pre_header
      _
    $region3: #{tpu_custom_call.1} parent=1 // loop_header
      %s9 = sphi 0, %s13
      %p10 = scmp.ge.s32.totalorder %s9, 6
      %s17 = sphi 0, %s17
      %s19 = sphi 0, %s17
      %s20 = sphi 0, %s19
      %s34 = sphi 0, %s20
      %s38 = sphi 0, %s38
      %s40 = sphi 0, %s38
      %s41 = sphi 0, %s40
      %s55 = sphi 0, %s41
    $region4: #{tpu_custom_call.1} parent=1 // loop_header_branch
      %12 = sbr.rel (%p10) target = $region8
    $region5: #{tpu_custom_call.1} parent=1 // loop_body
      %s14 = ssub.s32 %s9, 1
      %s15 = ssub.s32 %s9, 2
      %s16 = sadd.s32 %s9, 1
      %s18 = sadd.s32 %s17, 1
      %p21 = scmp.eq.s32.totalorder %s9, 3
      %p22 = scmp.ne.s32.totalorder %s17, %s19
      %p23 = scmp.eq.s32.totalorder %s9, 0
      %p24 = por %p22, %p23
      %p25 = scmp.ne.s32.totalorder %s17, %s19
      %p26 = scmp.eq.s32.totalorder %s14, 3
      %p27 = por %p25, %p26
      %p28 = scmp.ne.s32.totalorder %s19, %s20
      %p29 = scmp.eq.s32.totalorder %s14, 0
      %p30 = por %p28, %p29
      %p31 = scmp.ne.s32.totalorder %s19, %s20
      %p32 = scmp.eq.s32.totalorder %s15, 3
      %p33 = por %p31, %p32
      %p35 = scmp.ne.s32.totalorder %s20, %s34
      %p36 = scmp.eq.s32.totalorder %s15, 0
      %p37 = por %p35, %p36
      %s39 = sadd.s32 %s38, 1
      %p42 = scmp.eq.s32.totalorder %s9, 3
      %p43 = scmp.ne.s32.totalorder %s38, %s40
      %p44 = scmp.eq.s32.totalorder %s9, 0
      %p45 = por %p43, %p44
      %p46 = scmp.ne.s32.totalorder %s38, %s40
      %p47 = scmp.eq.s32.totalorder %s14, 3
      %p48 = por %p46, %p47
      %p49 = scmp.ne.s32.totalorder %s40, %s41
      %p50 = scmp.eq.s32.totalorder %s14, 0
      %p51 = por %p49, %p50
      %p52 = scmp.ne.s32.totalorder %s40, %s41
      %p53 = scmp.eq.s32.totalorder %s15, 3
      %p54 = por %p52, %p53
      %p56 = scmp.ne.s32.totalorder %s41, %s55
      %p57 = scmp.eq.s32.totalorder %s15, 0
      %p58 = por %p56, %p57
      %p59 = scmp.le.s32.totalorder 1, %s9
      %p60 = scmp.lt.s32.totalorder %s9, 5
      %p61 = pnand %p59, %p60
      %p62 = pneg %p61
      // Predicated region
      $region9: #{tpu_custom_call.1} parent=5 // pred_check
        _
      $region10: #{tpu_custom_call.1} parent=5 // pred_check_branch
        %64 = sbr.rel (%p61) target = $region12
      $region11: #{tpu_custom_call.1} parent=5 // pred_region
        %s65 = ssub.s32 %s9, 1
        // Predicated region
        $region13: #{tpu_custom_call.1} parent=11 // pred_check
          %p66 = pneg %p30
        $region14: #{tpu_custom_call.1} parent=11 // pred_check_branch
          %68 = sbr.rel (%p66) target = $region16
        $region15: #{tpu_custom_call.1} parent=11 // pred_region
          %s70 = ssub.s32 128, 128
          %71 = vsyncadd [#allocation3], %s70
          %s73 = sshll.u32 [#allocation2], 4
          %s74 = int_to_ptr.vmem [resolvable:$true] %s73
          %76 = dma.hbm_to_vmem [thread:$0]  %s0, 128, %s74, [#allocation3]
        $region16: #{tpu_custom_call.1} parent=11 // pred_fallthru
          _
      $region12: #{tpu_custom_call.1} parent=5 // pred_fallthru
        _
      %p77 = scmp.lt.s32.totalorder %s9, 4
      // Predicated region
      $region17: #{tpu_custom_call.1} parent=5 // pred_check
        %p78 = pneg %p77
      $region18: #{tpu_custom_call.1} parent=5 // pred_check_branch
        %80 = sbr.rel (%p78) target = $region20
      $region19: #{tpu_custom_call.1} parent=5 // pred_region
        _
      $region20: #{tpu_custom_call.1} parent=5 // pred_fallthru
        _
      %p81 = scmp.le.s32.totalorder 1, %s9
      %p82 = scmp.lt.s32.totalorder %s9, 5
      %p83 = pnand %p81, %p82
      %p84 = pneg %p83
      // Predicated region
      $region21: #{tpu_custom_call.1} parent=5 // pred_check
        _
      $region22: #{tpu_custom_call.1} parent=5 // pred_check_branch
        %86 = sbr.rel (%p83) target = $region24
      $region23: #{tpu_custom_call.1} parent=5 // pred_region
        %s87 = ssub.s32 %s9, 1
        // Predicated region
        $region25: #{tpu_custom_call.1} parent=23 // pred_check
          %p88 = pneg %p30
        $region26: #{tpu_custom_call.1} parent=23 // pred_check_branch
          %90 = sbr.rel (%p88) target = $region28
        $region27: #{tpu_custom_call.1} parent=23 // pred_region
          %91 = dma.done [#allocation3], 128
        $region28: #{tpu_custom_call.1} parent=23 // pred_fallthru
          _
        %p92 = pneg %p30
        %p93 = pneg %p27
        %p94 = pneg %p51
        %p95 = pneg %p48
        %v96 = vld [vmem:[#allocation2] sm:$0xff]
        %97 = vst [vmem:[#allocation5] sm:$0xff] %v96
        // Predicated region
        $region29: #{tpu_custom_call.1} parent=23 // pred_check
          %p98 = pneg %p48
        $region30: #{tpu_custom_call.1} parent=23 // pred_check_branch
          %100 = sbr.rel (%p98) target = $region32
        $region31: #{tpu_custom_call.1} parent=23 // pred_region
          %s102 = ssub.s32 128, 128
          %103 = vsyncadd [#allocation4], %s102
          %s105 = sshll.u32 [#allocation5], 4
          %s106 = int_to_ptr.vmem [resolvable:$true] %s105
          %108 = dma.vmem_to_hbm [thread:$0]  %s106, 128, %s1, [#allocation4]
        $region32: #{tpu_custom_call.1} parent=23 // pred_fallthru
          _
        // Predicated region
        $region33: #{tpu_custom_call.1} parent=23 // pred_check
          %p109 = pneg %p48
        $region34: #{tpu_custom_call.1} parent=23 // pred_check_branch
          %111 = sbr.rel (%p109) target = $region36
        $region35: #{tpu_custom_call.1} parent=23 // pred_region
          %112 = dma.done [#allocation4], 128
        $region36: #{tpu_custom_call.1} parent=23 // pred_fallthru
          _
      $region24: #{tpu_custom_call.1} parent=5 // pred_fallthru
        _
      %p113 = scmp.le.s32.totalorder 2, %s9
      // Predicated region
      $region37: #{tpu_custom_call.1} parent=5 // pred_check
        %p114 = pneg %p113
      $region38: #{tpu_custom_call.1} parent=5 // pred_check_branch
        %116 = sbr.rel (%p114) target = $region40
      $region39: #{tpu_custom_call.1} parent=5 // pred_region
        %s117 = ssub.s32 %s9, 2
      $region40: #{tpu_custom_call.1} parent=5 // pred_fallthru
        _
    $region6: #{tpu_custom_call.1} parent=1 // loop_footer
      %s13 = sadd.s32 1, %s9
    $region7: #{tpu_custom_call.1} parent=1 // loop_footer_branch
      %8 = sbr.rel target = $region3
    $region8: #{tpu_custom_call.1} parent=1 // loop_exit
      _
    %118 = vsyncpa [#allocation3], 1
    %s119 = scalar_lea.sflag [#allocation3], 1
    %120 = vsyncpa %s119, 1
    %121 = vsyncpa [#allocation4], 1
    %s122 = scalar_lea.sflag [#allocation4], 1
    %123 = vsyncpa %s122, 1

// kernel: tpu_custom_call.1
$region0: #{tpu_custom_call.1}
  #allocation0 [shape = 'u32[]', space=smem, size = 0x4, offset = 0x4, fixed_abs, tag = 'smem constant byte address 0x4 - core index']
  #allocation1 [shape = 'u32[144,128]{1,0:T(1,128)}', space=vmem, size = 0x12000, scoped, tag = 'internal scratch']
  %s0 = inlined_call_operand.hbm [shape: bf16[8,256], index: 0, kind: input, shape index: {}]
  %s1 = inlined_call_operand.hbm [shape: bf16[8,128], index: 1, kind: output, shape index: {}]
  %s2 = sld [smem:[#allocation0]]
  $region41: #{tpu_custom_call.1} parent=0
    _
  %s4 = ssub.s32 1, %s2
  %s5 = scalar_select 0, %s4, %s2
  $region1: #{tpu_custom_call.1} parent=0
    #allocation2 [shape = 'u8[4096]{0}', space=vmem, size = 0x1000, scoped, tag = 'input window, operand 0, single buffered']
    #allocation3 [shape = 's32[2]{0}', space=sflag, size = 0x8, scoped, tag = 'scoped memory for tpu_custom_call.1']
    #allocation4 [shape = 's32[2]{0}', space=sflag, size = 0x8, scoped, tag = 'scoped memory for tpu_custom_call.1']
    #allocation5 [shape = 'u8[2048]{0}', space=vmem, size = 0x800, scoped, tag = 'output window, operand 0, single buffered']
    %6 = vsyncpa [#allocation3], 0
    %7 = vsyncpa [#allocation4], 0
    loop: start=0, step=1, limit=4
    $region2: #{tpu_custom_call.1} parent=1 // loop_pre_header
      _
    $region3: #{tpu_custom_call.1} parent=1 // loop_header
      %s9 = sphi 0, %s13
      %p10 = scmp.ge.s32.totalorder %s9, 4
      %s17 = sphi 0, %s17
      %s19 = sphi 0, %s17
      %s20 = sphi 0, %s19
      %s34 = sphi 0, %s20
      %s38 = sphi 0, %s38
      %s40 = sphi 0, %s38
      %s41 = sphi 0, %s40
      %s55 = sphi 0, %s41
    $region4: #{tpu_custom_call.1} parent=1 // loop_header_branch
      %12 = sbr.rel (%p10) target = $region8
    $region5: #{tpu_custom_call.1} parent=1 // loop_body
      %s14 = ssub.s32 %s9, 1
      %s15 = ssub.s32 %s9, 2
      %s16 = sadd.s32 %s9, 1
      %s18 = sadd.s32 %s17, 1
      %p21 = scmp.eq.s32.totalorder %s9, 1
      %p22 = scmp.ne.s32.totalorder %s17, %s19
      %p23 = scmp.eq.s32.totalorder %s9, 0
      %p24 = por %p22, %p23
      %p25 = scmp.ne.s32.totalorder %s17, %s19
      %p26 = scmp.eq.s32.totalorder %s14, 1
      %p27 = por %p25, %p26
      %p28 = scmp.ne.s32.totalorder %s19, %s20
      %p29 = scmp.eq.s32.totalorder %s14, 0
      %p30 = por %p28, %p29
      %p31 = scmp.ne.s32.totalorder %s19, %s20
      %p32 = scmp.eq.s32.totalorder %s15, 1
      %p33 = por %p31, %p32
      %p35 = scmp.ne.s32.totalorder %s20, %s34
      %p36 = scmp.eq.s32.totalorder %s15, 0
      %p37 = por %p35, %p36
      %s39 = sadd.s32 %s38, 1
      %p42 = scmp.eq.s32.totalorder %s9, 1
      %p43 = scmp.ne.s32.totalorder %s38, %s40
      %p44 = scmp.eq.s32.totalorder %s9, 0
      %p45 = por %p43, %p44
      %p46 = scmp.ne.s32.totalorder %s38, %s40
      %p47 = scmp.eq.s32.totalorder %s14, 1
      %p48 = por %p46, %p47
      %p49 = scmp.ne.s32.totalorder %s40, %s41
      %p50 = scmp.eq.s32.totalorder %s14, 0
      %p51 = por %p49, %p50
      %p52 = scmp.ne.s32.totalorder %s40, %s41
      %p53 = scmp.eq.s32.totalorder %s15, 1
      %p54 = por %p52, %p53
      %p56 = scmp.ne.s32.totalorder %s41, %s55
      %p57 = scmp.eq.s32.totalorder %s15, 0
      %p58 = por %p56, %p57
      %p59 = scmp.le.s32.totalorder 1, %s9
      %p60 = scmp.lt.s32.totalorder %s9, 3
      %p61 = pnand %p59, %p60
      %p62 = pneg %p61
      // Predicated region
      $region9: #{tpu_custom_call.1} parent=5 // pred_check
        _
      $region10: #{tpu_custom_call.1} parent=5 // pred_check_branch
        %64 = sbr.rel (%p61) target = $region12
      $region11: #{tpu_custom_call.1} parent=5 // pred_region
        %s65 = ssub.s32 %s9, 1
        // Predicated region
        $region13: #{tpu_custom_call.1} parent=11 // pred_check
          %p66 = pneg %p30
        $region14: #{tpu_custom_call.1} parent=11 // pred_check_branch
          %68 = sbr.rel (%p66) target = $region16
        $region15: #{tpu_custom_call.1} parent=11 // pred_region
          %s70 = ssub.s32 128, 128
          %71 = vsyncadd [#allocation3], %s70
          %s73 = sshll.u32 [#allocation2], 4
          %s74 = int_to_ptr.vmem [resolvable:$true] %s73
          %76 = dma.hbm_to_vmem [thread:$0]  %s0, 128, %s74, [#allocation3]
        $region16: #{tpu_custom_call.1} parent=11 // pred_fallthru
          _
      $region12: #{tpu_custom_call.1} parent=5 // pred_fallthru
        _
      %p77 = scmp.lt.s32.totalorder %s9, 2
      // Predicated region
      $region17: #{tpu_custom_call.1} parent=5 // pred_check
        %p78 = pneg %p77
      $region18: #{tpu_custom_call.1} parent=5 // pred_check_branch
        %80 = sbr.rel (%p78) target = $region20
      $region19: #{tpu_custom_call.1} parent=5 // pred_region
        _
      $region20: #{tpu_custom_call.1} parent=5 // pred_fallthru
        _
      %p81 = scmp.le.s32.totalorder 1, %s9
      %p82 = scmp.lt.s32.totalorder %s9, 3
      %p83 = pnand %p81, %p82
      %p84 = pneg %p83
      // Predicated region
      $region21: #{tpu_custom_call.1} parent=5 // pred_check
        _
      $region22: #{tpu_custom_call.1} parent=5 // pred_check_branch
        %86 = sbr.rel (%p83) target = $region24
      $region23: #{tpu_custom_call.1} parent=5 // pred_region
        %s87 = ssub.s32 %s9, 1
        // Predicated region
        $region25: #{tpu_custom_call.1} parent=23 // pred_check
          %p88 = pneg %p30
        $region26: #{tpu_custom_call.1} parent=23 // pred_check_branch
          %90 = sbr.rel (%p88) target = $region28
        $region27: #{tpu_custom_call.1} parent=23 // pred_region
          %91 = dma.done [#allocation3], 128
        $region28: #{tpu_custom_call.1} parent=23 // pred_fallthru
          _
        %p92 = pneg %p30
        %p93 = pneg %p27
        %p94 = pneg %p51
        %p95 = pneg %p48
        %s96 = smul.u32 %s14, 128
        %s97 = sshra.s32 %s96, 7
        %s98 = sand.u32 %s96, 127
        %s99 = smul.addr %s97, 4
        %s100 = scalar_lea.vmem [#allocation2], %s99
        %v101 = vld [vmem:[%s100] sm:$0xf]
        %102 = vst [vmem:[#allocation5] sm:$0xf] %v101
        // Predicated region
        $region29: #{tpu_custom_call.1} parent=23 // pred_check
          %p103 = pneg %p48
        $region30: #{tpu_custom_call.1} parent=23 // pred_check_branch
          %105 = sbr.rel (%p103) target = $region32
        $region31: #{tpu_custom_call.1} parent=23 // pred_region
          %s107 = ssub.s32 64, 64
          %108 = vsyncadd [#allocation4], %s107
          %s110 = sshll.u32 [#allocation5], 4
          %s111 = int_to_ptr.vmem [resolvable:$true] %s110
          %113 = dma.vmem_to_hbm [thread:$0]  %s111, 64, %s1, [#allocation4]
        $region32: #{tpu_custom_call.1} parent=23 // pred_fallthru
          _
        // Predicated region
        $region33: #{tpu_custom_call.1} parent=23 // pred_check
          %p114 = pneg %p48
        $region34: #{tpu_custom_call.1} parent=23 // pred_check_branch
          %116 = sbr.rel (%p114) target = $region36
        $region35: #{tpu_custom_call.1} parent=23 // pred_region
          %117 = dma.done [#allocation4], 64
        $region36: #{tpu_custom_call.1} parent=23 // pred_fallthru
          _
      $region24: #{tpu_custom_call.1} parent=5 // pred_fallthru
        _
      %p118 = scmp.le.s32.totalorder 2, %s9
      // Predicated region
      $region37: #{tpu_custom_call.1} parent=5 // pred_check
        %p119 = pneg %p118
      $region38: #{tpu_custom_call.1} parent=5 // pred_check_branch
        %121 = sbr.rel (%p119) target = $region40
      $region39: #{tpu_custom_call.1} parent=5 // pred_region
        %s122 = ssub.s32 %s9, 2
      $region40: #{tpu_custom_call.1} parent=5 // pred_fallthru
        _
    $region6: #{tpu_custom_call.1} parent=1 // loop_footer
      %s13 = sadd.s32 1, %s9
    $region7: #{tpu_custom_call.1} parent=1 // loop_footer_branch
      %8 = sbr.rel target = $region3
    $region8: #{tpu_custom_call.1} parent=1 // loop_exit
      _
    %123 = vsyncpa [#allocation3], 1
    %s124 = scalar_lea.sflag [#allocation3], 1
    %125 = vsyncpa %s124, 1
    %126 = vsyncpa [#allocation4], 1
    %s127 = scalar_lea.sflag [#allocation4], 1
    %128 = vsyncpa %s127, 1

// kernel: fmri_encoder_cross_forward.10
$region0: #{fmri_encoder_cross_forward.10}
  #allocation0 [shape = 'u32[]', space=smem, size = 0x4, offset = 0x4, fixed_abs, tag = 'smem constant byte address 0x4 - core index']
  #allocation1 [shape = 'u32[144,128]{1,0:T(1,128)}', space=vmem, size = 0x12000, scoped, tag = 'internal scratch']
  #allocation2 [shape = 'f32[8,128]{1,0:T(8,128)}', space=vmem, size = 0x1000, scoped, tag = 'scratch operand']
  #allocation3 [shape = 's32[1]{0}', space=sflag, size = 0x4, scoped, tag = 'scoped memory for fmri_encoder_cross_forward.10']
  #allocation4 [shape = 'u8[512]{0}', space=smem, size = 0x200, scoped, tag = 'prefetched SMEM operand 0']
  %s0 = inlined_call_operand.vmem [shape: s32[2], index: 0, kind: input, shape index: {}]
  %s1 = inlined_call_operand.vmem [shape: bf16[2,8,256], index: 1, kind: input, shape index: {}]
  %s2 = inlined_call_operand.hbm [shape: bf16[2,256,128], index: 2, kind: input, shape index: {}]
  %s3 = inlined_call_operand.vmem [shape: f32[2,1,128], index: 3, kind: input, shape index: {}]
  %s4 = inlined_call_operand.vmem [shape: bf16[2,8,128], index: 4, kind: output, shape index: {}]
  %s5 = sld [smem:[#allocation0]]
  $region57: #{fmri_encoder_cross_forward.10} parent=0
    _
  %s7 = ssub.s32 1, %s5
  %s8 = scalar_select 0, %s7, %s5
  %s9 = sshll.u32 %s0, 4
  %s10 = int_to_ptr.vmem [resolvable:$true] %s9
  %12 = dma.vmem_to_smem %s10, 16, [#allocation4], [#allocation3]
  %13 = dma.done [#allocation3], 16
  %14 = sfence
  $region1: #{fmri_encoder_cross_forward.10} parent=0
    #allocation5 [shape = 'u8[65536]{0}', space=vmem, size = 0x10000, scoped, tag = 'input window, operand 2']
    #allocation6 [shape = 's32[2]{0}', space=sflag, size = 0x8, scoped, tag = 'scoped memory for fmri_encoder_cross_forward.10']
    %15 = vsyncpa [#allocation6], 0
    %s16 = scalar_lea.sflag [#allocation6], 1
    %17 = vsyncpa %s16, 0
    loop: start=0, step=1, limit=6
    $region2: #{fmri_encoder_cross_forward.10} parent=1 // loop_pre_header
      _
    $region3: #{fmri_encoder_cross_forward.10} parent=1 // loop_header
      %s19 = sphi 0, %s23
      %p20 = scmp.ge.s32.totalorder %s19, 6
      %s26 = sphi 0, %s45
      %s27 = sphi 0, %s41
      %s28 = sphi 0, %s37
      %s29 = sphi 0, %s26
      %s30 = sphi 0, %s27
      %s31 = sphi 0, %s28
      %s32 = sphi 0, %s29
      %s33 = sphi 0, %s30
      %s34 = sphi 0, %s31
      %s52 = sphi 0, %s54
      %s55 = sphi 0, %s52
      %s56 = sphi 0, %s55
      %s72 = sphi 0, %s56
      %s82 = sphi 0, %s84
      %s85 = sphi 0, %s82
      %s86 = sphi 0, %s85
      %s102 = sphi 0, %s86
      %s110 = sphi 0, %s112
      %s113 = sphi 0, %s110
      %s114 = sphi 0, %s113
      %s130 = sphi 0, %s114
      %s138 = sphi 0, %s140
      %s141 = sphi 0, %s138
      %s142 = sphi 0, %s141
      %s158 = sphi 0, %s142
    $region4: #{fmri_encoder_cross_forward.10} parent=1 // loop_header_branch
      %22 = sbr.rel (%p20) target = $region8
    $region5: #{fmri_encoder_cross_forward.10} parent=1 // loop_body
      %s24 = ssub.s32 %s19, 1
      %s25 = ssub.s32 %s19, 2
      %s35 = sadd.s32 1, %s28
      %p36 = scmp.ge.s32.totalorder %s35, 2
      %s37 = scalar_select %p36, 0, %s35
      %s38 = sadd.s32 1, %s27
      %s39 = scalar_select %p36, %s38, %s27
      %p40 = scmp.ge.s32.totalorder %s39, 1
      %s41 = scalar_select %p40, 0, %s39
      %s42 = sadd.s32 1, %s26
      %s43 = scalar_select %p40, %s42, %s26
      %p44 = scmp.ge.s32.totalorder %s43, 2
      %s45 = scalar_select %p44, 0, %s43
      %s46 = ssub.s32 %s26, %s45
      %s47 = ssub.s32 %s27, %s41
      %s48 = sor.u32 %s46, %s47
      %s49 = ssub.s32 %s28, %s37
      %s50 = sor.u32 %s48, %s49
      %p51 = scmp.eq.s32.totalorder %s50, 0
      %s53 = sadd.s32 %s52, 1
      %s54 = scalar_select %p51, %s52, %s53
      %p57 = pneg %p51
      %p58 = scmp.eq.s32.totalorder %s19, 3
      %p59 = por %p57, %p58
      %p60 = scmp.ne.s32.totalorder %s52, %s55
      %p61 = scmp.eq.s32.totalorder %s19, 0
      %p62 = por %p60, %p61
      %p63 = scmp.ne.s32.totalorder %s52, %s55
      %p64 = scmp.eq.s32.totalorder %s24, 3
      %p65 = por %p63, %p64
      %p66 = scmp.ne.s32.totalorder %s55, %s56
      %p67 = scmp.eq.s32.totalorder %s24, 0
      %p68 = por %p66, %p67
      %p69 = scmp.ne.s32.totalorder %s55, %s56
      %p70 = scmp.eq.s32.totalorder %s25, 3
      %p71 = por %p69, %p70
      %p73 = scmp.ne.s32.totalorder %s56, %s72
      %p74 = scmp.eq.s32.totalorder %s25, 0
      %p75 = por %p73, %p74
      %s76 = sld [smem:[#allocation4 + %s26]]
      %s77 = sld [smem:[#allocation4 + %s45]]
      %s78 = ssub.s32 %s76, %s77
      %s79 = ssub.s32 %s28, %s37
      %s80 = sor.u32 %s78, %s79
      %p81 = scmp.eq.s32.totalorder %s80, 0
      %s83 = sadd.s32 %s82, 1
      %s84 = scalar_select %p81, %s82, %s83
      %p87 = pneg %p81
      %p88 = scmp.eq.s32.totalorder %s19, 3
      %p89 = por %p87, %p88
      %p90 = scmp.ne.s32.totalorder %s82, %s85
      %p91 = scmp.eq.s32.totalorder %s19, 0
      %p92 = por %p90, %p91
      %p93 = scmp.ne.s32.totalorder %s82, %s85
      %p94 = scmp.eq.s32.totalorder %s24, 3
      %p95 = por %p93, %p94
      %p96 = scmp.ne.s32.totalorder %s85, %s86
      %p97 = scmp.eq.s32.totalorder %s24, 0
      %p98 = por %p96, %p97
      %p99 = scmp.ne.s32.totalorder %s85, %s86
      %p100 = scmp.eq.s32.totalorder %s25, 3
      %p101 = por %p99, %p100
      %p103 = scmp.ne.s32.totalorder %s86, %s102
      %p104 = scmp.eq.s32.totalorder %s25, 0
      %p105 = por %p103, %p104
      %s106 = sld [smem:[#allocation4 + %s26]]
      %s107 = sld [smem:[#allocation4 + %s45]]
      %s108 = ssub.s32 %s106, %s107
      %p109 = scmp.eq.s32.totalorder %s108, 0
      %s111 = sadd.s32 %s110, 1
      %s112 = scalar_select %p109, %s110, %s111
      %p115 = pneg %p109
      %p116 = scmp.eq.s32.totalorder %s19, 3
      %p117 = por %p115, %p116
      %p118 = scmp.ne.s32.totalorder %s110, %s113
      %p119 = scmp.eq.s32.totalorder %s19, 0
      %p120 = por %p118, %p119
      %p121 = scmp.ne.s32.totalorder %s110, %s113
      %p122 = scmp.eq.s32.totalorder %s24, 3
      %p123 = por %p121, %p122
      %p124 = scmp.ne.s32.totalorder %s113, %s114
      %p125 = scmp.eq.s32.totalorder %s24, 0
      %p126 = por %p124, %p125
      %p127 = scmp.ne.s32.totalorder %s113, %s114
      %p128 = scmp.eq.s32.totalorder %s25, 3
      %p129 = por %p127, %p128
      %p131 = scmp.ne.s32.totalorder %s114, %s130
      %p132 = scmp.eq.s32.totalorder %s25, 0
      %p133 = por %p131, %p132
      %s134 = ssub.s32 %s26, %s45
      %s135 = ssub.s32 %s27, %s41
      %s136 = sor.u32 %s134, %s135
      %p137 = scmp.eq.s32.totalorder %s136, 0
      %s139 = sadd.s32 %s138, 1
      %s140 = scalar_select %p137, %s138, %s139
      %p143 = pneg %p137
      %p144 = scmp.eq.s32.totalorder %s19, 3
      %p145 = por %p143, %p144
      %p146 = scmp.ne.s32.totalorder %s138, %s141
      %p147 = scmp.eq.s32.totalorder %s19, 0
      %p148 = por %p146, %p147
      %p149 = scmp.ne.s32.totalorder %s138, %s141
      %p150 = scmp.eq.s32.totalorder %s24, 3
      %p151 = por %p149, %p150
      %p152 = scmp.ne.s32.totalorder %s141, %s142
      %p153 = scmp.eq.s32.totalorder %s24, 0
      %p154 = por %p152, %p153
      %p155 = scmp.ne.s32.totalorder %s141, %s142
      %p156 = scmp.eq.s32.totalorder %s25, 3
      %p157 = por %p155, %p156
      %p159 = scmp.ne.s32.totalorder %s142, %s158
      %p160 = scmp.eq.s32.totalorder %s25, 0
      %p161 = por %p159, %p160
      %p162 = scmp.le.s32.totalorder 1, %s19
      %p163 = scmp.lt.s32.totalorder %s19, 5
      %p164 = pnand %p162, %p163
      %p165 = pneg %p164
      // Predicated region
      $region9: #{fmri_encoder_cross_forward.10} parent=5 // pred_check
        _
      $region10: #{fmri_encoder_cross_forward.10} parent=5 // pred_check_branch
        %167 = sbr.rel (%p164) target = $region12
      $region11: #{fmri_encoder_cross_forward.10} parent=5 // pred_region
        %s168 = ssub.s32 %s19, 1
      $region12: #{fmri_encoder_cross_forward.10} parent=5 // pred_fallthru
        _
      %p169 = scmp.lt.s32.totalorder %s19, 4
      // Predicated region
      $region13: #{fmri_encoder_cross_forward.10} parent=5 // pred_check
        %p170 = pneg %p169
      $region14: #{fmri_encoder_cross_forward.10} parent=5 // pred_check_branch
        %172 = sbr.rel (%p170) target = $region16
      $region15: #{fmri_encoder_cross_forward.10} parent=5 // pred_region
        // Predicated region
        $region17: #{fmri_encoder_cross_forward.10} parent=15 // pred_check
          %p173 = pneg %p62
        $region18: #{fmri_encoder_cross_forward.10} parent=15 // pred_check_branch
          %175 = sbr.rel (%p173) target = $region20
        $region19: #{fmri_encoder_cross_forward.10} parent=15 // pred_region
          %p176 = scmp.lt.s32.totalorder %s26, 1
          %s177 = scalar_select %p176, %s26, 1
          %p178 = scmp.lt.s32.totalorder %s27, 0
          %s179 = scalar_select %p178, %s27, 0
          %p180 = scmp.lt.s32.totalorder %s28, 1
          %s181 = scalar_select %p180, %s28, 1
          %s182 = smul.addr %s179, 2
          %s183 = sadd.s32 %s181, %s182
          %s184 = smul.addr %s177, 2
          %s185 = sadd.s32 %s183, %s184
          %s186 = smul.addr %s185, 4
          %s187 = scalar_lea.vmem %s1, %s186
        $region20: #{fmri_encoder_cross_forward.10} parent=15 // pred_fallthru
          _
        // Predicated region
        $region21: #{fmri_encoder_cross_forward.10} parent=15 // pred_check
          %p188 = pneg %p92
        $region22: #{fmri_encoder_cross_forward.10} parent=15 // pred_check_branch
          %190 = sbr.rel (%p188) target = $region24
        $region23: #{fmri_encoder_cross_forward.10} parent=15 // pred_region
          %s191 = sand.u32 %s82, 1
          %s192 = scalar_lea.sflag [#allocation6], %s191
          %s193 = sand.u32 %s82, 1
          %s194 = smul.addr %s193, 64
          %s195 = scalar_lea.vmem [#allocation5], %s194
          %s196 = sld [smem:[#allocation4 + %s26]]
          %s197 = smul.u32 16, %s28
          %s199 = ssub.s32 1024, 1024
          %200 = vsyncadd %s192, %s199
          %s201 = smul.addr %s196, 32
          %s202 = sadd.s32 %s197, %s201
          %s203 = smul.addr %s202, 64
          %s204 = scalar_lea.hbm %s2, %s203
          %s205 = sshll.u32 %s195, 4
          %s206 = int_to_ptr.vmem [resolvable:$true] %s205
          %211 = dma.hbm_to_vmem [thread:$0]  %s204, 1024, %s206, %s192, 64, 64, 4
        $region24: #{fmri_encoder_cross_forward.10} parent=15 // pred_fallthru
          _
        // Predicated region
        $region25: #{fmri_encoder_cross_forward.10} parent=15 // pred_check
          %p212 = pneg %p120
        $region26: #{fmri_encoder_cross_forward.10} parent=15 // pred_check_branch
          %214 = sbr.rel (%p212) target = $region28
        $region27: #{fmri_encoder_cross_forward.10} parent=15 // pred_region
          %s215 = sld [smem:[#allocation4 + %s26]]
          %p216 = scmp.lt.s32.totalorder %s215, 1
          %s217 = scalar_select %p216, %s215, 1
          %s218 = scalar_lea.vmem %s3, %s217
          %s219 = sld [smem:[#allocation4 + %s26]]
        $region28: #{fmri_encoder_cross_forward.10} parent=15 // pred_fallthru
          _
      $region16: #{fmri_encoder_cross_forward.10} parent=5 // pred_fallthru
        _
      %p220 = scmp.le.s32.totalorder 1, %s19
      %p221 = scmp.lt.s32.totalorder %s19, 5
      %p222 = pnand %p220, %p221
      %p223 = pneg %p222
      // Predicated region
      $region29: #{fmri_encoder_cross_forward.10} parent=5 // pred_check
        _
      $region30: #{fmri_encoder_cross_forward.10} parent=5 // pred_check_branch
        %225 = sbr.rel (%p222) target = $region32
      $region31: #{fmri_encoder_cross_forward.10} parent=5 // pred_region
        %s226 = ssub.s32 %s19, 1
        %s227 = sand.u32 %s85, 1
        %s228 = scalar_lea.sflag [#allocation6], %s227
        %s229 = sand.u32 %s85, 1
        %s230 = smul.addr %s229, 64
        %s231 = scalar_lea.vmem [#allocation5], %s230
        // Predicated region
        $region33: #{fmri_encoder_cross_forward.10} parent=31 // pred_check
          %p232 = pneg %p98
        $region34: #{fmri_encoder_cross_forward.10} parent=31 // pred_check_branch
          %234 = sbr.rel (%p232) target = $region36
        $region35: #{fmri_encoder_cross_forward.10} parent=31 // pred_region
          %235 = dma.done %s228, 1024
        $region36: #{fmri_encoder_cross_forward.10} parent=31 // pred_fallthru
          _
        %p236 = scmp.lt.s32.totalorder %s29, 1
        %s237 = scalar_select %p236, %s29, 1
        %p238 = scmp.lt.s32.totalorder %s30, 0
        %s239 = scalar_select %p238, %s30, 0
        %p240 = scmp.lt.s32.totalorder %s31, 1
        %s241 = scalar_select %p240, %s31, 1
        %s242 = smul.addr %s239, 2
        %s243 = sadd.s32 %s241, %s242
        %s244 = smul.addr %s237, 2
        %s245 = sadd.s32 %s243, %s244
        %s246 = smul.addr %s245, 4
        %s247 = scalar_lea.vmem %s1, %s246
        %p248 = pneg %p68
        %p249 = pneg %p65
        %s250 = sand.u32 %s85, 1
        %s251 = scalar_lea.sflag [#allocation6], %s250
        %s252 = sand.u32 %s85, 1
        %s253 = smul.addr %s252, 64
        %s254 = scalar_lea.vmem [#allocation5], %s253
        %p255 = pneg %p98
        %p256 = pneg %p95
        %s257 = sld [smem:[#allocation4 + %s29]]
        %p258 = scmp.lt.s32.totalorder %s257, 1
        %s259 = scalar_select %p258, %s257, 1
        %s260 = scalar_lea.vmem %s3, %s259
        %p261 = pneg %p126
        %p262 = pneg %p123
        %p263 = pneg %p154
        %p264 = pneg %p151
        %p265 = scmp.lt.s32.totalorder %s29, 1
        %s266 = scalar_select %p265, %s29, 1
        %p267 = scmp.lt.s32.totalorder %s30, 0
        %s268 = scalar_select %p267, %s30, 0
        %s269 = sadd.s32 %s268, %s266
        %s270 = smul.addr %s269, 4
        %s271 = scalar_lea.vmem %s4, %s270
        %p272 = scmp.lt.s32.totalorder %s29, 1
        %s273 = scalar_select %p272, %s29, 1
        %p274 = scmp.lt.s32.totalorder %s30, 0
        %s275 = scalar_select %p274, %s30, 0
        %p276 = scmp.lt.s32.totalorder %s31, 1
        %s277 = scalar_select %p276, %s31, 1
        %s278 = smul.addr %s275, 2
        %s279 = sadd.s32 %s277, %s278
        %s280 = smul.addr %s273, 2
        %s281 = sadd.s32 %s279, %s280
        %s282 = smul.addr %s281, 4
        %s283 = scalar_lea.vmem %s1, %s282
        %s284 = sld [smem:[#allocation4 + %s29]]
        %s285 = smul.u32 16, %s31
        %s286 = sld [smem:[#allocation4 + %s29]]
        %p287 = scmp.lt.s32.totalorder %s286, 1
        %s288 = scalar_select %p287, %s286, 1
        %s289 = scalar_lea.vmem %s3, %s288
        %s290 = sld [smem:[#allocation4 + %s29]]
        %p291 = scmp.lt.s32.totalorder %s29, 1
        %s292 = scalar_select %p291, %s29, 1
        %p293 = scmp.lt.s32.totalorder %s30, 0
        %s294 = scalar_select %p293, %s30, 0
        %s295 = sadd.s32 %s294, %s292
        %s296 = smul.addr %s295, 4
        %s297 = scalar_lea.vmem %s4, %s296
        %p299 = scmp.eq.s32.totalorder %s31, 0
        // Predicated region
        $region37: #{fmri_encoder_cross_forward.10} parent=31 // pred_check
          %p300 = pneg %p299
        $region38: #{fmri_encoder_cross_forward.10} parent=31 // pred_check_branch
          %302 = sbr.rel (%p300) target = $region40
        $region39: #{fmri_encoder_cross_forward.10} parent=31 // pred_region
          %303 = vst [vmem:[#allocation2] sm:$0xff] 0.0
        $region40: #{fmri_encoder_cross_forward.10} parent=31 // pred_fallthru
          _
        %v304 = vld [vmem:[#allocation2] sm:$0xff]
        %v305 = vld [vmem:[%s283] sm:$0xf]
        %v306 = vld [vmem:[%s231] sm:$0xf]
        %v307 = vld [vmem:[%s231 + $0x4] sm:$0xf]
        %v308 = vld [vmem:[%s231 + $0x8] sm:$0xf]
        %v309 = vld [vmem:[%s231 + $0xc] sm:$0xf]
        %v310 = vld [vmem:[%s231 + $0x10] sm:$0xf]
        %v311 = vld [vmem:[%s231 + $0x14] sm:$0xf]
        %v312 = vld [vmem:[%s231 + $0x18] sm:$0xf]
        %v313 = vld [vmem:[%s231 + $0x1c] sm:$0xf]
        %v314 = vld [vmem:[%s231 + $0x20] sm:$0xf]
        %v315 = vld [vmem:[%s231 + $0x24] sm:$0xf]
        %v316 = vld [vmem:[%s231 + $0x28] sm:$0xf]
        %v317 = vld [vmem:[%s231 + $0x2c] sm:$0xf]
        %v318 = vld [vmem:[%s231 + $0x30] sm:$0xf]
        %v319 = vld [vmem:[%s231 + $0x34] sm:$0xf]
        %v320 = vld [vmem:[%s231 + $0x38] sm:$0xf]
        %v321 = vld [vmem:[%s231 + $0x3c] sm:$0xf]
        %v338 = vunpack.c.l.b16 %v306
        %v339 = vunpack.c.l.b16 %v307
        %v340 = vunpack.c.l.b16 %v308
        %v341 = vunpack.c.l.b16 %v309
        %v342 = vunpack.c.l.b16 %v310
        %v343 = vunpack.c.l.b16 %v311
        %v344 = vunpack.c.l.b16 %v312
        %v345 = vunpack.c.l.b16 %v313
        %v346 = vunpack.c.l.b16 %v314
        %v347 = vunpack.c.l.b16 %v315
        %v348 = vunpack.c.l.b16 %v316
        %v349 = vunpack.c.l.b16 %v317
        %v350 = vunpack.c.l.b16 %v318
        %v351 = vunpack.c.l.b16 %v319
        %v352 = vunpack.c.l.b16 %v320
        %v353 = vunpack.c.l.b16 %v321
        %v354 = vpack.c.b16 %v339, %v338
        %v355 = vpack.c.b16 %v341, %v340
        %v356 = vpack.c.b16 %v343, %v342
        %v357 = vpack.c.b16 %v345, %v344
        %v358 = vpack.c.b16 %v347, %v346
        %v359 = vpack.c.b16 %v349, %v348
        %v360 = vpack.c.b16 %v351, %v350
        %v361 = vpack.c.b16 %v353, %v352
        %370 = vmatprep.subr.bf16.mxu0 0
        %371 = vmatpush1.bf16.msra.mxu0 %v361
        %372 = vmatprep.subr.bf16.mxu0 0
        %373 = vmatpush1.bf16.msra.mxu0 %v360
        %374 = vmatprep.subr.bf16.mxu0 0
        %375 = vmatpush1.bf16.msra.mxu0 %v359
        %376 = vmatprep.subr.bf16.mxu0 0
        %377 = vmatpush1.bf16.msra.mxu0 %v358
        %378 = vmatprep.subr.bf16.mxu0 0
        %379 = vmatpush1.bf16.msra.mxu0 %v357
        %380 = vmatprep.subr.bf16.mxu0 0
        %381 = vmatpush1.bf16.msra.mxu0 %v356
        %382 = vmatprep.subr.bf16.mxu0 0
        %383 = vmatpush1.bf16.msra.mxu0 %v355
        %384 = vmatprep.subr.bf16.mxu0 0
        %385 = vmatpush1.bf16.msra.mxu0 %v354
        %386 = vmatprep.subr.bf16.mxu0 0
        %387 = vmatpush2.bf16.msra.mxu0 0
        %388 = vmatprep.subr.bf16.mxu0 0
        %389 = vmatpush2.bf16.msra.mxu0 0
        %390 = vmatprep.subr.bf16.mxu0 0
        %391 = vmatpush2.bf16.msra.mxu0 0
        %392 = vmatprep.subr.bf16.mxu0 0
        %393 = vmatpush2.bf16.msra.mxu0 0
        %394 = vmatprep.subr.bf16.mxu0 0
        %395 = vmatpush2.bf16.msra.mxu0 0
        %396 = vmatprep.subr.bf16.mxu0 0
        %397 = vmatpush2.bf16.msra.mxu0 0
        %398 = vmatprep.subr.bf16.mxu0 0
        %399 = vmatpush2.bf16.msra.mxu0 0
        %400 = vmatprep.subr.bf16.mxu0 0
        %401 = vmatpush2.bf16.msra.mxu0 0
        %402 = vmatprep.mubr.bf16.mxu0 0
        %403 = vmatmul.mubr.bf16.gmra.mxu0 %v305
        %v404 = vpop.f32.mrf.mxu0
        %v405 = vadd.f32 0.0, %v404
        %v406 = vpop.f32.mrf.mxu0
        %v407 = vpop.f32.mrf.mxu0
        %v408 = vpop.f32.mrf.mxu0
        %409 = vdwg.mxu0
        %v410 = vadd.f32 %v304, %v405
        %411 = vst [vmem:[#allocation2] sm:$0xff] %v410
        %p412 = scmp.eq.s32.totalorder %s31, 1
        // Predicated region
        $region41: #{fmri_encoder_cross_forward.10} parent=31 // pred_check
          %p413 = pneg %p412
        $region42: #{fmri_encoder_cross_forward.10} parent=31 // pred_check_branch
          %415 = sbr.rel (%p413) target = $region44
        $region43: #{fmri_encoder_cross_forward.10} parent=31 // pred_region
          %v416 = vld [vmem:[#allocation2] sm:$0xff]
          %v417 = vld [vmem:[%s289] sm:$0x1]
          %v419 = vlaneseq
          %v420 = vshrl.u32 %v419, 7
          %v421 = vsub.s32 0, %v420
          %v422 = vrot.slane %v417, %v421
          %v424 = vadd.f32 %v416, %v422
          %v425 = vmax.f32 %v424, 0.0
          %v426 = vpack.c.bf16 %v425, %v425
          %427 = vst [vmem:[%s297] sm:$0xf] %v426
        $region44: #{fmri_encoder_cross_forward.10} parent=31 // pred_fallthru
          _
        %p428 = scmp.lt.s32.totalorder %s29, 1
        %s429 = scalar_select %p428, %s29, 1
        %p430 = scmp.lt.s32.totalorder %s30, 0
        %s431 = scalar_select %p430, %s30, 0
        %s432 = sadd.s32 %s431, %s429
        %s433 = smul.addr %s432, 4
        %s434 = scalar_lea.vmem %s4, %s433
        // Predicated region
        $region45: #{fmri_encoder_cross_forward.10} parent=31 // pred_check
          %p435 = pneg %p151
        $region46: #{fmri_encoder_cross_forward.10} parent=31 // pred_check_branch
          %437 = sbr.rel (%p435) target = $region48
        $region47: #{fmri_encoder_cross_forward.10} parent=31 // pred_region
          _
        $region48: #{fmri_encoder_cross_forward.10} parent=31 // pred_fallthru
          _
      $region32: #{fmri_encoder_cross_forward.10} parent=5 // pred_fallthru
        _
      %p438 = scmp.le.s32.totalorder 2, %s19
      // Predicated region
      $region49: #{fmri_encoder_cross_forward.10} parent=5 // pred_check
        %p439 = pneg %p438
      $region50: #{fmri_encoder_cross_forward.10} parent=5 // pred_check_branch
        %441 = sbr.rel (%p439) target = $region52
      $region51: #{fmri_encoder_cross_forward.10} parent=5 // pred_region
        %s442 = ssub.s32 %s19, 2
        // Predicated region
        $region53: #{fmri_encoder_cross_forward.10} parent=51 // pred_check
          %p443 = pneg %p157
        $region54: #{fmri_encoder_cross_forward.10} parent=51 // pred_check_branch
          %445 = sbr.rel (%p443) target = $region56
        $region55: #{fmri_encoder_cross_forward.10} parent=51 // pred_region
          %p446 = scmp.lt.s32.totalorder %s32, 1
          %s447 = scalar_select %p446, %s32, 1
          %p448 = scmp.lt.s32.totalorder %s33, 0
          %s449 = scalar_select %p448, %s33, 0
          %s450 = sadd.s32 %s449, %s447
          %s451 = smul.addr %s450, 4
          %s452 = scalar_lea.vmem %s4, %s451
        $region56: #{fmri_encoder_cross_forward.10} parent=51 // pred_fallthru
          _
      $region52: #{fmri_encoder_cross_forward.10} parent=5 // pred_fallthru
        _
    $region6: #{fmri_encoder_cross_forward.10} parent=1 // loop_footer
      %s23 = sadd.s32 1, %s19
    $region7: #{fmri_encoder_cross_forward.10} parent=1 // loop_footer_branch
      %18 = sbr.rel target = $region3
    $region8: #{fmri_encoder_cross_forward.10} parent=1 // loop_exit
      _
    %453 = vsyncpa [#allocation6], 1
    %s454 = scalar_lea.sflag [#allocation6], 1
    %455 = vsyncpa %s454, 1

// kernel: fmri_encoder_cross_forward.14
$region0: #{fmri_encoder_cross_forward.14}
  #allocation0 [shape = 'u32[]', space=smem, size = 0x4, offset = 0x4, fixed_abs, tag = 'smem constant byte address 0x4 - core index']
  #allocation1 [shape = 'u32[144,128]{1,0:T(1,128)}', space=vmem, size = 0x12000, scoped, tag = 'internal scratch']
  #allocation2 [shape = 'f32[8,128]{1,0:T(8,128)}', space=vmem, size = 0x1000, scoped, tag = 'scratch operand']
  #allocation3 [shape = 's32[1]{0}', space=sflag, size = 0x4, scoped, tag = 'scoped memory for fmri_encoder_cross_forward.14']
  #allocation4 [shape = 's32[1]{0:T(128)S(6)}', space=smem, size = 0x200, scoped, tag = 'prefetched SMEM operand 0']
  %s0 = inlined_call_operand.<no memory space> [shape: s32[1], index: 0, kind: input, shape index: {}]
  %s1 = inlined_call_operand.vmem [shape: bf16[1,8,256], index: 1, kind: input, shape index: {}]
  %s2 = inlined_call_operand.vmem [shape: bf16[2,256,128], index: 2, kind: input, shape index: {}]
  %s3 = inlined_call_operand.vmem [shape: f32[2,1,128], index: 3, kind: input, shape index: {}]
  %s4 = inlined_call_operand.vmem [shape: bf16[1,8,128], index: 4, kind: output, shape index: {}]
  %s5 = sld [smem:[#allocation0]]
  $region53: #{fmri_encoder_cross_forward.14} parent=0
    _
  %s7 = ssub.s32 1, %s5
  %s8 = scalar_select 0, %s7, %s5
  %9 = sst [smem:[#allocation4]] %s0
  loop: start=0, step=1, limit=4
  $region2: #{fmri_encoder_cross_forward.14} parent=0 // loop_pre_header
    _
  $region3: #{fmri_encoder_cross_forward.14} parent=0 // loop_header
    %s11 = sphi 0, %s15
    %p12 = scmp.ge.s32.totalorder %s11, 4
    %s18 = sphi 0, %s37
    %s19 = sphi 0, %s33
    %s20 = sphi 0, %s29
    %s21 = sphi 0, %s18
    %s22 = sphi 0, %s19
    %s23 = sphi 0, %s20
    %s24 = sphi 0, %s21
    %s25 = sphi 0, %s22
    %s26 = sphi 0, %s23
    %s44 = sphi 0, %s46
    %s47 = sphi 0, %s44
    %s48 = sphi 0, %s47
    %s64 = sphi 0, %s48
    %s74 = sphi 0, %s76
    %s77 = sphi 0, %s74
    %s78 = sphi 0, %s77
    %s94 = sphi 0, %s78
    %s102 = sphi 0, %s104
    %s105 = sphi 0, %s102
    %s106 = sphi 0, %s105
    %s122 = sphi 0, %s106
    %s130 = sphi 0, %s132
    %s133 = sphi 0, %s130
    %s134 = sphi 0, %s133
    %s150 = sphi 0, %s134
  $region4: #{fmri_encoder_cross_forward.14} parent=0 // loop_header_branch
    %14 = sbr.rel (%p12) target = $region8
  $region5: #{fmri_encoder_cross_forward.14} parent=0 // loop_body
    %s16 = ssub.s32 %s11, 1
    %s17 = ssub.s32 %s11, 2
    %s27 = sadd.s32 1, %s20
    %p28 = scmp.ge.s32.totalorder %s27, 2
    %s29 = scalar_select %p28, 0, %s27
    %s30 = sadd.s32 1, %s19
    %s31 = scalar_select %p28, %s30, %s19
    %p32 = scmp.ge.s32.totalorder %s31, 1
    %s33 = scalar_select %p32, 0, %s31
    %s34 = sadd.s32 1, %s18
    %s35 = scalar_select %p32, %s34, %s18
    %p36 = scmp.ge.s32.totalorder %s35, 1
    %s37 = scalar_select %p36, 0, %s35
    %s38 = ssub.s32 %s18, %s37
    %s39 = ssub.s32 %s19, %s33
    %s40 = sor.u32 %s38, %s39
    %s41 = ssub.s32 %s20, %s29
    %s42 = sor.u32 %s40, %s41
    %p43 = scmp.eq.s32.totalorder %s42, 0
    %s45 = sadd.s32 %s44, 1
    %s46 = scalar_select %p43, %s44, %s45
    %p49 = pneg %p43
    %p50 = scmp.eq.s32.totalorder %s11, 1
    %p51 = por %p49, %p50
    %p52 = scmp.ne.s32.totalorder %s44, %s47
    %p53 = scmp.eq.s32.totalorder %s11, 0
    %p54 = por %p52, %p53
    %p55 = scmp.ne.s32.totalorder %s44, %s47
    %p56 = scmp.eq.s32.totalorder %s16, 1
    %p57 = por %p55, %p56
    %p58 = scmp.ne.s32.totalorder %s47, %s48
    %p59 = scmp.eq.s32.totalorder %s16, 0
    %p60 = por %p58, %p59
    %p61 = scmp.ne.s32.totalorder %s47, %s48
    %p62 = scmp.eq.s32.totalorder %s17, 1
    %p63 = por %p61, %p62
    %p65 = scmp.ne.s32.totalorder %s48, %s64
    %p66 = scmp.eq.s32.totalorder %s17, 0
    %p67 = por %p65, %p66
    %s68 = sld [smem:[#allocation4 + %s18]]
    %s69 = sld [smem:[#allocation4 + %s37]]
    %s70 = ssub.s32 %s68, %s69
    %s71 = ssub.s32 %s20, %s29
    %s72 = sor.u32 %s70, %s71
    %p73 = scmp.eq.s32.totalorder %s72, 0
    %s75 = sadd.s32 %s74, 1
    %s76 = scalar_select %p73, %s74, %s75
    %p79 = pneg %p73
    %p80 = scmp.eq.s32.totalorder %s11, 1
    %p81 = por %p79, %p80
    %p82 = scmp.ne.s32.totalorder %s74, %s77
    %p83 = scmp.eq.s32.totalorder %s11, 0
    %p84 = por %p82, %p83
    %p85 = scmp.ne.s32.totalorder %s74, %s77
    %p86 = scmp.eq.s32.totalorder %s16, 1
    %p87 = por %p85, %p86
    %p88 = scmp.ne.s32.totalorder %s77, %s78
    %p89 = scmp.eq.s32.totalorder %s16, 0
    %p90 = por %p88, %p89
    %p91 = scmp.ne.s32.totalorder %s77, %s78
    %p92 = scmp.eq.s32.totalorder %s17, 1
    %p93 = por %p91, %p92
    %p95 = scmp.ne.s32.totalorder %s78, %s94
    %p96 = scmp.eq.s32.totalorder %s17, 0
    %p97 = por %p95, %p96
    %s98 = sld [smem:[#allocation4 + %s18]]
    %s99 = sld [smem:[#allocation4 + %s37]]
    %s100 = ssub.s32 %s98, %s99
    %p101 = scmp.eq.s32.totalorder %s100, 0
    %s103 = sadd.s32 %s102, 1
    %s104 = scalar_select %p101, %s102, %s103
    %p107 = pneg %p101
    %p108 = scmp.eq.s32.totalorder %s11, 1
    %p109 = por %p107, %p108
    %p110 = scmp.ne.s32.totalorder %s102, %s105
    %p111 = scmp.eq.s32.totalorder %s11, 0
    %p112 = por %p110, %p111
    %p113 = scmp.ne.s32.totalorder %s102, %s105
    %p114 = scmp.eq.s32.totalorder %s16, 1
    %p115 = por %p113, %p114
    %p116 = scmp.ne.s32.totalorder %s105, %s106
    %p117 = scmp.eq.s32.totalorder %s16, 0
    %p118 = por %p116, %p117
    %p119 = scmp.ne.s32.totalorder %s105, %s106
    %p120 = scmp.eq.s32.totalorder %s17, 1
    %p121 = por %p119, %p120
    %p123 = scmp.ne.s32.totalorder %s106, %s122
    %p124 = scmp.eq.s32.totalorder %s17, 0
    %p125 = por %p123, %p124
    %s126 = ssub.s32 %s18, %s37
    %s127 = ssub.s32 %s19, %s33
    %s128 = sor.u32 %s126, %s127
    %p129 = scmp.eq.s32.totalorder %s128, 0
    %s131 = sadd.s32 %s130, 1
    %s132 = scalar_select %p129, %s130, %s131
    %p135 = pneg %p129
    %p136 = scmp.eq.s32.totalorder %s11, 1
    %p137 = por %p135, %p136
    %p138 = scmp.ne.s32.totalorder %s130, %s133
    %p139 = scmp.eq.s32.totalorder %s11, 0
    %p140 = por %p138, %p139
    %p141 = scmp.ne.s32.totalorder %s130, %s133
    %p142 = scmp.eq.s32.totalorder %s16, 1
    %p143 = por %p141, %p142
    %p144 = scmp.ne.s32.totalorder %s133, %s134
    %p145 = scmp.eq.s32.totalorder %s16, 0
    %p146 = por %p144, %p145
    %p147 = scmp.ne.s32.totalorder %s133, %s134
    %p148 = scmp.eq.s32.totalorder %s17, 1
    %p149 = por %p147, %p148
    %p151 = scmp.ne.s32.totalorder %s134, %s150
    %p152 = scmp.eq.s32.totalorder %s17, 0
    %p153 = por %p151, %p152
    %p154 = scmp.le.s32.totalorder 1, %s11
    %p155 = scmp.lt.s32.totalorder %s11, 3
    %p156 = pnand %p154, %p155
    %p157 = pneg %p156
    // Predicated region
    $region9: #{fmri_encoder_cross_forward.14} parent=5 // pred_check
      _
    $region10: #{fmri_encoder_cross_forward.14} parent=5 // pred_check_branch
      %159 = sbr.rel (%p156) target = $region12
    $region11: #{fmri_encoder_cross_forward.14} parent=5 // pred_region
      %s160 = ssub.s32 %s11, 1
      // Predicated region
      $region13: #{fmri_encoder_cross_forward.14} parent=11 // pred_check
        %p161 = pneg %p118
      $region14: #{fmri_encoder_cross_forward.14} parent=11 // pred_check_branch
        %163 = sbr.rel (%p161) target = $region16
      $region15: #{fmri_encoder_cross_forward.14} parent=11 // pred_region
        %s164 = sld [smem:[#allocation4 + %s21]]
        %p165 = scmp.lt.s32.totalorder %s164, 1
        %s166 = scalar_select %p165, %s164, 1
        %s167 = scalar_lea.vmem %s3, %s166
        %s168 = sld [smem:[#allocation4 + %s21]]
      $region16: #{fmri_encoder_cross_forward.14} parent=11 // pred_fallthru
        _
    $region12: #{fmri_encoder_cross_forward.14} parent=5 // pred_fallthru
      _
    %p169 = scmp.lt.s32.totalorder %s11, 2
    // Predicated region
    $region17: #{fmri_encoder_cross_forward.14} parent=5 // pred_check
      %p170 = pneg %p169
    $region18: #{fmri_encoder_cross_forward.14} parent=5 // pred_check_branch
      %172 = sbr.rel (%p170) target = $region20
    $region19: #{fmri_encoder_cross_forward.14} parent=5 // pred_region
      // Predicated region
      $region21: #{fmri_encoder_cross_forward.14} parent=19 // pred_check
        %p173 = pneg %p54
      $region22: #{fmri_encoder_cross_forward.14} parent=19 // pred_check_branch
        %175 = sbr.rel (%p173) target = $region24
      $region23: #{fmri_encoder_cross_forward.14} parent=19 // pred_region
        %p176 = scmp.lt.s32.totalorder %s18, 0
        %s177 = scalar_select %p176, %s18, 0
        %p178 = scmp.lt.s32.totalorder %s19, 0
        %s179 = scalar_select %p178, %s19, 0
        %p180 = scmp.lt.s32.totalorder %s20, 1
        %s181 = scalar_select %p180, %s20, 1
        %s182 = smul.addr %s179, 2
        %s183 = sadd.s32 %s181, %s182
        %s184 = smul.addr %s177, 2
        %s185 = sadd.s32 %s183, %s184
        %s186 = smul.addr %s185, 4
        %s187 = scalar_lea.vmem %s1, %s186
      $region24: #{fmri_encoder_cross_forward.14} parent=19 // pred_fallthru
        _
      // Predicated region
      $region25: #{fmri_encoder_cross_forward.14} parent=19 // pred_check
        %p188 = pneg %p84
      $region26: #{fmri_encoder_cross_forward.14} parent=19 // pred_check_branch
        %190 = sbr.rel (%p188) target = $region28
      $region27: #{fmri_encoder_cross_forward.14} parent=19 // pred_region
        %s191 = sld [smem:[#allocation4 + %s18]]
        %s192 = smul.u32 16, %s20
        %p193 = scmp.lt.s32.totalorder %s191, 1
        %s194 = scalar_select %p193, %s191, 1
        %p195 = scmp.lt.s32.totalorder %s192, 31
        %s196 = scalar_select %p195, %s192, 31
        %s197 = smul.addr %s194, 32
        %s198 = sadd.s32 %s196, %s197
        %s199 = smul.addr %s198, 4
        %s200 = scalar_lea.vmem %s2, %s199
        %s201 = sld [smem:[#allocation4 + %s18]]
        %s202 = smul.u32 16, %s20
      $region28: #{fmri_encoder_cross_forward.14} parent=19 // pred_fallthru
        _
    $region20: #{fmri_encoder_cross_forward.14} parent=5 // pred_fallthru
      _
    %p203 = scmp.le.s32.totalorder 1, %s11
    %p204 = scmp.lt.s32.totalorder %s11, 3
    %p205 = pnand %p203, %p204
    %p206 = pneg %p205
    // Predicated region
    $region29: #{fmri_encoder_cross_forward.14} parent=5 // pred_check
      _
    $region30: #{fmri_encoder_cross_forward.14} parent=5 // pred_check_branch
      %208 = sbr.rel (%p205) target = $region32
    $region31: #{fmri_encoder_cross_forward.14} parent=5 // pred_region
      %s209 = ssub.s32 %s11, 1
      %p210 = scmp.lt.s32.totalorder %s21, 0
      %s211 = scalar_select %p210, %s21, 0
      %p212 = scmp.lt.s32.totalorder %s22, 0
      %s213 = scalar_select %p212, %s22, 0
      %p214 = scmp.lt.s32.totalorder %s23, 1
      %s215 = scalar_select %p214, %s23, 1
      %s216 = smul.addr %s213, 2
      %s217 = sadd.s32 %s215, %s216
      %s218 = smul.addr %s211, 2
      %s219 = sadd.s32 %s217, %s218
      %s220 = smul.addr %s219, 4
      %s221 = scalar_lea.vmem %s1, %s220
      %p222 = pneg %p60
      %p223 = pneg %p57
      %s224 = sld [smem:[#allocation4 + %s21]]
      %s225 = smul.u32 16, %s23
      %p226 = scmp.lt.s32.totalorder %s224, 1
      %s227 = scalar_select %p226, %s224, 1
      %p228 = scmp.lt.s32.totalorder %s225, 31
      %s229 = scalar_select %p228, %s225, 31
      %s230 = smul.addr %s227, 32
      %s231 = sadd.s32 %s229, %s230
      %s232 = smul.addr %s231, 4
      %s233 = scalar_lea.vmem %s2, %s232
      %p234 = pneg %p90
      %p235 = pneg %p87
      %s236 = sld [smem:[#allocation4 + %s21]]
      %p237 = scmp.lt.s32.totalorder %s236, 1
      %s238 = scalar_select %p237, %s236, 1
      %s239 = scalar_lea.vmem %s3, %s238
      %p240 = pneg %p118
      %p241 = pneg %p115
      %p242 = pneg %p146
      %p243 = pneg %p143
      %p244 = scmp.lt.s32.totalorder %s21, 0
      %s245 = scalar_select %p244, %s21, 0
      %p246 = scmp.lt.s32.totalorder %s22, 0
      %s247 = scalar_select %p246, %s22, 0
      %s248 = sadd.s32 %s247, %s245
      %s249 = smul.addr %s248, 4
      %s250 = scalar_lea.vmem %s4, %s249
      %p251 = scmp.lt.s32.totalorder %s21, 0
      %s252 = scalar_select %p251, %s21, 0
      %p253 = scmp.lt.s32.totalorder %s22, 0
      %s254 = scalar_select %p253, %s22, 0
      %p255 = scmp.lt.s32.totalorder %s23, 1
      %s256 = scalar_select %p255, %s23, 1
      %s257 = smul.addr %s254, 2
      %s258 = sadd.s32 %s256, %s257
      %s259 = smul.addr %s252, 2
      %s260 = sadd.s32 %s258, %s259
      %s261 = smul.addr %s260, 4
      %s262 = scalar_lea.vmem %s1, %s261
      %s263 = sld [smem:[#allocation4 + %s21]]
      %s264 = smul.u32 16, %s23
      %p265 = scmp.lt.s32.totalorder %s263, 1
      %s266 = scalar_select %p265, %s263, 1
      %p267 = scmp.lt.s32.totalorder %s264, 31
      %s268 = scalar_select %p267, %s264, 31
      %s269 = smul.addr %s266, 32
      %s270 = sadd.s32 %s268, %s269
      %s271 = smul.addr %s270, 4
      %s272 = scalar_lea.vmem %s2, %s271
      %s273 = sld [smem:[#allocation4 + %s21]]
      %s274 = smul.u32 16, %s23
      %s275 = sld [smem:[#allocation4 + %s21]]
      %p276 = scmp.lt.s32.totalorder %s275, 1
      %s277 = scalar_select %p276, %s275, 1
      %s278 = scalar_lea.vmem %s3, %s277
      %s279 = sld [smem:[#allocation4 + %s21]]
      %p280 = scmp.lt.s32.totalorder %s21, 0
      %s281 = scalar_select %p280, %s21, 0
      %p282 = scmp.lt.s32.totalorder %s22, 0
      %s283 = scalar_select %p282, %s22, 0
      %s284 = sadd.s32 %s283, %s281
      %s285 = smul.addr %s284, 4
      %s286 = scalar_lea.vmem %s4, %s285
      %p288 = scmp.eq.s32.totalorder %s23, 0
      // Predicated region
      $region33: #{fmri_encoder_cross_forward.14} parent=31 // pred_check
        %p289 = pneg %p288
      $region34: #{fmri_encoder_cross_forward.14} parent=31 // pred_check_branch
        %291 = sbr.rel (%p289) target = $region36
      $region35: #{fmri_encoder_cross_forward.14} parent=31 // pred_region
        %292 = vst [vmem:[#allocation2] sm:$0xff] 0.0
      $region36: #{fmri_encoder_cross_forward.14} parent=31 // pred_fallthru
        _
      %v293 = vld [vmem:[#allocation2] sm:$0xff]
      %v294 = vld [vmem:[%s262] sm:$0xf]
      %v295 = vld [vmem:[%s272] sm:$0xf]
      %v296 = vld [vmem:[%s272 + $0x4] sm:$0xf]
      %v297 = vld [vmem:[%s272 + $0x8] sm:$0xf]
      %v298 = vld [vmem:[%s272 + $0xc] sm:$0xf]
      %v299 = vld [vmem:[%s272 + $0x10] sm:$0xf]
      %v300 = vld [vmem:[%s272 + $0x14] sm:$0xf]
      %v301 = vld [vmem:[%s272 + $0x18] sm:$0xf]
      %v302 = vld [vmem:[%s272 + $0x1c] sm:$0xf]
      %v303 = vld [vmem:[%s272 + $0x20] sm:$0xf]
      %v304 = vld [vmem:[%s272 + $0x24] sm:$0xf]
      %v305 = vld [vmem:[%s272 + $0x28] sm:$0xf]
      %v306 = vld [vmem:[%s272 + $0x2c] sm:$0xf]
      %v307 = vld [vmem:[%s272 + $0x30] sm:$0xf]
      %v308 = vld [vmem:[%s272 + $0x34] sm:$0xf]
      %v309 = vld [vmem:[%s272 + $0x38] sm:$0xf]
      %v310 = vld [vmem:[%s272 + $0x3c] sm:$0xf]
      %v327 = vunpack.c.l.b16 %v295
      %v328 = vunpack.c.l.b16 %v296
      %v329 = vunpack.c.l.b16 %v297
      %v330 = vunpack.c.l.b16 %v298
      %v331 = vunpack.c.l.b16 %v299
      %v332 = vunpack.c.l.b16 %v300
      %v333 = vunpack.c.l.b16 %v301
      %v334 = vunpack.c.l.b16 %v302
      %v335 = vunpack.c.l.b16 %v303
      %v336 = vunpack.c.l.b16 %v304
      %v337 = vunpack.c.l.b16 %v305
      %v338 = vunpack.c.l.b16 %v306
      %v339 = vunpack.c.l.b16 %v307
      %v340 = vunpack.c.l.b16 %v308
      %v341 = vunpack.c.l.b16 %v309
      %v342 = vunpack.c.l.b16 %v310
      %v343 = vpack.c.b16 %v328, %v327
      %v344 = vpack.c.b16 %v330, %v329
      %v345 = vpack.c.b16 %v332, %v331
      %v346 = vpack.c.b16 %v334, %v333
      %v347 = vpack.c.b16 %v336, %v335
      %v348 = vpack.c.b16 %v338, %v337
      %v349 = vpack.c.b16 %v340, %v339
      %v350 = vpack.c.b16 %v342, %v341
      %359 = vmatprep.subr.bf16.mxu0 0
      %360 = vmatpush1.bf16.msra.mxu0 %v350
      %361 = vmatprep.subr.bf16.mxu0 0
      %362 = vmatpush1.bf16.msra.mxu0 %v349
      %363 = vmatprep.subr.bf16.mxu0 0
      %364 = vmatpush1.bf16.msra.mxu0 %v348
      %365 = vmatprep.subr.bf16.mxu0 0
      %366 = vmatpush1.bf16.msra.mxu0 %v347
      %367 = vmatprep.subr.bf16.mxu0 0
      %368 = vmatpush1.bf16.msra.mxu0 %v346
      %369 = vmatprep.subr.bf16.mxu0 0
      %370 = vmatpush1.bf16.msra.mxu0 %v345
      %371 = vmatprep.subr.bf16.mxu0 0
      %372 = vmatpush1.bf16.msra.mxu0 %v344
      %373 = vmatprep.subr.bf16.mxu0 0
      %374 = vmatpush1.bf16.msra.mxu0 %v343
      %375 = vmatprep.subr.bf16.mxu0 0
      %376 = vmatpush2.bf16.msra.mxu0 0
      %377 = vmatprep.subr.bf16.mxu0 0
      %378 = vmatpush2.bf16.msra.mxu0 0
      %379 = vmatprep.subr.bf16.mxu0 0
      %380 = vmatpush2.bf16.msra.mxu0 0
      %381 = vmatprep.subr.bf16.mxu0 0
      %382 = vmatpush2.bf16.msra.mxu0 0
      %383 = vmatprep.subr.bf16.mxu0 0
      %384 = vmatpush2.bf16.msra.mxu0 0
      %385 = vmatprep.subr.bf16.mxu0 0
      %386 = vmatpush2.bf16.msra.mxu0 0
      %387 = vmatprep.subr.bf16.mxu0 0
      %388 = vmatpush2.bf16.msra.mxu0 0
      %389 = vmatprep.subr.bf16.mxu0 0
      %390 = vmatpush2.bf16.msra.mxu0 0
      %391 = vmatprep.mubr.bf16.mxu0 0
      %392 = vmatmul.mubr.bf16.gmra.mxu0 %v294
      %v393 = vpop.f32.mrf.mxu0
      %v394 = vadd.f32 0.0, %v393
      %v395 = vpop.f32.mrf.mxu0
      %v396 = vpop.f32.mrf.mxu0
      %v397 = vpop.f32.mrf.mxu0
      %398 = vdwg.mxu0
      %v399 = vadd.f32 %v293, %v394
      %400 = vst [vmem:[#allocation2] sm:$0xff] %v399
      %p401 = scmp.eq.s32.totalorder %s23, 1
      // Predicated region
      $region37: #{fmri_encoder_cross_forward.14} parent=31 // pred_check
        %p402 = pneg %p401
      $region38: #{fmri_encoder_cross_forward.14} parent=31 // pred_check_branch
        %404 = sbr.rel (%p402) target = $region40
      $region39: #{fmri_encoder_cross_forward.14} parent=31 // pred_region
        %v405 = vld [vmem:[#allocation2] sm:$0xff]
        %v406 = vld [vmem:[%s278] sm:$0x1]
        %v408 = vlaneseq
        %v409 = vshrl.u32 %v408, 7
        %v410 = vsub.s32 0, %v409
        %v411 = vrot.slane %v406, %v410
        %v413 = vadd.f32 %v405, %v411
        %v414 = vmax.f32 %v413, 0.0
        %v415 = vpack.c.bf16 %v414, %v414
        %416 = vst [vmem:[%s286] sm:$0xf] %v415
      $region40: #{fmri_encoder_cross_forward.14} parent=31 // pred_fallthru
        _
      %p417 = scmp.lt.s32.totalorder %s21, 0
      %s418 = scalar_select %p417, %s21, 0
      %p419 = scmp.lt.s32.totalorder %s22, 0
      %s420 = scalar_select %p419, %s22, 0
      %s421 = sadd.s32 %s420, %s418
      %s422 = smul.addr %s421, 4
      %s423 = scalar_lea.vmem %s4, %s422
      // Predicated region
      $region41: #{fmri_encoder_cross_forward.14} parent=31 // pred_check
        %p424 = pneg %p143
      $region42: #{fmri_encoder_cross_forward.14} parent=31 // pred_check_branch
        %426 = sbr.rel (%p424) target = $region44
      $region43: #{fmri_encoder_cross_forward.14} parent=31 // pred_region
        _
      $region44: #{fmri_encoder_cross_forward.14} parent=31 // pred_fallthru
        _
      // Predicated region
      $region45: #{fmri_encoder_cross_forward.14} parent=31 // pred_check
        %p427 = pneg %p143
      $region46: #{fmri_encoder_cross_forward.14} parent=31 // pred_check_branch
        %429 = sbr.rel (%p427) target = $region48
      $region47: #{fmri_encoder_cross_forward.14} parent=31 // pred_region
        %p430 = scmp.lt.s32.totalorder %s21, 0
        %s431 = scalar_select %p430, %s21, 0
        %p432 = scmp.lt.s32.totalorder %s22, 0
        %s433 = scalar_select %p432, %s22, 0
        %s434 = sadd.s32 %s433, %s431
        %s435 = smul.addr %s434, 4
        %s436 = scalar_lea.vmem %s4, %s435
      $region48: #{fmri_encoder_cross_forward.14} parent=31 // pred_fallthru
        _
    $region32: #{fmri_encoder_cross_forward.14} parent=5 // pred_fallthru
      _
    %p437 = scmp.le.s32.totalorder 2, %s11
    // Predicated region
    $region49: #{fmri_encoder_cross_forward.14} parent=5 // pred_check
      %p438 = pneg %p437
    $region50: #{fmri_encoder_cross_forward.14} parent=5 // pred_check_branch
      %440 = sbr.rel (%p438) target = $region52
    $region51: #{fmri_encoder_cross_forward.14} parent=5 // pred_region
      %s441 = ssub.s32 %s11, 2
    $region52: #{fmri_encoder_cross_forward.14} parent=5 // pred_fallthru
      _
  $region6: #{fmri_encoder_cross_forward.14} parent=0 // loop_footer
    %s15 = sadd.s32 1, %s11
  $region7: #{fmri_encoder_cross_forward.14} parent=0 // loop_footer_branch
    %10 = sbr.rel target = $region3
  $region8: #{fmri_encoder_cross_forward.14} parent=0 // loop_exit
    _

// kernel: fmri_encoder_cross_forward.11
$region0: #{fmri_encoder_cross_forward.11}
  #allocation0 [shape = 'u32[]', space=smem, size = 0x4, offset = 0x4, fixed_abs, tag = 'smem constant byte address 0x4 - core index']
  #allocation1 [shape = 'u32[144,128]{1,0:T(1,128)}', space=vmem, size = 0x12000, scoped, tag = 'internal scratch']
  #allocation2 [shape = 'f32[8,256]{1,0:T(8,128)}', space=vmem, size = 0x2000, scoped, tag = 'scratch operand']
  #allocation3 [shape = 's32[1]{0}', space=sflag, size = 0x4, scoped, tag = 'scoped memory for fmri_encoder_cross_forward.11']
  #allocation4 [shape = 'u8[512]{0}', space=smem, size = 0x200, scoped, tag = 'prefetched SMEM operand 0']
  %s0 = inlined_call_operand.vmem [shape: s32[2], index: 0, kind: input, shape index: {}]
  %s1 = inlined_call_operand.vmem [shape: bf16[2,8,256], index: 1, kind: input, shape index: {}]
  %s2 = inlined_call_operand.vmem [shape: bf16[2,8,128], index: 2, kind: input, shape index: {}]
  %s3 = inlined_call_operand.vmem [shape: bf16[2,128,256], index: 3, kind: input, shape index: {}]
  %s4 = inlined_call_operand.vmem [shape: f32[2,1,256], index: 4, kind: input, shape index: {}]
  %s5 = inlined_call_operand.hbm [shape: bf16[2,256,256], index: 5, kind: input, shape index: {}]
  %s6 = inlined_call_operand.hbm [shape: f32[2,1,256], index: 6, kind: input, shape index: {}]
  %s7 = inlined_call_operand.hbm [shape: f32[2,1,256], index: 7, kind: input, shape index: {}]
  %s8 = inlined_call_operand.hbm [shape: f32[2,1,256], index: 8, kind: input, shape index: {}]
  %s9 = inlined_call_operand.vmem [shape: bf16[2,8,256], index: 9, kind: output, shape index: {}]
  %s10 = sld [smem:[#allocation0]]
  $region130: #{fmri_encoder_cross_forward.11} parent=0
    _
  %s12 = ssub.s32 1, %s10
  %s13 = scalar_select 0, %s12, %s10
  %s14 = sshll.u32 %s0, 4
  %s15 = int_to_ptr.vmem [resolvable:$true] %s14
  %17 = dma.vmem_to_smem %s15, 16, [#allocation4], [#allocation3]
  %18 = dma.done [#allocation3], 16
  %19 = sfence
  $region1: #{fmri_encoder_cross_forward.11} parent=0
    #allocation5 [shape = 'u8[65536]{0}', space=vmem, size = 0x10000, scoped, tag = 'input window, operand 3']
    #allocation6 [shape = 'u8[131072]{0}', space=vmem, size = 0x20000, scoped, tag = 'input window, operand 5']
    #allocation7 [shape = 's32[2]{0}', space=sflag, size = 0x8, scoped, tag = 'scoped memory for fmri_encoder_cross_forward.11']
    #allocation8 [shape = 'u8[2048]{0}', space=vmem, size = 0x800, scoped, tag = 'input window, operand 6']
    #allocation9 [shape = 's32[2]{0}', space=sflag, size = 0x8, scoped, tag = 'scoped memory for fmri_encoder_cross_forward.11']
    #allocation10 [shape = 'u8[2048]{0}', space=vmem, size = 0x800, scoped, tag = 'input window, operand 7']
    #allocation11 [shape = 'u8[2048]{0}', space=vmem, size = 0x800, scoped, tag = 'input window, operand 8']
    #allocation12 [shape = 's32[2]{0}', space=sflag, size = 0x8, scoped, tag = 'scoped memory for fmri_encoder_cross_forward.11']
    %20 = vsyncpa [#allocation7], 0
    %s21 = scalar_lea.sflag [#allocation7], 1
    %22 = vsyncpa %s21, 0
    %23 = vsyncpa [#allocation9], 0
    %s24 = scalar_lea.sflag [#allocation9], 1
    %25 = vsyncpa %s24, 0
    %26 = vsyncpa [#allocation12], 0
    %s27 = scalar_lea.sflag [#allocation12], 1
    %28 = vsyncpa %s27, 0
    loop: start=0, step=1, limit=6
    $region2: #{fmri_encoder_cross_forward.11} parent=1 // loop_pre_header
      _
    $region3: #{fmri_encoder_cross_forward.11} parent=1 // loop_header
      %s30 = sphi 0, %s34
      %p31 = scmp.ge.s32.totalorder %s30, 6
      %s37 = sphi 0, %s56
      %s38 = sphi 0, %s52
      %s39 = sphi 0, %s48
      %s40 = sphi 0, %s37
      %s41 = sphi 0, %s38
      %s42 = sphi 0, %s39
      %s43 = sphi 0, %s40
      %s44 = sphi 0, %s41
      %s45 = sphi 0, %s42
      %s63 = sphi 0, %s65
      %s66 = sphi 0, %s63
      %s67 = sphi 0, %s66
      %s83 = sphi 0, %s67
      %s91 = sphi 0, %s93
      %s94 = sphi 0, %s91
      %s95 = sphi 0, %s94
      %s111 = sphi 0, %s95
      %s121 = sphi 0, %s123
      %s124 = sphi 0, %s121
      %s125 = sphi 0, %s124
      %s141 = sphi 0, %s125
      %s151 = sphi 0, %s153
      %s154 = sphi 0, %s151
      %s155 = sphi 0, %s154
      %s171 = sphi 0, %s155
      %s181 = sphi 0, %s183
      %s184 = sphi 0, %s181
      %s185 = sphi 0, %s184
      %s201 = sphi 0, %s185
      %s209 = sphi 0, %s211
      %s212 = sphi 0, %s209
      %s213 = sphi 0, %s212
      %s229 = sphi 0, %s213
      %s237 = sphi 0, %s239
      %s240 = sphi 0, %s237
      %s241 = sphi 0, %s240
      %s257 = sphi 0, %s241
      %s265 = sphi 0, %s267
      %s268 = sphi 0, %s265
      %s269 = sphi 0, %s268
      %s285 = sphi 0, %s269
      %s293 = sphi 0, %s295
      %s296 = sphi 0, %s293
      %s297 = sphi 0, %s296
      %s313 = sphi 0, %s297
    $region4: #{fmri_encoder_cross_forward.11} parent=1 // loop_header_branch
      %33 = sbr.rel (%p31) target = $region8
    $region5: #{fmri_encoder_cross_forward.11} parent=1 // loop_body
      %s35 = ssub.s32 %s30, 1
      %s36 = ssub.s32 %s30, 2
      %s46 = sadd.s32 1, %s39
      %p47 = scmp.ge.s32.totalorder %s46, 2
      %s48 = scalar_select %p47, 0, %s46
      %s49 = sadd.s32 1, %s38
      %s50 = scalar_select %p47, %s49, %s38
      %p51 = scmp.ge.s32.totalorder %s50, 1
      %s52 = scalar_select %p51, 0, %s50
      %s53 = sadd.s32 1, %s37
      %s54 = scalar_select %p51, %s53, %s37
      %p55 = scmp.ge.s32.totalorder %s54, 2
      %s56 = scalar_select %p55, 0, %s54
      %s57 = ssub.s32 %s37, %s56
      %s58 = ssub.s32 %s38, %s52
      %s59 = sor.u32 %s57, %s58
      %s60 = ssub.s32 %s39, %s48
      %s61 = sor.u32 %s59, %s60
      %p62 = scmp.eq.s32.totalorder %s61, 0
      %s64 = sadd.s32 %s63, 1
      %s65 = scalar_select %p62, %s63, %s64
      %p68 = pneg %p62
      %p69 = scmp.eq.s32.totalorder %s30, 3
      %p70 = por %p68, %p69
      %p71 = scmp.ne.s32.totalorder %s63, %s66
      %p72 = scmp.eq.s32.totalorder %s30, 0
      %p73 = por %p71, %p72
      %p74 = scmp.ne.s32.totalorder %s63, %s66
      %p75 = scmp.eq.s32.totalorder %s35, 3
      %p76 = por %p74, %p75
      %p77 = scmp.ne.s32.totalorder %s66, %s67
      %p78 = scmp.eq.s32.totalorder %s35, 0
      %p79 = por %p77, %p78
      %p80 = scmp.ne.s32.totalorder %s66, %s67
      %p81 = scmp.eq.s32.totalorder %s36, 3
      %p82 = por %p80, %p81
      %p84 = scmp.ne.s32.totalorder %s67, %s83
      %p85 = scmp.eq.s32.totalorder %s36, 0
      %p86 = por %p84, %p85
      %s87 = ssub.s32 %s37, %s56
      %s88 = ssub.s32 %s38, %s52
      %s89 = sor.u32 %s87, %s88
      %p90 = scmp.eq.s32.totalorder %s89, 0
      %s92 = sadd.s32 %s91, 1
      %s93 = scalar_select %p90, %s91, %s92
      %p96 = pneg %p90
      %p97 = scmp.eq.s32.totalorder %s30, 3
      %p98 = por %p96, %p97
      %p99 = scmp.ne.s32.totalorder %s91, %s94
      %p100 = scmp.eq.s32.totalorder %s30, 0
      %p101 = por %p99, %p100
      %p102 = scmp.ne.s32.totalorder %s91, %s94
      %p103 = scmp.eq.s32.totalorder %s35, 3
      %p104 = por %p102, %p103
      %p105 = scmp.ne.s32.totalorder %s94, %s95
      %p106 = scmp.eq.s32.totalorder %s35, 0
      %p107 = por %p105, %p106
      %p108 = scmp.ne.s32.totalorder %s94, %s95
      %p109 = scmp.eq.s32.totalorder %s36, 3
      %p110 = por %p108, %p109
      %p112 = scmp.ne.s32.totalorder %s95, %s111
      %p113 = scmp.eq.s32.totalorder %s36, 0
      %p114 = por %p112, %p113
      %s115 = sld [smem:[#allocation4 + %s37]]
      %s116 = sld [smem:[#allocation4 + %s56]]
      %s117 = ssub.s32 %s115, %s116
      %s118 = ssub.s32 %s39, %s48
      %s119 = sor.u32 %s117, %s118
      %p120 = scmp.eq.s32.totalorder %s119, 0
      %s122 = sadd.s32 %s121, 1
      %s123 = scalar_select %p120, %s121, %s122
      %p126 = pneg %p120
      %p127 = scmp.eq.s32.totalorder %s30, 3
      %p128 = por %p126, %p127
      %p129 = scmp.ne.s32.totalorder %s121, %s124
      %p130 = scmp.eq.s32.totalorder %s30, 0
      %p131 = por %p129, %p130
      %p132 = scmp.ne.s32.totalorder %s121, %s124
      %p133 = scmp.eq.s32.totalorder %s35, 3
      %p134 = por %p132, %p133
      %p135 = scmp.ne.s32.totalorder %s124, %s125
      %p136 = scmp.eq.s32.totalorder %s35, 0
      %p137 = por %p135, %p136
      %p138 = scmp.ne.s32.totalorder %s124, %s125
      %p139 = scmp.eq.s32.totalorder %s36, 3
      %p140 = por %p138, %p139
      %p142 = scmp.ne.s32.totalorder %s125, %s141
      %p143 = scmp.eq.s32.totalorder %s36, 0
      %p144 = por %p142, %p143
      %s145 = sld [smem:[#allocation4 + %s37]]
      %s146 = sld [smem:[#allocation4 + %s56]]
      %s147 = ssub.s32 %s145, %s146
      %s148 = ssub.s32 %s39, %s48
      %s149 = sor.u32 %s147, %s148
      %p150 = scmp.eq.s32.totalorder %s149, 0
      %s152 = sadd.s32 %s151, 1
      %s153 = scalar_select %p150, %s151, %s152
      %p156 = pneg %p150
      %p157 = scmp.eq.s32.totalorder %s30, 3
      %p158 = por %p156, %p157
      %p159 = scmp.ne.s32.totalorder %s151, %s154
      %p160 = scmp.eq.s32.totalorder %s30, 0
      %p161 = por %p159, %p160
      %p162 = scmp.ne.s32.totalorder %s151, %s154
      %p163 = scmp.eq.s32.totalorder %s35, 3
      %p164 = por %p162, %p163
      %p165 = scmp.ne.s32.totalorder %s154, %s155
      %p166 = scmp.eq.s32.totalorder %s35, 0
      %p167 = por %p165, %p166
      %p168 = scmp.ne.s32.totalorder %s154, %s155
      %p169 = scmp.eq.s32.totalorder %s36, 3
      %p170 = por %p168, %p169
      %p172 = scmp.ne.s32.totalorder %s155, %s171
      %p173 = scmp.eq.s32.totalorder %s36, 0
      %p174 = por %p172, %p173
      %s175 = sld [smem:[#allocation4 + %s37]]
      %s176 = sld [smem:[#allocation4 + %s56]]
      %s177 = ssub.s32 %s175, %s176
      %s178 = ssub.s32 %s39, %s48
      %s179 = sor.u32 %s177, %s178
      %p180 = scmp.eq.s32.totalorder %s179, 0
      %s182 = sadd.s32 %s181, 1
      %s183 = scalar_select %p180, %s181, %s182
      %p186 = pneg %p180
      %p187 = scmp.eq.s32.totalorder %s30, 3
      %p188 = por %p186, %p187
      %p189 = scmp.ne.s32.totalorder %s181, %s184
      %p190 = scmp.eq.s32.totalorder %s30, 0
      %p191 = por %p189, %p190
      %p192 = scmp.ne.s32.totalorder %s181, %s184
      %p193 = scmp.eq.s32.totalorder %s35, 3
      %p194 = por %p192, %p193
      %p195 = scmp.ne.s32.totalorder %s184, %s185
      %p196 = scmp.eq.s32.totalorder %s35, 0
      %p197 = por %p195, %p196
      %p198 = scmp.ne.s32.totalorder %s184, %s185
      %p199 = scmp.eq.s32.totalorder %s36, 3
      %p200 = por %p198, %p199
      %p202 = scmp.ne.s32.totalorder %s185, %s201
      %p203 = scmp.eq.s32.totalorder %s36, 0
      %p204 = por %p202, %p203
      %s205 = sld [smem:[#allocation4 + %s37]]
      %s206 = sld [smem:[#allocation4 + %s56]]
      %s207 = ssub.s32 %s205, %s206
      %p208 = scmp.eq.s32.totalorder %s207, 0
      %s210 = sadd.s32 %s209, 1
      %s211 = scalar_select %p208, %s209, %s210
      %p214 = pneg %p208
      %p215 = scmp.eq.s32.totalorder %s30, 3
      %p216 = por %p214, %p215
      %p217 = scmp.ne.s32.totalorder %s209, %s212
      %p218 = scmp.eq.s32.totalorder %s30, 0
      %p219 = por %p217, %p218
      %p220 = scmp.ne.s32.totalorder %s209, %s212
      %p221 = scmp.eq.s32.totalorder %s35, 3
      %p222 = por %p220, %p221
      %p223 = scmp.ne.s32.totalorder %s212, %s213
      %p224 = scmp.eq.s32.totalorder %s35, 0
      %p225 = por %p223, %p224
      %p226 = scmp.ne.s32.totalorder %s212, %s213
      %p227 = scmp.eq.s32.totalorder %s36, 3
      %p228 = por %p226, %p227
      %p230 = scmp.ne.s32.totalorder %s213, %s229
      %p231 = scmp.eq.s32.totalorder %s36, 0
      %p232 = por %p230, %p231
      %s233 = sld [smem:[#allocation4 + %s37]]
      %s234 = sld [smem:[#allocation4 + %s56]]
      %s235 = ssub.s32 %s233, %s234
      %p236 = scmp.eq.s32.totalorder %s235, 0
      %s238 = sadd.s32 %s237, 1
      %s239 = scalar_select %p236, %s237, %s238
      %p242 = pneg %p236
      %p243 = scmp.eq.s32.totalorder %s30, 3
      %p244 = por %p242, %p243
      %p245 = scmp.ne.s32.totalorder %s237, %s240
      %p246 = scmp.eq.s32.totalorder %s30, 0
      %p247 = por %p245, %p246
      %p248 = scmp.ne.s32.totalorder %s237, %s240
      %p249 = scmp.eq.s32.totalorder %s35, 3
      %p250 = por %p248, %p249
      %p251 = scmp.ne.s32.totalorder %s240, %s241
      %p252 = scmp.eq.s32.totalorder %s35, 0
      %p253 = por %p251, %p252
      %p254 = scmp.ne.s32.totalorder %s240, %s241
      %p255 = scmp.eq.s32.totalorder %s36, 3
      %p256 = por %p254, %p255
      %p258 = scmp.ne.s32.totalorder %s241, %s257
      %p259 = scmp.eq.s32.totalorder %s36, 0
      %p260 = por %p258, %p259
      %s261 = sld [smem:[#allocation4 + %s37]]
      %s262 = sld [smem:[#allocation4 + %s56]]
      %s263 = ssub.s32 %s261, %s262
      %p264 = scmp.eq.s32.totalorder %s263, 0
      %s266 = sadd.s32 %s265, 1
      %s267 = scalar_select %p264, %s265, %s266
      %p270 = pneg %p264
      %p271 = scmp.eq.s32.totalorder %s30, 3
      %p272 = por %p270, %p271
      %p273 = scmp.ne.s32.totalorder %s265, %s268
      %p274 = scmp.eq.s32.totalorder %s30, 0
      %p275 = por %p273, %p274
      %p276 = scmp.ne.s32.totalorder %s265, %s268
      %p277 = scmp.eq.s32.totalorder %s35, 3
      %p278 = por %p276, %p277
      %p279 = scmp.ne.s32.totalorder %s268, %s269
      %p280 = scmp.eq.s32.totalorder %s35, 0
      %p281 = por %p279, %p280
      %p282 = scmp.ne.s32.totalorder %s268, %s269
      %p283 = scmp.eq.s32.totalorder %s36, 3
      %p284 = por %p282, %p283
      %p286 = scmp.ne.s32.totalorder %s269, %s285
      %p287 = scmp.eq.s32.totalorder %s36, 0
      %p288 = por %p286, %p287
      %s289 = ssub.s32 %s37, %s56
      %s290 = ssub.s32 %s38, %s52
      %s291 = sor.u32 %s289, %s290
      %p292 = scmp.eq.s32.totalorder %s291, 0
      %s294 = sadd.s32 %s293, 1
      %s295 = scalar_select %p292, %s293, %s294
      %p298 = pneg %p292
      %p299 = scmp.eq.s32.totalorder %s30, 3
      %p300 = por %p298, %p299
      %p301 = scmp.ne.s32.totalorder %s293, %s296
      %p302 = scmp.eq.s32.totalorder %s30, 0
      %p303 = por %p301, %p302
      %p304 = scmp.ne.s32.totalorder %s293, %s296
      %p305 = scmp.eq.s32.totalorder %s35, 3
      %p306 = por %p304, %p305
      %p307 = scmp.ne.s32.totalorder %s296, %s297
      %p308 = scmp.eq.s32.totalorder %s35, 0
      %p309 = por %p307, %p308
      %p310 = scmp.ne.s32.totalorder %s296, %s297
      %p311 = scmp.eq.s32.totalorder %s36, 3
      %p312 = por %p310, %p311
      %p314 = scmp.ne.s32.totalorder %s297, %s313
      %p315 = scmp.eq.s32.totalorder %s36, 0
      %p316 = por %p314, %p315
      %p317 = scmp.le.s32.totalorder 1, %s30
      %p318 = scmp.lt.s32.totalorder %s30, 5
      %p319 = pnand %p317, %p318
      %p320 = pneg %p319
      // Predicated region
      $region9: #{fmri_encoder_cross_forward.11} parent=5 // pred_check
        _
      $region10: #{fmri_encoder_cross_forward.11} parent=5 // pred_check_branch
        %322 = sbr.rel (%p319) target = $region12
      $region11: #{fmri_encoder_cross_forward.11} parent=5 // pred_region
        %s323 = ssub.s32 %s30, 1
      $region12: #{fmri_encoder_cross_forward.11} parent=5 // pred_fallthru
        _
      %p324 = scmp.lt.s32.totalorder %s30, 4
      // Predicated region
      $region13: #{fmri_encoder_cross_forward.11} parent=5 // pred_check
        %p325 = pneg %p324
      $region14: #{fmri_encoder_cross_forward.11} parent=5 // pred_check_branch
        %327 = sbr.rel (%p325) target = $region16
      $region15: #{fmri_encoder_cross_forward.11} parent=5 // pred_region
        // Predicated region
        $region17: #{fmri_encoder_cross_forward.11} parent=15 // pred_check
          %p328 = pneg %p73
        $region18: #{fmri_encoder_cross_forward.11} parent=15 // pred_check_branch
          %330 = sbr.rel (%p328) target = $region20
        $region19: #{fmri_encoder_cross_forward.11} parent=15 // pred_region
          %p331 = scmp.lt.s32.totalorder %s37, 1
          %s332 = scalar_select %p331, %s37, 1
          %p333 = scmp.lt.s32.totalorder %s38, 0
          %s334 = scalar_select %p333, %s38, 0
          %p335 = scmp.lt.s32.totalorder %s39, 1
          %s336 = scalar_select %p335, %s39, 1
          %s337 = smul.addr %s334, 2
          %s338 = sadd.s32 %s336, %s337
          %s339 = smul.addr %s332, 2
          %s340 = sadd.s32 %s338, %s339
          %s341 = smul.addr %s340, 4
          %s342 = scalar_lea.vmem %s1, %s341
        $region20: #{fmri_encoder_cross_forward.11} parent=15 // pred_fallthru
          _
        // Predicated region
        $region21: #{fmri_encoder_cross_forward.11} parent=15 // pred_check
          %p343 = pneg %p101
        $region22: #{fmri_encoder_cross_forward.11} parent=15 // pred_check_branch
          %345 = sbr.rel (%p343) target = $region24
        $region23: #{fmri_encoder_cross_forward.11} parent=15 // pred_region
          %p346 = scmp.lt.s32.totalorder %s37, 1
          %s347 = scalar_select %p346, %s37, 1
          %p348 = scmp.lt.s32.totalorder %s38, 0
          %s349 = scalar_select %p348, %s38, 0
          %s350 = sadd.s32 %s349, %s347
          %s351 = smul.addr %s350, 4
          %s352 = scalar_lea.vmem %s2, %s351
        $region24: #{fmri_encoder_cross_forward.11} parent=15 // pred_fallthru
          _
        // Predicated region
        $region25: #{fmri_encoder_cross_forward.11} parent=15 // pred_check
          %p353 = pneg %p131
        $region26: #{fmri_encoder_cross_forward.11} parent=15 // pred_check_branch
          %355 = sbr.rel (%p353) target = $region28
        $region27: #{fmri_encoder_cross_forward.11} parent=15 // pred_region
          %s356 = sand.u32 %s121, 1
          %s357 = sand.u32 %s121, 1
          %s358 = smul.addr %s357, 64
          %s359 = scalar_lea.vmem [#allocation5], %s358
          %s360 = sld [smem:[#allocation4 + %s37]]
          %s361 = smul.addr %s360, 32
          %s362 = sadd.s32 %s39, %s361
          %s363 = smul.addr %s362, 4
          %s364 = scalar_lea.vmem %s3, %s363
          // Predicated region
          $region29: #{fmri_encoder_cross_forward.11} parent=27 // pred_check
            _
          $region30: #{fmri_encoder_cross_forward.11} parent=27 // pred_check_branch
            %366 = sbr.rel (0) target = $region32
          $region31: #{fmri_encoder_cross_forward.11} parent=27 // pred_region
            // Predicated region
            $region33: #{fmri_encoder_cross_forward.11} parent=31 // pred_check
              _
            $region34: #{fmri_encoder_cross_forward.11} parent=31 // pred_check_branch
              %368 = sbr.rel target = $region36
            $region35: #{fmri_encoder_cross_forward.11} parent=31 // pred_region
              // Predicated region
              $region48: #{fmri_encoder_cross_forward.11} parent=35 // pred_check
                _
              $region49: #{fmri_encoder_cross_forward.11} parent=35 // pred_check_branch
                %414 = sbr.rel (0) target = $region51
              $region50: #{fmri_encoder_cross_forward.11} parent=35 // pred_region
                loop: start=0, step=1, limit=1
                $region52: #{fmri_encoder_cross_forward.11} parent=50 // loop_pre_header
                  _
                $region53: #{fmri_encoder_cross_forward.11} parent=50 // loop_header
                  %s416 = sphi 0, %s420
                  %p417 = scmp.ge.s32.totalorder %s416, 1
                  %s421 = sphi %s364, %s364
                  %s422 = sphi %s359, %s359
                $region54: #{fmri_encoder_cross_forward.11} parent=50 // loop_header_branch
                  %419 = sbr.rel (%p417) target = $region58
                $region55: #{fmri_encoder_cross_forward.11} parent=50 // loop_body
                  _
                $region56: #{fmri_encoder_cross_forward.11} parent=50 // loop_footer
                  %s420 = sadd.s32 1, %s416
                $region57: #{fmri_encoder_cross_forward.11} parent=50 // loop_footer_branch
                  %415 = sbr.rel target = $region53
                $region58: #{fmri_encoder_cross_forward.11} parent=50 // loop_exit
                  _
                %s424 = ssub.s32 16, 1
                loop: start=0, step=1, limit=1
                $region59: #{fmri_encoder_cross_forward.11} parent=50 // loop_pre_header
                  _
                $region60: #{fmri_encoder_cross_forward.11} parent=50 // loop_header
                  %s426 = sphi 0, %s430
                  %p427 = scmp.ge.s32.totalorder %s426, 1
                  %s431 = sphi %s364, %s364
                  %s432 = sphi %s359, %s359
                $region61: #{fmri_encoder_cross_forward.11} parent=50 // loop_header_branch
                  %429 = sbr.rel (%p427) target = $region65
                $region62: #{fmri_encoder_cross_forward.11} parent=50 // loop_body
                  %v433 = vld [vmem:[%s431] sm:%s424]
                  %434 = vst [vmem:[%s432] sm:%s424] %v433
                  %v435 = vld [vmem:[%s431 + $0x8] sm:%s424]
                  %436 = vst [vmem:[%s432 + $0x4] sm:%s424] %v435
                  %v437 = vld [vmem:[%s431 + $0x10] sm:%s424]
                  %438 = vst [vmem:[%s432 + $0x8] sm:%s424] %v437
                  %v439 = vld [vmem:[%s431 + $0x18] sm:%s424]
                  %440 = vst [vmem:[%s432 + $0xc] sm:%s424] %v439
                  %v441 = vld [vmem:[%s431 + $0x20] sm:%s424]
                  %442 = vst [vmem:[%s432 + $0x10] sm:%s424] %v441
                  %v443 = vld [vmem:[%s431 + $0x28] sm:%s424]
                  %444 = vst [vmem:[%s432 + $0x14] sm:%s424] %v443
                  %v445 = vld [vmem:[%s431 + $0x30] sm:%s424]
                  %446 = vst [vmem:[%s432 + $0x18] sm:%s424] %v445
                  %v447 = vld [vmem:[%s431 + $0x38] sm:%s424]
                  %448 = vst [vmem:[%s432 + $0x1c] sm:%s424] %v447
                  %v449 = vld [vmem:[%s431 + $0x40] sm:%s424]
                  %450 = vst [vmem:[%s432 + $0x20] sm:%s424] %v449
                  %v451 = vld [vmem:[%s431 + $0x48] sm:%s424]
                  %452 = vst [vmem:[%s432 + $0x24] sm:%s424] %v451
                  %v453 = vld [vmem:[%s431 + $0x50] sm:%s424]
                  %454 = vst [vmem:[%s432 + $0x28] sm:%s424] %v453
                  %v455 = vld [vmem:[%s431 + $0x58] sm:%s424]
                  %456 = vst [vmem:[%s432 + $0x2c] sm:%s424] %v455
                  %v457 = vld [vmem:[%s431 + $0x60] sm:%s424]
                  %458 = vst [vmem:[%s432 + $0x30] sm:%s424] %v457
                  %v459 = vld [vmem:[%s431 + $0x68] sm:%s424]
                  %460 = vst [vmem:[%s432 + $0x34] sm:%s424] %v459
                  %v461 = vld [vmem:[%s431 + $0x70] sm:%s424]
                  %462 = vst [vmem:[%s432 + $0x38] sm:%s424] %v461
                  %v463 = vld [vmem:[%s431 + $0x78] sm:%s424]
                  %464 = vst [vmem:[%s432 + $0x3c] sm:%s424] %v463
                $region63: #{fmri_encoder_cross_forward.11} parent=50 // loop_footer
                  %s430 = sadd.s32 1, %s426
                $region64: #{fmri_encoder_cross_forward.11} parent=50 // loop_footer_branch
                  %425 = sbr.rel target = $region60
                $region65: #{fmri_encoder_cross_forward.11} parent=50 // loop_exit
                  _
              $region51: #{fmri_encoder_cross_forward.11} parent=35 // pred_fallthru
                _
            $region36: #{fmri_encoder_cross_forward.11} parent=31 // pred_fallthru
              _
            // Predicated region
            $region37: #{fmri_encoder_cross_forward.11} parent=31 // pred_check
              _
            $region38: #{fmri_encoder_cross_forward.11} parent=31 // pred_check_branch
              %370 = sbr.rel (0) target = $region40
            $region39: #{fmri_encoder_cross_forward.11} parent=31 // pred_region
              %s372 = ssub.s32 16, 1
              loop: start=0, step=1, limit=1
              $region41: #{fmri_encoder_cross_forward.11} parent=39 // loop_pre_header
                _
              $region42: #{fmri_encoder_cross_forward.11} parent=39 // loop_header
                %s374 = sphi 0, %s378
                %p375 = scmp.ge.s32.totalorder %s374, 1
                %s379 = sphi %s364, %s364
                %s380 = sphi %s359, %s359
              $region43: #{fmri_encoder_cross_forward.11} parent=39 // loop_header_branch
                %377 = sbr.rel (%p375) target = $region47
              $region44: #{fmri_encoder_cross_forward.11} parent=39 // loop_body
                %v381 = vld [vmem:[%s379] sm:%s372]
                %382 = vst [vmem:[%s380] sm:%s372] %v381
                %v383 = vld [vmem:[%s379 + $0x8] sm:%s372]
                %384 = vst [vmem:[%s380 + $0x4] sm:%s372] %v383
                %v385 = vld [vmem:[%s379 + $0x10] sm:%s372]
                %386 = vst [vmem:[%s380 + $0x8] sm:%s372] %v385
                %v387 = vld [vmem:[%s379 + $0x18] sm:%s372]
                %388 = vst [vmem:[%s380 + $0xc] sm:%s372] %v387
                %v389 = vld [vmem:[%s379 + $0x20] sm:%s372]
                %390 = vst [vmem:[%s380 + $0x10] sm:%s372] %v389
                %v391 = vld [vmem:[%s379 + $0x28] sm:%s372]
                %392 = vst [vmem:[%s380 + $0x14] sm:%s372] %v391
                %v393 = vld [vmem:[%s379 + $0x30] sm:%s372]
                %394 = vst [vmem:[%s380 + $0x18] sm:%s372] %v393
                %v395 = vld [vmem:[%s379 + $0x38] sm:%s372]
                %396 = vst [vmem:[%s380 + $0x1c] sm:%s372] %v395
                %v397 = vld [vmem:[%s379 + $0x40] sm:%s372]
                %398 = vst [vmem:[%s380 + $0x20] sm:%s372] %v397
                %v399 = vld [vmem:[%s379 + $0x48] sm:%s372]
                %400 = vst [vmem:[%s380 + $0x24] sm:%s372] %v399
                %v401 = vld [vmem:[%s379 + $0x50] sm:%s372]
                %402 = vst [vmem:[%s380 + $0x28] sm:%s372] %v401
                %v403 = vld [vmem:[%s379 + $0x58] sm:%s372]
                %404 = vst [vmem:[%s380 + $0x2c] sm:%s372] %v403
                %v405 = vld [vmem:[%s379 + $0x60] sm:%s372]
                %406 = vst [vmem:[%s380 + $0x30] sm:%s372] %v405
                %v407 = vld [vmem:[%s379 + $0x68] sm:%s372]
                %408 = vst [vmem:[%s380 + $0x34] sm:%s372] %v407
                %v409 = vld [vmem:[%s379 + $0x70] sm:%s372]
                %410 = vst [vmem:[%s380 + $0x38] sm:%s372] %v409
                %v411 = vld [vmem:[%s379 + $0x78] sm:%s372]
                %412 = vst [vmem:[%s380 + $0x3c] sm:%s372] %v411
              $region45: #{fmri_encoder_cross_forward.11} parent=39 // loop_footer
                %s378 = sadd.s32 1, %s374
              $region46: #{fmri_encoder_cross_forward.11} parent=39 // loop_footer_branch
                %373 = sbr.rel target = $region42
              $region47: #{fmri_encoder_cross_forward.11} parent=39 // loop_exit
                _
            $region40: #{fmri_encoder_cross_forward.11} parent=31 // pred_fallthru
              _
          $region32: #{fmri_encoder_cross_forward.11} parent=27 // pred_fallthru
            _
          %465 = vnop
        $region28: #{fmri_encoder_cross_forward.11} parent=15 // pred_fallthru
          _
        // Predicated region
        $region66: #{fmri_encoder_cross_forward.11} parent=15 // pred_check
          %p466 = pneg %p161
        $region67: #{fmri_encoder_cross_forward.11} parent=15 // pred_check_branch
          %468 = sbr.rel (%p466) target = $region69
        $region68: #{fmri_encoder_cross_forward.11} parent=15 // pred_region
          %s469 = sld [smem:[#allocation4 + %s37]]
          %p470 = scmp.lt.s32.totalorder %s469, 1
          %s471 = scalar_select %p470, %s469, 1
          %p472 = scmp.lt.s32.totalorder %s39, 1
          %s473 = scalar_select %p472, %s39, 1
          %s474 = smul.addr %s471, 2
          %s475 = sadd.s32 %s473, %s474
          %s476 = scalar_lea.vmem %s4, %s475
          %s477 = sld [smem:[#allocation4 + %s37]]
        $region69: #{fmri_encoder_cross_forward.11} parent=15 // pred_fallthru
          _
        // Predicated region
        $region70: #{fmri_encoder_cross_forward.11} parent=15 // pred_check
          %p478 = pneg %p191
        $region71: #{fmri_encoder_cross_forward.11} parent=15 // pred_check_branch
          %480 = sbr.rel (%p478) target = $region73
        $region72: #{fmri_encoder_cross_forward.11} parent=15 // pred_region
          %s481 = sand.u32 %s181, 1
          %s482 = scalar_lea.sflag [#allocation7], %s481
          %s483 = sand.u32 %s181, 1
          %s484 = smul.addr %s483, 128
          %s485 = scalar_lea.vmem [#allocation6], %s484
          %s486 = sld [smem:[#allocation4 + %s37]]
          %s487 = smul.u32 16, %s39
          %s489 = ssub.s32 2048, 2048
          %490 = vsyncadd %s482, %s489
          %s491 = smul.addr %s487, 2
          %s492 = smul.addr %s486, 64
          %s493 = sadd.s32 %s491, %s492
          %s494 = smul.addr %s493, 64
          %s495 = scalar_lea.hbm %s5, %s494
          %s496 = sshll.u32 %s485, 4
          %s497 = int_to_ptr.vmem [resolvable:$true] %s496
          %502 = dma.hbm_to_vmem [thread:$0]  %s495, 2048, %s497, %s482, 128, 128, 8
        $region73: #{fmri_encoder_cross_forward.11} parent=15 // pred_fallthru
          _
        // Predicated region
        $region74: #{fmri_encoder_cross_forward.11} parent=15 // pred_check
          %p503 = pneg %p219
        $region75: #{fmri_encoder_cross_forward.11} parent=15 // pred_check_branch
          %505 = sbr.rel (%p503) target = $region77
        $region76: #{fmri_encoder_cross_forward.11} parent=15 // pred_region
          %s506 = sand.u32 %s30, 1
          %s507 = scalar_lea.sflag [#allocation9], %s506
          %s508 = sand.u32 %s209, 1
          %s509 = smul.addr %s508, 2
          %s510 = scalar_lea.vmem [#allocation8], %s509
          %s511 = sld [smem:[#allocation4 + %s37]]
          %s513 = ssub.s32 32, 32
          %514 = vsyncadd %s507, %s513
          %s515 = smul.addr %s511, 2
          %s516 = smul.addr %s515, 16
          %s517 = scalar_lea.hbm %s6, %s516
          %s519 = sshll.u32 %s510, 4
          %s520 = int_to_ptr.vmem [resolvable:$true] %s519
          %522 = dma.hbm_to_vmem [thread:$0]  %s517, 32, %s520, %s507
        $region77: #{fmri_encoder_cross_forward.11} parent=15 // pred_fallthru
          _
        // Predicated region
        $region78: #{fmri_encoder_cross_forward.11} parent=15 // pred_check
          %p523 = pneg %p247
        $region79: #{fmri_encoder_cross_forward.11} parent=15 // pred_check_branch
          %525 = sbr.rel (%p523) target = $region81
        $region80: #{fmri_encoder_cross_forward.11} parent=15 // pred_region
          %s526 = sand.u32 %s30, 1
          %s527 = scalar_lea.sflag [#allocation9], %s526
          %s528 = sand.u32 %s237, 1
          %s529 = smul.addr %s528, 2
          %s530 = scalar_lea.vmem [#allocation10], %s529
          %s531 = sld [smem:[#allocation4 + %s37]]
          %s533 = ssub.s32 32, 32
          %534 = vsyncadd %s527, %s533
          %s535 = smul.addr %s531, 2
          %s536 = smul.addr %s535, 16
          %s537 = scalar_lea.hbm %s7, %s536
          %s539 = sshll.u32 %s530, 4
          %s540 = int_to_ptr.vmem [resolvable:$true] %s539
          %542 = dma.hbm_to_vmem [thread:$0]  %s537, 32, %s540, %s527
        $region81: #{fmri_encoder_cross_forward.11} parent=15 // pred_fallthru
          _
        // Predicated region
        $region82: #{fmri_encoder_cross_forward.11} parent=15 // pred_check
          %p543 = pneg %p275
        $region83: #{fmri_encoder_cross_forward.11} parent=15 // pred_check_branch
          %545 = sbr.rel (%p543) target = $region85
        $region84: #{fmri_encoder_cross_forward.11} parent=15 // pred_region
          %s546 = sand.u32 %s265, 1
          %s547 = scalar_lea.sflag [#allocation12], %s546
          %s548 = sand.u32 %s265, 1
          %s549 = smul.addr %s548, 2
          %s550 = scalar_lea.vmem [#allocation11], %s549
          %s551 = sld [smem:[#allocation4 + %s37]]
          %s553 = ssub.s32 32, 32
          %554 = vsyncadd %s547, %s553
          %s555 = smul.addr %s551, 2
          %s556 = smul.addr %s555, 16
          %s557 = scalar_lea.hbm %s8, %s556
          %s559 = sshll.u32 %s550, 4
          %s560 = int_to_ptr.vmem [resolvable:$true] %s559
          %562 = dma.hbm_to_vmem [thread:$0]  %s557, 32, %s560, %s547
        $region85: #{fmri_encoder_cross_forward.11} parent=15 // pred_fallthru
          _
      $region16: #{fmri_encoder_cross_forward.11} parent=5 // pred_fallthru
        _
      %p563 = scmp.le.s32.totalorder 1, %s30
      %p564 = scmp.lt.s32.totalorder %s30, 5
      %p565 = pnand %p563, %p564
      %p566 = pneg %p565
      // Predicated region
      $region86: #{fmri_encoder_cross_forward.11} parent=5 // pred_check
        _
      $region87: #{fmri_encoder_cross_forward.11} parent=5 // pred_check_branch
        %568 = sbr.rel (%p565) target = $region89
      $region88: #{fmri_encoder_cross_forward.11} parent=5 // pred_region
        %s569 = ssub.s32 %s30, 1
        %s570 = sand.u32 %s124, 1
        %s571 = sand.u32 %s124, 1
        %s572 = smul.addr %s571, 64
        %s573 = scalar_lea.vmem [#allocation5], %s572
        // Predicated region
        $region90: #{fmri_encoder_cross_forward.11} parent=88 // pred_check
          %p574 = pneg %p137
        $region91: #{fmri_encoder_cross_forward.11} parent=88 // pred_check_branch
          %576 = sbr.rel (%p574) target = $region93
        $region92: #{fmri_encoder_cross_forward.11} parent=88 // pred_region
          _
        $region93: #{fmri_encoder_cross_forward.11} parent=88 // pred_fallthru
          _
        %s577 = sand.u32 %s184, 1
        %s578 = scalar_lea.sflag [#allocation7], %s577
        %s579 = sand.u32 %s184, 1
        %s580 = smul.addr %s579, 128
        %s581 = scalar_lea.vmem [#allocation6], %s580
        // Predicated region
        $region94: #{fmri_encoder_cross_forward.11} parent=88 // pred_check
          %p582 = pneg %p197
        $region95: #{fmri_encoder_cross_forward.11} parent=88 // pred_check_branch
          %584 = sbr.rel (%p582) target = $region97
        $region96: #{fmri_encoder_cross_forward.11} parent=88 // pred_region
          %585 = dma.done %s578, 2048
        $region97: #{fmri_encoder_cross_forward.11} parent=88 // pred_fallthru
          _
        %s586 = sand.u32 %s35, 1
        %s587 = scalar_lea.sflag [#allocation9], %s586
        %s588 = sand.u32 %s212, 1
        %s589 = smul.addr %s588, 2
        %s590 = scalar_lea.vmem [#allocation8], %s589
        // Predicated region
        $region98: #{fmri_encoder_cross_forward.11} parent=88 // pred_check
          %p591 = pneg %p225
        $region99: #{fmri_encoder_cross_forward.11} parent=88 // pred_check_branch
          %593 = sbr.rel (%p591) target = $region101
        $region100: #{fmri_encoder_cross_forward.11} parent=88 // pred_region
          %594 = dma.done %s587, 32
        $region101: #{fmri_encoder_cross_forward.11} parent=88 // pred_fallthru
          _
        %s595 = sand.u32 %s35, 1
        %s596 = scalar_lea.sflag [#allocation9], %s595
        %s597 = sand.u32 %s240, 1
        %s598 = smul.addr %s597, 2
        %s599 = scalar_lea.vmem [#allocation10], %s598
        // Predicated region
        $region102: #{fmri_encoder_cross_forward.11} parent=88 // pred_check
          %p600 = pneg %p253
        $region103: #{fmri_encoder_cross_forward.11} parent=88 // pred_check_branch
          %602 = sbr.rel (%p600) target = $region105
        $region104: #{fmri_encoder_cross_forward.11} parent=88 // pred_region
          %603 = dma.done %s596, 32
        $region105: #{fmri_encoder_cross_forward.11} parent=88 // pred_fallthru
          _
        %s604 = sand.u32 %s268, 1
        %s605 = scalar_lea.sflag [#allocation12], %s604
        %s606 = sand.u32 %s268, 1
        %s607 = smul.addr %s606, 2
        %s608 = scalar_lea.vmem [#allocation11], %s607
        // Predicated region
        $region106: #{fmri_encoder_cross_forward.11} parent=88 // pred_check
          %p609 = pneg %p281
        $region107: #{fmri_encoder_cross_forward.11} parent=88 // pred_check_branch
          %611 = sbr.rel (%p609) target = $region109
        $region108: #{fmri_encoder_cross_forward.11} parent=88 // pred_region
          %612 = dma.done %s605, 32
        $region109: #{fmri_encoder_cross_forward.11} parent=88 // pred_fallthru
          _
        %p613 = scmp.lt.s32.totalorder %s40, 1
        %s614 = scalar_select %p613, %s40, 1
        %p615 = scmp.lt.s32.totalorder %s41, 0
        %s616 = scalar_select %p615, %s41, 0
        %p617 = scmp.lt.s32.totalorder %s42, 1
        %s618 = scalar_select %p617, %s42, 1
        %s619 = smul.addr %s616, 2
        %s620 = sadd.s32 %s618, %s619
        %s621 = smul.addr %s614, 2
        %s622 = sadd.s32 %s620, %s621
        %s623 = smul.addr %s622, 4
        %s624 = scalar_lea.vmem %s1, %s623
        %p625 = pneg %p79
        %p626 = pneg %p76
        %p627 = scmp.lt.s32.totalorder %s40, 1
        %s628 = scalar_select %p627, %s40, 1
        %p629 = scmp.lt.s32.totalorder %s41, 0
        %s630 = scalar_select %p629, %s41, 0
        %s631 = sadd.s32 %s630, %s628
        %s632 = smul.addr %s631, 4
        %s633 = scalar_lea.vmem %s2, %s632
        %p634 = pneg %p107
        %p635 = pneg %p104
        %s636 = sand.u32 %s124, 1
        %s637 = sand.u32 %s124, 1
        %s638 = smul.addr %s637, 64
        %s639 = scalar_lea.vmem [#allocation5], %s638
        %p640 = pneg %p137
        %p641 = pneg %p134
        %s642 = sld [smem:[#allocation4 + %s40]]
        %p643 = scmp.lt.s32.totalorder %s642, 1
        %s644 = scalar_select %p643, %s642, 1
        %p645 = scmp.lt.s32.totalorder %s42, 1
        %s646 = scalar_select %p645, %s42, 1
        %s647 = smul.addr %s644, 2
        %s648 = sadd.s32 %s646, %s647
        %s649 = scalar_lea.vmem %s4, %s648
        %p650 = pneg %p167
        %p651 = pneg %p164
        %s652 = sand.u32 %s184, 1
        %s653 = scalar_lea.sflag [#allocation7], %s652
        %s654 = sand.u32 %s184, 1
        %s655 = smul.addr %s654, 128
        %s656 = scalar_lea.vmem [#allocation6], %s655
        %p657 = pneg %p197
        %p658 = pneg %p194
        %s659 = sand.u32 %s35, 1
        %s660 = scalar_lea.sflag [#allocation9], %s659
        %s661 = sand.u32 %s212, 1
        %s662 = smul.addr %s661, 2
        %s663 = scalar_lea.vmem [#allocation8], %s662
        %p664 = pneg %p225
        %p665 = pneg %p222
        %s666 = sand.u32 %s35, 1
        %s667 = scalar_lea.sflag [#allocation9], %s666
        %s668 = sand.u32 %s240, 1
        %s669 = smul.addr %s668, 2
        %s670 = scalar_lea.vmem [#allocation10], %s669
        %p671 = pneg %p253
        %p672 = pneg %p250
        %s673 = sand.u32 %s268, 1
        %s674 = scalar_lea.sflag [#allocation12], %s673
        %s675 = sand.u32 %s268, 1
        %s676 = smul.addr %s675, 2
        %s677 = scalar_lea.vmem [#allocation11], %s676
        %p678 = pneg %p281
        %p679 = pneg %p278
        %p680 = pneg %p309
        %p681 = pneg %p306
        %p682 = scmp.lt.s32.totalorder %s40, 1
        %s683 = scalar_select %p682, %s40, 1
        %p684 = scmp.lt.s32.totalorder %s41, 0
        %s685 = scalar_select %p684, %s41, 0
        %s686 = smul.addr %s685, 2
        %s687 = smul.addr %s683, 2
        %s688 = sadd.s32 %s686, %s687
        %s689 = smul.addr %s688, 4
        %s690 = scalar_lea.vmem %s9, %s689
        %p691 = scmp.lt.s32.totalorder %s40, 1
        %s692 = scalar_select %p691, %s40, 1
        %p693 = scmp.lt.s32.totalorder %s41, 0
        %s694 = scalar_select %p693, %s41, 0
        %p695 = scmp.lt.s32.totalorder %s42, 1
        %s696 = scalar_select %p695, %s42, 1
        %s697 = smul.addr %s694, 2
        %s698 = sadd.s32 %s696, %s697
        %s699 = smul.addr %s692, 2
        %s700 = sadd.s32 %s698, %s699
        %s701 = smul.addr %s700, 4
        %s702 = scalar_lea.vmem %s1, %s701
        %p703 = scmp.lt.s32.totalorder %s40, 1
        %s704 = scalar_select %p703, %s40, 1
        %p705 = scmp.lt.s32.totalorder %s41, 0
        %s706 = scalar_select %p705, %s41, 0
        %s707 = sadd.s32 %s706, %s704
        %s708 = smul.addr %s707, 4
        %s709 = scalar_lea.vmem %s2, %s708
        %s710 = sld [smem:[#allocation4 + %s40]]
        %s711 = sld [smem:[#allocation4 + %s40]]
        %p712 = scmp.lt.s32.totalorder %s711, 1
        %s713 = scalar_select %p712, %s711, 1
        %p714 = scmp.lt.s32.totalorder %s42, 1
        %s715 = scalar_select %p714, %s42, 1
        %s716 = smul.addr %s713, 2
        %s717 = sadd.s32 %s715, %s716
        %s718 = scalar_lea.vmem %s4, %s717
        %s719 = sld [smem:[#allocation4 + %s40]]
        %s720 = sld [smem:[#allocation4 + %s40]]
        %s721 = smul.u32 16, %s42
        %s722 = sld [smem:[#allocation4 + %s40]]
        %s723 = sld [smem:[#allocation4 + %s40]]
        %s724 = sld [smem:[#allocation4 + %s40]]
        %p725 = scmp.lt.s32.totalorder %s40, 1
        %s726 = scalar_select %p725, %s40, 1
        %p727 = scmp.lt.s32.totalorder %s41, 0
        %s728 = scalar_select %p727, %s41, 0
        %s729 = smul.addr %s728, 2
        %s730 = smul.addr %s726, 2
        %s731 = sadd.s32 %s729, %s730
        %s732 = smul.addr %s731, 4
        %s733 = scalar_lea.vmem %s9, %s732
        %p735 = scmp.eq.s32.totalorder %s42, 0
        // Predicated region
        $region110: #{fmri_encoder_cross_forward.11} parent=88 // pred_check
          %p736 = pneg %p735
        $region111: #{fmri_encoder_cross_forward.11} parent=88 // pred_check_branch
          %738 = sbr.rel (%p736) target = $region113
        $region112: #{fmri_encoder_cross_forward.11} parent=88 // pred_region
          %739 = vst [vmem:[#allocation2] sm:$0xff] 0.0
          %740 = vst [vmem:[#allocation2 + $0x8] sm:$0xff] 0.0
        $region113: #{fmri_encoder_cross_forward.11} parent=88 // pred_fallthru
          _
        %v741 = vld [vmem:[%s709] sm:$0xf]
        %v742 = vld [vmem:[%s573] sm:$0xf]
        %v743 = vld [vmem:[%s573 + $0x4] sm:$0xf]
        %v744 = vld [vmem:[%s573 + $0x8] sm:$0xf]
        %v745 = vld [vmem:[%s573 + $0xc] sm:$0xf]
        %v746 = vld [vmem:[%s573 + $0x10] sm:$0xf]
        %v747 = vld [vmem:[%s573 + $0x14] sm:$0xf]
        %v748 = vld [vmem:[%s573 + $0x18] sm:$0xf]
        %v749 = vld [vmem:[%s573 + $0x1c] sm:$0xf]
        %v750 = vld [vmem:[%s573 + $0x20] sm:$0xf]
        %v751 = vld [vmem:[%s573 + $0x24] sm:$0xf]
        %v752 = vld [vmem:[%s573 + $0x28] sm:$0xf]
        %v753 = vld [vmem:[%s573 + $0x2c] sm:$0xf]
        %v754 = vld [vmem:[%s573 + $0x30] sm:$0xf]
        %v755 = vld [vmem:[%s573 + $0x34] sm:$0xf]
        %v756 = vld [vmem:[%s573 + $0x38] sm:$0xf]
        %v757 = vld [vmem:[%s573 + $0x3c] sm:$0xf]
        %v758 = vld [vmem:[%s718] sm:$0x1]
        %v760 = vlaneseq
        %v761 = vshrl.u32 %v760, 7
        %v762 = vsub.s32 0, %v761
        %v763 = vrot.slane %v758, %v762
        %v781 = vunpack.c.l.b16 %v742
        %v782 = vunpack.c.l.b16 %v743
        %v783 = vunpack.c.l.b16 %v744
        %v784 = vunpack.c.l.b16 %v745
        %v785 = vunpack.c.l.b16 %v746
        %v786 = vunpack.c.l.b16 %v747
        %v787 = vunpack.c.l.b16 %v748
        %v788 = vunpack.c.l.b16 %v749
        %v789 = vunpack.c.l.b16 %v750
        %v790 = vunpack.c.l.b16 %v751
        %v791 = vunpack.c.l.b16 %v752
        %v792 = vunpack.c.l.b16 %v753
        %v793 = vunpack.c.l.b16 %v754
        %v794 = vunpack.c.l.b16 %v755
        %v795 = vunpack.c.l.b16 %v756
        %v796 = vunpack.c.l.b16 %v757
        %v797 = vpack.c.b16 %v782, %v781
        %v798 = vpack.c.b16 %v784, %v783
        %v799 = vpack.c.b16 %v786, %v785
        %v800 = vpack.c.b16 %v788, %v787
        %v801 = vpack.c.b16 %v790, %v789
        %v802 = vpack.c.b16 %v792, %v791
        %v803 = vpack.c.b16 %v794, %v793
        %v804 = vpack.c.b16 %v796, %v795
        %813 = vmatprep.subr.bf16.mxu0 0
        %814 = vmatpush1.bf16.msra.mxu0 %v804
        %815 = vmatprep.subr.bf16.mxu0 0
        %816 = vmatpush1.bf16.msra.mxu0 %v803
        %817 = vmatprep.subr.bf16.mxu0 0
        %818 = vmatpush1.bf16.msra.mxu0 %v802
        %819 = vmatprep.subr.bf16.mxu0 0
        %820 = vmatpush1.bf16.msra.mxu0 %v801
        %821 = vmatprep.subr.bf16.mxu0 0
        %822 = vmatpush1.bf16.msra.mxu0 %v800
        %823 = vmatprep.subr.bf16.mxu0 0
        %824 = vmatpush1.bf16.msra.mxu0 %v799
        %825 = vmatprep.subr.bf16.mxu0 0
        %826 = vmatpush1.bf16.msra.mxu0 %v798
        %827 = vmatprep.subr.bf16.mxu0 0
        %828 = vmatpush1.bf16.msra.mxu0 %v797
        %829 = vmatprep.subr.bf16.mxu0 0
        %830 = vmatpush2.bf16.msra.mxu0 0
        %831 = vmatprep.subr.bf16.mxu0 0
        %832 = vmatpush2.bf16.msra.mxu0 0
        %833 = vmatprep.subr.bf16.mxu0 0
        %834 = vmatpush2.bf16.msra.mxu0 0
        %835 = vmatprep.subr.bf16.mxu0 0
        %836 = vmatpush2.bf16.msra.mxu0 0
        %837 = vmatprep.subr.bf16.mxu0 0
        %838 = vmatpush2.bf16.msra.mxu0 0
        %839 = vmatprep.subr.bf16.mxu0 0
        %840 = vmatpush2.bf16.msra.mxu0 0
        %841 = vmatprep.subr.bf16.mxu0 0
        %842 = vmatpush2.bf16.msra.mxu0 0
        %843 = vmatprep.subr.bf16.mxu0 0
        %844 = vmatpush2.bf16.msra.mxu0 0
        %845 = vmatprep.mubr.bf16.mxu0 0
        %846 = vmatmul.mubr.bf16.gmra.mxu0 %v741
        %v847 = vpop.f32.mrf.mxu0
        %v848 = vadd.f32 %v763, %v847
        %v849 = vpop.f32.mrf.mxu0
        %v850 = vpop.f32.mrf.mxu0
        %v851 = vpop.f32.mrf.mxu0
        %852 = vdwg.mxu0
        %v853 = vld [vmem:[%s702] sm:$0xf]
        %v854 = vunpack.c.l.bf16 %v853
        %v855 = vadd.f32 %v854, %v848
        %v856 = vld [vmem:[#allocation2] sm:$0xff]
        %v857 = vld [vmem:[#allocation2 + $0x8] sm:$0xff]
        %v858 = vpack.c.bf16 %v855, %v855
        %v859 = vld [vmem:[%s581] sm:$0xff]
        %v860 = vld [vmem:[%s581 + $0x8] sm:$0xff]
        %v861 = vld [vmem:[%s581 + $0x10] sm:$0xff]
        %v862 = vld [vmem:[%s581 + $0x18] sm:$0xff]
        %v863 = vld [vmem:[%s581 + $0x20] sm:$0xff]
        %v864 = vld [vmem:[%s581 + $0x28] sm:$0xff]
        %v865 = vld [vmem:[%s581 + $0x30] sm:$0xff]
        %v866 = vld [vmem:[%s581 + $0x38] sm:$0xff]
        %v867 = vld [vmem:[%s581 + $0x40] sm:$0xff]
        %v868 = vld [vmem:[%s581 + $0x48] sm:$0xff]
        %v869 = vld [vmem:[%s581 + $0x50] sm:$0xff]
        %v870 = vld [vmem:[%s581 + $0x58] sm:$0xff]
        %v871 = vld [vmem:[%s581 + $0x60] sm:$0xff]
        %v872 = vld [vmem:[%s581 + $0x68] sm:$0xff]
        %v873 = vld [vmem:[%s581 + $0x70] sm:$0xff]
        %v874 = vld [vmem:[%s581 + $0x78] sm:$0xff]
        %v891 = vunpack.c.l.b16 %v859
        %v892 = vunpack.c.h.b16 %v859
        %v893 = vunpack.c.l.b16 %v860
        %v894 = vunpack.c.h.b16 %v860
        %v895 = vunpack.c.l.b16 %v861
        %v896 = vunpack.c.h.b16 %v861
        %v897 = vunpack.c.l.b16 %v862
        %v898 = vunpack.c.h.b16 %v862
        %v899 = vunpack.c.l.b16 %v863
        %v900 = vunpack.c.h.b16 %v863
        %v901 = vunpack.c.l.b16 %v864
        %v902 = vunpack.c.h.b16 %v864
        %v903 = vunpack.c.l.b16 %v865
        %v904 = vunpack.c.h.b16 %v865
        %v905 = vunpack.c.l.b16 %v866
        %v906 = vunpack.c.h.b16 %v866
        %v907 = vunpack.c.l.b16 %v867
        %v908 = vunpack.c.h.b16 %v867
        %v909 = vunpack.c.l.b16 %v868
        %v910 = vunpack.c.h.b16 %v868
        %v911 = vunpack.c.l.b16 %v869
        %v912 = vunpack.c.h.b16 %v869
        %v913 = vunpack.c.l.b16 %v870
        %v914 = vunpack.c.h.b16 %v870
        %v915 = vunpack.c.l.b16 %v871
        %v916 = vunpack.c.h.b16 %v871
        %v917 = vunpack.c.l.b16 %v872
        %v918 = vunpack.c.h.b16 %v872
        %v919 = vunpack.c.l.b16 %v873
        %v920 = vunpack.c.h.b16 %v873
        %v921 = vunpack.c.l.b16 %v874
        %v922 = vunpack.c.h.b16 %v874
        %v923 = vpack.c.b16 %v893, %v891
        %v924 = vpack.c.b16 %v894, %v892
        %v925 = vpack.c.b16 %v897, %v895
        %v926 = vpack.c.b16 %v898, %v896
        %v927 = vpack.c.b16 %v901, %v899
        %v928 = vpack.c.b16 %v902, %v900
        %v929 = vpack.c.b16 %v905, %v903
        %v930 = vpack.c.b16 %v906, %v904
        %v931 = vpack.c.b16 %v909, %v907
        %v932 = vpack.c.b16 %v910, %v908
        %v933 = vpack.c.b16 %v913, %v911
        %v934 = vpack.c.b16 %v914, %v912
        %v935 = vpack.c.b16 %v917, %v915
        %v936 = vpack.c.b16 %v918, %v916
        %v937 = vpack.c.b16 %v921, %v919
        %v938 = vpack.c.b16 %v922, %v920
        %955 = vmatprep.subr.bf16.mxu0 %v938
        %956 = vmatpush1.bf16.msra.mxu0 %v937
        %957 = vmatprep.subr.bf16.mxu0 %v936
        %958 = vmatpush1.bf16.msra.mxu0 %v935
        %959 = vmatprep.subr.bf16.mxu0 %v934
        %960 = vmatpush1.bf16.msra.mxu0 %v933
        %961 = vmatprep.subr.bf16.mxu0 %v932
        %962 = vmatpush1.bf16.msra.mxu0 %v931
        %963 = vmatprep.subr.bf16.mxu0 %v930
        %964 = vmatpush1.bf16.msra.mxu0 %v929
        %965 = vmatprep.subr.bf16.mxu0 %v928
        %966 = vmatpush1.bf16.msra.mxu0 %v927
        %967 = vmatprep.subr.bf16.mxu0 %v926
        %968 = vmatpush1.bf16.msra.mxu0 %v925
        %969 = vmatprep.subr.bf16.mxu0 %v924
        %970 = vmatpush1.bf16.msra.mxu0 %v923
        %971 = vmatprep.subr.bf16.mxu0 0
        %972 = vmatpush2.bf16.msra.mxu0 0
        %973 = vmatprep.subr.bf16.mxu0 0
        %974 = vmatpush2.bf16.msra.mxu0 0
        %975 = vmatprep.subr.bf16.mxu0 0
        %976 = vmatpush2.bf16.msra.mxu0 0
        %977 = vmatprep.subr.bf16.mxu0 0
        %978 = vmatpush2.bf16.msra.mxu0 0
        %979 = vmatprep.subr.bf16.mxu0 0
        %980 = vmatpush2.bf16.msra.mxu0 0
        %981 = vmatprep.subr.bf16.mxu0 0
        %982 = vmatpush2.bf16.msra.mxu0 0
        %983 = vmatprep.subr.bf16.mxu0 0
        %984 = vmatpush2.bf16.msra.mxu0 0
        %985 = vmatprep.subr.bf16.mxu0 0
        %986 = vmatpush2.bf16.msra.mxu0 0
        %987 = vmatprep.mubr.bf16.mxu0 0
        %988 = vmatmul.mubr.bf16.gmra.mxu0 %v858
        %v989 = vpop.f32.mrf.mxu0
        %v990 = vadd.f32 0.0, %v989
        %v991 = vpop.f32.mrf.mxu0
        %v992 = vadd.f32 0.0, %v991
        %v993 = vpop.f32.mrf.mxu0
        %v994 = vpop.f32.mrf.mxu0
        %995 = vdwg.mxu0
        %v996 = vadd.f32 %v856, %v990
        %v997 = vadd.f32 %v857, %v992
        %998 = vst [vmem:[#allocation2] sm:$0xff] %v996
        %999 = vst [vmem:[#allocation2 + $0x8] sm:$0xff] %v997
        %p1000 = scmp.eq.s32.totalorder %s42, 1
        // Predicated region
        $region114: #{fmri_encoder_cross_forward.11} parent=88 // pred_check
          %p1001 = pneg %p1000
        $region115: #{fmri_encoder_cross_forward.11} parent=88 // pred_check_branch
          %1003 = sbr.rel (%p1001) target = $region117
        $region116: #{fmri_encoder_cross_forward.11} parent=88 // pred_region
          %v1004 = vld [vmem:[#allocation2] sm:$0xff]
          %v1005 = vld [vmem:[#allocation2 + $0x8] sm:$0xff]
          %v1006 = vld [vmem:[%s590] sm:$0x3]
          %v1008 = vlaneseq
          %v1009 = vshrl.u32 %v1008, 7
          %v1010 = vsub.s32 0, %v1009
          %v1011 = vrot.slane %v1006, %v1010
          %v1012 = vlaneseq
          %v1013 = vshrl.u32 %v1012, 7
          %v1014 = vsub.s32 1, %v1013
          %v1015 = vrot.slane %v1006, %v1014
          %v1018 = vadd.f32 %v1004, %v1011
          %v1019 = vadd.f32 %v1005, %v1015
          %v1020 = vld [vmem:[%s599] sm:$0x3]
          %v1021 = vld [vmem:[%s608] sm:$0x3]
          %v1022 = vadd.f32 %v1018, %v1019
          %1023 = vadd.xlane.f32.xlu0 %v1022
          %v1024 = vpop.xlane.xlu0 %1023
          %v1025 = vrcp.pop 256.0
          %v1026 = vmul.f32 %v1024, %v1025
          %v1027 = vsub.f32 %v1018, %v1026
          %v1028 = vsub.f32 %v1019, %v1026
          %v1029 = vmul.f32 %v1027, %v1027
          %v1030 = vmul.f32 %v1028, %v1028
          %v1031 = vadd.f32 %v1029, %v1030
          %1032 = vadd.xlane.f32.xlu0 %v1031
          %v1033 = vpop.xlane.xlu0 %1032
          %v1034 = vmul.f32 %v1033, %v1025
          %v1035 = vadd.f32 %v1034, 1e-05
          %v1036 = vrsqrt.pop %v1035
          %v1037 = vmul.f32 %v1027, %v1036
          %v1038 = vmul.f32 %v1028, %v1036
          %v1040 = vlaneseq
          %v1041 = vshrl.u32 %v1040, 7
          %v1042 = vsub.s32 0, %v1041
          %v1043 = vrot.slane %v1020, %v1042
          %v1044 = vlaneseq
          %v1045 = vshrl.u32 %v1044, 7
          %v1046 = vsub.s32 1, %v1045
          %v1047 = vrot.slane %v1020, %v1046
          %v1050 = vmul.f32 %v1037, %v1043
          %v1051 = vmul.f32 %v1038, %v1047
          %v1053 = vlaneseq
          %v1054 = vshrl.u32 %v1053, 7
          %v1055 = vsub.s32 0, %v1054
          %v1056 = vrot.slane %v1021, %v1055
          %v1057 = vlaneseq
          %v1058 = vshrl.u32 %v1057, 7
          %v1059 = vsub.s32 1, %v1058
          %v1060 = vrot.slane %v1021, %v1059
          %v1063 = vadd.f32 %v1050, %v1056
          %v1064 = vadd.f32 %v1051, %v1060
          %v1065 = vmul.f32 %v1063, %v1063
          %v1066 = vmul.f32 %v1064, %v1064
          %v1067 = vmul.f32 %v1063, %v1065
          %v1068 = vmul.f32 %v1064, %v1066
          %v1069 = vmul.f32 %v1067, 0.044715
          %v1070 = vmul.f32 %v1068, 0.044715
          %v1071 = vadd.f32 %v1063, %v1069
          %v1072 = vadd.f32 %v1064, %v1070
          %v1073 = vmul.f32 %v1071, 0.7978846
          %v1074 = vmul.f32 %v1072, 0.7978846
          %v1075 = vtanh.pop %v1073
          %v1076 = vtanh.pop %v1074
          %v1077 = vadd.f32 %v1075, 1.0
          %v1078 = vadd.f32 %v1076, 1.0
          %v1079 = vmul.f32 %v1077, 0.5
          %v1080 = vmul.f32 %v1078, 0.5
          %v1081 = vmul.f32 %v1063, %v1079
          %v1082 = vmul.f32 %v1064, %v1080
          %v1083 = vpack.c.bf16 %v1081, %v1081
          %v1084 = vpack.c.bf16 %v1082, %v1082
          %v1087 = vunpack.c.l.b16 %v1083
          %v1088 = vunpack.c.l.b16 %v1084
          %v1089 = vpack.c.b16 %v1088, %v1087
          %1091 = vst [vmem:[%s733] sm:$0xff] %v1089
        $region117: #{fmri_encoder_cross_forward.11} parent=88 // pred_fallthru
          _
        %p1092 = scmp.lt.s32.totalorder %s40, 1
        %s1093 = scalar_select %p1092, %s40, 1
        %p1094 = scmp.lt.s32.totalorder %s41, 0
        %s1095 = scalar_select %p1094, %s41, 0
        %s1096 = smul.addr %s1095, 2
        %s1097 = smul.addr %s1093, 2
        %s1098 = sadd.s32 %s1096, %s1097
        %s1099 = smul.addr %s1098, 4
        %s1100 = scalar_lea.vmem %s9, %s1099
        // Predicated region
        $region118: #{fmri_encoder_cross_forward.11} parent=88 // pred_check
          %p1101 = pneg %p306
        $region119: #{fmri_encoder_cross_forward.11} parent=88 // pred_check_branch
          %1103 = sbr.rel (%p1101) target = $region121
        $region120: #{fmri_encoder_cross_forward.11} parent=88 // pred_region
          _
        $region121: #{fmri_encoder_cross_forward.11} parent=88 // pred_fallthru
          _
      $region89: #{fmri_encoder_cross_forward.11} parent=5 // pred_fallthru
        _
      %p1104 = scmp.le.s32.totalorder 2, %s30
      // Predicated region
      $region122: #{fmri_encoder_cross_forward.11} parent=5 // pred_check
        %p1105 = pneg %p1104
      $region123: #{fmri_encoder_cross_forward.11} parent=5 // pred_check_branch
        %1107 = sbr.rel (%p1105) target = $region125
      $region124: #{fmri_encoder_cross_forward.11} parent=5 // pred_region
        %s1108 = ssub.s32 %s30, 2
        // Predicated region
        $region126: #{fmri_encoder_cross_forward.11} parent=124 // pred_check
          %p1109 = pneg %p312
        $region127: #{fmri_encoder_cross_forward.11} parent=124 // pred_check_branch
          %1111 = sbr.rel (%p1109) target = $region129
        $region128: #{fmri_encoder_cross_forward.11} parent=124 // pred_region
          %p1112 = scmp.lt.s32.totalorder %s43, 1
          %s1113 = scalar_select %p1112, %s43, 1
          %p1114 = scmp.lt.s32.totalorder %s44, 0
          %s1115 = scalar_select %p1114, %s44, 0
          %s1116 = smul.addr %s1115, 2
          %s1117 = smul.addr %s1113, 2
          %s1118 = sadd.s32 %s1116, %s1117
          %s1119 = smul.addr %s1118, 4
          %s1120 = scalar_lea.vmem %s9, %s1119
        $region129: #{fmri_encoder_cross_forward.11} parent=124 // pred_fallthru
          _
      $region125: #{fmri_encoder_cross_forward.11} parent=5 // pred_fallthru
        _
    $region6: #{fmri_encoder_cross_forward.11} parent=1 // loop_footer
      %s34 = sadd.s32 1, %s30
    $region7: #{fmri_encoder_cross_forward.11} parent=1 // loop_footer_branch
      %29 = sbr.rel target = $region3
    $region8: #{fmri_encoder_cross_forward.11} parent=1 // loop_exit
      _
    %1121 = vsyncpa [#allocation7], 1
    %s1122 = scalar_lea.sflag [#allocation7], 1
    %1123 = vsyncpa %s1122, 1
    %1124 = vsyncpa [#allocation9], 1
    %s1125 = scalar_lea.sflag [#allocation9], 1
    %1126 = vsyncpa %s1125, 1
    %1127 = vsyncpa [#allocation12], 1
    %s1128 = scalar_lea.sflag [#allocation12], 1
    %1129 = vsyncpa %s1128, 1

// kernel: fmri_encoder_cross_forward.13
$region0: #{fmri_encoder_cross_forward.13}
  #allocation0 [shape = 'u32[]', space=smem, size = 0x4, offset = 0x4, fixed_abs, tag = 'smem constant byte address 0x4 - core index']
  #allocation1 [shape = 'u32[144,128]{1,0:T(1,128)}', space=vmem, size = 0x12000, scoped, tag = 'internal scratch']
  #allocation2 [shape = 'f32[8,256]{1,0:T(8,128)}', space=vmem, size = 0x2000, scoped, tag = 'scratch operand']
  #allocation3 [shape = 's32[1]{0}', space=sflag, size = 0x4, scoped, tag = 'scoped memory for fmri_encoder_cross_forward.13']
  #allocation4 [shape = 's32[1]{0:T(128)S(6)}', space=smem, size = 0x200, scoped, tag = 'prefetched SMEM operand 0']
  %s0 = inlined_call_operand.<no memory space> [shape: s32[1], index: 0, kind: input, shape index: {}]
  %s1 = inlined_call_operand.vmem [shape: bf16[1,8,256], index: 1, kind: input, shape index: {}]
  %s2 = inlined_call_operand.vmem [shape: bf16[2,256,256], index: 2, kind: input, shape index: {}]
  %s3 = inlined_call_operand.vmem [shape: f32[2,1,256], index: 3, kind: input, shape index: {}]
  %s4 = inlined_call_operand.hbm [shape: f32[2,1,256], index: 4, kind: input, shape index: {}]
  %s5 = inlined_call_operand.hbm [shape: f32[2,1,256], index: 5, kind: input, shape index: {}]
  %s6 = inlined_call_operand.vmem [shape: bf16[2,256,128], index: 6, kind: input, shape index: {}]
  %s7 = inlined_call_operand.hbm [shape: f32[2,1,128], index: 7, kind: input, shape index: {}]
  %s8 = inlined_call_operand.vmem [shape: bf16[2,128,256], index: 8, kind: input, shape index: {}]
  %s9 = inlined_call_operand.hbm [shape: f32[2,1,256], index: 9, kind: input, shape index: {}]
  %s10 = inlined_call_operand.vmem [shape: bf16[1,8,256], index: 10, kind: output, shape index: {}]
  %s11 = sld [smem:[#allocation0]]
  $region93: #{fmri_encoder_cross_forward.13} parent=0
    _
  %s13 = ssub.s32 1, %s11
  %s14 = scalar_select 0, %s13, %s11
  %15 = sst [smem:[#allocation4]] %s0
  $region1: #{fmri_encoder_cross_forward.13} parent=0
    #allocation5 [shape = 'u8[1024]{0}', space=vmem, size = 0x400, scoped, tag = 'input window, operand 4, single buffered']
    #allocation6 [shape = 's32[2]{0}', space=sflag, size = 0x8, scoped, tag = 'scoped memory for fmri_encoder_cross_forward.13']
    #allocation7 [shape = 'u8[1024]{0}', space=vmem, size = 0x400, scoped, tag = 'input window, operand 5, single buffered']
    #allocation8 [shape = 's32[1]{0}', space=sflag, size = 0x4, scoped, tag = 'scoped memory for fmri_encoder_cross_forward.13']
    #allocation9 [shape = 'u8[512]{0}', space=vmem, size = 0x400, scoped, tag = 'input window, operand 7, single buffered']
    #allocation10 [shape = 'u8[1024]{0}', space=vmem, size = 0x400, scoped, tag = 'input window, operand 9, single buffered']
    #allocation11 [shape = 's32[1]{0}', space=sflag, size = 0x4, scoped, tag = 'scoped memory for fmri_encoder_cross_forward.13']
    %16 = vsyncpa [#allocation6], 0
    %17 = vsyncpa [#allocation8], 0
    %18 = vsyncpa [#allocation11], 0
    loop: start=0, step=1, limit=4
    $region2: #{fmri_encoder_cross_forward.13} parent=1 // loop_pre_header
      _
    $region3: #{fmri_encoder_cross_forward.13} parent=1 // loop_header
      %s20 = sphi 0, %s24
      %p21 = scmp.ge.s32.totalorder %s20, 4
      %s27 = sphi 0, %s46
      %s28 = sphi 0, %s42
      %s29 = sphi 0, %s38
      %s30 = sphi 0, %s27
      %s31 = sphi 0, %s28
      %s32 = sphi 0, %s29
      %s33 = sphi 0, %s30
      %s34 = sphi 0, %s31
      %s35 = sphi 0, %s32
      %s53 = sphi 0, %s55
      %s56 = sphi 0, %s53
      %s57 = sphi 0, %s56
      %s73 = sphi 0, %s57
      %s83 = sphi 0, %s85
      %s86 = sphi 0, %s83
      %s87 = sphi 0, %s86
      %s103 = sphi 0, %s87
      %s111 = sphi 0, %s113
      %s114 = sphi 0, %s111
      %s115 = sphi 0, %s114
      %s131 = sphi 0, %s115
      %s139 = sphi 0, %s141
      %s142 = sphi 0, %s139
      %s143 = sphi 0, %s142
      %s159 = sphi 0, %s143
      %s167 = sphi 0, %s169
      %s170 = sphi 0, %s167
      %s171 = sphi 0, %s170
      %s187 = sphi 0, %s171
      %s195 = sphi 0, %s197
      %s198 = sphi 0, %s195
      %s199 = sphi 0, %s198
      %s215 = sphi 0, %s199
      %s223 = sphi 0, %s225
      %s226 = sphi 0, %s223
      %s227 = sphi 0, %s226
      %s243 = sphi 0, %s227
      %s251 = sphi 0, %s253
      %s254 = sphi 0, %s251
      %s255 = sphi 0, %s254
      %s271 = sphi 0, %s255
      %s279 = sphi 0, %s281
      %s282 = sphi 0, %s279
      %s283 = sphi 0, %s282
      %s299 = sphi 0, %s283
      %s307 = sphi 0, %s309
      %s310 = sphi 0, %s307
      %s311 = sphi 0, %s310
      %s327 = sphi 0, %s311
    $region4: #{fmri_encoder_cross_forward.13} parent=1 // loop_header_branch
      %23 = sbr.rel (%p21) target = $region8
    $region5: #{fmri_encoder_cross_forward.13} parent=1 // loop_body
      %s25 = ssub.s32 %s20, 1
      %s26 = ssub.s32 %s20, 2
      %s36 = sadd.s32 1, %s29
      %p37 = scmp.ge.s32.totalorder %s36, 2
      %s38 = scalar_select %p37, 0, %s36
      %s39 = sadd.s32 1, %s28
      %s40 = scalar_select %p37, %s39, %s28
      %p41 = scmp.ge.s32.totalorder %s40, 1
      %s42 = scalar_select %p41, 0, %s40
      %s43 = sadd.s32 1, %s27
      %s44 = scalar_select %p41, %s43, %s27
      %p45 = scmp.ge.s32.totalorder %s44, 1
      %s46 = scalar_select %p45, 0, %s44
      %s47 = ssub.s32 %s27, %s46
      %s48 = ssub.s32 %s28, %s42
      %s49 = sor.u32 %s47, %s48
      %s50 = ssub.s32 %s29, %s38
      %s51 = sor.u32 %s49, %s50
      %p52 = scmp.eq.s32.totalorder %s51, 0
      %s54 = sadd.s32 %s53, 1
      %s55 = scalar_select %p52, %s53, %s54
      %p58 = pneg %p52
      %p59 = scmp.eq.s32.totalorder %s20, 1
      %p60 = por %p58, %p59
      %p61 = scmp.ne.s32.totalorder %s53, %s56
      %p62 = scmp.eq.s32.totalorder %s20, 0
      %p63 = por %p61, %p62
      %p64 = scmp.ne.s32.totalorder %s53, %s56
      %p65 = scmp.eq.s32.totalorder %s25, 1
      %p66 = por %p64, %p65
      %p67 = scmp.ne.s32.totalorder %s56, %s57
      %p68 = scmp.eq.s32.totalorder %s25, 0
      %p69 = por %p67, %p68
      %p70 = scmp.ne.s32.totalorder %s56, %s57
      %p71 = scmp.eq.s32.totalorder %s26, 1
      %p72 = por %p70, %p71
      %p74 = scmp.ne.s32.totalorder %s57, %s73
      %p75 = scmp.eq.s32.totalorder %s26, 0
      %p76 = por %p74, %p75
      %s77 = sld [smem:[#allocation4 + %s27]]
      %s78 = sld [smem:[#allocation4 + %s46]]
      %s79 = ssub.s32 %s77, %s78
      %s80 = ssub.s32 %s29, %s38
      %s81 = sor.u32 %s79, %s80
      %p82 = scmp.eq.s32.totalorder %s81, 0
      %s84 = sadd.s32 %s83, 1
      %s85 = scalar_select %p82, %s83, %s84
      %p88 = pneg %p82
      %p89 = scmp.eq.s32.totalorder %s20, 1
      %p90 = por %p88, %p89
      %p91 = scmp.ne.s32.totalorder %s83, %s86
      %p92 = scmp.eq.s32.totalorder %s20, 0
      %p93 = por %p91, %p92
      %p94 = scmp.ne.s32.totalorder %s83, %s86
      %p95 = scmp.eq.s32.totalorder %s25, 1
      %p96 = por %p94, %p95
      %p97 = scmp.ne.s32.totalorder %s86, %s87
      %p98 = scmp.eq.s32.totalorder %s25, 0
      %p99 = por %p97, %p98
      %p100 = scmp.ne.s32.totalorder %s86, %s87
      %p101 = scmp.eq.s32.totalorder %s26, 1
      %p102 = por %p100, %p101
      %p104 = scmp.ne.s32.totalorder %s87, %s103
      %p105 = scmp.eq.s32.totalorder %s26, 0
      %p106 = por %p104, %p105
      %s107 = sld [smem:[#allocation4 + %s27]]
      %s108 = sld [smem:[#allocation4 + %s46]]
      %s109 = ssub.s32 %s107, %s108
      %p110 = scmp.eq.s32.totalorder %s109, 0
      %s112 = sadd.s32 %s111, 1
      %s113 = scalar_select %p110, %s111, %s112
      %p116 = pneg %p110
      %p117 = scmp.eq.s32.totalorder %s20, 1
      %p118 = por %p116, %p117
      %p119 = scmp.ne.s32.totalorder %s111, %s114
      %p120 = scmp.eq.s32.totalorder %s20, 0
      %p121 = por %p119, %p120
      %p122 = scmp.ne.s32.totalorder %s111, %s114
      %p123 = scmp.eq.s32.totalorder %s25, 1
      %p124 = por %p122, %p123
      %p125 = scmp.ne.s32.totalorder %s114, %s115
      %p126 = scmp.eq.s32.totalorder %s25, 0
      %p127 = por %p125, %p126
      %p128 = scmp.ne.s32.totalorder %s114, %s115
      %p129 = scmp.eq.s32.totalorder %s26, 1
      %p130 = por %p128, %p129
      %p132 = scmp.ne.s32.totalorder %s115, %s131
      %p133 = scmp.eq.s32.totalorder %s26, 0
      %p134 = por %p132, %p133
      %s135 = sld [smem:[#allocation4 + %s27]]
      %s136 = sld [smem:[#allocation4 + %s46]]
      %s137 = ssub.s32 %s135, %s136
      %p138 = scmp.eq.s32.totalorder %s137, 0
      %s140 = sadd.s32 %s139, 1
      %s141 = scalar_select %p138, %s139, %s140
      %p144 = pneg %p138
      %p145 = scmp.eq.s32.totalorder %s20, 1
      %p146 = por %p144, %p145
      %p147 = scmp.ne.s32.totalorder %s139, %s142
      %p148 = scmp.eq.s32.totalorder %s20, 0
      %p149 = por %p147, %p148
      %p150 = scmp.ne.s32.totalorder %s139, %s142
      %p151 = scmp.eq.s32.totalorder %s25, 1
      %p152 = por %p150, %p151
      %p153 = scmp.ne.s32.totalorder %s142, %s143
      %p154 = scmp.eq.s32.totalorder %s25, 0
      %p155 = por %p153, %p154
      %p156 = scmp.ne.s32.totalorder %s142, %s143
      %p157 = scmp.eq.s32.totalorder %s26, 1
      %p158 = por %p156, %p157
      %p160 = scmp.ne.s32.totalorder %s143, %s159
      %p161 = scmp.eq.s32.totalorder %s26, 0
      %p162 = por %p160, %p161
      %s163 = sld [smem:[#allocation4 + %s27]]
      %s164 = sld [smem:[#allocation4 + %s46]]
      %s165 = ssub.s32 %s163, %s164
      %p166 = scmp.eq.s32.totalorder %s165, 0
      %s168 = sadd.s32 %s167, 1
      %s169 = scalar_select %p166, %s167, %s168
      %p172 = pneg %p166
      %p173 = scmp.eq.s32.totalorder %s20, 1
      %p174 = por %p172, %p173
      %p175 = scmp.ne.s32.totalorder %s167, %s170
      %p176 = scmp.eq.s32.totalorder %s20, 0
      %p177 = por %p175, %p176
      %p178 = scmp.ne.s32.totalorder %s167, %s170
      %p179 = scmp.eq.s32.totalorder %s25, 1
      %p180 = por %p178, %p179
      %p181 = scmp.ne.s32.totalorder %s170, %s171
      %p182 = scmp.eq.s32.totalorder %s25, 0
      %p183 = por %p181, %p182
      %p184 = scmp.ne.s32.totalorder %s170, %s171
      %p185 = scmp.eq.s32.totalorder %s26, 1
      %p186 = por %p184, %p185
      %p188 = scmp.ne.s32.totalorder %s171, %s187
      %p189 = scmp.eq.s32.totalorder %s26, 0
      %p190 = por %p188, %p189
      %s191 = sld [smem:[#allocation4 + %s27]]
      %s192 = sld [smem:[#allocation4 + %s46]]
      %s193 = ssub.s32 %s191, %s192
      %p194 = scmp.eq.s32.totalorder %s193, 0
      %s196 = sadd.s32 %s195, 1
      %s197 = scalar_select %p194, %s195, %s196
      %p200 = pneg %p194
      %p201 = scmp.eq.s32.totalorder %s20, 1
      %p202 = por %p200, %p201
      %p203 = scmp.ne.s32.totalorder %s195, %s198
      %p204 = scmp.eq.s32.totalorder %s20, 0
      %p205 = por %p203, %p204
      %p206 = scmp.ne.s32.totalorder %s195, %s198
      %p207 = scmp.eq.s32.totalorder %s25, 1
      %p208 = por %p206, %p207
      %p209 = scmp.ne.s32.totalorder %s198, %s199
      %p210 = scmp.eq.s32.totalorder %s25, 0
      %p211 = por %p209, %p210
      %p212 = scmp.ne.s32.totalorder %s198, %s199
      %p213 = scmp.eq.s32.totalorder %s26, 1
      %p214 = por %p212, %p213
      %p216 = scmp.ne.s32.totalorder %s199, %s215
      %p217 = scmp.eq.s32.totalorder %s26, 0
      %p218 = por %p216, %p217
      %s219 = sld [smem:[#allocation4 + %s27]]
      %s220 = sld [smem:[#allocation4 + %s46]]
      %s221 = ssub.s32 %s219, %s220
      %p222 = scmp.eq.s32.totalorder %s221, 0
      %s224 = sadd.s32 %s223, 1
      %s225 = scalar_select %p222, %s223, %s224
      %p228 = pneg %p222
      %p229 = scmp.eq.s32.totalorder %s20, 1
      %p230 = por %p228, %p229
      %p231 = scmp.ne.s32.totalorder %s223, %s226
      %p232 = scmp.eq.s32.totalorder %s20, 0
      %p233 = por %p231, %p232
      %p234 = scmp.ne.s32.totalorder %s223, %s226
      %p235 = scmp.eq.s32.totalorder %s25, 1
      %p236 = por %p234, %p235
      %p237 = scmp.ne.s32.totalorder %s226, %s227
      %p238 = scmp.eq.s32.totalorder %s25, 0
      %p239 = por %p237, %p238
      %p240 = scmp.ne.s32.totalorder %s226, %s227
      %p241 = scmp.eq.s32.totalorder %s26, 1
      %p242 = por %p240, %p241
      %p244 = scmp.ne.s32.totalorder %s227, %s243
      %p245 = scmp.eq.s32.totalorder %s26, 0
      %p246 = por %p244, %p245
      %s247 = sld [smem:[#allocation4 + %s27]]
      %s248 = sld [smem:[#allocation4 + %s46]]
      %s249 = ssub.s32 %s247, %s248
      %p250 = scmp.eq.s32.totalorder %s249, 0
      %s252 = sadd.s32 %s251, 1
      %s253 = scalar_select %p250, %s251, %s252
      %p256 = pneg %p250
      %p257 = scmp.eq.s32.totalorder %s20, 1
      %p258 = por %p256, %p257
      %p259 = scmp.ne.s32.totalorder %s251, %s254
      %p260 = scmp.eq.s32.totalorder %s20, 0
      %p261 = por %p259, %p260
      %p262 = scmp.ne.s32.totalorder %s251, %s254
      %p263 = scmp.eq.s32.totalorder %s25, 1
      %p264 = por %p262, %p263
      %p265 = scmp.ne.s32.totalorder %s254, %s255
      %p266 = scmp.eq.s32.totalorder %s25, 0
      %p267 = por %p265, %p266
      %p268 = scmp.ne.s32.totalorder %s254, %s255
      %p269 = scmp.eq.s32.totalorder %s26, 1
      %p270 = por %p268, %p269
      %p272 = scmp.ne.s32.totalorder %s255, %s271
      %p273 = scmp.eq.s32.totalorder %s26, 0
      %p274 = por %p272, %p273
      %s275 = sld [smem:[#allocation4 + %s27]]
      %s276 = sld [smem:[#allocation4 + %s46]]
      %s277 = ssub.s32 %s275, %s276
      %p278 = scmp.eq.s32.totalorder %s277, 0
      %s280 = sadd.s32 %s279, 1
      %s281 = scalar_select %p278, %s279, %s280
      %p284 = pneg %p278
      %p285 = scmp.eq.s32.totalorder %s20, 1
      %p286 = por %p284, %p285
      %p287 = scmp.ne.s32.totalorder %s279, %s282
      %p288 = scmp.eq.s32.totalorder %s20, 0
      %p289 = por %p287, %p288
      %p290 = scmp.ne.s32.totalorder %s279, %s282
      %p291 = scmp.eq.s32.totalorder %s25, 1
      %p292 = por %p290, %p291
      %p293 = scmp.ne.s32.totalorder %s282, %s283
      %p294 = scmp.eq.s32.totalorder %s25, 0
      %p295 = por %p293, %p294
      %p296 = scmp.ne.s32.totalorder %s282, %s283
      %p297 = scmp.eq.s32.totalorder %s26, 1
      %p298 = por %p296, %p297
      %p300 = scmp.ne.s32.totalorder %s283, %s299
      %p301 = scmp.eq.s32.totalorder %s26, 0
      %p302 = por %p300, %p301
      %s303 = ssub.s32 %s27, %s46
      %s304 = ssub.s32 %s28, %s42
      %s305 = sor.u32 %s303, %s304
      %p306 = scmp.eq.s32.totalorder %s305, 0
      %s308 = sadd.s32 %s307, 1
      %s309 = scalar_select %p306, %s307, %s308
      %p312 = pneg %p306
      %p313 = scmp.eq.s32.totalorder %s20, 1
      %p314 = por %p312, %p313
      %p315 = scmp.ne.s32.totalorder %s307, %s310
      %p316 = scmp.eq.s32.totalorder %s20, 0
      %p317 = por %p315, %p316
      %p318 = scmp.ne.s32.totalorder %s307, %s310
      %p319 = scmp.eq.s32.totalorder %s25, 1
      %p320 = por %p318, %p319
      %p321 = scmp.ne.s32.totalorder %s310, %s311
      %p322 = scmp.eq.s32.totalorder %s25, 0
      %p323 = por %p321, %p322
      %p324 = scmp.ne.s32.totalorder %s310, %s311
      %p325 = scmp.eq.s32.totalorder %s26, 1
      %p326 = por %p324, %p325
      %p328 = scmp.ne.s32.totalorder %s311, %s327
      %p329 = scmp.eq.s32.totalorder %s26, 0
      %p330 = por %p328, %p329
      %p331 = scmp.le.s32.totalorder 1, %s20
      %p332 = scmp.lt.s32.totalorder %s20, 3
      %p333 = pnand %p331, %p332
      %p334 = pneg %p333
      // Predicated region
      $region9: #{fmri_encoder_cross_forward.13} parent=5 // pred_check
        _
      $region10: #{fmri_encoder_cross_forward.13} parent=5 // pred_check_branch
        %336 = sbr.rel (%p333) target = $region12
      $region11: #{fmri_encoder_cross_forward.13} parent=5 // pred_region
        %s337 = ssub.s32 %s20, 1
        // Predicated region
        $region13: #{fmri_encoder_cross_forward.13} parent=11 // pred_check
          %p338 = pneg %p127
        $region14: #{fmri_encoder_cross_forward.13} parent=11 // pred_check_branch
          %340 = sbr.rel (%p338) target = $region16
        $region15: #{fmri_encoder_cross_forward.13} parent=11 // pred_region
          %s341 = sld [smem:[#allocation4 + %s30]]
          %p342 = scmp.lt.s32.totalorder %s341, 1
          %s343 = scalar_select %p342, %s341, 1
          %s344 = smul.addr %s343, 2
          %s345 = scalar_lea.vmem %s3, %s344
          %s346 = sld [smem:[#allocation4 + %s30]]
        $region16: #{fmri_encoder_cross_forward.13} parent=11 // pred_fallthru
          _
        // Predicated region
        $region17: #{fmri_encoder_cross_forward.13} parent=11 // pred_check
          %p347 = pneg %p155
        $region18: #{fmri_encoder_cross_forward.13} parent=11 // pred_check_branch
          %349 = sbr.rel (%p347) target = $region20
        $region19: #{fmri_encoder_cross_forward.13} parent=11 // pred_region
          %s350 = sld [smem:[#allocation4 + %s30]]
          %s352 = ssub.s32 32, 32
          %353 = vsyncadd [#allocation6], %s352
          %s354 = smul.addr %s350, 2
          %s355 = smul.addr %s354, 16
          %s356 = scalar_lea.hbm %s4, %s355
          %s358 = sshll.u32 [#allocation5], 4
          %s359 = int_to_ptr.vmem [resolvable:$true] %s358
          %361 = dma.hbm_to_vmem [thread:$0]  %s356, 32, %s359, [#allocation6]
        $region20: #{fmri_encoder_cross_forward.13} parent=11 // pred_fallthru
          _
        // Predicated region
        $region21: #{fmri_encoder_cross_forward.13} parent=11 // pred_check
          %p362 = pneg %p183
        $region22: #{fmri_encoder_cross_forward.13} parent=11 // pred_check_branch
          %364 = sbr.rel (%p362) target = $region24
        $region23: #{fmri_encoder_cross_forward.13} parent=11 // pred_region
          %s365 = sld [smem:[#allocation4 + %s30]]
          %s367 = ssub.s32 32, 32
          %368 = vsyncadd [#allocation8], %s367
          %s369 = smul.addr %s365, 2
          %s370 = smul.addr %s369, 16
          %s371 = scalar_lea.hbm %s5, %s370
          %s373 = sshll.u32 [#allocation7], 4
          %s374 = int_to_ptr.vmem [resolvable:$true] %s373
          %376 = dma.hbm_to_vmem [thread:$0]  %s371, 32, %s374, [#allocation8]
        $region24: #{fmri_encoder_cross_forward.13} parent=11 // pred_fallthru
          _
        // Predicated region
        $region25: #{fmri_encoder_cross_forward.13} parent=11 // pred_check
          %p377 = pneg %p211
        $region26: #{fmri_encoder_cross_forward.13} parent=11 // pred_check_branch
          %379 = sbr.rel (%p377) target = $region28
        $region27: #{fmri_encoder_cross_forward.13} parent=11 // pred_region
          %s380 = sld [smem:[#allocation4 + %s30]]
          %p381 = scmp.lt.s32.totalorder %s380, 1
          %s382 = scalar_select %p381, %s380, 1
          %s383 = smul.addr %s382, 32
          %s384 = smul.addr %s383, 4
          %s385 = scalar_lea.vmem %s6, %s384
          %s386 = sld [smem:[#allocation4 + %s30]]
        $region28: #{fmri_encoder_cross_forward.13} parent=11 // pred_fallthru
          _
        // Predicated region
        $region29: #{fmri_encoder_cross_forward.13} parent=11 // pred_check
          %p387 = pneg %p239
        $region30: #{fmri_encoder_cross_forward.13} parent=11 // pred_check_branch
          %389 = sbr.rel (%p387) target = $region32
        $region31: #{fmri_encoder_cross_forward.13} parent=11 // pred_region
          %s390 = sld [smem:[#allocation4 + %s30]]
          %s392 = ssub.s32 16, 16
          %393 = vsyncadd [#allocation8], %s392
          %s394 = smul.addr %s390, 16
          %s395 = scalar_lea.hbm %s7, %s394
          %s397 = sshll.u32 [#allocation9], 4
          %s398 = int_to_ptr.vmem [resolvable:$true] %s397
          %400 = dma.hbm_to_vmem [thread:$0]  %s395, 16, %s398, [#allocation8]
        $region32: #{fmri_encoder_cross_forward.13} parent=11 // pred_fallthru
          _
        // Predicated region
        $region33: #{fmri_encoder_cross_forward.13} parent=11 // pred_check
          %p401 = pneg %p267
        $region34: #{fmri_encoder_cross_forward.13} parent=11 // pred_check_branch
          %403 = sbr.rel (%p401) target = $region36
        $region35: #{fmri_encoder_cross_forward.13} parent=11 // pred_region
          %s404 = sld [smem:[#allocation4 + %s30]]
          %p405 = scmp.lt.s32.totalorder %s404, 1
          %s406 = scalar_select %p405, %s404, 1
          %s407 = smul.addr %s406, 32
          %s408 = smul.addr %s407, 4
          %s409 = scalar_lea.vmem %s8, %s408
          %s410 = sld [smem:[#allocation4 + %s30]]
        $region36: #{fmri_encoder_cross_forward.13} parent=11 // pred_fallthru
          _
        // Predicated region
        $region37: #{fmri_encoder_cross_forward.13} parent=11 // pred_check
          %p411 = pneg %p295
        $region38: #{fmri_encoder_cross_forward.13} parent=11 // pred_check_branch
          %413 = sbr.rel (%p411) target = $region40
        $region39: #{fmri_encoder_cross_forward.13} parent=11 // pred_region
          %s414 = sld [smem:[#allocation4 + %s30]]
          %s416 = ssub.s32 32, 32
          %417 = vsyncadd [#allocation11], %s416
          %s418 = smul.addr %s414, 2
          %s419 = smul.addr %s418, 16
          %s420 = scalar_lea.hbm %s9, %s419
          %s422 = sshll.u32 [#allocation10], 4
          %s423 = int_to_ptr.vmem [resolvable:$true] %s422
          %425 = dma.hbm_to_vmem [thread:$0]  %s420, 32, %s423, [#allocation11]
        $region40: #{fmri_encoder_cross_forward.13} parent=11 // pred_fallthru
          _
      $region12: #{fmri_encoder_cross_forward.13} parent=5 // pred_fallthru
        _
      %p426 = scmp.lt.s32.totalorder %s20, 2
      // Predicated region
      $region41: #{fmri_encoder_cross_forward.13} parent=5 // pred_check
        %p427 = pneg %p426
      $region42: #{fmri_encoder_cross_forward.13} parent=5 // pred_check_branch
        %429 = sbr.rel (%p427) target = $region44
      $region43: #{fmri_encoder_cross_forward.13} parent=5 // pred_region
        // Predicated region
        $region45: #{fmri_encoder_cross_forward.13} parent=43 // pred_check
          %p430 = pneg %p63
        $region46: #{fmri_encoder_cross_forward.13} parent=43 // pred_check_branch
          %432 = sbr.rel (%p430) target = $region48
        $region47: #{fmri_encoder_cross_forward.13} parent=43 // pred_region
          %p433 = scmp.lt.s32.totalorder %s27, 0
          %s434 = scalar_select %p433, %s27, 0
          %p435 = scmp.lt.s32.totalorder %s28, 0
          %s436 = scalar_select %p435, %s28, 0
          %p437 = scmp.lt.s32.totalorder %s29, 1
          %s438 = scalar_select %p437, %s29, 1
          %s439 = smul.addr %s436, 2
          %s440 = sadd.s32 %s438, %s439
          %s441 = smul.addr %s434, 2
          %s442 = sadd.s32 %s440, %s441
          %s443 = smul.addr %s442, 4
          %s444 = scalar_lea.vmem %s1, %s443
        $region48: #{fmri_encoder_cross_forward.13} parent=43 // pred_fallthru
          _
        // Predicated region
        $region49: #{fmri_encoder_cross_forward.13} parent=43 // pred_check
          %p445 = pneg %p93
        $region50: #{fmri_encoder_cross_forward.13} parent=43 // pred_check_branch
          %447 = sbr.rel (%p445) target = $region52
        $region51: #{fmri_encoder_cross_forward.13} parent=43 // pred_region
          %s448 = sld [smem:[#allocation4 + %s27]]
          %s449 = smul.u32 16, %s29
          %p450 = scmp.lt.s32.totalorder %s448, 1
          %s451 = scalar_select %p450, %s448, 1
          %p452 = scmp.lt.s32.totalorder %s449, 31
          %s453 = scalar_select %p452, %s449, 31
          %s454 = smul.addr %s453, 2
          %s455 = smul.addr %s451, 64
          %s456 = sadd.s32 %s454, %s455
          %s457 = smul.addr %s456, 4
          %s458 = scalar_lea.vmem %s2, %s457
          %s459 = sld [smem:[#allocation4 + %s27]]
          %s460 = smul.u32 16, %s29
        $region52: #{fmri_encoder_cross_forward.13} parent=43 // pred_fallthru
          _
      $region44: #{fmri_encoder_cross_forward.13} parent=5 // pred_fallthru
        _
      %p461 = scmp.le.s32.totalorder 1, %s20
      %p462 = scmp.lt.s32.totalorder %s20, 3
      %p463 = pnand %p461, %p462
      %p464 = pneg %p463
      // Predicated region
      $region53: #{fmri_encoder_cross_forward.13} parent=5 // pred_check
        _
      $region54: #{fmri_encoder_cross_forward.13} parent=5 // pred_check_branch
        %466 = sbr.rel (%p463) target = $region56
      $region55: #{fmri_encoder_cross_forward.13} parent=5 // pred_region
        %s467 = ssub.s32 %s20, 1
        // Predicated region
        $region57: #{fmri_encoder_cross_forward.13} parent=55 // pred_check
          %p468 = pneg %p155
        $region58: #{fmri_encoder_cross_forward.13} parent=55 // pred_check_branch
          %470 = sbr.rel (%p468) target = $region60
        $region59: #{fmri_encoder_cross_forward.13} parent=55 // pred_region
          %471 = dma.done [#allocation6], 32
        $region60: #{fmri_encoder_cross_forward.13} parent=55 // pred_fallthru
          _
        // Predicated region
        $region61: #{fmri_encoder_cross_forward.13} parent=55 // pred_check
          %p472 = pneg %p183
        $region62: #{fmri_encoder_cross_forward.13} parent=55 // pred_check_branch
          %474 = sbr.rel (%p472) target = $region64
        $region63: #{fmri_encoder_cross_forward.13} parent=55 // pred_region
          %475 = dma.done [#allocation8], 32
        $region64: #{fmri_encoder_cross_forward.13} parent=55 // pred_fallthru
          _
        // Predicated region
        $region65: #{fmri_encoder_cross_forward.13} parent=55 // pred_check
          %p476 = pneg %p239
        $region66: #{fmri_encoder_cross_forward.13} parent=55 // pred_check_branch
          %478 = sbr.rel (%p476) target = $region68
        $region67: #{fmri_encoder_cross_forward.13} parent=55 // pred_region
          %479 = dma.done [#allocation8], 16
        $region68: #{fmri_encoder_cross_forward.13} parent=55 // pred_fallthru
          _
        // Predicated region
        $region69: #{fmri_encoder_cross_forward.13} parent=55 // pred_check
          %p480 = pneg %p295
        $region70: #{fmri_encoder_cross_forward.13} parent=55 // pred_check_branch
          %482 = sbr.rel (%p480) target = $region72
        $region71: #{fmri_encoder_cross_forward.13} parent=55 // pred_region
          %483 = dma.done [#allocation11], 32
        $region72: #{fmri_encoder_cross_forward.13} parent=55 // pred_fallthru
          _
        %p484 = scmp.lt.s32.totalorder %s30, 0
        %s485 = scalar_select %p484, %s30, 0
        %p486 = scmp.lt.s32.totalorder %s31, 0
        %s487 = scalar_select %p486, %s31, 0
        %p488 = scmp.lt.s32.totalorder %s32, 1
        %s489 = scalar_select %p488, %s32, 1
        %s490 = smul.addr %s487, 2
        %s491 = sadd.s32 %s489, %s490
        %s492 = smul.addr %s485, 2
        %s493 = sadd.s32 %s491, %s492
        %s494 = smul.addr %s493, 4
        %s495 = scalar_lea.vmem %s1, %s494
        %p496 = pneg %p69
        %p497 = pneg %p66
        %s498 = sld [smem:[#allocation4 + %s30]]
        %s499 = smul.u32 16, %s32
        %p500 = scmp.lt.s32.totalorder %s498, 1
        %s501 = scalar_select %p500, %s498, 1
        %p502 = scmp.lt.s32.totalorder %s499, 31
        %s503 = scalar_select %p502, %s499, 31
        %s504 = smul.addr %s503, 2
        %s505 = smul.addr %s501, 64
        %s506 = sadd.s32 %s504, %s505
        %s507 = smul.addr %s506, 4
        %s508 = scalar_lea.vmem %s2, %s507
        %p509 = pneg %p99
        %p510 = pneg %p96
        %s511 = sld [smem:[#allocation4 + %s30]]
        %p512 = scmp.lt.s32.totalorder %s511, 1
        %s513 = scalar_select %p512, %s511, 1
        %s514 = smul.addr %s513, 2
        %s515 = scalar_lea.vmem %s3, %s514
        %p516 = pneg %p127
        %p517 = pneg %p124
        %p518 = pneg %p155
        %p519 = pneg %p152
        %p520 = pneg %p183
        %p521 = pneg %p180
        %s522 = sld [smem:[#allocation4 + %s30]]
        %p523 = scmp.lt.s32.totalorder %s522, 1
        %s524 = scalar_select %p523, %s522, 1
        %s525 = smul.addr %s524, 32
        %s526 = smul.addr %s525, 4
        %s527 = scalar_lea.vmem %s6, %s526
        %p528 = pneg %p211
        %p529 = pneg %p208
        %p530 = pneg %p239
        %p531 = pneg %p236
        %s532 = sld [smem:[#allocation4 + %s30]]
        %p533 = scmp.lt.s32.totalorder %s532, 1
        %s534 = scalar_select %p533, %s532, 1
        %s535 = smul.addr %s534, 32
        %s536 = smul.addr %s535, 4
        %s537 = scalar_lea.vmem %s8, %s536
        %p538 = pneg %p267
        %p539 = pneg %p264
        %p540 = pneg %p295
        %p541 = pneg %p292
        %p542 = pneg %p323
        %p543 = pneg %p320
        %p544 = scmp.lt.s32.totalorder %s30, 0
        %s545 = scalar_select %p544, %s30, 0
        %p546 = scmp.lt.s32.totalorder %s31, 0
        %s547 = scalar_select %p546, %s31, 0
        %s548 = smul.addr %s547, 2
        %s549 = smul.addr %s545, 2
        %s550 = sadd.s32 %s548, %s549
        %s551 = smul.addr %s550, 4
        %s552 = scalar_lea.vmem %s10, %s551
        %p553 = scmp.lt.s32.totalorder %s30, 0
        %s554 = scalar_select %p553, %s30, 0
        %p555 = scmp.lt.s32.totalorder %s31, 0
        %s556 = scalar_select %p555, %s31, 0
        %p557 = scmp.lt.s32.totalorder %s32, 1
        %s558 = scalar_select %p557, %s32, 1
        %s559 = smul.addr %s556, 2
        %s560 = sadd.s32 %s558, %s559
        %s561 = smul.addr %s554, 2
        %s562 = sadd.s32 %s560, %s561
        %s563 = smul.addr %s562, 4
        %s564 = scalar_lea.vmem %s1, %s563
        %s565 = sld [smem:[#allocation4 + %s30]]
        %s566 = smul.u32 16, %s32
        %p567 = scmp.lt.s32.totalorder %s565, 1
        %s568 = scalar_select %p567, %s565, 1
        %p569 = scmp.lt.s32.totalorder %s566, 31
        %s570 = scalar_select %p569, %s566, 31
        %s571 = smul.addr %s570, 2
        %s572 = smul.addr %s568, 64
        %s573 = sadd.s32 %s571, %s572
        %s574 = smul.addr %s573, 4
        %s575 = scalar_lea.vmem %s2, %s574
        %s576 = sld [smem:[#allocation4 + %s30]]
        %s577 = smul.u32 16, %s32
        %s578 = sld [smem:[#allocation4 + %s30]]
        %p579 = scmp.lt.s32.totalorder %s578, 1
        %s580 = scalar_select %p579, %s578, 1
        %s581 = smul.addr %s580, 2
        %s582 = scalar_lea.vmem %s3, %s581
        %s583 = sld [smem:[#allocation4 + %s30]]
        %s584 = sld [smem:[#allocation4 + %s30]]
        %s585 = sld [smem:[#allocation4 + %s30]]
        %s586 = sld [smem:[#allocation4 + %s30]]
        %p587 = scmp.lt.s32.totalorder %s586, 1
        %s588 = scalar_select %p587, %s586, 1
        %s589 = smul.addr %s588, 32
        %s590 = smul.addr %s589, 4
        %s591 = scalar_lea.vmem %s6, %s590
        %s592 = sld [smem:[#allocation4 + %s30]]
        %s593 = sld [smem:[#allocation4 + %s30]]
        %s594 = sld [smem:[#allocation4 + %s30]]
        %p595 = scmp.lt.s32.totalorder %s594, 1
        %s596 = scalar_select %p595, %s594, 1
        %s597 = smul.addr %s596, 32
        %s598 = smul.addr %s597, 4
        %s599 = scalar_lea.vmem %s8, %s598
        %s600 = sld [smem:[#allocation4 + %s30]]
        %s601 = sld [smem:[#allocation4 + %s30]]
        %p602 = scmp.lt.s32.totalorder %s30, 0
        %s603 = scalar_select %p602, %s30, 0
        %p604 = scmp.lt.s32.totalorder %s31, 0
        %s605 = scalar_select %p604, %s31, 0
        %s606 = smul.addr %s605, 2
        %s607 = smul.addr %s603, 2
        %s608 = sadd.s32 %s606, %s607
        %s609 = smul.addr %s608, 4
        %s610 = scalar_lea.vmem %s10, %s609
        %p612 = scmp.eq.s32.totalorder %s32, 0
        // Predicated region
        $region73: #{fmri_encoder_cross_forward.13} parent=55 // pred_check
          %p613 = pneg %p612
        $region74: #{fmri_encoder_cross_forward.13} parent=55 // pred_check_branch
          %615 = sbr.rel (%p613) target = $region76
        $region75: #{fmri_encoder_cross_forward.13} parent=55 // pred_region
          %616 = vst [vmem:[#allocation2] sm:$0xff] 0.0
          %617 = vst [vmem:[#allocation2 + $0x8] sm:$0xff] 0.0
        $region76: #{fmri_encoder_cross_forward.13} parent=55 // pred_fallthru
          _
        %v618 = vld [vmem:[#allocation2] sm:$0xff]
        %v619 = vld [vmem:[#allocation2 + $0x8] sm:$0xff]
        %v620 = vld [vmem:[%s564] sm:$0xf]
        %v621 = vld [vmem:[%s575] sm:$0xff]
        %v622 = vld [vmem:[%s575 + $0x8] sm:$0xff]
        %v623 = vld [vmem:[%s575 + $0x10] sm:$0xff]
        %v624 = vld [vmem:[%s575 + $0x18] sm:$0xff]
        %v625 = vld [vmem:[%s575 + $0x20] sm:$0xff]
        %v626 = vld [vmem:[%s575 + $0x28] sm:$0xff]
        %v627 = vld [vmem:[%s575 + $0x30] sm:$0xff]
        %v628 = vld [vmem:[%s575 + $0x38] sm:$0xff]
        %v629 = vld [vmem:[%s575 + $0x40] sm:$0xff]
        %v630 = vld [vmem:[%s575 + $0x48] sm:$0xff]
        %v631 = vld [vmem:[%s575 + $0x50] sm:$0xff]
        %v632 = vld [vmem:[%s575 + $0x58] sm:$0xff]
        %v633 = vld [vmem:[%s575 + $0x60] sm:$0xff]
        %v634 = vld [vmem:[%s575 + $0x68] sm:$0xff]
        %v635 = vld [vmem:[%s575 + $0x70] sm:$0xff]
        %v636 = vld [vmem:[%s575 + $0x78] sm:$0xff]
        %v653 = vunpack.c.l.b16 %v621
        %v654 = vunpack.c.h.b16 %v621
        %v655 = vunpack.c.l.b16 %v622
        %v656 = vunpack.c.h.b16 %v622
        %v657 = vunpack.c.l.b16 %v623
        %v658 = vunpack.c.h.b16 %v623
        %v659 = vunpack.c.l.b16 %v624
        %v660 = vunpack.c.h.b16 %v624
        %v661 = vunpack.c.l.b16 %v625
        %v662 = vunpack.c.h.b16 %v625
        %v663 = vunpack.c.l.b16 %v626
        %v664 = vunpack.c.h.b16 %v626
        %v665 = vunpack.c.l.b16 %v627
        %v666 = vunpack.c.h.b16 %v627
        %v667 = vunpack.c.l.b16 %v628
        %v668 = vunpack.c.h.b16 %v628
        %v669 = vunpack.c.l.b16 %v629
        %v670 = vunpack.c.h.b16 %v629
        %v671 = vunpack.c.l.b16 %v630
        %v672 = vunpack.c.h.b16 %v630
        %v673 = vunpack.c.l.b16 %v631
        %v674 = vunpack.c.h.b16 %v631
        %v675 = vunpack.c.l.b16 %v632
        %v676 = vunpack.c.h.b16 %v632
        %v677 = vunpack.c.l.b16 %v633
        %v678 = vunpack.c.h.b16 %v633
        %v679 = vunpack.c.l.b16 %v634
        %v680 = vunpack.c.h.b16 %v634
        %v681 = vunpack.c.l.b16 %v635
        %v682 = vunpack.c.h.b16 %v635
        %v683 = vunpack.c.l.b16 %v636
        %v684 = vunpack.c.h.b16 %v636
        %v685 = vpack.c.b16 %v655, %v653
        %v686 = vpack.c.b16 %v656, %v654
        %v687 = vpack.c.b16 %v659, %v657
        %v688 = vpack.c.b16 %v660, %v658
        %v689 = vpack.c.b16 %v663, %v661
        %v690 = vpack.c.b16 %v664, %v662
        %v691 = vpack.c.b16 %v667, %v665
        %v692 = vpack.c.b16 %v668, %v666
        %v693 = vpack.c.b16 %v671, %v669
        %v694 = vpack.c.b16 %v672, %v670
        %v695 = vpack.c.b16 %v675, %v673
        %v696 = vpack.c.b16 %v676, %v674
        %v697 = vpack.c.b16 %v679, %v677
        %v698 = vpack.c.b16 %v680, %v678
        %v699 = vpack.c.b16 %v683, %v681
        %v700 = vpack.c.b16 %v684, %v682
        %717 = vmatprep.subr.bf16.mxu0 %v700
        %718 = vmatpush1.bf16.msra.mxu0 %v699
        %719 = vmatprep.subr.bf16.mxu0 %v698
        %720 = vmatpush1.bf16.msra.mxu0 %v697
        %721 = vmatprep.subr.bf16.mxu0 %v696
        %722 = vmatpush1.bf16.msra.mxu0 %v695
        %723 = vmatprep.subr.bf16.mxu0 %v694
        %724 = vmatpush1.bf16.msra.mxu0 %v693
        %725 = vmatprep.subr.bf16.mxu0 %v692
        %726 = vmatpush1.bf16.msra.mxu0 %v691
        %727 = vmatprep.subr.bf16.mxu0 %v690
        %728 = vmatpush1.bf16.msra.mxu0 %v689
        %729 = vmatprep.subr.bf16.mxu0 %v688
        %730 = vmatpush1.bf16.msra.mxu0 %v687
        %731 = vmatprep.subr.bf16.mxu0 %v686
        %732 = vmatpush1.bf16.msra.mxu0 %v685
        %733 = vmatprep.subr.bf16.mxu0 0
        %734 = vmatpush2.bf16.msra.mxu0 0
        %735 = vmatprep.subr.bf16.mxu0 0
        %736 = vmatpush2.bf16.msra.mxu0 0
        %737 = vmatprep.subr.bf16.mxu0 0
        %738 = vmatpush2.bf16.msra.mxu0 0
        %739 = vmatprep.subr.bf16.mxu0 0
        %740 = vmatpush2.bf16.msra.mxu0 0
        %741 = vmatprep.subr.bf16.mxu0 0
        %742 = vmatpush2.bf16.msra.mxu0 0
        %743 = vmatprep.subr.bf16.mxu0 0
        %744 = vmatpush2.bf16.msra.mxu0 0
        %745 = vmatprep.subr.bf16.mxu0 0
        %746 = vmatpush2.bf16.msra.mxu0 0
        %747 = vmatprep.subr.bf16.mxu0 0
        %748 = vmatpush2.bf16.msra.mxu0 0
        %749 = vmatprep.mubr.bf16.mxu0 0
        %750 = vmatmul.mubr.bf16.gmra.mxu0 %v620
        %v751 = vpop.f32.mrf.mxu0
        %v752 = vadd.f32 0.0, %v751
        %v753 = vpop.f32.mrf.mxu0
        %v754 = vadd.f32 0.0, %v753
        %v755 = vpop.f32.mrf.mxu0
        %v756 = vpop.f32.mrf.mxu0
        %757 = vdwg.mxu0
        %v758 = vadd.f32 %v618, %v752
        %v759 = vadd.f32 %v619, %v754
        %760 = vst [vmem:[#allocation2] sm:$0xff] %v758
        %761 = vst [vmem:[#allocation2 + $0x8] sm:$0xff] %v759
        %p762 = scmp.eq.s32.totalorder %s32, 1
        // Predicated region
        $region77: #{fmri_encoder_cross_forward.13} parent=55 // pred_check
          %p763 = pneg %p762
        $region78: #{fmri_encoder_cross_forward.13} parent=55 // pred_check_branch
          %765 = sbr.rel (%p763) target = $region80
        $region79: #{fmri_encoder_cross_forward.13} parent=55 // pred_region
          %v766 = vld [vmem:[#allocation2] sm:$0xff]
          %v767 = vld [vmem:[#allocation2 + $0x8] sm:$0xff]
          %v768 = vld [vmem:[%s582] sm:$0x3]
          %v770 = vlaneseq
          %v771 = vshrl.u32 %v770, 7
          %v772 = vsub.s32 0, %v771
          %v773 = vrot.slane %v768, %v772
          %v774 = vlaneseq
          %v775 = vshrl.u32 %v774, 7
          %v776 = vsub.s32 1, %v775
          %v777 = vrot.slane %v768, %v776
          %v780 = vadd.f32 %v766, %v773
          %v781 = vadd.f32 %v767, %v777
          %v782 = vld [vmem:[#allocation5] sm:$0x3]
          %v783 = vld [vmem:[#allocation7] sm:$0x3]
          %v784 = vadd.f32 %v780, %v781
          %785 = vadd.xlane.f32.xlu0 %v784
          %v786 = vpop.xlane.xlu0 %785
          %v787 = vrcp.pop 256.0
          %v788 = vmul.f32 %v786, %v787
          %v789 = vsub.f32 %v780, %v788
          %v790 = vsub.f32 %v781, %v788
          %v791 = vmul.f32 %v789, %v789
          %v792 = vmul.f32 %v790, %v790
          %v793 = vadd.f32 %v791, %v792
          %794 = vadd.xlane.f32.xlu0 %v793
          %v795 = vpop.xlane.xlu0 %794
          %v796 = vmul.f32 %v795, %v787
          %v797 = vadd.f32 %v796, 1e-05
          %v798 = vrsqrt.pop %v797
          %v799 = vmul.f32 %v789, %v798
          %v800 = vmul.f32 %v790, %v798
          %v802 = vlaneseq
          %v803 = vshrl.u32 %v802, 7
          %v804 = vsub.s32 0, %v803
          %v805 = vrot.slane %v782, %v804
          %v806 = vlaneseq
          %v807 = vshrl.u32 %v806, 7
          %v808 = vsub.s32 1, %v807
          %v809 = vrot.slane %v782, %v808
          %v812 = vmul.f32 %v799, %v805
          %v813 = vmul.f32 %v800, %v809
          %v815 = vlaneseq
          %v816 = vshrl.u32 %v815, 7
          %v817 = vsub.s32 0, %v816
          %v818 = vrot.slane %v783, %v817
          %v819 = vlaneseq
          %v820 = vshrl.u32 %v819, 7
          %v821 = vsub.s32 1, %v820
          %v822 = vrot.slane %v783, %v821
          %v825 = vadd.f32 %v812, %v818
          %v826 = vadd.f32 %v813, %v822
          %v827 = vmul.f32 %v825, %v825
          %v828 = vmul.f32 %v826, %v826
          %v829 = vmul.f32 %v825, %v827
          %v830 = vmul.f32 %v826, %v828
          %v831 = vmul.f32 %v829, 0.044715
          %v832 = vmul.f32 %v830, 0.044715
          %v833 = vadd.f32 %v825, %v831
          %v834 = vadd.f32 %v826, %v832
          %v835 = vmul.f32 %v833, 0.7978846
          %v836 = vmul.f32 %v834, 0.7978846
          %v837 = vtanh.pop %v835
          %v838 = vtanh.pop %v836
          %v839 = vadd.f32 %v837, 1.0
          %v840 = vadd.f32 %v838, 1.0
          %v841 = vmul.f32 %v839, 0.5
          %v842 = vmul.f32 %v840, 0.5
          %v843 = vmul.f32 %v825, %v841
          %v844 = vmul.f32 %v826, %v842
          %v845 = vpack.c.bf16 %v843, %v843
          %v846 = vpack.c.bf16 %v844, %v844
          %v847 = vld [vmem:[%s591] sm:$0xf]
          %v848 = vld [vmem:[%s591 + $0x4] sm:$0xf]
          %v849 = vld [vmem:[%s591 + $0x8] sm:$0xf]
          %v850 = vld [vmem:[%s591 + $0xc] sm:$0xf]
          %v851 = vld [vmem:[%s591 + $0x10] sm:$0xf]
          %v852 = vld [vmem:[%s591 + $0x14] sm:$0xf]
          %v853 = vld [vmem:[%s591 + $0x18] sm:$0xf]
          %v854 = vld [vmem:[%s591 + $0x1c] sm:$0xf]
          %v855 = vld [vmem:[%s591 + $0x20] sm:$0xf]
          %v856 = vld [vmem:[%s591 + $0x24] sm:$0xf]
          %v857 = vld [vmem:[%s591 + $0x28] sm:$0xf]
          %v858 = vld [vmem:[%s591 + $0x2c] sm:$0xf]
          %v859 = vld [vmem:[%s591 + $0x30] sm:$0xf]
          %v860 = vld [vmem:[%s591 + $0x34] sm:$0xf]
          %v861 = vld [vmem:[%s591 + $0x38] sm:$0xf]
          %v862 = vld [vmem:[%s591 + $0x3c] sm:$0xf]
          %v863 = vld [vmem:[%s591 + $0x40] sm:$0xf]
          %v864 = vld [vmem:[%s591 + $0x44] sm:$0xf]
          %v865 = vld [vmem:[%s591 + $0x48] sm:$0xf]
          %v866 = vld [vmem:[%s591 + $0x4c] sm:$0xf]
          %v867 = vld [vmem:[%s591 + $0x50] sm:$0xf]
          %v868 = vld [vmem:[%s591 + $0x54] sm:$0xf]
          %v869 = vld [vmem:[%s591 + $0x58] sm:$0xf]
          %v870 = vld [vmem:[%s591 + $0x5c] sm:$0xf]
          %v871 = vld [vmem:[%s591 + $0x60] sm:$0xf]
          %v872 = vld [vmem:[%s591 + $0x64] sm:$0xf]
          %v873 = vld [vmem:[%s591 + $0x68] sm:$0xf]
          %v874 = vld [vmem:[%s591 + $0x6c] sm:$0xf]
          %v875 = vld [vmem:[%s591 + $0x70] sm:$0xf]
          %v876 = vld [vmem:[%s591 + $0x74] sm:$0xf]
          %v877 = vld [vmem:[%s591 + $0x78] sm:$0xf]
          %v878 = vld [vmem:[%s591 + $0x7c] sm:$0xf]
          %v879 = vld [vmem:[#allocation9] sm:$0x1]
          %v881 = vlaneseq
          %v882 = vshrl.u32 %v881, 7
          %v883 = vsub.s32 0, %v882
          %v884 = vrot.slane %v879, %v883
          %v918 = vunpack.c.l.b16 %v847
          %v919 = vunpack.c.l.b16 %v848
          %v920 = vunpack.c.l.b16 %v849
          %v921 = vunpack.c.l.b16 %v850
          %v922 = vunpack.c.l.b16 %v851
          %v923 = vunpack.c.l.b16 %v852
          %v924 = vunpack.c.l.b16 %v853
          %v925 = vunpack.c.l.b16 %v854
          %v926 = vunpack.c.l.b16 %v855
          %v927 = vunpack.c.l.b16 %v856
          %v928 = vunpack.c.l.b16 %v857
          %v929 = vunpack.c.l.b16 %v858
          %v930 = vunpack.c.l.b16 %v859
          %v931 = vunpack.c.l.b16 %v860
          %v932 = vunpack.c.l.b16 %v861
          %v933 = vunpack.c.l.b16 %v862
          %v934 = vunpack.c.l.b16 %v863
          %v935 = vunpack.c.l.b16 %v864
          %v936 = vunpack.c.l.b16 %v865
          %v937 = vunpack.c.l.b16 %v866
          %v938 = vunpack.c.l.b16 %v867
          %v939 = vunpack.c.l.b16 %v868
          %v940 = vunpack.c.l.b16 %v869
          %v941 = vunpack.c.l.b16 %v870
          %v942 = vunpack.c.l.b16 %v871
          %v943 = vunpack.c.l.b16 %v872
          %v944 = vunpack.c.l.b16 %v873
          %v945 = vunpack.c.l.b16 %v874
          %v946 = vunpack.c.l.b16 %v875
          %v947 = vunpack.c.l.b16 %v876
          %v948 = vunpack.c.l.b16 %v877
          %v949 = vunpack.c.l.b16 %v878
          %v950 = vpack.c.b16 %v919, %v918
          %v951 = vpack.c.b16 %v921, %v920
          %v952 = vpack.c.b16 %v923, %v922
          %v953 = vpack.c.b16 %v925, %v924
          %v954 = vpack.c.b16 %v927, %v926
          %v955 = vpack.c.b16 %v929, %v928
          %v956 = vpack.c.b16 %v931, %v930
          %v957 = vpack.c.b16 %v933, %v932
          %v958 = vpack.c.b16 %v935, %v934
          %v959 = vpack.c.b16 %v937, %v936
          %v960 = vpack.c.b16 %v939, %v938
          %v961 = vpack.c.b16 %v941, %v940
          %v962 = vpack.c.b16 %v943, %v942
          %v963 = vpack.c.b16 %v945, %v944
          %v964 = vpack.c.b16 %v947, %v946
          %v965 = vpack.c.b16 %v949, %v948
          %982 = vmatprep.subr.bf16.mxu0 0
          %983 = vmatpush1.bf16.msra.mxu0 %v957
          %984 = vmatprep.subr.bf16.mxu0 0
          %985 = vmatpush1.bf16.msra.mxu0 %v956
          %986 = vmatprep.subr.bf16.mxu0 0
          %987 = vmatpush1.bf16.msra.mxu0 %v955
          %988 = vmatprep.subr.bf16.mxu0 0
          %989 = vmatpush1.bf16.msra.mxu0 %v954
          %990 = vmatprep.subr.bf16.mxu0 0
          %991 = vmatpush1.bf16.msra.mxu0 %v953
          %992 = vmatprep.subr.bf16.mxu0 0
          %993 = vmatpush1.bf16.msra.mxu0 %v952
          %994 = vmatprep.subr.bf16.mxu0 0
          %995 = vmatpush1.bf16.msra.mxu0 %v951
          %996 = vmatprep.subr.bf16.mxu0 0
          %997 = vmatpush1.bf16.msra.mxu0 %v950
          %998 = vmatprep.subr.bf16.mxu0 0
          %999 = vmatpush2.bf16.msra.mxu0 %v965
          %1000 = vmatprep.subr.bf16.mxu0 0
          %1001 = vmatpush2.bf16.msra.mxu0 %v964
          %1002 = vmatprep.subr.bf16.mxu0 0
          %1003 = vmatpush2.bf16.msra.mxu0 %v963
          %1004 = vmatprep.subr.bf16.mxu0 0
          %1005 = vmatpush2.bf16.msra.mxu0 %v962
          %1006 = vmatprep.subr.bf16.mxu0 0
          %1007 = vmatpush2.bf16.msra.mxu0 %v961
          %1008 = vmatprep.subr.bf16.mxu0 0
          %1009 = vmatpush2.bf16.msra.mxu0 %v960
          %1010 = vmatprep.subr.bf16.mxu0 0
          %1011 = vmatpush2.bf16.msra.mxu0 %v959
          %1012 = vmatprep.subr.bf16.mxu0 0
          %1013 = vmatpush2.bf16.msra.mxu0 %v958
          %1014 = vmatprep.mubr.bf16.mxu0 %v846
          %1015 = vmatmul.mubr.bf16.gmra.mxu0 %v845
          %v1016 = vpop.f32.mrf.mxu0
          %v1017 = vadd.f32 %v884, %v1016
          %v1018 = vpop.f32.mrf.mxu0
          %v1019 = vpop.f32.mrf.mxu0
          %v1020 = vpop.f32.mrf.mxu0
          %1021 = vdwg.mxu0
          %v1022 = vmax.f32 %v1017, 0.0
          %v1023 = vpack.c.bf16 %v1022, %v1022
          %v1024 = vld [vmem:[%s599] sm:$0xff]
          %v1025 = vld [vmem:[%s599 + $0x8] sm:$0xff]
          %v1026 = vld [vmem:[%s599 + $0x10] sm:$0xff]
          %v1027 = vld [vmem:[%s599 + $0x18] sm:$0xff]
          %v1028 = vld [vmem:[%s599 + $0x20] sm:$0xff]
          %v1029 = vld [vmem:[%s599 + $0x28] sm:$0xff]
          %v1030 = vld [vmem:[%s599 + $0x30] sm:$0xff]
          %v1031 = vld [vmem:[%s599 + $0x38] sm:$0xff]
          %v1032 = vld [vmem:[%s599 + $0x40] sm:$0xff]
          %v1033 = vld [vmem:[%s599 + $0x48] sm:$0xff]
          %v1034 = vld [vmem:[%s599 + $0x50] sm:$0xff]
          %v1035 = vld [vmem:[%s599 + $0x58] sm:$0xff]
          %v1036 = vld [vmem:[%s599 + $0x60] sm:$0xff]
          %v1037 = vld [vmem:[%s599 + $0x68] sm:$0xff]
          %v1038 = vld [vmem:[%s599 + $0x70] sm:$0xff]
          %v1039 = vld [vmem:[%s599 + $0x78] sm:$0xff]
          %v1040 = vld [vmem:[#allocation10] sm:$0x3]
          %v1042 = vlaneseq
          %v1043 = vshrl.u32 %v1042, 7
          %v1044 = vsub.s32 0, %v1043
          %v1045 = vrot.slane %v1040, %v1044
          %v1046 = vlaneseq
          %v1047 = vshrl.u32 %v1046, 7
          %v1048 = vsub.s32 1, %v1047
          %v1049 = vrot.slane %v1040, %v1048
          %v1068 = vunpack.c.l.b16 %v1024
          %v1069 = vunpack.c.h.b16 %v1024
          %v1070 = vunpack.c.l.b16 %v1025
          %v1071 = vunpack.c.h.b16 %v1025
          %v1072 = vunpack.c.l.b16 %v1026
          %v1073 = vunpack.c.h.b16 %v1026
          %v1074 = vunpack.c.l.b16 %v1027
          %v1075 = vunpack.c.h.b16 %v1027
          %v1076 = vunpack.c.l.b16 %v1028
          %v1077 = vunpack.c.h.b16 %v1028
          %v1078 = vunpack.c.l.b16 %v1029
          %v1079 = vunpack.c.h.b16 %v1029
          %v1080 = vunpack.c.l.b16 %v1030
          %v1081 = vunpack.c.h.b16 %v1030
          %v1082 = vunpack.c.l.b16 %v1031
          %v1083 = vunpack.c.h.b16 %v1031
          %v1084 = vunpack.c.l.b16 %v1032
          %v1085 = vunpack.c.h.b16 %v1032
          %v1086 = vunpack.c.l.b16 %v1033
          %v1087 = vunpack.c.h.b16 %v1033
          %v1088 = vunpack.c.l.b16 %v1034
          %v1089 = vunpack.c.h.b16 %v1034
          %v1090 = vunpack.c.l.b16 %v1035
          %v1091 = vunpack.c.h.b16 %v1035
          %v1092 = vunpack.c.l.b16 %v1036
          %v1093 = vunpack.c.h.b16 %v1036
          %v1094 = vunpack.c.l.b16 %v1037
          %v1095 = vunpack.c.h.b16 %v1037
          %v1096 = vunpack.c.l.b16 %v1038
          %v1097 = vunpack.c.h.b16 %v1038
          %v1098 = vunpack.c.l.b16 %v1039
          %v1099 = vunpack.c.h.b16 %v1039
          %v1100 = vpack.c.b16 %v1070, %v1068
          %v1101 = vpack.c.b16 %v1071, %v1069
          %v1102 = vpack.c.b16 %v1074, %v1072
          %v1103 = vpack.c.b16 %v1075, %v1073
          %v1104 = vpack.c.b16 %v1078, %v1076
          %v1105 = vpack.c.b16 %v1079, %v1077
          %v1106 = vpack.c.b16 %v1082, %v1080
          %v1107 = vpack.c.b16 %v1083, %v1081
          %v1108 = vpack.c.b16 %v1086, %v1084
          %v1109 = vpack.c.b16 %v1087, %v1085
          %v1110 = vpack.c.b16 %v1090, %v1088
          %v1111 = vpack.c.b16 %v1091, %v1089
          %v1112 = vpack.c.b16 %v1094, %v1092
          %v1113 = vpack.c.b16 %v1095, %v1093
          %v1114 = vpack.c.b16 %v1098, %v1096
          %v1115 = vpack.c.b16 %v1099, %v1097
          %1132 = vmatprep.subr.bf16.mxu0 %v1115
          %1133 = vmatpush1.bf16.msra.mxu0 %v1114
          %1134 = vmatprep.subr.bf16.mxu0 %v1113
          %1135 = vmatpush1.bf16.msra.mxu0 %v1112
          %1136 = vmatprep.subr.bf16.mxu0 %v1111
          %1137 = vmatpush1.bf16.msra.mxu0 %v1110
          %1138 = vmatprep.subr.bf16.mxu0 %v1109
          %1139 = vmatpush1.bf16.msra.mxu0 %v1108
          %1140 = vmatprep.subr.bf16.mxu0 %v1107
          %1141 = vmatpush1.bf16.msra.mxu0 %v1106
          %1142 = vmatprep.subr.bf16.mxu0 %v1105
          %1143 = vmatpush1.bf16.msra.mxu0 %v1104
          %1144 = vmatprep.subr.bf16.mxu0 %v1103
          %1145 = vmatpush1.bf16.msra.mxu0 %v1102
          %1146 = vmatprep.subr.bf16.mxu0 %v1101
          %1147 = vmatpush1.bf16.msra.mxu0 %v1100
          %1148 = vmatprep.subr.bf16.mxu0 0
          %1149 = vmatpush2.bf16.msra.mxu0 0
          %1150 = vmatprep.subr.bf16.mxu0 0
          %1151 = vmatpush2.bf16.msra.mxu0 0
          %1152 = vmatprep.subr.bf16.mxu0 0
          %1153 = vmatpush2.bf16.msra.mxu0 0
          %1154 = vmatprep.subr.bf16.mxu0 0
          %1155 = vmatpush2.bf16.msra.mxu0 0
          %1156 = vmatprep.subr.bf16.mxu0 0
          %1157 = vmatpush2.bf16.msra.mxu0 0
          %1158 = vmatprep.subr.bf16.mxu0 0
          %1159 = vmatpush2.bf16.msra.mxu0 0
          %1160 = vmatprep.subr.bf16.mxu0 0
          %1161 = vmatpush2.bf16.msra.mxu0 0
          %1162 = vmatprep.subr.bf16.mxu0 0
          %1163 = vmatpush2.bf16.msra.mxu0 0
          %1164 = vmatprep.mubr.bf16.mxu0 0
          %1165 = vmatmul.mubr.bf16.gmra.mxu0 %v1023
          %v1166 = vpop.f32.mrf.mxu0
          %v1167 = vadd.f32 %v1045, %v1166
          %v1168 = vpop.f32.mrf.mxu0
          %v1169 = vadd.f32 %v1049, %v1168
          %v1170 = vpop.f32.mrf.mxu0
          %v1171 = vpop.f32.mrf.mxu0
          %1172 = vdwg.mxu0
          %v1173 = vadd.f32 %v843, %v1167
          %v1174 = vadd.f32 %v844, %v1169
          %v1175 = vpack.c.bf16 %v1173, %v1173
          %v1176 = vpack.c.bf16 %v1174, %v1174
          %v1179 = vunpack.c.l.b16 %v1175
          %v1180 = vunpack.c.l.b16 %v1176
          %v1181 = vpack.c.b16 %v1180, %v1179
          %1183 = vst [vmem:[%s610] sm:$0xff] %v1181
        $region80: #{fmri_encoder_cross_forward.13} parent=55 // pred_fallthru
          _
        %p1184 = scmp.lt.s32.totalorder %s30, 0
        %s1185 = scalar_select %p1184, %s30, 0
        %p1186 = scmp.lt.s32.totalorder %s31, 0
        %s1187 = scalar_select %p1186, %s31, 0
        %s1188 = smul.addr %s1187, 2
        %s1189 = smul.addr %s1185, 2
        %s1190 = sadd.s32 %s1188, %s1189
        %s1191 = smul.addr %s1190, 4
        %s1192 = scalar_lea.vmem %s10, %s1191
        // Predicated region
        $region81: #{fmri_encoder_cross_forward.13} parent=55 // pred_check
          %p1193 = pneg %p320
        $region82: #{fmri_encoder_cross_forward.13} parent=55 // pred_check_branch
          %1195 = sbr.rel (%p1193) target = $region84
        $region83: #{fmri_encoder_cross_forward.13} parent=55 // pred_region
          _
        $region84: #{fmri_encoder_cross_forward.13} parent=55 // pred_fallthru
          _
        // Predicated region
        $region85: #{fmri_encoder_cross_forward.13} parent=55 // pred_check
          %p1196 = pneg %p320
        $region86: #{fmri_encoder_cross_forward.13} parent=55 // pred_check_branch
          %1198 = sbr.rel (%p1196) target = $region88
        $region87: #{fmri_encoder_cross_forward.13} parent=55 // pred_region
          %p1199 = scmp.lt.s32.totalorder %s30, 0
          %s1200 = scalar_select %p1199, %s30, 0
          %p1201 = scmp.lt.s32.totalorder %s31, 0
          %s1202 = scalar_select %p1201, %s31, 0
          %s1203 = smul.addr %s1202, 2
          %s1204 = smul.addr %s1200, 2
          %s1205 = sadd.s32 %s1203, %s1204
          %s1206 = smul.addr %s1205, 4
          %s1207 = scalar_lea.vmem %s10, %s1206
        $region88: #{fmri_encoder_cross_forward.13} parent=55 // pred_fallthru
          _
      $region56: #{fmri_encoder_cross_forward.13} parent=5 // pred_fallthru
        _
      %p1208 = scmp.le.s32.totalorder 2, %s20
      // Predicated region
      $region89: #{fmri_encoder_cross_forward.13} parent=5 // pred_check
        %p1209 = pneg %p1208
      $region90: #{fmri_encoder_cross_forward.13} parent=5 // pred_check_branch
        %1211 = sbr.rel (%p1209) target = $region92
      $region91: #{fmri_encoder_cross_forward.13} parent=5 // pred_region
        %s1212 = ssub.s32 %s20, 2
      $region92: #{fmri_encoder_cross_forward.13} parent=5 // pred_fallthru
        _
    $region6: #{fmri_encoder_cross_forward.13} parent=1 // loop_footer
      %s24 = sadd.s32 1, %s20
    $region7: #{fmri_encoder_cross_forward.13} parent=1 // loop_footer_branch
      %19 = sbr.rel target = $region3
    $region8: #{fmri_encoder_cross_forward.13} parent=1 // loop_exit
      _
    %1213 = vsyncpa [#allocation6], 1
    %s1214 = scalar_lea.sflag [#allocation6], 1
    %1215 = vsyncpa %s1214, 1
    %1216 = vsyncpa [#allocation8], 1
    %1217 = vsyncpa [#allocation11], 1

// kernel: fmri_encoder_cross_forward.16
$region0: #{fmri_encoder_cross_forward.16}
  #allocation0 [shape = 'u32[]', space=smem, size = 0x4, offset = 0x4, fixed_abs, tag = 'smem constant byte address 0x4 - core index']
  #allocation1 [shape = 'u32[144,128]{1,0:T(1,128)}', space=vmem, size = 0x12000, scoped, tag = 'internal scratch']
  %s0 = inlined_call_operand.vmem [shape: bf16[8,256], index: 0, kind: input, shape index: {}]
  %s1 = inlined_call_operand.vmem [shape: bf16[8,256], index: 1, kind: input, shape index: {}]
  %s2 = inlined_call_operand.hbm [shape: f32[1,1], index: 2, kind: output, shape index: {}]
  %s3 = sld [smem:[#allocation0]]
  $region22: #{fmri_encoder_cross_forward.16} parent=0
    _
  %s5 = ssub.s32 1, %s3
  %s6 = scalar_select 0, %s5, %s3
  $region1: #{fmri_encoder_cross_forward.16} parent=0
    #allocation2 [shape = 'u8[512]{0}', space=smem, size = 0x200, scoped, tag = 'output window, operand 0, single buffered']
    #allocation3 [shape = 's32[1]{0}', space=sflag, size = 0x4, scoped, tag = 'scoped memory for fmri_encoder_cross_forward.16']
    %7 = vsyncpa [#allocation3], 0
    // Predicated region
    $region2: #{fmri_encoder_cross_forward.16} parent=1 // pred_check
      _
    $region3: #{fmri_encoder_cross_forward.16} parent=1 // pred_check_branch
      %9 = sbr.rel (0) target = $region5
    $region4: #{fmri_encoder_cross_forward.16} parent=1 // pred_region
      _
    $region5: #{fmri_encoder_cross_forward.16} parent=1 // pred_fallthru
      _
    // Predicated region
    $region6: #{fmri_encoder_cross_forward.16} parent=1 // pred_check
      _
    $region7: #{fmri_encoder_cross_forward.16} parent=1 // pred_check_branch
      %11 = sbr.rel (0) target = $region9
    $region8: #{fmri_encoder_cross_forward.16} parent=1 // pred_region
      _
    $region9: #{fmri_encoder_cross_forward.16} parent=1 // pred_fallthru
      _
    %p12 = scmp.eq.s32.totalorder 0, 0
    // Predicated region
    $region10: #{fmri_encoder_cross_forward.16} parent=1 // pred_check
      %p13 = pneg %p12
    $region11: #{fmri_encoder_cross_forward.16} parent=1 // pred_check_branch
      %15 = sbr.rel (%p13) target = $region13
    $region12: #{fmri_encoder_cross_forward.16} parent=1 // pred_region
      %s16 = scalar_lea.smem [#allocation2], 0
      %17 = sst [smem:[%s16]] 0.0
    $region13: #{fmri_encoder_cross_forward.16} parent=1 // pred_fallthru
      _
    %v18 = vld [vmem:[%s0] sm:$0xff]
    %v19 = vunpack.c.l.bf16 %v18
    %v20 = vunpack.c.h.bf16 %v18
    %v21 = vld [vmem:[%s1] sm:$0xff]
    %v22 = vunpack.c.l.bf16 %v21
    %v23 = vunpack.c.h.bf16 %v21
    %v24 = vsub.f32 %v19, %v22
    %v25 = vsub.f32 %v20, %v23
    %s26 = sld [smem:[#allocation2]]
    %v27 = vmul.f32 %v24, %v24
    %v28 = vmul.f32 %v25, %v25
    %v29 = vadd.f32 %v27, %v28
    %30 = vadd.xlane.f32.xlu0 %v29
    %v31 = vpop.xlane.xlu0 %30
    %v32 = vrot.slane %v31, 4
    %v33 = vadd.f32 %v31, %v32
    %v34 = vrot.slane %v33, 2
    %v35 = vadd.f32 %v33, %v34
    %v36 = vrot.slane %v35, 1
    %v37 = vadd.f32 %v35, %v36
    %s38 = vtos %v37
    %s39 = sadd.f32 %s26, %s38
    %s40 = scalar_lea.smem [#allocation2], 0
    %41 = sst [smem:[%s40]] %s39
    // Predicated region
    $region14: #{fmri_encoder_cross_forward.16} parent=1 // pred_check
      _
    $region15: #{fmri_encoder_cross_forward.16} parent=1 // pred_check_branch
      %43 = sbr.rel (0) target = $region17
    $region16: #{fmri_encoder_cross_forward.16} parent=1 // pred_region
      %s45 = ssub.s32 16, 16
      %46 = vsyncadd [#allocation3], %s45
      %49 = dma.smem_to_hbm [#allocation2], 16, %s2, [#allocation3]
    $region17: #{fmri_encoder_cross_forward.16} parent=1 // pred_fallthru
      _
    // Predicated region
    $region18: #{fmri_encoder_cross_forward.16} parent=1 // pred_check
      _
    $region19: #{fmri_encoder_cross_forward.16} parent=1 // pred_check_branch
      %51 = sbr.rel (0) target = $region21
    $region20: #{fmri_encoder_cross_forward.16} parent=1 // pred_region
      %52 = dma.done [#allocation3], 16
    $region21: #{fmri_encoder_cross_forward.16} parent=1 // pred_fallthru
      _
    %53 = sfence
    %54 = vsyncpa [#allocation3], 1

// kernel: fmri_encoder_cross_forward.15
$region0: #{fmri_encoder_cross_forward.15}
  #allocation0 [shape = 'u32[]', space=smem, size = 0x4, offset = 0x4, fixed_abs, tag = 'smem constant byte address 0x4 - core index']
  #allocation1 [shape = 'u32[144,128]{1,0:T(1,128)}', space=vmem, size = 0x12000, scoped, tag = 'internal scratch']
  #allocation2 [shape = 'f32[8,256]{1,0:T(8,128)}', space=vmem, size = 0x2000, scoped, tag = 'scratch operand']
  #allocation3 [shape = 's32[1]{0}', space=sflag, size = 0x4, scoped, tag = 'scoped memory for fmri_encoder_cross_forward.15']
  #allocation4 [shape = 's32[1]{0:T(128)S(6)}', space=smem, size = 0x200, scoped, tag = 'prefetched SMEM operand 0']
  %s0 = inlined_call_operand.<no memory space> [shape: s32[1], index: 0, kind: input, shape index: {}]
  %s1 = inlined_call_operand.vmem [shape: bf16[1,8,256], index: 1, kind: input, shape index: {}]
  %s2 = inlined_call_operand.vmem [shape: bf16[1,8,128], index: 2, kind: input, shape index: {}]
  %s3 = inlined_call_operand.vmem [shape: bf16[2,128,256], index: 3, kind: input, shape index: {}]
  %s4 = inlined_call_operand.vmem [shape: f32[2,1,256], index: 4, kind: input, shape index: {}]
  %s5 = inlined_call_operand.vmem [shape: bf16[2,256,256], index: 5, kind: input, shape index: {}]
  %s6 = inlined_call_operand.vmem [shape: f32[2,1,256], index: 6, kind: input, shape index: {}]
  %s7 = inlined_call_operand.vmem [shape: f32[2,1,256], index: 7, kind: input, shape index: {}]
  %s8 = inlined_call_operand.vmem [shape: f32[2,1,256], index: 8, kind: input, shape index: {}]
  %s9 = inlined_call_operand.vmem [shape: bf16[1,8,256], index: 9, kind: output, shape index: {}]
  %s10 = sld [smem:[#allocation0]]
  $region114: #{fmri_encoder_cross_forward.15} parent=0
    _
  %s12 = ssub.s32 1, %s10
  %s13 = scalar_select 0, %s12, %s10
  %14 = sst [smem:[#allocation4]] %s0
  $region1: #{fmri_encoder_cross_forward.15} parent=0
    #allocation5 [shape = 'u8[65536]{0}', space=vmem, size = 0x10000, scoped, tag = 'input window, operand 3']
    loop: start=0, step=1, limit=4
    $region2: #{fmri_encoder_cross_forward.15} parent=1 // loop_pre_header
      _
    $region3: #{fmri_encoder_cross_forward.15} parent=1 // loop_header
      %s16 = sphi 0, %s20
      %p17 = scmp.ge.s32.totalorder %s16, 4
      %s23 = sphi 0, %s42
      %s24 = sphi 0, %s38
      %s25 = sphi 0, %s34
      %s26 = sphi 0, %s23
      %s27 = sphi 0, %s24
      %s28 = sphi 0, %s25
      %s29 = sphi 0, %s26
      %s30 = sphi 0, %s27
      %s31 = sphi 0, %s28
      %s49 = sphi 0, %s51
      %s52 = sphi 0, %s49
      %s53 = sphi 0, %s52
      %s69 = sphi 0, %s53
      %s77 = sphi 0, %s79
      %s80 = sphi 0, %s77
      %s81 = sphi 0, %s80
      %s97 = sphi 0, %s81
      %s107 = sphi 0, %s109
      %s110 = sphi 0, %s107
      %s111 = sphi 0, %s110
      %s127 = sphi 0, %s111
      %s137 = sphi 0, %s139
      %s140 = sphi 0, %s137
      %s141 = sphi 0, %s140
      %s157 = sphi 0, %s141
      %s167 = sphi 0, %s169
      %s170 = sphi 0, %s167
      %s171 = sphi 0, %s170
      %s187 = sphi 0, %s171
      %s195 = sphi 0, %s197
      %s198 = sphi 0, %s195
      %s199 = sphi 0, %s198
      %s215 = sphi 0, %s199
      %s223 = sphi 0, %s225
      %s226 = sphi 0, %s223
      %s227 = sphi 0, %s226
      %s243 = sphi 0, %s227
      %s251 = sphi 0, %s253
      %s254 = sphi 0, %s251
      %s255 = sphi 0, %s254
      %s271 = sphi 0, %s255
      %s279 = sphi 0, %s281
      %s282 = sphi 0, %s279
      %s283 = sphi 0, %s282
      %s299 = sphi 0, %s283
    $region4: #{fmri_encoder_cross_forward.15} parent=1 // loop_header_branch
      %19 = sbr.rel (%p17) target = $region8
    $region5: #{fmri_encoder_cross_forward.15} parent=1 // loop_body
      %s21 = ssub.s32 %s16, 1
      %s22 = ssub.s32 %s16, 2
      %s32 = sadd.s32 1, %s25
      %p33 = scmp.ge.s32.totalorder %s32, 2
      %s34 = scalar_select %p33, 0, %s32
      %s35 = sadd.s32 1, %s24
      %s36 = scalar_select %p33, %s35, %s24
      %p37 = scmp.ge.s32.totalorder %s36, 1
      %s38 = scalar_select %p37, 0, %s36
      %s39 = sadd.s32 1, %s23
      %s40 = scalar_select %p37, %s39, %s23
      %p41 = scmp.ge.s32.totalorder %s40, 1
      %s42 = scalar_select %p41, 0, %s40
      %s43 = ssub.s32 %s23, %s42
      %s44 = ssub.s32 %s24, %s38
      %s45 = sor.u32 %s43, %s44
      %s46 = ssub.s32 %s25, %s34
      %s47 = sor.u32 %s45, %s46
      %p48 = scmp.eq.s32.totalorder %s47, 0
      %s50 = sadd.s32 %s49, 1
      %s51 = scalar_select %p48, %s49, %s50
      %p54 = pneg %p48
      %p55 = scmp.eq.s32.totalorder %s16, 1
      %p56 = por %p54, %p55
      %p57 = scmp.ne.s32.totalorder %s49, %s52
      %p58 = scmp.eq.s32.totalorder %s16, 0
      %p59 = por %p57, %p58
      %p60 = scmp.ne.s32.totalorder %s49, %s52
      %p61 = scmp.eq.s32.totalorder %s21, 1
      %p62 = por %p60, %p61
      %p63 = scmp.ne.s32.totalorder %s52, %s53
      %p64 = scmp.eq.s32.totalorder %s21, 0
      %p65 = por %p63, %p64
      %p66 = scmp.ne.s32.totalorder %s52, %s53
      %p67 = scmp.eq.s32.totalorder %s22, 1
      %p68 = por %p66, %p67
      %p70 = scmp.ne.s32.totalorder %s53, %s69
      %p71 = scmp.eq.s32.totalorder %s22, 0
      %p72 = por %p70, %p71
      %s73 = ssub.s32 %s23, %s42
      %s74 = ssub.s32 %s24, %s38
      %s75 = sor.u32 %s73, %s74
      %p76 = scmp.eq.s32.totalorder %s75, 0
      %s78 = sadd.s32 %s77, 1
      %s79 = scalar_select %p76, %s77, %s78
      %p82 = pneg %p76
      %p83 = scmp.eq.s32.totalorder %s16, 1
      %p84 = por %p82, %p83
      %p85 = scmp.ne.s32.totalorder %s77, %s80
      %p86 = scmp.eq.s32.totalorder %s16, 0
      %p87 = por %p85, %p86
      %p88 = scmp.ne.s32.totalorder %s77, %s80
      %p89 = scmp.eq.s32.totalorder %s21, 1
      %p90 = por %p88, %p89
      %p91 = scmp.ne.s32.totalorder %s80, %s81
      %p92 = scmp.eq.s32.totalorder %s21, 0
      %p93 = por %p91, %p92
      %p94 = scmp.ne.s32.totalorder %s80, %s81
      %p95 = scmp.eq.s32.totalorder %s22, 1
      %p96 = por %p94, %p95
      %p98 = scmp.ne.s32.totalorder %s81, %s97
      %p99 = scmp.eq.s32.totalorder %s22, 0
      %p100 = por %p98, %p99
      %s101 = sld [smem:[#allocation4 + %s23]]
      %s102 = sld [smem:[#allocation4 + %s42]]
      %s103 = ssub.s32 %s101, %s102
      %s104 = ssub.s32 %s25, %s34
      %s105 = sor.u32 %s103, %s104
      %p106 = scmp.eq.s32.totalorder %s105, 0
      %s108 = sadd.s32 %s107, 1
      %s109 = scalar_select %p106, %s107, %s108
      %p112 = pneg %p106
      %p113 = scmp.eq.s32.totalorder %s16, 1
      %p114 = por %p112, %p113
      %p115 = scmp.ne.s32.totalorder %s107, %s110
      %p116 = scmp.eq.s32.totalorder %s16, 0
      %p117 = por %p115, %p116
      %p118 = scmp.ne.s32.totalorder %s107, %s110
      %p119 = scmp.eq.s32.totalorder %s21, 1
      %p120 = por %p118, %p119
      %p121 = scmp.ne.s32.totalorder %s110, %s111
      %p122 = scmp.eq.s32.totalorder %s21, 0
      %p123 = por %p121, %p122
      %p124 = scmp.ne.s32.totalorder %s110, %s111
      %p125 = scmp.eq.s32.totalorder %s22, 1
      %p126 = por %p124, %p125
      %p128 = scmp.ne.s32.totalorder %s111, %s127
      %p129 = scmp.eq.s32.totalorder %s22, 0
      %p130 = por %p128, %p129
      %s131 = sld [smem:[#allocation4 + %s23]]
      %s132 = sld [smem:[#allocation4 + %s42]]
      %s133 = ssub.s32 %s131, %s132
      %s134 = ssub.s32 %s25, %s34
      %s135 = sor.u32 %s133, %s134
      %p136 = scmp.eq.s32.totalorder %s135, 0
      %s138 = sadd.s32 %s137, 1
      %s139 = scalar_select %p136, %s137, %s138
      %p142 = pneg %p136
      %p143 = scmp.eq.s32.totalorder %s16, 1
      %p144 = por %p142, %p143
      %p145 = scmp.ne.s32.totalorder %s137, %s140
      %p146 = scmp.eq.s32.totalorder %s16, 0
      %p147 = por %p145, %p146
      %p148 = scmp.ne.s32.totalorder %s137, %s140
      %p149 = scmp.eq.s32.totalorder %s21, 1
      %p150 = por %p148, %p149
      %p151 = scmp.ne.s32.totalorder %s140, %s141
      %p152 = scmp.eq.s32.totalorder %s21, 0
      %p153 = por %p151, %p152
      %p154 = scmp.ne.s32.totalorder %s140, %s141
      %p155 = scmp.eq.s32.totalorder %s22, 1
      %p156 = por %p154, %p155
      %p158 = scmp.ne.s32.totalorder %s141, %s157
      %p159 = scmp.eq.s32.totalorder %s22, 0
      %p160 = por %p158, %p159
      %s161 = sld [smem:[#allocation4 + %s23]]
      %s162 = sld [smem:[#allocation4 + %s42]]
      %s163 = ssub.s32 %s161, %s162
      %s164 = ssub.s32 %s25, %s34
      %s165 = sor.u32 %s163, %s164
      %p166 = scmp.eq.s32.totalorder %s165, 0
      %s168 = sadd.s32 %s167, 1
      %s169 = scalar_select %p166, %s167, %s168
      %p172 = pneg %p166
      %p173 = scmp.eq.s32.totalorder %s16, 1
      %p174 = por %p172, %p173
      %p175 = scmp.ne.s32.totalorder %s167, %s170
      %p176 = scmp.eq.s32.totalorder %s16, 0
      %p177 = por %p175, %p176
      %p178 = scmp.ne.s32.totalorder %s167, %s170
      %p179 = scmp.eq.s32.totalorder %s21, 1
      %p180 = por %p178, %p179
      %p181 = scmp.ne.s32.totalorder %s170, %s171
      %p182 = scmp.eq.s32.totalorder %s21, 0
      %p183 = por %p181, %p182
      %p184 = scmp.ne.s32.totalorder %s170, %s171
      %p185 = scmp.eq.s32.totalorder %s22, 1
      %p186 = por %p184, %p185
      %p188 = scmp.ne.s32.totalorder %s171, %s187
      %p189 = scmp.eq.s32.totalorder %s22, 0
      %p190 = por %p188, %p189
      %s191 = sld [smem:[#allocation4 + %s23]]
      %s192 = sld [smem:[#allocation4 + %s42]]
      %s193 = ssub.s32 %s191, %s192
      %p194 = scmp.eq.s32.totalorder %s193, 0
      %s196 = sadd.s32 %s195, 1
      %s197 = scalar_select %p194, %s195, %s196
      %p200 = pneg %p194
      %p201 = scmp.eq.s32.totalorder %s16, 1
      %p202 = por %p200, %p201
      %p203 = scmp.ne.s32.totalorder %s195, %s198
      %p204 = scmp.eq.s32.totalorder %s16, 0
      %p205 = por %p203, %p204
      %p206 = scmp.ne.s32.totalorder %s195, %s198
      %p207 = scmp.eq.s32.totalorder %s21, 1
      %p208 = por %p206, %p207
      %p209 = scmp.ne.s32.totalorder %s198, %s199
      %p210 = scmp.eq.s32.totalorder %s21, 0
      %p211 = por %p209, %p210
      %p212 = scmp.ne.s32.totalorder %s198, %s199
      %p213 = scmp.eq.s32.totalorder %s22, 1
      %p214 = por %p212, %p213
      %p216 = scmp.ne.s32.totalorder %s199, %s215
      %p217 = scmp.eq.s32.totalorder %s22, 0
      %p218 = por %p216, %p217
      %s219 = sld [smem:[#allocation4 + %s23]]
      %s220 = sld [smem:[#allocation4 + %s42]]
      %s221 = ssub.s32 %s219, %s220
      %p222 = scmp.eq.s32.totalorder %s221, 0
      %s224 = sadd.s32 %s223, 1
      %s225 = scalar_select %p222, %s223, %s224
      %p228 = pneg %p222
      %p229 = scmp.eq.s32.totalorder %s16, 1
      %p230 = por %p228, %p229
      %p231 = scmp.ne.s32.totalorder %s223, %s226
      %p232 = scmp.eq.s32.totalorder %s16, 0
      %p233 = por %p231, %p232
      %p234 = scmp.ne.s32.totalorder %s223, %s226
      %p235 = scmp.eq.s32.totalorder %s21, 1
      %p236 = por %p234, %p235
      %p237 = scmp.ne.s32.totalorder %s226, %s227
      %p238 = scmp.eq.s32.totalorder %s21, 0
      %p239 = por %p237, %p238
      %p240 = scmp.ne.s32.totalorder %s226, %s227
      %p241 = scmp.eq.s32.totalorder %s22, 1
      %p242 = por %p240, %p241
      %p244 = scmp.ne.s32.totalorder %s227, %s243
      %p245 = scmp.eq.s32.totalorder %s22, 0
      %p246 = por %p244, %p245
      %s247 = sld [smem:[#allocation4 + %s23]]
      %s248 = sld [smem:[#allocation4 + %s42]]
      %s249 = ssub.s32 %s247, %s248
      %p250 = scmp.eq.s32.totalorder %s249, 0
      %s252 = sadd.s32 %s251, 1
      %s253 = scalar_select %p250, %s251, %s252
      %p256 = pneg %p250
      %p257 = scmp.eq.s32.totalorder %s16, 1
      %p258 = por %p256, %p257
      %p259 = scmp.ne.s32.totalorder %s251, %s254
      %p260 = scmp.eq.s32.totalorder %s16, 0
      %p261 = por %p259, %p260
      %p262 = scmp.ne.s32.totalorder %s251, %s254
      %p263 = scmp.eq.s32.totalorder %s21, 1
      %p264 = por %p262, %p263
      %p265 = scmp.ne.s32.totalorder %s254, %s255
      %p266 = scmp.eq.s32.totalorder %s21, 0
      %p267 = por %p265, %p266
      %p268 = scmp.ne.s32.totalorder %s254, %s255
      %p269 = scmp.eq.s32.totalorder %s22, 1
      %p270 = por %p268, %p269
      %p272 = scmp.ne.s32.totalorder %s255, %s271
      %p273 = scmp.eq.s32.totalorder %s22, 0
      %p274 = por %p272, %p273
      %s275 = ssub.s32 %s23, %s42
      %s276 = ssub.s32 %s24, %s38
      %s277 = sor.u32 %s275, %s276
      %p278 = scmp.eq.s32.totalorder %s277, 0
      %s280 = sadd.s32 %s279, 1
      %s281 = scalar_select %p278, %s279, %s280
      %p284 = pneg %p278
      %p285 = scmp.eq.s32.totalorder %s16, 1
      %p286 = por %p284, %p285
      %p287 = scmp.ne.s32.totalorder %s279, %s282
      %p288 = scmp.eq.s32.totalorder %s16, 0
      %p289 = por %p287, %p288
      %p290 = scmp.ne.s32.totalorder %s279, %s282
      %p291 = scmp.eq.s32.totalorder %s21, 1
      %p292 = por %p290, %p291
      %p293 = scmp.ne.s32.totalorder %s282, %s283
      %p294 = scmp.eq.s32.totalorder %s21, 0
      %p295 = por %p293, %p294
      %p296 = scmp.ne.s32.totalorder %s282, %s283
      %p297 = scmp.eq.s32.totalorder %s22, 1
      %p298 = por %p296, %p297
      %p300 = scmp.ne.s32.totalorder %s283, %s299
      %p301 = scmp.eq.s32.totalorder %s22, 0
      %p302 = por %p300, %p301
      %p303 = scmp.le.s32.totalorder 1, %s16
      %p304 = scmp.lt.s32.totalorder %s16, 3
      %p305 = pnand %p303, %p304
      %p306 = pneg %p305
      // Predicated region
      $region9: #{fmri_encoder_cross_forward.15} parent=5 // pred_check
        _
      $region10: #{fmri_encoder_cross_forward.15} parent=5 // pred_check_branch
        %308 = sbr.rel (%p305) target = $region12
      $region11: #{fmri_encoder_cross_forward.15} parent=5 // pred_region
        %s309 = ssub.s32 %s16, 1
        // Predicated region
        $region13: #{fmri_encoder_cross_forward.15} parent=11 // pred_check
          %p310 = pneg %p93
        $region14: #{fmri_encoder_cross_forward.15} parent=11 // pred_check_branch
          %312 = sbr.rel (%p310) target = $region16
        $region15: #{fmri_encoder_cross_forward.15} parent=11 // pred_region
          %p313 = scmp.lt.s32.totalorder %s26, 0
          %s314 = scalar_select %p313, %s26, 0
          %p315 = scmp.lt.s32.totalorder %s27, 0
          %s316 = scalar_select %p315, %s27, 0
          %s317 = sadd.s32 %s316, %s314
          %s318 = smul.addr %s317, 4
          %s319 = scalar_lea.vmem %s2, %s318
        $region16: #{fmri_encoder_cross_forward.15} parent=11 // pred_fallthru
          _
        // Predicated region
        $region17: #{fmri_encoder_cross_forward.15} parent=11 // pred_check
          %p320 = pneg %p211
        $region18: #{fmri_encoder_cross_forward.15} parent=11 // pred_check_branch
          %322 = sbr.rel (%p320) target = $region20
        $region19: #{fmri_encoder_cross_forward.15} parent=11 // pred_region
          %s323 = sld [smem:[#allocation4 + %s26]]
          %p324 = scmp.lt.s32.totalorder %s323, 1
          %s325 = scalar_select %p324, %s323, 1
          %s326 = smul.addr %s325, 2
          %s327 = scalar_lea.vmem %s6, %s326
          %s328 = sld [smem:[#allocation4 + %s26]]
        $region20: #{fmri_encoder_cross_forward.15} parent=11 // pred_fallthru
          _
        // Predicated region
        $region21: #{fmri_encoder_cross_forward.15} parent=11 // pred_check
          %p329 = pneg %p239
        $region22: #{fmri_encoder_cross_forward.15} parent=11 // pred_check_branch
          %331 = sbr.rel (%p329) target = $region24
        $region23: #{fmri_encoder_cross_forward.15} parent=11 // pred_region
          %s332 = sld [smem:[#allocation4 + %s26]]
          %p333 = scmp.lt.s32.totalorder %s332, 1
          %s334 = scalar_select %p333, %s332, 1
          %s335 = smul.addr %s334, 2
          %s336 = scalar_lea.vmem %s7, %s335
          %s337 = sld [smem:[#allocation4 + %s26]]
        $region24: #{fmri_encoder_cross_forward.15} parent=11 // pred_fallthru
          _
        // Predicated region
        $region25: #{fmri_encoder_cross_forward.15} parent=11 // pred_check
          %p338 = pneg %p267
        $region26: #{fmri_encoder_cross_forward.15} parent=11 // pred_check_branch
          %340 = sbr.rel (%p338) target = $region28
        $region27: #{fmri_encoder_cross_forward.15} parent=11 // pred_region
          %s341 = sld [smem:[#allocation4 + %s26]]
          %p342 = scmp.lt.s32.totalorder %s341, 1
          %s343 = scalar_select %p342, %s341, 1
          %s344 = smul.addr %s343, 2
          %s345 = scalar_lea.vmem %s8, %s344
          %s346 = sld [smem:[#allocation4 + %s26]]
        $region28: #{fmri_encoder_cross_forward.15} parent=11 // pred_fallthru
          _
      $region12: #{fmri_encoder_cross_forward.15} parent=5 // pred_fallthru
        _
      %p347 = scmp.lt.s32.totalorder %s16, 2
      // Predicated region
      $region29: #{fmri_encoder_cross_forward.15} parent=5 // pred_check
        %p348 = pneg %p347
      $region30: #{fmri_encoder_cross_forward.15} parent=5 // pred_check_branch
        %350 = sbr.rel (%p348) target = $region32
      $region31: #{fmri_encoder_cross_forward.15} parent=5 // pred_region
        // Predicated region
        $region33: #{fmri_encoder_cross_forward.15} parent=31 // pred_check
          %p351 = pneg %p59
        $region34: #{fmri_encoder_cross_forward.15} parent=31 // pred_check_branch
          %353 = sbr.rel (%p351) target = $region36
        $region35: #{fmri_encoder_cross_forward.15} parent=31 // pred_region
          %p354 = scmp.lt.s32.totalorder %s23, 0
          %s355 = scalar_select %p354, %s23, 0
          %p356 = scmp.lt.s32.totalorder %s24, 0
          %s357 = scalar_select %p356, %s24, 0
          %p358 = scmp.lt.s32.totalorder %s25, 1
          %s359 = scalar_select %p358, %s25, 1
          %s360 = smul.addr %s357, 2
          %s361 = sadd.s32 %s359, %s360
          %s362 = smul.addr %s355, 2
          %s363 = sadd.s32 %s361, %s362
          %s364 = smul.addr %s363, 4
          %s365 = scalar_lea.vmem %s1, %s364
        $region36: #{fmri_encoder_cross_forward.15} parent=31 // pred_fallthru
          _
        // Predicated region
        $region37: #{fmri_encoder_cross_forward.15} parent=31 // pred_check
          %p366 = pneg %p117
        $region38: #{fmri_encoder_cross_forward.15} parent=31 // pred_check_branch
          %368 = sbr.rel (%p366) target = $region40
        $region39: #{fmri_encoder_cross_forward.15} parent=31 // pred_region
          %s369 = sand.u32 %s107, 1
          %s370 = sand.u32 %s107, 1
          %s371 = smul.addr %s370, 64
          %s372 = scalar_lea.vmem [#allocation5], %s371
          %s373 = sld [smem:[#allocation4 + %s23]]
          %s374 = smul.addr %s373, 32
          %s375 = sadd.s32 %s25, %s374
          %s376 = smul.addr %s375, 4
          %s377 = scalar_lea.vmem %s3, %s376
          // Predicated region
          $region41: #{fmri_encoder_cross_forward.15} parent=39 // pred_check
            _
          $region42: #{fmri_encoder_cross_forward.15} parent=39 // pred_check_branch
            %379 = sbr.rel (0) target = $region44
          $region43: #{fmri_encoder_cross_forward.15} parent=39 // pred_region
            // Predicated region
            $region45: #{fmri_encoder_cross_forward.15} parent=43 // pred_check
              _
            $region46: #{fmri_encoder_cross_forward.15} parent=43 // pred_check_branch
              %381 = sbr.rel target = $region48
            $region47: #{fmri_encoder_cross_forward.15} parent=43 // pred_region
              // Predicated region
              $region60: #{fmri_encoder_cross_forward.15} parent=47 // pred_check
                _
              $region61: #{fmri_encoder_cross_forward.15} parent=47 // pred_check_branch
                %427 = sbr.rel (0) target = $region63
              $region62: #{fmri_encoder_cross_forward.15} parent=47 // pred_region
                loop: start=0, step=1, limit=1
                $region64: #{fmri_encoder_cross_forward.15} parent=62 // loop_pre_header
                  _
                $region65: #{fmri_encoder_cross_forward.15} parent=62 // loop_header
                  %s429 = sphi 0, %s433
                  %p430 = scmp.ge.s32.totalorder %s429, 1
                  %s434 = sphi %s377, %s377
                  %s435 = sphi %s372, %s372
                $region66: #{fmri_encoder_cross_forward.15} parent=62 // loop_header_branch
                  %432 = sbr.rel (%p430) target = $region70
                $region67: #{fmri_encoder_cross_forward.15} parent=62 // loop_body
                  _
                $region68: #{fmri_encoder_cross_forward.15} parent=62 // loop_footer
                  %s433 = sadd.s32 1, %s429
                $region69: #{fmri_encoder_cross_forward.15} parent=62 // loop_footer_branch
                  %428 = sbr.rel target = $region65
                $region70: #{fmri_encoder_cross_forward.15} parent=62 // loop_exit
                  _
                %s437 = ssub.s32 16, 1
                loop: start=0, step=1, limit=1
                $region71: #{fmri_encoder_cross_forward.15} parent=62 // loop_pre_header
                  _
                $region72: #{fmri_encoder_cross_forward.15} parent=62 // loop_header
                  %s439 = sphi 0, %s443
                  %p440 = scmp.ge.s32.totalorder %s439, 1
                  %s444 = sphi %s377, %s377
                  %s445 = sphi %s372, %s372
                $region73: #{fmri_encoder_cross_forward.15} parent=62 // loop_header_branch
                  %442 = sbr.rel (%p440) target = $region77
                $region74: #{fmri_encoder_cross_forward.15} parent=62 // loop_body
                  %v446 = vld [vmem:[%s444] sm:%s437]
                  %447 = vst [vmem:[%s445] sm:%s437] %v446
                  %v448 = vld [vmem:[%s444 + $0x8] sm:%s437]
                  %449 = vst [vmem:[%s445 + $0x4] sm:%s437] %v448
                  %v450 = vld [vmem:[%s444 + $0x10] sm:%s437]
                  %451 = vst [vmem:[%s445 + $0x8] sm:%s437] %v450
                  %v452 = vld [vmem:[%s444 + $0x18] sm:%s437]
                  %453 = vst [vmem:[%s445 + $0xc] sm:%s437] %v452
                  %v454 = vld [vmem:[%s444 + $0x20] sm:%s437]
                  %455 = vst [vmem:[%s445 + $0x10] sm:%s437] %v454
                  %v456 = vld [vmem:[%s444 + $0x28] sm:%s437]
                  %457 = vst [vmem:[%s445 + $0x14] sm:%s437] %v456
                  %v458 = vld [vmem:[%s444 + $0x30] sm:%s437]
                  %459 = vst [vmem:[%s445 + $0x18] sm:%s437] %v458
                  %v460 = vld [vmem:[%s444 + $0x38] sm:%s437]
                  %461 = vst [vmem:[%s445 + $0x1c] sm:%s437] %v460
                  %v462 = vld [vmem:[%s444 + $0x40] sm:%s437]
                  %463 = vst [vmem:[%s445 + $0x20] sm:%s437] %v462
                  %v464 = vld [vmem:[%s444 + $0x48] sm:%s437]
                  %465 = vst [vmem:[%s445 + $0x24] sm:%s437] %v464
                  %v466 = vld [vmem:[%s444 + $0x50] sm:%s437]
                  %467 = vst [vmem:[%s445 + $0x28] sm:%s437] %v466
                  %v468 = vld [vmem:[%s444 + $0x58] sm:%s437]
                  %469 = vst [vmem:[%s445 + $0x2c] sm:%s437] %v468
                  %v470 = vld [vmem:[%s444 + $0x60] sm:%s437]
                  %471 = vst [vmem:[%s445 + $0x30] sm:%s437] %v470
                  %v472 = vld [vmem:[%s444 + $0x68] sm:%s437]
                  %473 = vst [vmem:[%s445 + $0x34] sm:%s437] %v472
                  %v474 = vld [vmem:[%s444 + $0x70] sm:%s437]
                  %475 = vst [vmem:[%s445 + $0x38] sm:%s437] %v474
                  %v476 = vld [vmem:[%s444 + $0x78] sm:%s437]
                  %477 = vst [vmem:[%s445 + $0x3c] sm:%s437] %v476
                $region75: #{fmri_encoder_cross_forward.15} parent=62 // loop_footer
                  %s443 = sadd.s32 1, %s439
                $region76: #{fmri_encoder_cross_forward.15} parent=62 // loop_footer_branch
                  %438 = sbr.rel target = $region72
                $region77: #{fmri_encoder_cross_forward.15} parent=62 // loop_exit
                  _
              $region63: #{fmri_encoder_cross_forward.15} parent=47 // pred_fallthru
                _
            $region48: #{fmri_encoder_cross_forward.15} parent=43 // pred_fallthru
              _
            // Predicated region
            $region49: #{fmri_encoder_cross_forward.15} parent=43 // pred_check
              _
            $region50: #{fmri_encoder_cross_forward.15} parent=43 // pred_check_branch
              %383 = sbr.rel (0) target = $region52
            $region51: #{fmri_encoder_cross_forward.15} parent=43 // pred_region
              %s385 = ssub.s32 16, 1
              loop: start=0, step=1, limit=1
              $region53: #{fmri_encoder_cross_forward.15} parent=51 // loop_pre_header
                _
              $region54: #{fmri_encoder_cross_forward.15} parent=51 // loop_header
                %s387 = sphi 0, %s391
                %p388 = scmp.ge.s32.totalorder %s387, 1
                %s392 = sphi %s377, %s377
                %s393 = sphi %s372, %s372
              $region55: #{fmri_encoder_cross_forward.15} parent=51 // loop_header_branch
                %390 = sbr.rel (%p388) target = $region59
              $region56: #{fmri_encoder_cross_forward.15} parent=51 // loop_body
                %v394 = vld [vmem:[%s392] sm:%s385]
                %395 = vst [vmem:[%s393] sm:%s385] %v394
                %v396 = vld [vmem:[%s392 + $0x8] sm:%s385]
                %397 = vst [vmem:[%s393 + $0x4] sm:%s385] %v396
                %v398 = vld [vmem:[%s392 + $0x10] sm:%s385]
                %399 = vst [vmem:[%s393 + $0x8] sm:%s385] %v398
                %v400 = vld [vmem:[%s392 + $0x18] sm:%s385]
                %401 = vst [vmem:[%s393 + $0xc] sm:%s385] %v400
                %v402 = vld [vmem:[%s392 + $0x20] sm:%s385]
                %403 = vst [vmem:[%s393 + $0x10] sm:%s385] %v402
                %v404 = vld [vmem:[%s392 + $0x28] sm:%s385]
                %405 = vst [vmem:[%s393 + $0x14] sm:%s385] %v404
                %v406 = vld [vmem:[%s392 + $0x30] sm:%s385]
                %407 = vst [vmem:[%s393 + $0x18] sm:%s385] %v406
                %v408 = vld [vmem:[%s392 + $0x38] sm:%s385]
                %409 = vst [vmem:[%s393 + $0x1c] sm:%s385] %v408
                %v410 = vld [vmem:[%s392 + $0x40] sm:%s385]
                %411 = vst [vmem:[%s393 + $0x20] sm:%s385] %v410
                %v412 = vld [vmem:[%s392 + $0x48] sm:%s385]
                %413 = vst [vmem:[%s393 + $0x24] sm:%s385] %v412
                %v414 = vld [vmem:[%s392 + $0x50] sm:%s385]
                %415 = vst [vmem:[%s393 + $0x28] sm:%s385] %v414
                %v416 = vld [vmem:[%s392 + $0x58] sm:%s385]
                %417 = vst [vmem:[%s393 + $0x2c] sm:%s385] %v416
                %v418 = vld [vmem:[%s392 + $0x60] sm:%s385]
                %419 = vst [vmem:[%s393 + $0x30] sm:%s385] %v418
                %v420 = vld [vmem:[%s392 + $0x68] sm:%s385]
                %421 = vst [vmem:[%s393 + $0x34] sm:%s385] %v420
                %v422 = vld [vmem:[%s392 + $0x70] sm:%s385]
                %423 = vst [vmem:[%s393 + $0x38] sm:%s385] %v422
                %v424 = vld [vmem:[%s392 + $0x78] sm:%s385]
                %425 = vst [vmem:[%s393 + $0x3c] sm:%s385] %v424
              $region57: #{fmri_encoder_cross_forward.15} parent=51 // loop_footer
                %s391 = sadd.s32 1, %s387
              $region58: #{fmri_encoder_cross_forward.15} parent=51 // loop_footer_branch
                %386 = sbr.rel target = $region54
              $region59: #{fmri_encoder_cross_forward.15} parent=51 // loop_exit
                _
            $region52: #{fmri_encoder_cross_forward.15} parent=43 // pred_fallthru
              _
          $region44: #{fmri_encoder_cross_forward.15} parent=39 // pred_fallthru
            _
          %478 = vnop
        $region40: #{fmri_encoder_cross_forward.15} parent=31 // pred_fallthru
          _
        // Predicated region
        $region78: #{fmri_encoder_cross_forward.15} parent=31 // pred_check
          %p479 = pneg %p147
        $region79: #{fmri_encoder_cross_forward.15} parent=31 // pred_check_branch
          %481 = sbr.rel (%p479) target = $region81
        $region80: #{fmri_encoder_cross_forward.15} parent=31 // pred_region
          %s482 = sld [smem:[#allocation4 + %s23]]
          %p483 = scmp.lt.s32.totalorder %s482, 1
          %s484 = scalar_select %p483, %s482, 1
          %p485 = scmp.lt.s32.totalorder %s25, 1
          %s486 = scalar_select %p485, %s25, 1
          %s487 = smul.addr %s484, 2
          %s488 = sadd.s32 %s486, %s487
          %s489 = scalar_lea.vmem %s4, %s488
          %s490 = sld [smem:[#allocation4 + %s23]]
        $region81: #{fmri_encoder_cross_forward.15} parent=31 // pred_fallthru
          _
        // Predicated region
        $region82: #{fmri_encoder_cross_forward.15} parent=31 // pred_check
          %p491 = pneg %p177
        $region83: #{fmri_encoder_cross_forward.15} parent=31 // pred_check_branch
          %493 = sbr.rel (%p491) target = $region85
        $region84: #{fmri_encoder_cross_forward.15} parent=31 // pred_region
          %s494 = sld [smem:[#allocation4 + %s23]]
          %s495 = smul.u32 16, %s25
          %p496 = scmp.lt.s32.totalorder %s494, 1
          %s497 = scalar_select %p496, %s494, 1
          %p498 = scmp.lt.s32.totalorder %s495, 31
          %s499 = scalar_select %p498, %s495, 31
          %s500 = smul.addr %s499, 2
          %s501 = smul.addr %s497, 64
          %s502 = sadd.s32 %s500, %s501
          %s503 = smul.addr %s502, 4
          %s504 = scalar_lea.vmem %s5, %s503
          %s505 = sld [smem:[#allocation4 + %s23]]
          %s506 = smul.u32 16, %s25
        $region85: #{fmri_encoder_cross_forward.15} parent=31 // pred_fallthru
          _
      $region32: #{fmri_encoder_cross_forward.15} parent=5 // pred_fallthru
        _
      %p507 = scmp.le.s32.totalorder 1, %s16
      %p508 = scmp.lt.s32.totalorder %s16, 3
      %p509 = pnand %p507, %p508
      %p510 = pneg %p509
      // Predicated region
      $region86: #{fmri_encoder_cross_forward.15} parent=5 // pred_check
        _
      $region87: #{fmri_encoder_cross_forward.15} parent=5 // pred_check_branch
        %512 = sbr.rel (%p509) target = $region89
      $region88: #{fmri_encoder_cross_forward.15} parent=5 // pred_region
        %s513 = ssub.s32 %s16, 1
        %s514 = sand.u32 %s110, 1
        %s515 = sand.u32 %s110, 1
        %s516 = smul.addr %s515, 64
        %s517 = scalar_lea.vmem [#allocation5], %s516
        // Predicated region
        $region90: #{fmri_encoder_cross_forward.15} parent=88 // pred_check
          %p518 = pneg %p123
        $region91: #{fmri_encoder_cross_forward.15} parent=88 // pred_check_branch
          %520 = sbr.rel (%p518) target = $region93
        $region92: #{fmri_encoder_cross_forward.15} parent=88 // pred_region
          _
        $region93: #{fmri_encoder_cross_forward.15} parent=88 // pred_fallthru
          _
        %p521 = scmp.lt.s32.totalorder %s26, 0
        %s522 = scalar_select %p521, %s26, 0
        %p523 = scmp.lt.s32.totalorder %s27, 0
        %s524 = scalar_select %p523, %s27, 0
        %p525 = scmp.lt.s32.totalorder %s28, 1
        %s526 = scalar_select %p525, %s28, 1
        %s527 = smul.addr %s524, 2
        %s528 = sadd.s32 %s526, %s527
        %s529 = smul.addr %s522, 2
        %s530 = sadd.s32 %s528, %s529
        %s531 = smul.addr %s530, 4
        %s532 = scalar_lea.vmem %s1, %s531
        %p533 = pneg %p65
        %p534 = pneg %p62
        %p535 = scmp.lt.s32.totalorder %s26, 0
        %s536 = scalar_select %p535, %s26, 0
        %p537 = scmp.lt.s32.totalorder %s27, 0
        %s538 = scalar_select %p537, %s27, 0
        %s539 = sadd.s32 %s538, %s536
        %s540 = smul.addr %s539, 4
        %s541 = scalar_lea.vmem %s2, %s540
        %p542 = pneg %p93
        %p543 = pneg %p90
        %s544 = sand.u32 %s110, 1
        %s545 = sand.u32 %s110, 1
        %s546 = smul.addr %s545, 64
        %s547 = scalar_lea.vmem [#allocation5], %s546
        %p548 = pneg %p123
        %p549 = pneg %p120
        %s550 = sld [smem:[#allocation4 + %s26]]
        %p551 = scmp.lt.s32.totalorder %s550, 1
        %s552 = scalar_select %p551, %s550, 1
        %p553 = scmp.lt.s32.totalorder %s28, 1
        %s554 = scalar_select %p553, %s28, 1
        %s555 = smul.addr %s552, 2
        %s556 = sadd.s32 %s554, %s555
        %s557 = scalar_lea.vmem %s4, %s556
        %p558 = pneg %p153
        %p559 = pneg %p150
        %s560 = sld [smem:[#allocation4 + %s26]]
        %s561 = smul.u32 16, %s28
        %p562 = scmp.lt.s32.totalorder %s560, 1
        %s563 = scalar_select %p562, %s560, 1
        %p564 = scmp.lt.s32.totalorder %s561, 31
        %s565 = scalar_select %p564, %s561, 31
        %s566 = smul.addr %s565, 2
        %s567 = smul.addr %s563, 64
        %s568 = sadd.s32 %s566, %s567
        %s569 = smul.addr %s568, 4
        %s570 = scalar_lea.vmem %s5, %s569
        %p571 = pneg %p183
        %p572 = pneg %p180
        %s573 = sld [smem:[#allocation4 + %s26]]
        %p574 = scmp.lt.s32.totalorder %s573, 1
        %s575 = scalar_select %p574, %s573, 1
        %s576 = smul.addr %s575, 2
        %s577 = scalar_lea.vmem %s6, %s576
        %p578 = pneg %p211
        %p579 = pneg %p208
        %s580 = sld [smem:[#allocation4 + %s26]]
        %p581 = scmp.lt.s32.totalorder %s580, 1
        %s582 = scalar_select %p581, %s580, 1
        %s583 = smul.addr %s582, 2
        %s584 = scalar_lea.vmem %s7, %s583
        %p585 = pneg %p239
        %p586 = pneg %p236
        %s587 = sld [smem:[#allocation4 + %s26]]
        %p588 = scmp.lt.s32.totalorder %s587, 1
        %s589 = scalar_select %p588, %s587, 1
        %s590 = smul.addr %s589, 2
        %s591 = scalar_lea.vmem %s8, %s590
        %p592 = pneg %p267
        %p593 = pneg %p264
        %p594 = pneg %p295
        %p595 = pneg %p292
        %p596 = scmp.lt.s32.totalorder %s26, 0
        %s597 = scalar_select %p596, %s26, 0
        %p598 = scmp.lt.s32.totalorder %s27, 0
        %s599 = scalar_select %p598, %s27, 0
        %s600 = smul.addr %s599, 2
        %s601 = smul.addr %s597, 2
        %s602 = sadd.s32 %s600, %s601
        %s603 = smul.addr %s602, 4
        %s604 = scalar_lea.vmem %s9, %s603
        %p605 = scmp.lt.s32.totalorder %s26, 0
        %s606 = scalar_select %p605, %s26, 0
        %p607 = scmp.lt.s32.totalorder %s27, 0
        %s608 = scalar_select %p607, %s27, 0
        %p609 = scmp.lt.s32.totalorder %s28, 1
        %s610 = scalar_select %p609, %s28, 1
        %s611 = smul.addr %s608, 2
        %s612 = sadd.s32 %s610, %s611
        %s613 = smul.addr %s606, 2
        %s614 = sadd.s32 %s612, %s613
        %s615 = smul.addr %s614, 4
        %s616 = scalar_lea.vmem %s1, %s615
        %p617 = scmp.lt.s32.totalorder %s26, 0
        %s618 = scalar_select %p617, %s26, 0
        %p619 = scmp.lt.s32.totalorder %s27, 0
        %s620 = scalar_select %p619, %s27, 0
        %s621 = sadd.s32 %s620, %s618
        %s622 = smul.addr %s621, 4
        %s623 = scalar_lea.vmem %s2, %s622
        %s624 = sld [smem:[#allocation4 + %s26]]
        %s625 = sld [smem:[#allocation4 + %s26]]
        %p626 = scmp.lt.s32.totalorder %s625, 1
        %s627 = scalar_select %p626, %s625, 1
        %p628 = scmp.lt.s32.totalorder %s28, 1
        %s629 = scalar_select %p628, %s28, 1
        %s630 = smul.addr %s627, 2
        %s631 = sadd.s32 %s629, %s630
        %s632 = scalar_lea.vmem %s4, %s631
        %s633 = sld [smem:[#allocation4 + %s26]]
        %s634 = sld [smem:[#allocation4 + %s26]]
        %s635 = smul.u32 16, %s28
        %p636 = scmp.lt.s32.totalorder %s634, 1
        %s637 = scalar_select %p636, %s634, 1
        %p638 = scmp.lt.s32.totalorder %s635, 31
        %s639 = scalar_select %p638, %s635, 31
        %s640 = smul.addr %s639, 2
        %s641 = smul.addr %s637, 64
        %s642 = sadd.s32 %s640, %s641
        %s643 = smul.addr %s642, 4
        %s644 = scalar_lea.vmem %s5, %s643
        %s645 = sld [smem:[#allocation4 + %s26]]
        %s646 = smul.u32 16, %s28
        %s647 = sld [smem:[#allocation4 + %s26]]
        %p648 = scmp.lt.s32.totalorder %s647, 1
        %s649 = scalar_select %p648, %s647, 1
        %s650 = smul.addr %s649, 2
        %s651 = scalar_lea.vmem %s6, %s650
        %s652 = sld [smem:[#allocation4 + %s26]]
        %s653 = sld [smem:[#allocation4 + %s26]]
        %p654 = scmp.lt.s32.totalorder %s653, 1
        %s655 = scalar_select %p654, %s653, 1
        %s656 = smul.addr %s655, 2
        %s657 = scalar_lea.vmem %s7, %s656
        %s658 = sld [smem:[#allocation4 + %s26]]
        %s659 = sld [smem:[#allocation4 + %s26]]
        %p660 = scmp.lt.s32.totalorder %s659, 1
        %s661 = scalar_select %p660, %s659, 1
        %s662 = smul.addr %s661, 2
        %s663 = scalar_lea.vmem %s8, %s662
        %s664 = sld [smem:[#allocation4 + %s26]]
        %p665 = scmp.lt.s32.totalorder %s26, 0
        %s666 = scalar_select %p665, %s26, 0
        %p667 = scmp.lt.s32.totalorder %s27, 0
        %s668 = scalar_select %p667, %s27, 0
        %s669 = smul.addr %s668, 2
        %s670 = smul.addr %s666, 2
        %s671 = sadd.s32 %s669, %s670
        %s672 = smul.addr %s671, 4
        %s673 = scalar_lea.vmem %s9, %s672
        %p675 = scmp.eq.s32.totalorder %s28, 0
        // Predicated region
        $region94: #{fmri_encoder_cross_forward.15} parent=88 // pred_check
          %p676 = pneg %p675
        $region95: #{fmri_encoder_cross_forward.15} parent=88 // pred_check_branch
          %678 = sbr.rel (%p676) target = $region97
        $region96: #{fmri_encoder_cross_forward.15} parent=88 // pred_region
          %679 = vst [vmem:[#allocation2] sm:$0xff] 0.0
          %680 = vst [vmem:[#allocation2 + $0x8] sm:$0xff] 0.0
        $region97: #{fmri_encoder_cross_forward.15} parent=88 // pred_fallthru
          _
        %v681 = vld [vmem:[%s623] sm:$0xf]
        %v682 = vld [vmem:[%s517] sm:$0xf]
        %v683 = vld [vmem:[%s517 + $0x4] sm:$0xf]
        %v684 = vld [vmem:[%s517 + $0x8] sm:$0xf]
        %v685 = vld [vmem:[%s517 + $0xc] sm:$0xf]
        %v686 = vld [vmem:[%s517 + $0x10] sm:$0xf]
        %v687 = vld [vmem:[%s517 + $0x14] sm:$0xf]
        %v688 = vld [vmem:[%s517 + $0x18] sm:$0xf]
        %v689 = vld [vmem:[%s517 + $0x1c] sm:$0xf]
        %v690 = vld [vmem:[%s517 + $0x20] sm:$0xf]
        %v691 = vld [vmem:[%s517 + $0x24] sm:$0xf]
        %v692 = vld [vmem:[%s517 + $0x28] sm:$0xf]
        %v693 = vld [vmem:[%s517 + $0x2c] sm:$0xf]
        %v694 = vld [vmem:[%s517 + $0x30] sm:$0xf]
        %v695 = vld [vmem:[%s517 + $0x34] sm:$0xf]
        %v696 = vld [vmem:[%s517 + $0x38] sm:$0xf]
        %v697 = vld [vmem:[%s517 + $0x3c] sm:$0xf]
        %v698 = vld [vmem:[%s632] sm:$0x1]
        %v700 = vlaneseq
        %v701 = vshrl.u32 %v700, 7
        %v702 = vsub.s32 0, %v701
        %v703 = vrot.slane %v698, %v702
        %v721 = vunpack.c.l.b16 %v682
        %v722 = vunpack.c.l.b16 %v683
        %v723 = vunpack.c.l.b16 %v684
        %v724 = vunpack.c.l.b16 %v685
        %v725 = vunpack.c.l.b16 %v686
        %v726 = vunpack.c.l.b16 %v687
        %v727 = vunpack.c.l.b16 %v688
        %v728 = vunpack.c.l.b16 %v689
        %v729 = vunpack.c.l.b16 %v690
        %v730 = vunpack.c.l.b16 %v691
        %v731 = vunpack.c.l.b16 %v692
        %v732 = vunpack.c.l.b16 %v693
        %v733 = vunpack.c.l.b16 %v694
        %v734 = vunpack.c.l.b16 %v695
        %v735 = vunpack.c.l.b16 %v696
        %v736 = vunpack.c.l.b16 %v697
        %v737 = vpack.c.b16 %v722, %v721
        %v738 = vpack.c.b16 %v724, %v723
        %v739 = vpack.c.b16 %v726, %v725
        %v740 = vpack.c.b16 %v728, %v727
        %v741 = vpack.c.b16 %v730, %v729
        %v742 = vpack.c.b16 %v732, %v731
        %v743 = vpack.c.b16 %v734, %v733
        %v744 = vpack.c.b16 %v736, %v735
        %753 = vmatprep.subr.bf16.mxu0 0
        %754 = vmatpush1.bf16.msra.mxu0 %v744
        %755 = vmatprep.subr.bf16.mxu0 0
        %756 = vmatpush1.bf16.msra.mxu0 %v743
        %757 = vmatprep.subr.bf16.mxu0 0
        %758 = vmatpush1.bf16.msra.mxu0 %v742
        %759 = vmatprep.subr.bf16.mxu0 0
        %760 = vmatpush1.bf16.msra.mxu0 %v741
        %761 = vmatprep.subr.bf16.mxu0 0
        %762 = vmatpush1.bf16.msra.mxu0 %v740
        %763 = vmatprep.subr.bf16.mxu0 0
        %764 = vmatpush1.bf16.msra.mxu0 %v739
        %765 = vmatprep.subr.bf16.mxu0 0
        %766 = vmatpush1.bf16.msra.mxu0 %v738
        %767 = vmatprep.subr.bf16.mxu0 0
        %768 = vmatpush1.bf16.msra.mxu0 %v737
        %769 = vmatprep.subr.bf16.mxu0 0
        %770 = vmatpush2.bf16.msra.mxu0 0
        %771 = vmatprep.subr.bf16.mxu0 0
        %772 = vmatpush2.bf16.msra.mxu0 0
        %773 = vmatprep.subr.bf16.mxu0 0
        %774 = vmatpush2.bf16.msra.mxu0 0
        %775 = vmatprep.subr.bf16.mxu0 0
        %776 = vmatpush2.bf16.msra.mxu0 0
        %777 = vmatprep.subr.bf16.mxu0 0
        %778 = vmatpush2.bf16.msra.mxu0 0
        %779 = vmatprep.subr.bf16.mxu0 0
        %780 = vmatpush2.bf16.msra.mxu0 0
        %781 = vmatprep.subr.bf16.mxu0 0
        %782 = vmatpush2.bf16.msra.mxu0 0
        %783 = vmatprep.subr.bf16.mxu0 0
        %784 = vmatpush2.bf16.msra.mxu0 0
        %785 = vmatprep.mubr.bf16.mxu0 0
        %786 = vmatmul.mubr.bf16.gmra.mxu0 %v681
        %v787 = vpop.f32.mrf.mxu0
        %v788 = vadd.f32 %v703, %v787
        %v789 = vpop.f32.mrf.mxu0
        %v790 = vpop.f32.mrf.mxu0
        %v791 = vpop.f32.mrf.mxu0
        %792 = vdwg.mxu0
        %v793 = vld [vmem:[%s616] sm:$0xf]
        %v794 = vunpack.c.l.bf16 %v793
        %v795 = vadd.f32 %v794, %v788
        %v796 = vld [vmem:[#allocation2] sm:$0xff]
        %v797 = vld [vmem:[#allocation2 + $0x8] sm:$0xff]
        %v798 = vpack.c.bf16 %v795, %v795
        %v799 = vld [vmem:[%s644] sm:$0xff]
        %v800 = vld [vmem:[%s644 + $0x8] sm:$0xff]
        %v801 = vld [vmem:[%s644 + $0x10] sm:$0xff]
        %v802 = vld [vmem:[%s644 + $0x18] sm:$0xff]
        %v803 = vld [vmem:[%s644 + $0x20] sm:$0xff]
        %v804 = vld [vmem:[%s644 + $0x28] sm:$0xff]
        %v805 = vld [vmem:[%s644 + $0x30] sm:$0xff]
        %v806 = vld [vmem:[%s644 + $0x38] sm:$0xff]
        %v807 = vld [vmem:[%s644 + $0x40] sm:$0xff]
        %v808 = vld [vmem:[%s644 + $0x48] sm:$0xff]
        %v809 = vld [vmem:[%s644 + $0x50] sm:$0xff]
        %v810 = vld [vmem:[%s644 + $0x58] sm:$0xff]
        %v811 = vld [vmem:[%s644 + $0x60] sm:$0xff]
        %v812 = vld [vmem:[%s644 + $0x68] sm:$0xff]
        %v813 = vld [vmem:[%s644 + $0x70] sm:$0xff]
        %v814 = vld [vmem:[%s644 + $0x78] sm:$0xff]
        %v831 = vunpack.c.l.b16 %v799
        %v832 = vunpack.c.h.b16 %v799
        %v833 = vunpack.c.l.b16 %v800
        %v834 = vunpack.c.h.b16 %v800
        %v835 = vunpack.c.l.b16 %v801
        %v836 = vunpack.c.h.b16 %v801
        %v837 = vunpack.c.l.b16 %v802
        %v838 = vunpack.c.h.b16 %v802
        %v839 = vunpack.c.l.b16 %v803
        %v840 = vunpack.c.h.b16 %v803
        %v841 = vunpack.c.l.b16 %v804
        %v842 = vunpack.c.h.b16 %v804
        %v843 = vunpack.c.l.b16 %v805
        %v844 = vunpack.c.h.b16 %v805
        %v845 = vunpack.c.l.b16 %v806
        %v846 = vunpack.c.h.b16 %v806
        %v847 = vunpack.c.l.b16 %v807
        %v848 = vunpack.c.h.b16 %v807
        %v849 = vunpack.c.l.b16 %v808
        %v850 = vunpack.c.h.b16 %v808
        %v851 = vunpack.c.l.b16 %v809
        %v852 = vunpack.c.h.b16 %v809
        %v853 = vunpack.c.l.b16 %v810
        %v854 = vunpack.c.h.b16 %v810
        %v855 = vunpack.c.l.b16 %v811
        %v856 = vunpack.c.h.b16 %v811
        %v857 = vunpack.c.l.b16 %v812
        %v858 = vunpack.c.h.b16 %v812
        %v859 = vunpack.c.l.b16 %v813
        %v860 = vunpack.c.h.b16 %v813
        %v861 = vunpack.c.l.b16 %v814
        %v862 = vunpack.c.h.b16 %v814
        %v863 = vpack.c.b16 %v833, %v831
        %v864 = vpack.c.b16 %v834, %v832
        %v865 = vpack.c.b16 %v837, %v835
        %v866 = vpack.c.b16 %v838, %v836
        %v867 = vpack.c.b16 %v841, %v839
        %v868 = vpack.c.b16 %v842, %v840
        %v869 = vpack.c.b16 %v845, %v843
        %v870 = vpack.c.b16 %v846, %v844
        %v871 = vpack.c.b16 %v849, %v847
        %v872 = vpack.c.b16 %v850, %v848
        %v873 = vpack.c.b16 %v853, %v851
        %v874 = vpack.c.b16 %v854, %v852
        %v875 = vpack.c.b16 %v857, %v855
        %v876 = vpack.c.b16 %v858, %v856
        %v877 = vpack.c.b16 %v861, %v859
        %v878 = vpack.c.b16 %v862, %v860
        %895 = vmatprep.subr.bf16.mxu0 %v878
        %896 = vmatpush1.bf16.msra.mxu0 %v877
        %897 = vmatprep.subr.bf16.mxu0 %v876
        %898 = vmatpush1.bf16.msra.mxu0 %v875
        %899 = vmatprep.subr.bf16.mxu0 %v874
        %900 = vmatpush1.bf16.msra.mxu0 %v873
        %901 = vmatprep.subr.bf16.mxu0 %v872
        %902 = vmatpush1.bf16.msra.mxu0 %v871
        %903 = vmatprep.subr.bf16.mxu0 %v870
        %904 = vmatpush1.bf16.msra.mxu0 %v869
        %905 = vmatprep.subr.bf16.mxu0 %v868
        %906 = vmatpush1.bf16.msra.mxu0 %v867
        %907 = vmatprep.subr.bf16.mxu0 %v866
        %908 = vmatpush1.bf16.msra.mxu0 %v865
        %909 = vmatprep.subr.bf16.mxu0 %v864
        %910 = vmatpush1.bf16.msra.mxu0 %v863
        %911 = vmatprep.subr.bf16.mxu0 0
        %912 = vmatpush2.bf16.msra.mxu0 0
        %913 = vmatprep.subr.bf16.mxu0 0
        %914 = vmatpush2.bf16.msra.mxu0 0
        %915 = vmatprep.subr.bf16.mxu0 0
        %916 = vmatpush2.bf16.msra.mxu0 0
        %917 = vmatprep.subr.bf16.mxu0 0
        %918 = vmatpush2.bf16.msra.mxu0 0
        %919 = vmatprep.subr.bf16.mxu0 0
        %920 = vmatpush2.bf16.msra.mxu0 0
        %921 = vmatprep.subr.bf16.mxu0 0
        %922 = vmatpush2.bf16.msra.mxu0 0
        %923 = vmatprep.subr.bf16.mxu0 0
        %924 = vmatpush2.bf16.msra.mxu0 0
        %925 = vmatprep.subr.bf16.mxu0 0
        %926 = vmatpush2.bf16.msra.mxu0 0
        %927 = vmatprep.mubr.bf16.mxu0 0
        %928 = vmatmul.mubr.bf16.gmra.mxu0 %v798
        %v929 = vpop.f32.mrf.mxu0
        %v930 = vadd.f32 0.0, %v929
        %v931 = vpop.f32.mrf.mxu0
        %v932 = vadd.f32 0.0, %v931
        %v933 = vpop.f32.mrf.mxu0
        %v934 = vpop.f32.mrf.mxu0
        %935 = vdwg.mxu0
        %v936 = vadd.f32 %v796, %v930
        %v937 = vadd.f32 %v797, %v932
        %938 = vst [vmem:[#allocation2] sm:$0xff] %v936
        %939 = vst [vmem:[#allocation2 + $0x8] sm:$0xff] %v937
        %p940 = scmp.eq.s32.totalorder %s28, 1
        // Predicated region
        $region98: #{fmri_encoder_cross_forward.15} parent=88 // pred_check
          %p941 = pneg %p940
        $region99: #{fmri_encoder_cross_forward.15} parent=88 // pred_check_branch
          %943 = sbr.rel (%p941) target = $region101
        $region100: #{fmri_encoder_cross_forward.15} parent=88 // pred_region
          %v944 = vld [vmem:[#allocation2] sm:$0xff]
          %v945 = vld [vmem:[#allocation2 + $0x8] sm:$0xff]
          %v946 = vld [vmem:[%s651] sm:$0x3]
          %v948 = vlaneseq
          %v949 = vshrl.u32 %v948, 7
          %v950 = vsub.s32 0, %v949
          %v951 = vrot.slane %v946, %v950
          %v952 = vlaneseq
          %v953 = vshrl.u32 %v952, 7
          %v954 = vsub.s32 1, %v953
          %v955 = vrot.slane %v946, %v954
          %v958 = vadd.f32 %v944, %v951
          %v959 = vadd.f32 %v945, %v955
          %v960 = vld [vmem:[%s657] sm:$0x3]
          %v961 = vld [vmem:[%s663] sm:$0x3]
          %v962 = vadd.f32 %v958, %v959
          %963 = vadd.xlane.f32.xlu0 %v962
          %v964 = vpop.xlane.xlu0 %963
          %v965 = vrcp.pop 256.0
          %v966 = vmul.f32 %v964, %v965
          %v967 = vsub.f32 %v958, %v966
          %v968 = vsub.f32 %v959, %v966
          %v969 = vmul.f32 %v967, %v967
          %v970 = vmul.f32 %v968, %v968
          %v971 = vadd.f32 %v969, %v970
          %972 = vadd.xlane.f32.xlu0 %v971
          %v973 = vpop.xlane.xlu0 %972
          %v974 = vmul.f32 %v973, %v965
          %v975 = vadd.f32 %v974, 1e-05
          %v976 = vrsqrt.pop %v975
          %v977 = vmul.f32 %v967, %v976
          %v978 = vmul.f32 %v968, %v976
          %v980 = vlaneseq
          %v981 = vshrl.u32 %v980, 7
          %v982 = vsub.s32 0, %v981
          %v983 = vrot.slane %v960, %v982
          %v984 = vlaneseq
          %v985 = vshrl.u32 %v984, 7
          %v986 = vsub.s32 1, %v985
          %v987 = vrot.slane %v960, %v986
          %v990 = vmul.f32 %v977, %v983
          %v991 = vmul.f32 %v978, %v987
          %v993 = vlaneseq
          %v994 = vshrl.u32 %v993, 7
          %v995 = vsub.s32 0, %v994
          %v996 = vrot.slane %v961, %v995
          %v997 = vlaneseq
          %v998 = vshrl.u32 %v997, 7
          %v999 = vsub.s32 1, %v998
          %v1000 = vrot.slane %v961, %v999
          %v1003 = vadd.f32 %v990, %v996
          %v1004 = vadd.f32 %v991, %v1000
          %v1005 = vmul.f32 %v1003, %v1003
          %v1006 = vmul.f32 %v1004, %v1004
          %v1007 = vmul.f32 %v1003, %v1005
          %v1008 = vmul.f32 %v1004, %v1006
          %v1009 = vmul.f32 %v1007, 0.044715
          %v1010 = vmul.f32 %v1008, 0.044715
          %v1011 = vadd.f32 %v1003, %v1009
          %v1012 = vadd.f32 %v1004, %v1010
          %v1013 = vmul.f32 %v1011, 0.7978846
          %v1014 = vmul.f32 %v1012, 0.7978846
          %v1015 = vtanh.pop %v1013
          %v1016 = vtanh.pop %v1014
          %v1017 = vadd.f32 %v1015, 1.0
          %v1018 = vadd.f32 %v1016, 1.0
          %v1019 = vmul.f32 %v1017, 0.5
          %v1020 = vmul.f32 %v1018, 0.5
          %v1021 = vmul.f32 %v1003, %v1019
          %v1022 = vmul.f32 %v1004, %v1020
          %v1023 = vpack.c.bf16 %v1021, %v1021
          %v1024 = vpack.c.bf16 %v1022, %v1022
          %v1027 = vunpack.c.l.b16 %v1023
          %v1028 = vunpack.c.l.b16 %v1024
          %v1029 = vpack.c.b16 %v1028, %v1027
          %1031 = vst [vmem:[%s673] sm:$0xff] %v1029
        $region101: #{fmri_encoder_cross_forward.15} parent=88 // pred_fallthru
          _
        %p1032 = scmp.lt.s32.totalorder %s26, 0
        %s1033 = scalar_select %p1032, %s26, 0
        %p1034 = scmp.lt.s32.totalorder %s27, 0
        %s1035 = scalar_select %p1034, %s27, 0
        %s1036 = smul.addr %s1035, 2
        %s1037 = smul.addr %s1033, 2
        %s1038 = sadd.s32 %s1036, %s1037
        %s1039 = smul.addr %s1038, 4
        %s1040 = scalar_lea.vmem %s9, %s1039
        // Predicated region
        $region102: #{fmri_encoder_cross_forward.15} parent=88 // pred_check
          %p1041 = pneg %p292
        $region103: #{fmri_encoder_cross_forward.15} parent=88 // pred_check_branch
          %1043 = sbr.rel (%p1041) target = $region105
        $region104: #{fmri_encoder_cross_forward.15} parent=88 // pred_region
          _
        $region105: #{fmri_encoder_cross_forward.15} parent=88 // pred_fallthru
          _
        // Predicated region
        $region106: #{fmri_encoder_cross_forward.15} parent=88 // pred_check
          %p1044 = pneg %p292
        $region107: #{fmri_encoder_cross_forward.15} parent=88 // pred_check_branch
          %1046 = sbr.rel (%p1044) target = $region109
        $region108: #{fmri_encoder_cross_forward.15} parent=88 // pred_region
          %p1047 = scmp.lt.s32.totalorder %s26, 0
          %s1048 = scalar_select %p1047, %s26, 0
          %p1049 = scmp.lt.s32.totalorder %s27, 0
          %s1050 = scalar_select %p1049, %s27, 0
          %s1051 = smul.addr %s1050, 2
          %s1052 = smul.addr %s1048, 2
          %s1053 = sadd.s32 %s1051, %s1052
          %s1054 = smul.addr %s1053, 4
          %s1055 = scalar_lea.vmem %s9, %s1054
        $region109: #{fmri_encoder_cross_forward.15} parent=88 // pred_fallthru
          _
      $region89: #{fmri_encoder_cross_forward.15} parent=5 // pred_fallthru
        _
      %p1056 = scmp.le.s32.totalorder 2, %s16
      // Predicated region
      $region110: #{fmri_encoder_cross_forward.15} parent=5 // pred_check
        %p1057 = pneg %p1056
      $region111: #{fmri_encoder_cross_forward.15} parent=5 // pred_check_branch
        %1059 = sbr.rel (%p1057) target = $region113
      $region112: #{fmri_encoder_cross_forward.15} parent=5 // pred_region
        %s1060 = ssub.s32 %s16, 2
      $region113: #{fmri_encoder_cross_forward.15} parent=5 // pred_fallthru
        _
    $region6: #{fmri_encoder_cross_forward.15} parent=1 // loop_footer
      %s20 = sadd.s32 1, %s16
    $region7: #{fmri_encoder_cross_forward.15} parent=1 // loop_footer_branch
      %15 = sbr.rel target = $region3
    $region8: #{fmri_encoder_cross_forward.15} parent=1 // loop_exit
      _

// kernel: fmri_encoder_cross_forward.17
$region0: #{fmri_encoder_cross_forward.17}
  #allocation0 [shape = 'u32[]', space=smem, size = 0x4, offset = 0x4, fixed_abs, tag = 'smem constant byte address 0x4 - core index']
  #allocation1 [shape = 'u32[144,128]{1,0:T(1,128)}', space=vmem, size = 0x12000, scoped, tag = 'internal scratch']
  #allocation2 [shape = 'f32[16,256]{1,0:T(8,128)}', space=vmem, size = 0x4000, scoped, tag = 'scratch operand']
  %s0 = inlined_call_operand.vmem [shape: bf16[16,256], index: 0, kind: input, shape index: {}, may-alias: {0,1}]
  %s1 = inlined_call_operand.vmem [shape: bf16[16,256], index: 1, kind: input, shape index: {}, may-alias: {0,1}]
  %s2 = inlined_call_operand.vmem [shape: bf16[256,256], index: 2, kind: input, shape index: {}]
  %s3 = inlined_call_operand.vmem [shape: f32[1,256], index: 3, kind: input, shape index: {}]
  %s4 = inlined_call_operand.vmem [shape: f32[1,256], index: 4, kind: input, shape index: {}]
  %s5 = inlined_call_operand.vmem [shape: f32[1,256], index: 5, kind: input, shape index: {}]
  %s6 = inlined_call_operand.vmem [shape: bf16[16,256], index: 6, kind: output, shape index: {}]
  %s7 = sld [smem:[#allocation0]]
  $region106: #{fmri_encoder_cross_forward.17} parent=0
    _
  %s9 = ssub.s32 1, %s7
  %s10 = scalar_select 0, %s9, %s7
  $region1: #{fmri_encoder_cross_forward.17} parent=0
    #allocation3 [shape = 'u8[8192]{0}', space=vmem, size = 0x2000, scoped, tag = 'input window, operand 0']
    loop: start=0, step=1, limit=4
    $region2: #{fmri_encoder_cross_forward.17} parent=1 // loop_pre_header
      _
    $region3: #{fmri_encoder_cross_forward.17} parent=1 // loop_header
      %s12 = sphi 0, %s16
      %p13 = scmp.ge.s32.totalorder %s12, 4
      %s19 = sphi 0, %s31
      %s20 = sphi 0, %s27
      %s21 = sphi 0, %s19
      %s22 = sphi 0, %s20
      %s23 = sphi 0, %s21
      %s24 = sphi 0, %s22
      %s36 = sphi 0, %s38
      %s39 = sphi 0, %s36
      %s40 = sphi 0, %s39
      %s56 = sphi 0, %s40
      %s62 = sphi 0, %s64
      %s65 = sphi 0, %s62
      %s66 = sphi 0, %s65
      %s82 = sphi 0, %s66
      %s88 = sphi 0, %s90
      %s91 = sphi 0, %s88
      %s92 = sphi 0, %s91
      %s108 = sphi 0, %s92
      %s112 = sphi 0, %s112
      %s114 = sphi 0, %s112
      %s115 = sphi 0, %s114
      %s129 = sphi 0, %s115
      %s133 = sphi 0, %s133
      %s135 = sphi 0, %s133
      %s136 = sphi 0, %s135
      %s150 = sphi 0, %s136
      %s154 = sphi 0, %s154
      %s156 = sphi 0, %s154
      %s157 = sphi 0, %s156
      %s171 = sphi 0, %s157
      %s177 = sphi 0, %s179
      %s180 = sphi 0, %s177
      %s181 = sphi 0, %s180
      %s197 = sphi 0, %s181
    $region4: #{fmri_encoder_cross_forward.17} parent=1 // loop_header_branch
      %15 = sbr.rel (%p13) target = $region8
    $region5: #{fmri_encoder_cross_forward.17} parent=1 // loop_body
      %s17 = ssub.s32 %s12, 1
      %s18 = ssub.s32 %s12, 2
      %s25 = sadd.s32 1, %s20
      %p26 = scmp.ge.s32.totalorder %s25, 2
      %s27 = scalar_select %p26, 0, %s25
      %s28 = sadd.s32 1, %s19
      %s29 = scalar_select %p26, %s28, %s19
      %p30 = scmp.ge.s32.totalorder %s29, 1
      %s31 = scalar_select %p30, 0, %s29
      %s32 = ssub.s32 %s19, %s31
      %s33 = ssub.s32 %s20, %s27
      %s34 = sor.u32 %s32, %s33
      %p35 = scmp.eq.s32.totalorder %s34, 0
      %s37 = sadd.s32 %s36, 1
      %s38 = scalar_select %p35, %s36, %s37
      %p41 = pneg %p35
      %p42 = scmp.eq.s32.totalorder %s12, 1
      %p43 = por %p41, %p42
      %p44 = scmp.ne.s32.totalorder %s36, %s39
      %p45 = scmp.eq.s32.totalorder %s12, 0
      %p46 = por %p44, %p45
      %p47 = scmp.ne.s32.totalorder %s36, %s39
      %p48 = scmp.eq.s32.totalorder %s17, 1
      %p49 = por %p47, %p48
      %p50 = scmp.ne.s32.totalorder %s39, %s40
      %p51 = scmp.eq.s32.totalorder %s17, 0
      %p52 = por %p50, %p51
      %p53 = scmp.ne.s32.totalorder %s39, %s40
      %p54 = scmp.eq.s32.totalorder %s18, 1
      %p55 = por %p53, %p54
      %p57 = scmp.ne.s32.totalorder %s40, %s56
      %p58 = scmp.eq.s32.totalorder %s18, 0
      %p59 = por %p57, %p58
      %s60 = ssub.s32 %s19, %s31
      %p61 = scmp.eq.s32.totalorder %s60, 0
      %s63 = sadd.s32 %s62, 1
      %s64 = scalar_select %p61, %s62, %s63
      %p67 = pneg %p61
      %p68 = scmp.eq.s32.totalorder %s12, 1
      %p69 = por %p67, %p68
      %p70 = scmp.ne.s32.totalorder %s62, %s65
      %p71 = scmp.eq.s32.totalorder %s12, 0
      %p72 = por %p70, %p71
      %p73 = scmp.ne.s32.totalorder %s62, %s65
      %p74 = scmp.eq.s32.totalorder %s17, 1
      %p75 = por %p73, %p74
      %p76 = scmp.ne.s32.totalorder %s65, %s66
      %p77 = scmp.eq.s32.totalorder %s17, 0
      %p78 = por %p76, %p77
      %p79 = scmp.ne.s32.totalorder %s65, %s66
      %p80 = scmp.eq.s32.totalorder %s18, 1
      %p81 = por %p79, %p80
      %p83 = scmp.ne.s32.totalorder %s66, %s82
      %p84 = scmp.eq.s32.totalorder %s18, 0
      %p85 = por %p83, %p84
      %s86 = ssub.s32 %s20, %s27
      %p87 = scmp.eq.s32.totalorder %s86, 0
      %s89 = sadd.s32 %s88, 1
      %s90 = scalar_select %p87, %s88, %s89
      %p93 = pneg %p87
      %p94 = scmp.eq.s32.totalorder %s12, 1
      %p95 = por %p93, %p94
      %p96 = scmp.ne.s32.totalorder %s88, %s91
      %p97 = scmp.eq.s32.totalorder %s12, 0
      %p98 = por %p96, %p97
      %p99 = scmp.ne.s32.totalorder %s88, %s91
      %p100 = scmp.eq.s32.totalorder %s17, 1
      %p101 = por %p99, %p100
      %p102 = scmp.ne.s32.totalorder %s91, %s92
      %p103 = scmp.eq.s32.totalorder %s17, 0
      %p104 = por %p102, %p103
      %p105 = scmp.ne.s32.totalorder %s91, %s92
      %p106 = scmp.eq.s32.totalorder %s18, 1
      %p107 = por %p105, %p106
      %p109 = scmp.ne.s32.totalorder %s92, %s108
      %p110 = scmp.eq.s32.totalorder %s18, 0
      %p111 = por %p109, %p110
      %s113 = sadd.s32 %s112, 1
      %p116 = scmp.eq.s32.totalorder %s12, 1
      %p117 = scmp.ne.s32.totalorder %s112, %s114
      %p118 = scmp.eq.s32.totalorder %s12, 0
      %p119 = por %p117, %p118
      %p120 = scmp.ne.s32.totalorder %s112, %s114
      %p121 = scmp.eq.s32.totalorder %s17, 1
      %p122 = por %p120, %p121
      %p123 = scmp.ne.s32.totalorder %s114, %s115
      %p124 = scmp.eq.s32.totalorder %s17, 0
      %p125 = por %p123, %p124
      %p126 = scmp.ne.s32.totalorder %s114, %s115
      %p127 = scmp.eq.s32.totalorder %s18, 1
      %p128 = por %p126, %p127
      %p130 = scmp.ne.s32.totalorder %s115, %s129
      %p131 = scmp.eq.s32.totalorder %s18, 0
      %p132 = por %p130, %p131
      %s134 = sadd.s32 %s133, 1
      %p137 = scmp.eq.s32.totalorder %s12, 1
      %p138 = scmp.ne.s32.totalorder %s133, %s135
      %p139 = scmp.eq.s32.totalorder %s12, 0
      %p140 = por %p138, %p139
      %p141 = scmp.ne.s32.totalorder %s133, %s135
      %p142 = scmp.eq.s32.totalorder %s17, 1
      %p143 = por %p141, %p142
      %p144 = scmp.ne.s32.totalorder %s135, %s136
      %p145 = scmp.eq.s32.totalorder %s17, 0
      %p146 = por %p144, %p145
      %p147 = scmp.ne.s32.totalorder %s135, %s136
      %p148 = scmp.eq.s32.totalorder %s18, 1
      %p149 = por %p147, %p148
      %p151 = scmp.ne.s32.totalorder %s136, %s150
      %p152 = scmp.eq.s32.totalorder %s18, 0
      %p153 = por %p151, %p152
      %s155 = sadd.s32 %s154, 1
      %p158 = scmp.eq.s32.totalorder %s12, 1
      %p159 = scmp.ne.s32.totalorder %s154, %s156
      %p160 = scmp.eq.s32.totalorder %s12, 0
      %p161 = por %p159, %p160
      %p162 = scmp.ne.s32.totalorder %s154, %s156
      %p163 = scmp.eq.s32.totalorder %s17, 1
      %p164 = por %p162, %p163
      %p165 = scmp.ne.s32.totalorder %s156, %s157
      %p166 = scmp.eq.s32.totalorder %s17, 0
      %p167 = por %p165, %p166
      %p168 = scmp.ne.s32.totalorder %s156, %s157
      %p169 = scmp.eq.s32.totalorder %s18, 1
      %p170 = por %p168, %p169
      %p172 = scmp.ne.s32.totalorder %s157, %s171
      %p173 = scmp.eq.s32.totalorder %s18, 0
      %p174 = por %p172, %p173
      %s175 = ssub.s32 %s19, %s31
      %p176 = scmp.eq.s32.totalorder %s175, 0
      %s178 = sadd.s32 %s177, 1
      %s179 = scalar_select %p176, %s177, %s178
      %p182 = pneg %p176
      %p183 = scmp.eq.s32.totalorder %s12, 1
      %p184 = por %p182, %p183
      %p185 = scmp.ne.s32.totalorder %s177, %s180
      %p186 = scmp.eq.s32.totalorder %s12, 0
      %p187 = por %p185, %p186
      %p188 = scmp.ne.s32.totalorder %s177, %s180
      %p189 = scmp.eq.s32.totalorder %s17, 1
      %p190 = por %p188, %p189
      %p191 = scmp.ne.s32.totalorder %s180, %s181
      %p192 = scmp.eq.s32.totalorder %s17, 0
      %p193 = por %p191, %p192
      %p194 = scmp.ne.s32.totalorder %s180, %s181
      %p195 = scmp.eq.s32.totalorder %s18, 1
      %p196 = por %p194, %p195
      %p198 = scmp.ne.s32.totalorder %s181, %s197
      %p199 = scmp.eq.s32.totalorder %s18, 0
      %p200 = por %p198, %p199
      %p201 = scmp.le.s32.totalorder 1, %s12
      %p202 = scmp.lt.s32.totalorder %s12, 3
      %p203 = pnand %p201, %p202
      %p204 = pneg %p203
      // Predicated region
      $region9: #{fmri_encoder_cross_forward.17} parent=5 // pred_check
        _
      $region10: #{fmri_encoder_cross_forward.17} parent=5 // pred_check_branch
        %206 = sbr.rel (%p203) target = $region12
      $region11: #{fmri_encoder_cross_forward.17} parent=5 // pred_region
        %s207 = ssub.s32 %s12, 1
        // Predicated region
        $region13: #{fmri_encoder_cross_forward.17} parent=11 // pred_check
          %p208 = pneg %p78
        $region14: #{fmri_encoder_cross_forward.17} parent=11 // pred_check_branch
          %210 = sbr.rel (%p208) target = $region16
        $region15: #{fmri_encoder_cross_forward.17} parent=11 // pred_region
          %s211 = smul.u32 2, %s21
          %p212 = scmp.lt.s32.totalorder %s211, 1
          %s213 = scalar_select %p212, %s211, 1
          %s214 = smul.addr %s213, 2
          %s215 = smul.addr %s214, 4
          %s216 = scalar_lea.vmem %s1, %s215
          %s217 = smul.u32 2, %s21
        $region16: #{fmri_encoder_cross_forward.17} parent=11 // pred_fallthru
          _
        // Predicated region
        $region17: #{fmri_encoder_cross_forward.17} parent=11 // pred_check
          %p218 = pneg %p125
        $region18: #{fmri_encoder_cross_forward.17} parent=11 // pred_check_branch
          %220 = sbr.rel (%p218) target = $region20
        $region19: #{fmri_encoder_cross_forward.17} parent=11 // pred_region
          _
        $region20: #{fmri_encoder_cross_forward.17} parent=11 // pred_fallthru
          _
        // Predicated region
        $region21: #{fmri_encoder_cross_forward.17} parent=11 // pred_check
          %p221 = pneg %p146
        $region22: #{fmri_encoder_cross_forward.17} parent=11 // pred_check_branch
          %223 = sbr.rel (%p221) target = $region24
        $region23: #{fmri_encoder_cross_forward.17} parent=11 // pred_region
          _
        $region24: #{fmri_encoder_cross_forward.17} parent=11 // pred_fallthru
          _
        // Predicated region
        $region25: #{fmri_encoder_cross_forward.17} parent=11 // pred_check
          %p224 = pneg %p167
        $region26: #{fmri_encoder_cross_forward.17} parent=11 // pred_check_branch
          %226 = sbr.rel (%p224) target = $region28
        $region27: #{fmri_encoder_cross_forward.17} parent=11 // pred_region
          _
        $region28: #{fmri_encoder_cross_forward.17} parent=11 // pred_fallthru
          _
      $region12: #{fmri_encoder_cross_forward.17} parent=5 // pred_fallthru
        _
      %p227 = scmp.lt.s32.totalorder %s12, 2
      // Predicated region
      $region29: #{fmri_encoder_cross_forward.17} parent=5 // pred_check
        %p228 = pneg %p227
      $region30: #{fmri_encoder_cross_forward.17} parent=5 // pred_check_branch
        %230 = sbr.rel (%p228) target = $region32
      $region31: #{fmri_encoder_cross_forward.17} parent=5 // pred_region
        // Predicated region
        $region33: #{fmri_encoder_cross_forward.17} parent=31 // pred_check
          %p231 = pneg %p46
        $region34: #{fmri_encoder_cross_forward.17} parent=31 // pred_check_branch
          %233 = sbr.rel (%p231) target = $region36
        $region35: #{fmri_encoder_cross_forward.17} parent=31 // pred_region
          %s234 = sand.u32 %s36, 1
          %s235 = sand.u32 %s36, 1
          %s236 = smul.addr %s235, 8
          %s237 = scalar_lea.vmem [#allocation3], %s236
          %s238 = smul.u32 2, %s19
          %s239 = smul.addr %s238, 2
          %s240 = sadd.s32 %s20, %s239
          %s241 = smul.addr %s240, 4
          %s242 = scalar_lea.vmem %s0, %s241
          // Predicated region
          $region37: #{fmri_encoder_cross_forward.17} parent=35 // pred_check
            _
          $region38: #{fmri_encoder_cross_forward.17} parent=35 // pred_check_branch
            %244 = sbr.rel (0) target = $region40
          $region39: #{fmri_encoder_cross_forward.17} parent=35 // pred_region
            // Predicated region
            $region41: #{fmri_encoder_cross_forward.17} parent=39 // pred_check
              _
            $region42: #{fmri_encoder_cross_forward.17} parent=39 // pred_check_branch
              %246 = sbr.rel target = $region44
            $region43: #{fmri_encoder_cross_forward.17} parent=39 // pred_region
              // Predicated region
              $region56: #{fmri_encoder_cross_forward.17} parent=43 // pred_check
                _
              $region57: #{fmri_encoder_cross_forward.17} parent=43 // pred_check_branch
                %264 = sbr.rel (0) target = $region59
              $region58: #{fmri_encoder_cross_forward.17} parent=43 // pred_region
                loop: start=0, step=1, limit=1
                $region60: #{fmri_encoder_cross_forward.17} parent=58 // loop_pre_header
                  _
                $region61: #{fmri_encoder_cross_forward.17} parent=58 // loop_header
                  %s266 = sphi 0, %s270
                  %p267 = scmp.ge.s32.totalorder %s266, 1
                  %s271 = sphi %s242, %s242
                  %s272 = sphi %s237, %s237
                $region62: #{fmri_encoder_cross_forward.17} parent=58 // loop_header_branch
                  %269 = sbr.rel (%p267) target = $region66
                $region63: #{fmri_encoder_cross_forward.17} parent=58 // loop_body
                  _
                $region64: #{fmri_encoder_cross_forward.17} parent=58 // loop_footer
                  %s270 = sadd.s32 1, %s266
                $region65: #{fmri_encoder_cross_forward.17} parent=58 // loop_footer_branch
                  %265 = sbr.rel target = $region61
                $region66: #{fmri_encoder_cross_forward.17} parent=58 // loop_exit
                  _
                %s274 = ssub.s32 16, 1
                loop: start=0, step=1, limit=1
                $region67: #{fmri_encoder_cross_forward.17} parent=58 // loop_pre_header
                  _
                $region68: #{fmri_encoder_cross_forward.17} parent=58 // loop_header
                  %s276 = sphi 0, %s280
                  %p277 = scmp.ge.s32.totalorder %s276, 1
                  %s281 = sphi %s242, %s242
                  %s282 = sphi %s237, %s237
                $region69: #{fmri_encoder_cross_forward.17} parent=58 // loop_header_branch
                  %279 = sbr.rel (%p277) target = $region73
                $region70: #{fmri_encoder_cross_forward.17} parent=58 // loop_body
                  %v283 = vld [vmem:[%s281] sm:%s274]
                  %284 = vst [vmem:[%s282] sm:%s274] %v283
                  %v285 = vld [vmem:[%s281 + $0x8] sm:%s274]
                  %286 = vst [vmem:[%s282 + $0x4] sm:%s274] %v285
                $region71: #{fmri_encoder_cross_forward.17} parent=58 // loop_footer
                  %s280 = sadd.s32 1, %s276
                $region72: #{fmri_encoder_cross_forward.17} parent=58 // loop_footer_branch
                  %275 = sbr.rel target = $region68
                $region73: #{fmri_encoder_cross_forward.17} parent=58 // loop_exit
                  _
              $region59: #{fmri_encoder_cross_forward.17} parent=43 // pred_fallthru
                _
            $region44: #{fmri_encoder_cross_forward.17} parent=39 // pred_fallthru
              _
            // Predicated region
            $region45: #{fmri_encoder_cross_forward.17} parent=39 // pred_check
              _
            $region46: #{fmri_encoder_cross_forward.17} parent=39 // pred_check_branch
              %248 = sbr.rel (0) target = $region48
            $region47: #{fmri_encoder_cross_forward.17} parent=39 // pred_region
              %s250 = ssub.s32 16, 1
              loop: start=0, step=1, limit=1
              $region49: #{fmri_encoder_cross_forward.17} parent=47 // loop_pre_header
                _
              $region50: #{fmri_encoder_cross_forward.17} parent=47 // loop_header
                %s252 = sphi 0, %s256
                %p253 = scmp.ge.s32.totalorder %s252, 1
                %s257 = sphi %s242, %s242
                %s258 = sphi %s237, %s237
              $region51: #{fmri_encoder_cross_forward.17} parent=47 // loop_header_branch
                %255 = sbr.rel (%p253) target = $region55
              $region52: #{fmri_encoder_cross_forward.17} parent=47 // loop_body
                %v259 = vld [vmem:[%s257] sm:%s250]
                %260 = vst [vmem:[%s258] sm:%s250] %v259
                %v261 = vld [vmem:[%s257 + $0x8] sm:%s250]
                %262 = vst [vmem:[%s258 + $0x4] sm:%s250] %v261
              $region53: #{fmri_encoder_cross_forward.17} parent=47 // loop_footer
                %s256 = sadd.s32 1, %s252
              $region54: #{fmri_encoder_cross_forward.17} parent=47 // loop_footer_branch
                %251 = sbr.rel target = $region50
              $region55: #{fmri_encoder_cross_forward.17} parent=47 // loop_exit
                _
            $region48: #{fmri_encoder_cross_forward.17} parent=39 // pred_fallthru
              _
          $region40: #{fmri_encoder_cross_forward.17} parent=35 // pred_fallthru
            _
          %287 = vnop
        $region36: #{fmri_encoder_cross_forward.17} parent=31 // pred_fallthru
          _
        // Predicated region
        $region74: #{fmri_encoder_cross_forward.17} parent=31 // pred_check
          %p288 = pneg %p98
        $region75: #{fmri_encoder_cross_forward.17} parent=31 // pred_check_branch
          %290 = sbr.rel (%p288) target = $region77
        $region76: #{fmri_encoder_cross_forward.17} parent=31 // pred_region
          %s291 = smul.u32 16, %s20
          %p292 = scmp.lt.s32.totalorder %s291, 31
          %s293 = scalar_select %p292, %s291, 31
          %s294 = smul.addr %s293, 2
          %s295 = smul.addr %s294, 4
          %s296 = scalar_lea.vmem %s2, %s295
          %s297 = smul.u32 16, %s20
        $region77: #{fmri_encoder_cross_forward.17} parent=31 // pred_fallthru
          _
      $region32: #{fmri_encoder_cross_forward.17} parent=5 // pred_fallthru
        _
      %p298 = scmp.le.s32.totalorder 1, %s12
      %p299 = scmp.lt.s32.totalorder %s12, 3
      %p300 = pnand %p298, %p299
      %p301 = pneg %p300
      // Predicated region
      $region78: #{fmri_encoder_cross_forward.17} parent=5 // pred_check
        _
      $region79: #{fmri_encoder_cross_forward.17} parent=5 // pred_check_branch
        %303 = sbr.rel (%p300) target = $region81
      $region80: #{fmri_encoder_cross_forward.17} parent=5 // pred_region
        %s304 = ssub.s32 %s12, 1
        %s305 = sand.u32 %s39, 1
        %s306 = sand.u32 %s39, 1
        %s307 = smul.addr %s306, 8
        %s308 = scalar_lea.vmem [#allocation3], %s307
        // Predicated region
        $region82: #{fmri_encoder_cross_forward.17} parent=80 // pred_check
          %p309 = pneg %p52
        $region83: #{fmri_encoder_cross_forward.17} parent=80 // pred_check_branch
          %311 = sbr.rel (%p309) target = $region85
        $region84: #{fmri_encoder_cross_forward.17} parent=80 // pred_region
          _
        $region85: #{fmri_encoder_cross_forward.17} parent=80 // pred_fallthru
          _
        %s312 = sand.u32 %s39, 1
        %s313 = sand.u32 %s39, 1
        %s314 = smul.addr %s313, 8
        %s315 = scalar_lea.vmem [#allocation3], %s314
        %p316 = pneg %p52
        %p317 = pneg %p49
        %s318 = smul.u32 2, %s21
        %p319 = scmp.lt.s32.totalorder %s318, 1
        %s320 = scalar_select %p319, %s318, 1
        %s321 = smul.addr %s320, 2
        %s322 = smul.addr %s321, 4
        %s323 = scalar_lea.vmem %s1, %s322
        %p324 = pneg %p78
        %p325 = pneg %p75
        %s326 = smul.u32 16, %s22
        %p327 = scmp.lt.s32.totalorder %s326, 31
        %s328 = scalar_select %p327, %s326, 31
        %s329 = smul.addr %s328, 2
        %s330 = smul.addr %s329, 4
        %s331 = scalar_lea.vmem %s2, %s330
        %p332 = pneg %p104
        %p333 = pneg %p101
        %p334 = pneg %p125
        %p335 = pneg %p122
        %p336 = pneg %p146
        %p337 = pneg %p143
        %p338 = pneg %p167
        %p339 = pneg %p164
        %p340 = pneg %p193
        %p341 = pneg %p190
        %s342 = smul.u32 2, %s21
        %p343 = scmp.lt.s32.totalorder %s342, 1
        %s344 = scalar_select %p343, %s342, 1
        %s345 = smul.addr %s344, 2
        %s346 = smul.addr %s345, 4
        %s347 = scalar_lea.vmem %s6, %s346
        %s348 = smul.u32 2, %s21
        %s349 = smul.u32 2, %s21
        %p350 = scmp.lt.s32.totalorder %s349, 1
        %s351 = scalar_select %p350, %s349, 1
        %s352 = smul.addr %s351, 2
        %s353 = smul.addr %s352, 4
        %s354 = scalar_lea.vmem %s1, %s353
        %s355 = smul.u32 2, %s21
        %s356 = smul.u32 16, %s22
        %p357 = scmp.lt.s32.totalorder %s356, 31
        %s358 = scalar_select %p357, %s356, 31
        %s359 = smul.addr %s358, 2
        %s360 = smul.addr %s359, 4
        %s361 = scalar_lea.vmem %s2, %s360
        %s362 = smul.u32 16, %s22
        %s363 = smul.u32 2, %s21
        %p364 = scmp.lt.s32.totalorder %s363, 1
        %s365 = scalar_select %p364, %s363, 1
        %s366 = smul.addr %s365, 2
        %s367 = smul.addr %s366, 4
        %s368 = scalar_lea.vmem %s6, %s367
        %s369 = smul.u32 2, %s21
        %p371 = scmp.eq.s32.totalorder %s22, 0
        // Predicated region
        $region86: #{fmri_encoder_cross_forward.17} parent=80 // pred_check
          %p372 = pneg %p371
        $region87: #{fmri_encoder_cross_forward.17} parent=80 // pred_check_branch
          %374 = sbr.rel (%p372) target = $region89
        $region88: #{fmri_encoder_cross_forward.17} parent=80 // pred_region
          %375 = vst [vmem:[#allocation2] sm:$0xff] 0.0
          %376 = vst [vmem:[#allocation2 + $0x8] sm:$0xff] 0.0
          %377 = vst [vmem:[#allocation2 + $0x10] sm:$0xff] 0.0
          %378 = vst [vmem:[#allocation2 + $0x18] sm:$0xff] 0.0
        $region89: #{fmri_encoder_cross_forward.17} parent=80 // pred_fallthru
          _
        %v379 = vld [vmem:[#allocation2] sm:$0xff]
        %v380 = vld [vmem:[#allocation2 + $0x8] sm:$0xff]
        %v381 = vld [vmem:[#allocation2 + $0x10] sm:$0xff]
        %v382 = vld [vmem:[#allocation2 + $0x18] sm:$0xff]
        %v383 = vld [vmem:[%s308] sm:$0xf]
        %v384 = vld [vmem:[%s308 + $0x4] sm:$0xf]
        %v385 = vld [vmem:[%s361] sm:$0xff]
        %v386 = vld [vmem:[%s361 + $0x8] sm:$0xff]
        %v387 = vld [vmem:[%s361 + $0x10] sm:$0xff]
        %v388 = vld [vmem:[%s361 + $0x18] sm:$0xff]
        %v389 = vld [vmem:[%s361 + $0x20] sm:$0xff]
        %v390 = vld [vmem:[%s361 + $0x28] sm:$0xff]
        %v391 = vld [vmem:[%s361 + $0x30] sm:$0xff]
        %v392 = vld [vmem:[%s361 + $0x38] sm:$0xff]
        %v393 = vld [vmem:[%s361 + $0x40] sm:$0xff]
        %v394 = vld [vmem:[%s361 + $0x48] sm:$0xff]
        %v395 = vld [vmem:[%s361 + $0x50] sm:$0xff]
        %v396 = vld [vmem:[%s361 + $0x58] sm:$0xff]
        %v397 = vld [vmem:[%s361 + $0x60] sm:$0xff]
        %v398 = vld [vmem:[%s361 + $0x68] sm:$0xff]
        %v399 = vld [vmem:[%s361 + $0x70] sm:$0xff]
        %v400 = vld [vmem:[%s361 + $0x78] sm:$0xff]
        %v403 = vunpack.c.l.b16 %v383
        %v404 = vunpack.c.l.b16 %v384
        %v405 = vpack.c.b16 %v404, %v403
        %v423 = vunpack.c.l.b16 %v385
        %v424 = vunpack.c.h.b16 %v385
        %v425 = vunpack.c.l.b16 %v386
        %v426 = vunpack.c.h.b16 %v386
        %v427 = vunpack.c.l.b16 %v387
        %v428 = vunpack.c.h.b16 %v387
        %v429 = vunpack.c.l.b16 %v388
        %v430 = vunpack.c.h.b16 %v388
        %v431 = vunpack.c.l.b16 %v389
        %v432 = vunpack.c.h.b16 %v389
        %v433 = vunpack.c.l.b16 %v390
        %v434 = vunpack.c.h.b16 %v390
        %v435 = vunpack.c.l.b16 %v391
        %v436 = vunpack.c.h.b16 %v391
        %v437 = vunpack.c.l.b16 %v392
        %v438 = vunpack.c.h.b16 %v392
        %v439 = vunpack.c.l.b16 %v393
        %v440 = vunpack.c.h.b16 %v393
        %v441 = vunpack.c.l.b16 %v394
        %v442 = vunpack.c.h.b16 %v394
        %v443 = vunpack.c.l.b16 %v395
        %v444 = vunpack.c.h.b16 %v395
        %v445 = vunpack.c.l.b16 %v396
        %v446 = vunpack.c.h.b16 %v396
        %v447 = vunpack.c.l.b16 %v397
        %v448 = vunpack.c.h.b16 %v397
        %v449 = vunpack.c.l.b16 %v398
        %v450 = vunpack.c.h.b16 %v398
        %v451 = vunpack.c.l.b16 %v399
        %v452 = vunpack.c.h.b16 %v399
        %v453 = vunpack.c.l.b16 %v400
        %v454 = vunpack.c.h.b16 %v400
        %v455 = vpack.c.b16 %v425, %v423
        %v456 = vpack.c.b16 %v426, %v424
        %v457 = vpack.c.b16 %v429, %v427
        %v458 = vpack.c.b16 %v430, %v428
        %v459 = vpack.c.b16 %v433, %v431
        %v460 = vpack.c.b16 %v434, %v432
        %v461 = vpack.c.b16 %v437, %v435
        %v462 = vpack.c.b16 %v438, %v436
        %v463 = vpack.c.b16 %v441, %v439
        %v464 = vpack.c.b16 %v442, %v440
        %v465 = vpack.c.b16 %v445, %v443
        %v466 = vpack.c.b16 %v446, %v444
        %v467 = vpack.c.b16 %v449, %v447
        %v468 = vpack.c.b16 %v450, %v448
        %v469 = vpack.c.b16 %v453, %v451
        %v470 = vpack.c.b16 %v454, %v452
        %487 = vmatprep.subr.bf16.mxu0 %v470
        %488 = vmatpush1.bf16.msra.mxu0 %v469
        %489 = vmatprep.subr.bf16.mxu0 %v468
        %490 = vmatpush1.bf16.msra.mxu0 %v467
        %491 = vmatprep.subr.bf16.mxu0 %v466
        %492 = vmatpush1.bf16.msra.mxu0 %v465
        %493 = vmatprep.subr.bf16.mxu0 %v464
        %494 = vmatpush1.bf16.msra.mxu0 %v463
        %495 = vmatprep.subr.bf16.mxu0 %v462
        %496 = vmatpush1.bf16.msra.mxu0 %v461
        %497 = vmatprep.subr.bf16.mxu0 %v460
        %498 = vmatpush1.bf16.msra.mxu0 %v459
        %499 = vmatprep.subr.bf16.mxu0 %v458
        %500 = vmatpush1.bf16.msra.mxu0 %v457
        %501 = vmatprep.subr.bf16.mxu0 %v456
        %502 = vmatpush1.bf16.msra.mxu0 %v455
        %503 = vmatprep.subr.bf16.mxu0 0
        %504 = vmatpush2.bf16.msra.mxu0 0
        %505 = vmatprep.subr.bf16.mxu0 0
        %506 = vmatpush2.bf16.msra.mxu0 0
        %507 = vmatprep.subr.bf16.mxu0 0
        %508 = vmatpush2.bf16.msra.mxu0 0
        %509 = vmatprep.subr.bf16.mxu0 0
        %510 = vmatpush2.bf16.msra.mxu0 0
        %511 = vmatprep.subr.bf16.mxu0 0
        %512 = vmatpush2.bf16.msra.mxu0 0
        %513 = vmatprep.subr.bf16.mxu0 0
        %514 = vmatpush2.bf16.msra.mxu0 0
        %515 = vmatprep.subr.bf16.mxu0 0
        %516 = vmatpush2.bf16.msra.mxu0 0
        %517 = vmatprep.subr.bf16.mxu0 0
        %518 = vmatpush2.bf16.msra.mxu0 0
        %519 = vmatprep.mubr.bf16.mxu0 0
        %520 = vmatmul.mubr.bf16.gmra.mxu0 %v405
        %v521 = vpop.f32.mrf.mxu0
        %v522 = vadd.f32 0.0, %v521
        %v523 = vpop.f32.mrf.mxu0
        %v524 = vadd.f32 0.0, %v523
        %v525 = vpop.f32.mrf.mxu0
        %v526 = vadd.f32 0.0, %v525
        %v527 = vpop.f32.mrf.mxu0
        %v528 = vadd.f32 0.0, %v527
        %529 = vdwg.mxu0
        %v530 = vadd.f32 %v379, %v522
        %v531 = vadd.f32 %v380, %v524
        %v532 = vadd.f32 %v381, %v526
        %v533 = vadd.f32 %v382, %v528
        %534 = vst [vmem:[#allocation2] sm:$0xff] %v530
        %535 = vst [vmem:[#allocation2 + $0x8] sm:$0xff] %v531
        %536 = vst [vmem:[#allocation2 + $0x10] sm:$0xff] %v532
        %537 = vst [vmem:[#allocation2 + $0x18] sm:$0xff] %v533
        %p538 = scmp.eq.s32.totalorder %s22, 1
        // Predicated region
        $region90: #{fmri_encoder_cross_forward.17} parent=80 // pred_check
          %p539 = pneg %p538
        $region91: #{fmri_encoder_cross_forward.17} parent=80 // pred_check_branch
          %541 = sbr.rel (%p539) target = $region93
        $region92: #{fmri_encoder_cross_forward.17} parent=80 // pred_region
          %v542 = vld [vmem:[#allocation2] sm:$0xff]
          %v543 = vld [vmem:[#allocation2 + $0x8] sm:$0xff]
          %v544 = vld [vmem:[#allocation2 + $0x10] sm:$0xff]
          %v545 = vld [vmem:[#allocation2 + $0x18] sm:$0xff]
          %v546 = vld [vmem:[%s3] sm:$0x3]
          %v548 = vlaneseq
          %v549 = vshrl.u32 %v548, 7
          %v550 = vsub.s32 0, %v549
          %v551 = vrot.slane %v546, %v550
          %v552 = vlaneseq
          %v553 = vshrl.u32 %v552, 7
          %v554 = vsub.s32 1, %v553
          %v555 = vrot.slane %v546, %v554
          %v558 = vadd.f32 %v542, %v551
          %v559 = vadd.f32 %v543, %v555
          %v560 = vadd.f32 %v544, %v551
          %v561 = vadd.f32 %v545, %v555
          %v562 = vld [vmem:[%s4] sm:$0x3]
          %v563 = vld [vmem:[%s5] sm:$0x3]
          %v564 = vadd.f32 %v558, %v559
          %565 = vadd.xlane.f32.xlu0 %v564
          %v566 = vpop.xlane.xlu0 %565
          %v567 = vadd.f32 %v560, %v561
          %568 = vadd.xlane.f32.xlu0 %v567
          %v569 = vpop.xlane.xlu0 %568
          %v570 = vrcp.pop 256.0
          %v571 = vmul.f32 %v566, %v570
          %v572 = vmul.f32 %v569, %v570
          %v573 = vsub.f32 %v558, %v571
          %v574 = vsub.f32 %v559, %v571
          %v575 = vsub.f32 %v560, %v572
          %v576 = vsub.f32 %v561, %v572
          %v577 = vmul.f32 %v573, %v573
          %v578 = vmul.f32 %v574, %v574
          %v579 = vmul.f32 %v575, %v575
          %v580 = vmul.f32 %v576, %v576
          %v581 = vadd.f32 %v577, %v578
          %582 = vadd.xlane.f32.xlu0 %v581
          %v583 = vpop.xlane.xlu0 %582
          %v584 = vadd.f32 %v579, %v580
          %585 = vadd.xlane.f32.xlu0 %v584
          %v586 = vpop.xlane.xlu0 %585
          %v587 = vmul.f32 %v583, %v570
          %v588 = vmul.f32 %v586, %v570
          %v589 = vadd.f32 %v587, 1e-05
          %v590 = vadd.f32 %v588, 1e-05
          %v591 = vrsqrt.pop %v589
          %v592 = vrsqrt.pop %v590
          %v593 = vmul.f32 %v573, %v591
          %v594 = vmul.f32 %v574, %v591
          %v595 = vmul.f32 %v575, %v592
          %v596 = vmul.f32 %v576, %v592
          %v598 = vlaneseq
          %v599 = vshrl.u32 %v598, 7
          %v600 = vsub.s32 0, %v599
          %v601 = vrot.slane %v562, %v600
          %v602 = vlaneseq
          %v603 = vshrl.u32 %v602, 7
          %v604 = vsub.s32 1, %v603
          %v605 = vrot.slane %v562, %v604
          %v608 = vmul.f32 %v593, %v601
          %v609 = vmul.f32 %v594, %v605
          %v610 = vmul.f32 %v595, %v601
          %v611 = vmul.f32 %v596, %v605
          %v613 = vlaneseq
          %v614 = vshrl.u32 %v613, 7
          %v615 = vsub.s32 0, %v614
          %v616 = vrot.slane %v563, %v615
          %v617 = vlaneseq
          %v618 = vshrl.u32 %v617, 7
          %v619 = vsub.s32 1, %v618
          %v620 = vrot.slane %v563, %v619
          %v623 = vadd.f32 %v608, %v616
          %v624 = vadd.f32 %v609, %v620
          %v625 = vadd.f32 %v610, %v616
          %v626 = vadd.f32 %v611, %v620
          %v627 = vmul.f32 %v623, %v623
          %v628 = vmul.f32 %v624, %v624
          %v629 = vmul.f32 %v625, %v625
          %v630 = vmul.f32 %v626, %v626
          %v631 = vmul.f32 %v623, %v627
          %v632 = vmul.f32 %v624, %v628
          %v633 = vmul.f32 %v625, %v629
          %v634 = vmul.f32 %v626, %v630
          %v635 = vmul.f32 %v631, 0.044715
          %v636 = vmul.f32 %v632, 0.044715
          %v637 = vmul.f32 %v633, 0.044715
          %v638 = vmul.f32 %v634, 0.044715
          %v639 = vadd.f32 %v623, %v635
          %v640 = vadd.f32 %v624, %v636
          %v641 = vadd.f32 %v625, %v637
          %v642 = vadd.f32 %v626, %v638
          %v643 = vmul.f32 %v639, 0.7978846
          %v644 = vmul.f32 %v640, 0.7978846
          %v645 = vmul.f32 %v641, 0.7978846
          %v646 = vmul.f32 %v642, 0.7978846
          %v647 = vtanh.pop %v643
          %v648 = vtanh.pop %v644
          %v649 = vtanh.pop %v645
          %v650 = vtanh.pop %v646
          %v651 = vadd.f32 %v647, 1.0
          %v652 = vadd.f32 %v648, 1.0
          %v653 = vadd.f32 %v649, 1.0
          %v654 = vadd.f32 %v650, 1.0
          %v655 = vmul.f32 %v651, 0.5
          %v656 = vmul.f32 %v652, 0.5
          %v657 = vmul.f32 %v653, 0.5
          %v658 = vmul.f32 %v654, 0.5
          %v659 = vmul.f32 %v623, %v655
          %v660 = vmul.f32 %v624, %v656
          %v661 = vmul.f32 %v625, %v657
          %v662 = vmul.f32 %v626, %v658
          %v663 = vld [vmem:[%s354] sm:$0xff]
          %v664 = vld [vmem:[%s354 + $0x8] sm:$0xff]
          %v665 = vunpack.c.l.bf16 %v663
          %v666 = vunpack.c.h.bf16 %v663
          %v667 = vunpack.c.l.bf16 %v664
          %v668 = vunpack.c.h.bf16 %v664
          %v669 = vadd.f32 %v659, %v665
          %v670 = vadd.f32 %v660, %v666
          %v671 = vadd.f32 %v661, %v667
          %v672 = vadd.f32 %v662, %v668
          %v673 = vpack.c.bf16 %v671, %v669
          %v674 = vpack.c.bf16 %v672, %v670
          %v677 = vunpack.c.l.b16 %v673
          %v678 = vunpack.c.l.b16 %v674
          %v679 = vunpack.c.h.b16 %v673
          %v680 = vunpack.c.h.b16 %v674
          %v681 = vpack.c.b16 %v678, %v677
          %v682 = vpack.c.b16 %v680, %v679
          %685 = vst [vmem:[%s368] sm:$0xff] %v681
          %686 = vst [vmem:[%s368 + $0x8] sm:$0xff] %v682
        $region93: #{fmri_encoder_cross_forward.17} parent=80 // pred_fallthru
          _
        %s687 = smul.u32 2, %s21
        %p688 = scmp.lt.s32.totalorder %s687, 1
        %s689 = scalar_select %p688, %s687, 1
        %s690 = smul.addr %s689, 2
        %s691 = smul.addr %s690, 4
        %s692 = scalar_lea.vmem %s6, %s691
        // Predicated region
        $region94: #{fmri_encoder_cross_forward.17} parent=80 // pred_check
          %p693 = pneg %p190
        $region95: #{fmri_encoder_cross_forward.17} parent=80 // pred_check_branch
          %695 = sbr.rel (%p693) target = $region97
        $region96: #{fmri_encoder_cross_forward.17} parent=80 // pred_region
          %s696 = smul.u32 2, %s21
        $region97: #{fmri_encoder_cross_forward.17} parent=80 // pred_fallthru
          _
        // Predicated region
        $region98: #{fmri_encoder_cross_forward.17} parent=80 // pred_check
          %p697 = pneg %p190
        $region99: #{fmri_encoder_cross_forward.17} parent=80 // pred_check_branch
          %699 = sbr.rel (%p697) target = $region101
        $region100: #{fmri_encoder_cross_forward.17} parent=80 // pred_region
          %s700 = smul.u32 2, %s21
          %p701 = scmp.lt.s32.totalorder %s700, 1
          %s702 = scalar_select %p701, %s700, 1
          %s703 = smul.addr %s702, 2
          %s704 = smul.addr %s703, 4
          %s705 = scalar_lea.vmem %s6, %s704
        $region101: #{fmri_encoder_cross_forward.17} parent=80 // pred_fallthru
          _
      $region81: #{fmri_encoder_cross_forward.17} parent=5 // pred_fallthru
        _
      %p706 = scmp.le.s32.totalorder 2, %s12
      // Predicated region
      $region102: #{fmri_encoder_cross_forward.17} parent=5 // pred_check
        %p707 = pneg %p706
      $region103: #{fmri_encoder_cross_forward.17} parent=5 // pred_check_branch
        %709 = sbr.rel (%p707) target = $region105
      $region104: #{fmri_encoder_cross_forward.17} parent=5 // pred_region
        %s710 = ssub.s32 %s12, 2
      $region105: #{fmri_encoder_cross_forward.17} parent=5 // pred_fallthru
        _
    $region6: #{fmri_encoder_cross_forward.17} parent=1 // loop_footer
      %s16 = sadd.s32 1, %s12
    $region7: #{fmri_encoder_cross_forward.17} parent=1 // loop_footer_branch
      %11 = sbr.rel target = $region3
    $region8: #{fmri_encoder_cross_forward.17} parent=1 // loop_exit
      _

// kernel: fmri_encoder_cross_forward.12
$region0: #{fmri_encoder_cross_forward.12}
  #allocation0 [shape = 'u32[]', space=smem, size = 0x4, offset = 0x4, fixed_abs, tag = 'smem constant byte address 0x4 - core index']
  #allocation1 [shape = 'u32[144,128]{1,0:T(1,128)}', space=vmem, size = 0x12000, scoped, tag = 'internal scratch']
  #allocation2 [shape = 'f32[8,256]{1,0:T(8,128)}', space=vmem, size = 0x2000, scoped, tag = 'scratch operand']
  #allocation3 [shape = 's32[1]{0}', space=sflag, size = 0x4, scoped, tag = 'scoped memory for fmri_encoder_cross_forward.12']
  #allocation4 [shape = 'u8[512]{0}', space=smem, size = 0x200, scoped, tag = 'prefetched SMEM operand 0']
  %s0 = inlined_call_operand.vmem [shape: s32[2], index: 0, kind: input, shape index: {}]
  %s1 = inlined_call_operand.vmem [shape: bf16[2,8,256], index: 1, kind: input, shape index: {}]
  %s2 = inlined_call_operand.vmem [shape: bf16[2,256,256], index: 2, kind: input, shape index: {}]
  %s3 = inlined_call_operand.vmem [shape: f32[2,1,256], index: 3, kind: input, shape index: {}]
  %s4 = inlined_call_operand.vmem [shape: f32[2,1,256], index: 4, kind: input, shape index: {}]
  %s5 = inlined_call_operand.vmem [shape: f32[2,1,256], index: 5, kind: input, shape index: {}]
  %s6 = inlined_call_operand.vmem [shape: bf16[2,256,128], index: 6, kind: input, shape index: {}]
  %s7 = inlined_call_operand.vmem [shape: f32[2,1,128], index: 7, kind: input, shape index: {}]
  %s8 = inlined_call_operand.vmem [shape: bf16[2,128,256], index: 8, kind: input, shape index: {}]
  %s9 = inlined_call_operand.vmem [shape: f32[2,1,256], index: 9, kind: input, shape index: {}]
  %s10 = inlined_call_operand.hbm [shape: bf16[2,8,256], index: 10, kind: output, shape index: {}]
  %s11 = sld [smem:[#allocation0]]
  $region77: #{fmri_encoder_cross_forward.12} parent=0
    _
  %s13 = ssub.s32 1, %s11
  %s14 = scalar_select 0, %s13, %s11
  %s15 = sshll.u32 %s0, 4
  %s16 = int_to_ptr.vmem [resolvable:$true] %s15
  %18 = dma.vmem_to_smem %s16, 16, [#allocation4], [#allocation3]
  %19 = dma.done [#allocation3], 16
  %20 = sfence
  $region1: #{fmri_encoder_cross_forward.12} parent=0
    #allocation5 [shape = 'u8[8192]{0}', space=vmem, size = 0x2000, scoped, tag = 'output window, operand 0']
    #allocation6 [shape = 's32[2]{0}', space=sflag, size = 0x8, scoped, tag = 'scoped memory for fmri_encoder_cross_forward.12']
    %21 = vsyncpa [#allocation6], 0
    %s22 = scalar_lea.sflag [#allocation6], 1
    %23 = vsyncpa %s22, 0
    loop: start=0, step=1, limit=6
    $region2: #{fmri_encoder_cross_forward.12} parent=1 // loop_pre_header
      _
    $region3: #{fmri_encoder_cross_forward.12} parent=1 // loop_header
      %s25 = sphi 0, %s29
      %p26 = scmp.ge.s32.totalorder %s25, 6
      %s32 = sphi 0, %s51
      %s33 = sphi 0, %s47
      %s34 = sphi 0, %s43
      %s35 = sphi 0, %s32
      %s36 = sphi 0, %s33
      %s37 = sphi 0, %s34
      %s38 = sphi 0, %s35
      %s39 = sphi 0, %s36
      %s40 = sphi 0, %s37
      %s58 = sphi 0, %s60
      %s61 = sphi 0, %s58
      %s62 = sphi 0, %s61
      %s78 = sphi 0, %s62
      %s88 = sphi 0, %s90
      %s91 = sphi 0, %s88
      %s92 = sphi 0, %s91
      %s108 = sphi 0, %s92
      %s116 = sphi 0, %s118
      %s119 = sphi 0, %s116
      %s120 = sphi 0, %s119
      %s136 = sphi 0, %s120
      %s144 = sphi 0, %s146
      %s147 = sphi 0, %s144
      %s148 = sphi 0, %s147
      %s164 = sphi 0, %s148
      %s172 = sphi 0, %s174
      %s175 = sphi 0, %s172
      %s176 = sphi 0, %s175
      %s192 = sphi 0, %s176
      %s200 = sphi 0, %s202
      %s203 = sphi 0, %s200
      %s204 = sphi 0, %s203
      %s220 = sphi 0, %s204
      %s228 = sphi 0, %s230
      %s231 = sphi 0, %s228
      %s232 = sphi 0, %s231
      %s248 = sphi 0, %s232
      %s256 = sphi 0, %s258
      %s259 = sphi 0, %s256
      %s260 = sphi 0, %s259
      %s276 = sphi 0, %s260
      %s284 = sphi 0, %s286
      %s287 = sphi 0, %s284
      %s288 = sphi 0, %s287
      %s304 = sphi 0, %s288
      %s312 = sphi 0, %s314
      %s315 = sphi 0, %s312
      %s316 = sphi 0, %s315
      %s332 = sphi 0, %s316
    $region4: #{fmri_encoder_cross_forward.12} parent=1 // loop_header_branch
      %28 = sbr.rel (%p26) target = $region8
    $region5: #{fmri_encoder_cross_forward.12} parent=1 // loop_body
      %s30 = ssub.s32 %s25, 1
      %s31 = ssub.s32 %s25, 2
      %s41 = sadd.s32 1, %s34
      %p42 = scmp.ge.s32.totalorder %s41, 2
      %s43 = scalar_select %p42, 0, %s41
      %s44 = sadd.s32 1, %s33
      %s45 = scalar_select %p42, %s44, %s33
      %p46 = scmp.ge.s32.totalorder %s45, 1
      %s47 = scalar_select %p46, 0, %s45
      %s48 = sadd.s32 1, %s32
      %s49 = scalar_select %p46, %s48, %s32
      %p50 = scmp.ge.s32.totalorder %s49, 2
      %s51 = scalar_select %p50, 0, %s49
      %s52 = ssub.s32 %s32, %s51
      %s53 = ssub.s32 %s33, %s47
      %s54 = sor.u32 %s52, %s53
      %s55 = ssub.s32 %s34, %s43
      %s56 = sor.u32 %s54, %s55
      %p57 = scmp.eq.s32.totalorder %s56, 0
      %s59 = sadd.s32 %s58, 1
      %s60 = scalar_select %p57, %s58, %s59
      %p63 = pneg %p57
      %p64 = scmp.eq.s32.totalorder %s25, 3
      %p65 = por %p63, %p64
      %p66 = scmp.ne.s32.totalorder %s58, %s61
      %p67 = scmp.eq.s32.totalorder %s25, 0
      %p68 = por %p66, %p67
      %p69 = scmp.ne.s32.totalorder %s58, %s61
      %p70 = scmp.eq.s32.totalorder %s30, 3
      %p71 = por %p69, %p70
      %p72 = scmp.ne.s32.totalorder %s61, %s62
      %p73 = scmp.eq.s32.totalorder %s30, 0
      %p74 = por %p72, %p73
      %p75 = scmp.ne.s32.totalorder %s61, %s62
      %p76 = scmp.eq.s32.totalorder %s31, 3
      %p77 = por %p75, %p76
      %p79 = scmp.ne.s32.totalorder %s62, %s78
      %p80 = scmp.eq.s32.totalorder %s31, 0
      %p81 = por %p79, %p80
      %s82 = sld [smem:[#allocation4 + %s32]]
      %s83 = sld [smem:[#allocation4 + %s51]]
      %s84 = ssub.s32 %s82, %s83
      %s85 = ssub.s32 %s34, %s43
      %s86 = sor.u32 %s84, %s85
      %p87 = scmp.eq.s32.totalorder %s86, 0
      %s89 = sadd.s32 %s88, 1
      %s90 = scalar_select %p87, %s88, %s89
      %p93 = pneg %p87
      %p94 = scmp.eq.s32.totalorder %s25, 3
      %p95 = por %p93, %p94
      %p96 = scmp.ne.s32.totalorder %s88, %s91
      %p97 = scmp.eq.s32.totalorder %s25, 0
      %p98 = por %p96, %p97
      %p99 = scmp.ne.s32.totalorder %s88, %s91
      %p100 = scmp.eq.s32.totalorder %s30, 3
      %p101 = por %p99, %p100
      %p102 = scmp.ne.s32.totalorder %s91, %s92
      %p103 = scmp.eq.s32.totalorder %s30, 0
      %p104 = por %p102, %p103
      %p105 = scmp.ne.s32.totalorder %s91, %s92
      %p106 = scmp.eq.s32.totalorder %s31, 3
      %p107 = por %p105, %p106
      %p109 = scmp.ne.s32.totalorder %s92, %s108
      %p110 = scmp.eq.s32.totalorder %s31, 0
      %p111 = por %p109, %p110
      %s112 = sld [smem:[#allocation4 + %s32]]
      %s113 = sld [smem:[#allocation4 + %s51]]
      %s114 = ssub.s32 %s112, %s113
      %p115 = scmp.eq.s32.totalorder %s114, 0
      %s117 = sadd.s32 %s116, 1
      %s118 = scalar_select %p115, %s116, %s117
      %p121 = pneg %p115
      %p122 = scmp.eq.s32.totalorder %s25, 3
      %p123 = por %p121, %p122
      %p124 = scmp.ne.s32.totalorder %s116, %s119
      %p125 = scmp.eq.s32.totalorder %s25, 0
      %p126 = por %p124, %p125
      %p127 = scmp.ne.s32.totalorder %s116, %s119
      %p128 = scmp.eq.s32.totalorder %s30, 3
      %p129 = por %p127, %p128
      %p130 = scmp.ne.s32.totalorder %s119, %s120
      %p131 = scmp.eq.s32.totalorder %s30, 0
      %p132 = por %p130, %p131
      %p133 = scmp.ne.s32.totalorder %s119, %s120
      %p134 = scmp.eq.s32.totalorder %s31, 3
      %p135 = por %p133, %p134
      %p137 = scmp.ne.s32.totalorder %s120, %s136
      %p138 = scmp.eq.s32.totalorder %s31, 0
      %p139 = por %p137, %p138
      %s140 = sld [smem:[#allocation4 + %s32]]
      %s141 = sld [smem:[#allocation4 + %s51]]
      %s142 = ssub.s32 %s140, %s141
      %p143 = scmp.eq.s32.totalorder %s142, 0
      %s145 = sadd.s32 %s144, 1
      %s146 = scalar_select %p143, %s144, %s145
      %p149 = pneg %p143
      %p150 = scmp.eq.s32.totalorder %s25, 3
      %p151 = por %p149, %p150
      %p152 = scmp.ne.s32.totalorder %s144, %s147
      %p153 = scmp.eq.s32.totalorder %s25, 0
      %p154 = por %p152, %p153
      %p155 = scmp.ne.s32.totalorder %s144, %s147
      %p156 = scmp.eq.s32.totalorder %s30, 3
      %p157 = por %p155, %p156
      %p158 = scmp.ne.s32.totalorder %s147, %s148
      %p159 = scmp.eq.s32.totalorder %s30, 0
      %p160 = por %p158, %p159
      %p161 = scmp.ne.s32.totalorder %s147, %s148
      %p162 = scmp.eq.s32.totalorder %s31, 3
      %p163 = por %p161, %p162
      %p165 = scmp.ne.s32.totalorder %s148, %s164
      %p166 = scmp.eq.s32.totalorder %s31, 0
      %p167 = por %p165, %p166
      %s168 = sld [smem:[#allocation4 + %s32]]
      %s169 = sld [smem:[#allocation4 + %s51]]
      %s170 = ssub.s32 %s168, %s169
      %p171 = scmp.eq.s32.totalorder %s170, 0
      %s173 = sadd.s32 %s172, 1
      %s174 = scalar_select %p171, %s172, %s173
      %p177 = pneg %p171
      %p178 = scmp.eq.s32.totalorder %s25, 3
      %p179 = por %p177, %p178
      %p180 = scmp.ne.s32.totalorder %s172, %s175
      %p181 = scmp.eq.s32.totalorder %s25, 0
      %p182 = por %p180, %p181
      %p183 = scmp.ne.s32.totalorder %s172, %s175
      %p184 = scmp.eq.s32.totalorder %s30, 3
      %p185 = por %p183, %p184
      %p186 = scmp.ne.s32.totalorder %s175, %s176
      %p187 = scmp.eq.s32.totalorder %s30, 0
      %p188 = por %p186, %p187
      %p189 = scmp.ne.s32.totalorder %s175, %s176
      %p190 = scmp.eq.s32.totalorder %s31, 3
      %p191 = por %p189, %p190
      %p193 = scmp.ne.s32.totalorder %s176, %s192
      %p194 = scmp.eq.s32.totalorder %s31, 0
      %p195 = por %p193, %p194
      %s196 = sld [smem:[#allocation4 + %s32]]
      %s197 = sld [smem:[#allocation4 + %s51]]
      %s198 = ssub.s32 %s196, %s197
      %p199 = scmp.eq.s32.totalorder %s198, 0
      %s201 = sadd.s32 %s200, 1
      %s202 = scalar_select %p199, %s200, %s201
      %p205 = pneg %p199
      %p206 = scmp.eq.s32.totalorder %s25, 3
      %p207 = por %p205, %p206
      %p208 = scmp.ne.s32.totalorder %s200, %s203
      %p209 = scmp.eq.s32.totalorder %s25, 0
      %p210 = por %p208, %p209
      %p211 = scmp.ne.s32.totalorder %s200, %s203
      %p212 = scmp.eq.s32.totalorder %s30, 3
      %p213 = por %p211, %p212
      %p214 = scmp.ne.s32.totalorder %s203, %s204
      %p215 = scmp.eq.s32.totalorder %s30, 0
      %p216 = por %p214, %p215
      %p217 = scmp.ne.s32.totalorder %s203, %s204
      %p218 = scmp.eq.s32.totalorder %s31, 3
      %p219 = por %p217, %p218
      %p221 = scmp.ne.s32.totalorder %s204, %s220
      %p222 = scmp.eq.s32.totalorder %s31, 0
      %p223 = por %p221, %p222
      %s224 = sld [smem:[#allocation4 + %s32]]
      %s225 = sld [smem:[#allocation4 + %s51]]
      %s226 = ssub.s32 %s224, %s225
      %p227 = scmp.eq.s32.totalorder %s226, 0
      %s229 = sadd.s32 %s228, 1
      %s230 = scalar_select %p227, %s228, %s229
      %p233 = pneg %p227
      %p234 = scmp.eq.s32.totalorder %s25, 3
      %p235 = por %p233, %p234
      %p236 = scmp.ne.s32.totalorder %s228, %s231
      %p237 = scmp.eq.s32.totalorder %s25, 0
      %p238 = por %p236, %p237
      %p239 = scmp.ne.s32.totalorder %s228, %s231
      %p240 = scmp.eq.s32.totalorder %s30, 3
      %p241 = por %p239, %p240
      %p242 = scmp.ne.s32.totalorder %s231, %s232
      %p243 = scmp.eq.s32.totalorder %s30, 0
      %p244 = por %p242, %p243
      %p245 = scmp.ne.s32.totalorder %s231, %s232
      %p246 = scmp.eq.s32.totalorder %s31, 3
      %p247 = por %p245, %p246
      %p249 = scmp.ne.s32.totalorder %s232, %s248
      %p250 = scmp.eq.s32.totalorder %s31, 0
      %p251 = por %p249, %p250
      %s252 = sld [smem:[#allocation4 + %s32]]
      %s253 = sld [smem:[#allocation4 + %s51]]
      %s254 = ssub.s32 %s252, %s253
      %p255 = scmp.eq.s32.totalorder %s254, 0
      %s257 = sadd.s32 %s256, 1
      %s258 = scalar_select %p255, %s256, %s257
      %p261 = pneg %p255
      %p262 = scmp.eq.s32.totalorder %s25, 3
      %p263 = por %p261, %p262
      %p264 = scmp.ne.s32.totalorder %s256, %s259
      %p265 = scmp.eq.s32.totalorder %s25, 0
      %p266 = por %p264, %p265
      %p267 = scmp.ne.s32.totalorder %s256, %s259
      %p268 = scmp.eq.s32.totalorder %s30, 3
      %p269 = por %p267, %p268
      %p270 = scmp.ne.s32.totalorder %s259, %s260
      %p271 = scmp.eq.s32.totalorder %s30, 0
      %p272 = por %p270, %p271
      %p273 = scmp.ne.s32.totalorder %s259, %s260
      %p274 = scmp.eq.s32.totalorder %s31, 3
      %p275 = por %p273, %p274
      %p277 = scmp.ne.s32.totalorder %s260, %s276
      %p278 = scmp.eq.s32.totalorder %s31, 0
      %p279 = por %p277, %p278
      %s280 = sld [smem:[#allocation4 + %s32]]
      %s281 = sld [smem:[#allocation4 + %s51]]
      %s282 = ssub.s32 %s280, %s281
      %p283 = scmp.eq.s32.totalorder %s282, 0
      %s285 = sadd.s32 %s284, 1
      %s286 = scalar_select %p283, %s284, %s285
      %p289 = pneg %p283
      %p290 = scmp.eq.s32.totalorder %s25, 3
      %p291 = por %p289, %p290
      %p292 = scmp.ne.s32.totalorder %s284, %s287
      %p293 = scmp.eq.s32.totalorder %s25, 0
      %p294 = por %p292, %p293
      %p295 = scmp.ne.s32.totalorder %s284, %s287
      %p296 = scmp.eq.s32.totalorder %s30, 3
      %p297 = por %p295, %p296
      %p298 = scmp.ne.s32.totalorder %s287, %s288
      %p299 = scmp.eq.s32.totalorder %s30, 0
      %p300 = por %p298, %p299
      %p301 = scmp.ne.s32.totalorder %s287, %s288
      %p302 = scmp.eq.s32.totalorder %s31, 3
      %p303 = por %p301, %p302
      %p305 = scmp.ne.s32.totalorder %s288, %s304
      %p306 = scmp.eq.s32.totalorder %s31, 0
      %p307 = por %p305, %p306
      %s308 = ssub.s32 %s32, %s51
      %s309 = ssub.s32 %s33, %s47
      %s310 = sor.u32 %s308, %s309
      %p311 = scmp.eq.s32.totalorder %s310, 0
      %s313 = sadd.s32 %s312, 1
      %s314 = scalar_select %p311, %s312, %s313
      %p317 = pneg %p311
      %p318 = scmp.eq.s32.totalorder %s25, 3
      %p319 = por %p317, %p318
      %p320 = scmp.ne.s32.totalorder %s312, %s315
      %p321 = scmp.eq.s32.totalorder %s25, 0
      %p322 = por %p320, %p321
      %p323 = scmp.ne.s32.totalorder %s312, %s315
      %p324 = scmp.eq.s32.totalorder %s30, 3
      %p325 = por %p323, %p324
      %p326 = scmp.ne.s32.totalorder %s315, %s316
      %p327 = scmp.eq.s32.totalorder %s30, 0
      %p328 = por %p326, %p327
      %p329 = scmp.ne.s32.totalorder %s315, %s316
      %p330 = scmp.eq.s32.totalorder %s31, 3
      %p331 = por %p329, %p330
      %p333 = scmp.ne.s32.totalorder %s316, %s332
      %p334 = scmp.eq.s32.totalorder %s31, 0
      %p335 = por %p333, %p334
      %p336 = scmp.le.s32.totalorder 1, %s25
      %p337 = scmp.lt.s32.totalorder %s25, 5
      %p338 = pnand %p336, %p337
      %p339 = pneg %p338
      // Predicated region
      $region9: #{fmri_encoder_cross_forward.12} parent=5 // pred_check
        _
      $region10: #{fmri_encoder_cross_forward.12} parent=5 // pred_check_branch
        %341 = sbr.rel (%p338) target = $region12
      $region11: #{fmri_encoder_cross_forward.12} parent=5 // pred_region
        %s342 = ssub.s32 %s25, 1
      $region12: #{fmri_encoder_cross_forward.12} parent=5 // pred_fallthru
        _
      %p343 = scmp.lt.s32.totalorder %s25, 4
      // Predicated region
      $region13: #{fmri_encoder_cross_forward.12} parent=5 // pred_check
        %p344 = pneg %p343
      $region14: #{fmri_encoder_cross_forward.12} parent=5 // pred_check_branch
        %346 = sbr.rel (%p344) target = $region16
      $region15: #{fmri_encoder_cross_forward.12} parent=5 // pred_region
        // Predicated region
        $region17: #{fmri_encoder_cross_forward.12} parent=15 // pred_check
          %p347 = pneg %p68
        $region18: #{fmri_encoder_cross_forward.12} parent=15 // pred_check_branch
          %349 = sbr.rel (%p347) target = $region20
        $region19: #{fmri_encoder_cross_forward.12} parent=15 // pred_region
          %p350 = scmp.lt.s32.totalorder %s32, 1
          %s351 = scalar_select %p350, %s32, 1
          %p352 = scmp.lt.s32.totalorder %s33, 0
          %s353 = scalar_select %p352, %s33, 0
          %p354 = scmp.lt.s32.totalorder %s34, 1
          %s355 = scalar_select %p354, %s34, 1
          %s356 = smul.addr %s353, 2
          %s357 = sadd.s32 %s355, %s356
          %s358 = smul.addr %s351, 2
          %s359 = sadd.s32 %s357, %s358
          %s360 = smul.addr %s359, 4
          %s361 = scalar_lea.vmem %s1, %s360
        $region20: #{fmri_encoder_cross_forward.12} parent=15 // pred_fallthru
          _
        // Predicated region
        $region21: #{fmri_encoder_cross_forward.12} parent=15 // pred_check
          %p362 = pneg %p98
        $region22: #{fmri_encoder_cross_forward.12} parent=15 // pred_check_branch
          %364 = sbr.rel (%p362) target = $region24
        $region23: #{fmri_encoder_cross_forward.12} parent=15 // pred_region
          %s365 = sld [smem:[#allocation4 + %s32]]
          %s366 = smul.u32 16, %s34
          %p367 = scmp.lt.s32.totalorder %s365, 1
          %s368 = scalar_select %p367, %s365, 1
          %p369 = scmp.lt.s32.totalorder %s366, 31
          %s370 = scalar_select %p369, %s366, 31
          %s371 = smul.addr %s370, 2
          %s372 = smul.addr %s368, 64
          %s373 = sadd.s32 %s371, %s372
          %s374 = smul.addr %s373, 4
          %s375 = scalar_lea.vmem %s2, %s374
          %s376 = sld [smem:[#allocation4 + %s32]]
          %s377 = smul.u32 16, %s34
        $region24: #{fmri_encoder_cross_forward.12} parent=15 // pred_fallthru
          _
        // Predicated region
        $region25: #{fmri_encoder_cross_forward.12} parent=15 // pred_check
          %p378 = pneg %p126
        $region26: #{fmri_encoder_cross_forward.12} parent=15 // pred_check_branch
          %380 = sbr.rel (%p378) target = $region28
        $region27: #{fmri_encoder_cross_forward.12} parent=15 // pred_region
          %s381 = sld [smem:[#allocation4 + %s32]]
          %p382 = scmp.lt.s32.totalorder %s381, 1
          %s383 = scalar_select %p382, %s381, 1
          %s384 = smul.addr %s383, 2
          %s385 = scalar_lea.vmem %s3, %s384
          %s386 = sld [smem:[#allocation4 + %s32]]
        $region28: #{fmri_encoder_cross_forward.12} parent=15 // pred_fallthru
          _
        // Predicated region
        $region29: #{fmri_encoder_cross_forward.12} parent=15 // pred_check
          %p387 = pneg %p154
        $region30: #{fmri_encoder_cross_forward.12} parent=15 // pred_check_branch
          %389 = sbr.rel (%p387) target = $region32
        $region31: #{fmri_encoder_cross_forward.12} parent=15 // pred_region
          %s390 = sld [smem:[#allocation4 + %s32]]
          %p391 = scmp.lt.s32.totalorder %s390, 1
          %s392 = scalar_select %p391, %s390, 1
          %s393 = smul.addr %s392, 2
          %s394 = scalar_lea.vmem %s4, %s393
          %s395 = sld [smem:[#allocation4 + %s32]]
        $region32: #{fmri_encoder_cross_forward.12} parent=15 // pred_fallthru
          _
        // Predicated region
        $region33: #{fmri_encoder_cross_forward.12} parent=15 // pred_check
          %p396 = pneg %p182
        $region34: #{fmri_encoder_cross_forward.12} parent=15 // pred_check_branch
          %398 = sbr.rel (%p396) target = $region36
        $region35: #{fmri_encoder_cross_forward.12} parent=15 // pred_region
          %s399 = sld [smem:[#allocation4 + %s32]]
          %p400 = scmp.lt.s32.totalorder %s399, 1
          %s401 = scalar_select %p400, %s399, 1
          %s402 = smul.addr %s401, 2
          %s403 = scalar_lea.vmem %s5, %s402
          %s404 = sld [smem:[#allocation4 + %s32]]
        $region36: #{fmri_encoder_cross_forward.12} parent=15 // pred_fallthru
          _
        // Predicated region
        $region37: #{fmri_encoder_cross_forward.12} parent=15 // pred_check
          %p405 = pneg %p210
        $region38: #{fmri_encoder_cross_forward.12} parent=15 // pred_check_branch
          %407 = sbr.rel (%p405) target = $region40
        $region39: #{fmri_encoder_cross_forward.12} parent=15 // pred_region
          %s408 = sld [smem:[#allocation4 + %s32]]
          %p409 = scmp.lt.s32.totalorder %s408, 1
          %s410 = scalar_select %p409, %s408, 1
          %s411 = smul.addr %s410, 32
          %s412 = smul.addr %s411, 4
          %s413 = scalar_lea.vmem %s6, %s412
          %s414 = sld [smem:[#allocation4 + %s32]]
        $region40: #{fmri_encoder_cross_forward.12} parent=15 // pred_fallthru
          _
        // Predicated region
        $region41: #{fmri_encoder_cross_forward.12} parent=15 // pred_check
          %p415 = pneg %p238
        $region42: #{fmri_encoder_cross_forward.12} parent=15 // pred_check_branch
          %417 = sbr.rel (%p415) target = $region44
        $region43: #{fmri_encoder_cross_forward.12} parent=15 // pred_region
          %s418 = sld [smem:[#allocation4 + %s32]]
          %p419 = scmp.lt.s32.totalorder %s418, 1
          %s420 = scalar_select %p419, %s418, 1
          %s421 = scalar_lea.vmem %s7, %s420
          %s422 = sld [smem:[#allocation4 + %s32]]
        $region44: #{fmri_encoder_cross_forward.12} parent=15 // pred_fallthru
          _
        // Predicated region
        $region45: #{fmri_encoder_cross_forward.12} parent=15 // pred_check
          %p423 = pneg %p266
        $region46: #{fmri_encoder_cross_forward.12} parent=15 // pred_check_branch
          %425 = sbr.rel (%p423) target = $region48
        $region47: #{fmri_encoder_cross_forward.12} parent=15 // pred_region
          %s426 = sld [smem:[#allocation4 + %s32]]
          %p427 = scmp.lt.s32.totalorder %s426, 1
          %s428 = scalar_select %p427, %s426, 1
          %s429 = smul.addr %s428, 32
          %s430 = smul.addr %s429, 4
          %s431 = scalar_lea.vmem %s8, %s430
          %s432 = sld [smem:[#allocation4 + %s32]]
        $region48: #{fmri_encoder_cross_forward.12} parent=15 // pred_fallthru
          _
        // Predicated region
        $region49: #{fmri_encoder_cross_forward.12} parent=15 // pred_check
          %p433 = pneg %p294
        $region50: #{fmri_encoder_cross_forward.12} parent=15 // pred_check_branch
          %435 = sbr.rel (%p433) target = $region52
        $region51: #{fmri_encoder_cross_forward.12} parent=15 // pred_region
          %s436 = sld [smem:[#allocation4 + %s32]]
          %p437 = scmp.lt.s32.totalorder %s436, 1
          %s438 = scalar_select %p437, %s436, 1
          %s439 = smul.addr %s438, 2
          %s440 = scalar_lea.vmem %s9, %s439
          %s441 = sld [smem:[#allocation4 + %s32]]
        $region52: #{fmri_encoder_cross_forward.12} parent=15 // pred_fallthru
          _
      $region16: #{fmri_encoder_cross_forward.12} parent=5 // pred_fallthru
        _
      %p442 = scmp.le.s32.totalorder 1, %s25
      %p443 = scmp.lt.s32.totalorder %s25, 5
      %p444 = pnand %p442, %p443
      %p445 = pneg %p444
      // Predicated region
      $region53: #{fmri_encoder_cross_forward.12} parent=5 // pred_check
        _
      $region54: #{fmri_encoder_cross_forward.12} parent=5 // pred_check_branch
        %447 = sbr.rel (%p444) target = $region56
      $region55: #{fmri_encoder_cross_forward.12} parent=5 // pred_region
        %s448 = ssub.s32 %s25, 1
        %p449 = scmp.lt.s32.totalorder %s35, 1
        %s450 = scalar_select %p449, %s35, 1
        %p451 = scmp.lt.s32.totalorder %s36, 0
        %s452 = scalar_select %p451, %s36, 0
        %p453 = scmp.lt.s32.totalorder %s37, 1
        %s454 = scalar_select %p453, %s37, 1
        %s455 = smul.addr %s452, 2
        %s456 = sadd.s32 %s454, %s455
        %s457 = smul.addr %s450, 2
        %s458 = sadd.s32 %s456, %s457
        %s459 = smul.addr %s458, 4
        %s460 = scalar_lea.vmem %s1, %s459
        %p461 = pneg %p74
        %p462 = pneg %p71
        %s463 = sld [smem:[#allocation4 + %s35]]
        %s464 = smul.u32 16, %s37
        %p465 = scmp.lt.s32.totalorder %s463, 1
        %s466 = scalar_select %p465, %s463, 1
        %p467 = scmp.lt.s32.totalorder %s464, 31
        %s468 = scalar_select %p467, %s464, 31
        %s469 = smul.addr %s468, 2
        %s470 = smul.addr %s466, 64
        %s471 = sadd.s32 %s469, %s470
        %s472 = smul.addr %s471, 4
        %s473 = scalar_lea.vmem %s2, %s472
        %p474 = pneg %p104
        %p475 = pneg %p101
        %s476 = sld [smem:[#allocation4 + %s35]]
        %p477 = scmp.lt.s32.totalorder %s476, 1
        %s478 = scalar_select %p477, %s476, 1
        %s479 = smul.addr %s478, 2
        %s480 = scalar_lea.vmem %s3, %s479
        %p481 = pneg %p132
        %p482 = pneg %p129
        %s483 = sld [smem:[#allocation4 + %s35]]
        %p484 = scmp.lt.s32.totalorder %s483, 1
        %s485 = scalar_select %p484, %s483, 1
        %s486 = smul.addr %s485, 2
        %s487 = scalar_lea.vmem %s4, %s486
        %p488 = pneg %p160
        %p489 = pneg %p157
        %s490 = sld [smem:[#allocation4 + %s35]]
        %p491 = scmp.lt.s32.totalorder %s490, 1
        %s492 = scalar_select %p491, %s490, 1
        %s493 = smul.addr %s492, 2
        %s494 = scalar_lea.vmem %s5, %s493
        %p495 = pneg %p188
        %p496 = pneg %p185
        %s497 = sld [smem:[#allocation4 + %s35]]
        %p498 = scmp.lt.s32.totalorder %s497, 1
        %s499 = scalar_select %p498, %s497, 1
        %s500 = smul.addr %s499, 32
        %s501 = smul.addr %s500, 4
        %s502 = scalar_lea.vmem %s6, %s501
        %p503 = pneg %p216
        %p504 = pneg %p213
        %s505 = sld [smem:[#allocation4 + %s35]]
        %p506 = scmp.lt.s32.totalorder %s505, 1
        %s507 = scalar_select %p506, %s505, 1
        %s508 = scalar_lea.vmem %s7, %s507
        %p509 = pneg %p244
        %p510 = pneg %p241
        %s511 = sld [smem:[#allocation4 + %s35]]
        %p512 = scmp.lt.s32.totalorder %s511, 1
        %s513 = scalar_select %p512, %s511, 1
        %s514 = smul.addr %s513, 32
        %s515 = smul.addr %s514, 4
        %s516 = scalar_lea.vmem %s8, %s515
        %p517 = pneg %p272
        %p518 = pneg %p269
        %s519 = sld [smem:[#allocation4 + %s35]]
        %p520 = scmp.lt.s32.totalorder %s519, 1
        %s521 = scalar_select %p520, %s519, 1
        %s522 = smul.addr %s521, 2
        %s523 = scalar_lea.vmem %s9, %s522
        %p524 = pneg %p300
        %p525 = pneg %p297
        %p526 = pneg %p328
        %p527 = pneg %p325
        %s528 = sand.u32 %s315, 1
        %s529 = scalar_lea.sflag [#allocation6], %s528
        %s530 = sand.u32 %s315, 1
        %s531 = smul.addr %s530, 8
        %s532 = scalar_lea.vmem [#allocation5], %s531
        %p533 = scmp.lt.s32.totalorder %s35, 1
        %s534 = scalar_select %p533, %s35, 1
        %p535 = scmp.lt.s32.totalorder %s36, 0
        %s536 = scalar_select %p535, %s36, 0
        %p537 = scmp.lt.s32.totalorder %s37, 1
        %s538 = scalar_select %p537, %s37, 1
        %s539 = smul.addr %s536, 2
        %s540 = sadd.s32 %s538, %s539
        %s541 = smul.addr %s534, 2
        %s542 = sadd.s32 %s540, %s541
        %s543 = smul.addr %s542, 4
        %s544 = scalar_lea.vmem %s1, %s543
        %s545 = sld [smem:[#allocation4 + %s35]]
        %s546 = smul.u32 16, %s37
        %p547 = scmp.lt.s32.totalorder %s545, 1
        %s548 = scalar_select %p547, %s545, 1
        %p549 = scmp.lt.s32.totalorder %s546, 31
        %s550 = scalar_select %p549, %s546, 31
        %s551 = smul.addr %s550, 2
        %s552 = smul.addr %s548, 64
        %s553 = sadd.s32 %s551, %s552
        %s554 = smul.addr %s553, 4
        %s555 = scalar_lea.vmem %s2, %s554
        %s556 = sld [smem:[#allocation4 + %s35]]
        %s557 = smul.u32 16, %s37
        %s558 = sld [smem:[#allocation4 + %s35]]
        %p559 = scmp.lt.s32.totalorder %s558, 1
        %s560 = scalar_select %p559, %s558, 1
        %s561 = smul.addr %s560, 2
        %s562 = scalar_lea.vmem %s3, %s561
        %s563 = sld [smem:[#allocation4 + %s35]]
        %s564 = sld [smem:[#allocation4 + %s35]]
        %p565 = scmp.lt.s32.totalorder %s564, 1
        %s566 = scalar_select %p565, %s564, 1
        %s567 = smul.addr %s566, 2
        %s568 = scalar_lea.vmem %s4, %s567
        %s569 = sld [smem:[#allocation4 + %s35]]
        %s570 = sld [smem:[#allocation4 + %s35]]
        %p571 = scmp.lt.s32.totalorder %s570, 1
        %s572 = scalar_select %p571, %s570, 1
        %s573 = smul.addr %s572, 2
        %s574 = scalar_lea.vmem %s5, %s573
        %s575 = sld [smem:[#allocation4 + %s35]]
        %s576 = sld [smem:[#allocation4 + %s35]]
        %p577 = scmp.lt.s32.totalorder %s576, 1
        %s578 = scalar_select %p577, %s576, 1
        %s579 = smul.addr %s578, 32
        %s580 = smul.addr %s579, 4
        %s581 = scalar_lea.vmem %s6, %s580
        %s582 = sld [smem:[#allocation4 + %s35]]
        %s583 = sld [smem:[#allocation4 + %s35]]
        %p584 = scmp.lt.s32.totalorder %s583, 1
        %s585 = scalar_select %p584, %s583, 1
        %s586 = scalar_lea.vmem %s7, %s585
        %s587 = sld [smem:[#allocation4 + %s35]]
        %s588 = sld [smem:[#allocation4 + %s35]]
        %p589 = scmp.lt.s32.totalorder %s588, 1
        %s590 = scalar_select %p589, %s588, 1
        %s591 = smul.addr %s590, 32
        %s592 = smul.addr %s591, 4
        %s593 = scalar_lea.vmem %s8, %s592
        %s594 = sld [smem:[#allocation4 + %s35]]
        %s595 = sld [smem:[#allocation4 + %s35]]
        %p596 = scmp.lt.s32.totalorder %s595, 1
        %s597 = scalar_select %p596, %s595, 1
        %s598 = smul.addr %s597, 2
        %s599 = scalar_lea.vmem %s9, %s598
        %s600 = sld [smem:[#allocation4 + %s35]]
        %p602 = scmp.eq.s32.totalorder %s37, 0
        // Predicated region
        $region57: #{fmri_encoder_cross_forward.12} parent=55 // pred_check
          %p603 = pneg %p602
        $region58: #{fmri_encoder_cross_forward.12} parent=55 // pred_check_branch
          %605 = sbr.rel (%p603) target = $region60
        $region59: #{fmri_encoder_cross_forward.12} parent=55 // pred_region
          %606 = vst [vmem:[#allocation2] sm:$0xff] 0.0
          %607 = vst [vmem:[#allocation2 + $0x8] sm:$0xff] 0.0
        $region60: #{fmri_encoder_cross_forward.12} parent=55 // pred_fallthru
          _
        %v608 = vld [vmem:[#allocation2] sm:$0xff]
        %v609 = vld [vmem:[#allocation2 + $0x8] sm:$0xff]
        %v610 = vld [vmem:[%s544] sm:$0xf]
        %v611 = vld [vmem:[%s555] sm:$0xff]
        %v612 = vld [vmem:[%s555 + $0x8] sm:$0xff]
        %v613 = vld [vmem:[%s555 + $0x10] sm:$0xff]
        %v614 = vld [vmem:[%s555 + $0x18] sm:$0xff]
        %v615 = vld [vmem:[%s555 + $0x20] sm:$0xff]
        %v616 = vld [vmem:[%s555 + $0x28] sm:$0xff]
        %v617 = vld [vmem:[%s555 + $0x30] sm:$0xff]
        %v618 = vld [vmem:[%s555 + $0x38] sm:$0xff]
        %v619 = vld [vmem:[%s555 + $0x40] sm:$0xff]
        %v620 = vld [vmem:[%s555 + $0x48] sm:$0xff]
        %v621 = vld [vmem:[%s555 + $0x50] sm:$0xff]
        %v622 = vld [vmem:[%s555 + $0x58] sm:$0xff]
        %v623 = vld [vmem:[%s555 + $0x60] sm:$0xff]
        %v624 = vld [vmem:[%s555 + $0x68] sm:$0xff]
        %v625 = vld [vmem:[%s555 + $0x70] sm:$0xff]
        %v626 = vld [vmem:[%s555 + $0x78] sm:$0xff]
        %v643 = vunpack.c.l.b16 %v611
        %v644 = vunpack.c.h.b16 %v611
        %v645 = vunpack.c.l.b16 %v612
        %v646 = vunpack.c.h.b16 %v612
        %v647 = vunpack.c.l.b16 %v613
        %v648 = vunpack.c.h.b16 %v613
        %v649 = vunpack.c.l.b16 %v614
        %v650 = vunpack.c.h.b16 %v614
        %v651 = vunpack.c.l.b16 %v615
        %v652 = vunpack.c.h.b16 %v615
        %v653 = vunpack.c.l.b16 %v616
        %v654 = vunpack.c.h.b16 %v616
        %v655 = vunpack.c.l.b16 %v617
        %v656 = vunpack.c.h.b16 %v617
        %v657 = vunpack.c.l.b16 %v618
        %v658 = vunpack.c.h.b16 %v618
        %v659 = vunpack.c.l.b16 %v619
        %v660 = vunpack.c.h.b16 %v619
        %v661 = vunpack.c.l.b16 %v620
        %v662 = vunpack.c.h.b16 %v620
        %v663 = vunpack.c.l.b16 %v621
        %v664 = vunpack.c.h.b16 %v621
        %v665 = vunpack.c.l.b16 %v622
        %v666 = vunpack.c.h.b16 %v622
        %v667 = vunpack.c.l.b16 %v623
        %v668 = vunpack.c.h.b16 %v623
        %v669 = vunpack.c.l.b16 %v624
        %v670 = vunpack.c.h.b16 %v624
        %v671 = vunpack.c.l.b16 %v625
        %v672 = vunpack.c.h.b16 %v625
        %v673 = vunpack.c.l.b16 %v626
        %v674 = vunpack.c.h.b16 %v626
        %v675 = vpack.c.b16 %v645, %v643
        %v676 = vpack.c.b16 %v646, %v644
        %v677 = vpack.c.b16 %v649, %v647
        %v678 = vpack.c.b16 %v650, %v648
        %v679 = vpack.c.b16 %v653, %v651
        %v680 = vpack.c.b16 %v654, %v652
        %v681 = vpack.c.b16 %v657, %v655
        %v682 = vpack.c.b16 %v658, %v656
        %v683 = vpack.c.b16 %v661, %v659
        %v684 = vpack.c.b16 %v662, %v660
        %v685 = vpack.c.b16 %v665, %v663
        %v686 = vpack.c.b16 %v666, %v664
        %v687 = vpack.c.b16 %v669, %v667
        %v688 = vpack.c.b16 %v670, %v668
        %v689 = vpack.c.b16 %v673, %v671
        %v690 = vpack.c.b16 %v674, %v672
        %707 = vmatprep.subr.bf16.mxu0 %v690
        %708 = vmatpush1.bf16.msra.mxu0 %v689
        %709 = vmatprep.subr.bf16.mxu0 %v688
        %710 = vmatpush1.bf16.msra.mxu0 %v687
        %711 = vmatprep.subr.bf16.mxu0 %v686
        %712 = vmatpush1.bf16.msra.mxu0 %v685
        %713 = vmatprep.subr.bf16.mxu0 %v684
        %714 = vmatpush1.bf16.msra.mxu0 %v683
        %715 = vmatprep.subr.bf16.mxu0 %v682
        %716 = vmatpush1.bf16.msra.mxu0 %v681
        %717 = vmatprep.subr.bf16.mxu0 %v680
        %718 = vmatpush1.bf16.msra.mxu0 %v679
        %719 = vmatprep.subr.bf16.mxu0 %v678
        %720 = vmatpush1.bf16.msra.mxu0 %v677
        %721 = vmatprep.subr.bf16.mxu0 %v676
        %722 = vmatpush1.bf16.msra.mxu0 %v675
        %723 = vmatprep.subr.bf16.mxu0 0
        %724 = vmatpush2.bf16.msra.mxu0 0
        %725 = vmatprep.subr.bf16.mxu0 0
        %726 = vmatpush2.bf16.msra.mxu0 0
        %727 = vmatprep.subr.bf16.mxu0 0
        %728 = vmatpush2.bf16.msra.mxu0 0
        %729 = vmatprep.subr.bf16.mxu0 0
        %730 = vmatpush2.bf16.msra.mxu0 0
        %731 = vmatprep.subr.bf16.mxu0 0
        %732 = vmatpush2.bf16.msra.mxu0 0
        %733 = vmatprep.subr.bf16.mxu0 0
        %734 = vmatpush2.bf16.msra.mxu0 0
        %735 = vmatprep.subr.bf16.mxu0 0
        %736 = vmatpush2.bf16.msra.mxu0 0
        %737 = vmatprep.subr.bf16.mxu0 0
        %738 = vmatpush2.bf16.msra.mxu0 0
        %739 = vmatprep.mubr.bf16.mxu0 0
        %740 = vmatmul.mubr.bf16.gmra.mxu0 %v610
        %v741 = vpop.f32.mrf.mxu0
        %v742 = vadd.f32 0.0, %v741
        %v743 = vpop.f32.mrf.mxu0
        %v744 = vadd.f32 0.0, %v743
        %v745 = vpop.f32.mrf.mxu0
        %v746 = vpop.f32.mrf.mxu0
        %747 = vdwg.mxu0
        %v748 = vadd.f32 %v608, %v742
        %v749 = vadd.f32 %v609, %v744
        %750 = vst [vmem:[#allocation2] sm:$0xff] %v748
        %751 = vst [vmem:[#allocation2 + $0x8] sm:$0xff] %v749
        %p752 = scmp.eq.s32.totalorder %s37, 1
        // Predicated region
        $region61: #{fmri_encoder_cross_forward.12} parent=55 // pred_check
          %p753 = pneg %p752
        $region62: #{fmri_encoder_cross_forward.12} parent=55 // pred_check_branch
          %755 = sbr.rel (%p753) target = $region64
        $region63: #{fmri_encoder_cross_forward.12} parent=55 // pred_region
          %v756 = vld [vmem:[#allocation2] sm:$0xff]
          %v757 = vld [vmem:[#allocation2 + $0x8] sm:$0xff]
          %v758 = vld [vmem:[%s562] sm:$0x3]
          %v760 = vlaneseq
          %v761 = vshrl.u32 %v760, 7
          %v762 = vsub.s32 0, %v761
          %v763 = vrot.slane %v758, %v762
          %v764 = vlaneseq
          %v765 = vshrl.u32 %v764, 7
          %v766 = vsub.s32 1, %v765
          %v767 = vrot.slane %v758, %v766
          %v770 = vadd.f32 %v756, %v763
          %v771 = vadd.f32 %v757, %v767
          %v772 = vld [vmem:[%s568] sm:$0x3]
          %v773 = vld [vmem:[%s574] sm:$0x3]
          %v774 = vadd.f32 %v770, %v771
          %775 = vadd.xlane.f32.xlu0 %v774
          %v776 = vpop.xlane.xlu0 %775
          %v777 = vrcp.pop 256.0
          %v778 = vmul.f32 %v776, %v777
          %v779 = vsub.f32 %v770, %v778
          %v780 = vsub.f32 %v771, %v778
          %v781 = vmul.f32 %v779, %v779
          %v782 = vmul.f32 %v780, %v780
          %v783 = vadd.f32 %v781, %v782
          %784 = vadd.xlane.f32.xlu0 %v783
          %v785 = vpop.xlane.xlu0 %784
          %v786 = vmul.f32 %v785, %v777
          %v787 = vadd.f32 %v786, 1e-05
          %v788 = vrsqrt.pop %v787
          %v789 = vmul.f32 %v779, %v788
          %v790 = vmul.f32 %v780, %v788
          %v792 = vlaneseq
          %v793 = vshrl.u32 %v792, 7
          %v794 = vsub.s32 0, %v793
          %v795 = vrot.slane %v772, %v794
          %v796 = vlaneseq
          %v797 = vshrl.u32 %v796, 7
          %v798 = vsub.s32 1, %v797
          %v799 = vrot.slane %v772, %v798
          %v802 = vmul.f32 %v789, %v795
          %v803 = vmul.f32 %v790, %v799
          %v805 = vlaneseq
          %v806 = vshrl.u32 %v805, 7
          %v807 = vsub.s32 0, %v806
          %v808 = vrot.slane %v773, %v807
          %v809 = vlaneseq
          %v810 = vshrl.u32 %v809, 7
          %v811 = vsub.s32 1, %v810
          %v812 = vrot.slane %v773, %v811
          %v815 = vadd.f32 %v802, %v808
          %v816 = vadd.f32 %v803, %v812
          %v817 = vmul.f32 %v815, %v815
          %v818 = vmul.f32 %v816, %v816
          %v819 = vmul.f32 %v815, %v817
          %v820 = vmul.f32 %v816, %v818
          %v821 = vmul.f32 %v819, 0.044715
          %v822 = vmul.f32 %v820, 0.044715
          %v823 = vadd.f32 %v815, %v821
          %v824 = vadd.f32 %v816, %v822
          %v825 = vmul.f32 %v823, 0.7978846
          %v826 = vmul.f32 %v824, 0.7978846
          %v827 = vtanh.pop %v825
          %v828 = vtanh.pop %v826
          %v829 = vadd.f32 %v827, 1.0
          %v830 = vadd.f32 %v828, 1.0
          %v831 = vmul.f32 %v829, 0.5
          %v832 = vmul.f32 %v830, 0.5
          %v833 = vmul.f32 %v815, %v831
          %v834 = vmul.f32 %v816, %v832
          %v835 = vpack.c.bf16 %v833, %v833
          %v836 = vpack.c.bf16 %v834, %v834
          %v837 = vld [vmem:[%s581] sm:$0xf]
          %v838 = vld [vmem:[%s581 + $0x4] sm:$0xf]
          %v839 = vld [vmem:[%s581 + $0x8] sm:$0xf]
          %v840 = vld [vmem:[%s581 + $0xc] sm:$0xf]
          %v841 = vld [vmem:[%s581 + $0x10] sm:$0xf]
          %v842 = vld [vmem:[%s581 + $0x14] sm:$0xf]
          %v843 = vld [vmem:[%s581 + $0x18] sm:$0xf]
          %v844 = vld [vmem:[%s581 + $0x1c] sm:$0xf]
          %v845 = vld [vmem:[%s581 + $0x20] sm:$0xf]
          %v846 = vld [vmem:[%s581 + $0x24] sm:$0xf]
          %v847 = vld [vmem:[%s581 + $0x28] sm:$0xf]
          %v848 = vld [vmem:[%s581 + $0x2c] sm:$0xf]
          %v849 = vld [vmem:[%s581 + $0x30] sm:$0xf]
          %v850 = vld [vmem:[%s581 + $0x34] sm:$0xf]
          %v851 = vld [vmem:[%s581 + $0x38] sm:$0xf]
          %v852 = vld [vmem:[%s581 + $0x3c] sm:$0xf]
          %v853 = vld [vmem:[%s581 + $0x40] sm:$0xf]
          %v854 = vld [vmem:[%s581 + $0x44] sm:$0xf]
          %v855 = vld [vmem:[%s581 + $0x48] sm:$0xf]
          %v856 = vld [vmem:[%s581 + $0x4c] sm:$0xf]
          %v857 = vld [vmem:[%s581 + $0x50] sm:$0xf]
          %v858 = vld [vmem:[%s581 + $0x54] sm:$0xf]
          %v859 = vld [vmem:[%s581 + $0x58] sm:$0xf]
          %v860 = vld [vmem:[%s581 + $0x5c] sm:$0xf]
          %v861 = vld [vmem:[%s581 + $0x60] sm:$0xf]
          %v862 = vld [vmem:[%s581 + $0x64] sm:$0xf]
          %v863 = vld [vmem:[%s581 + $0x68] sm:$0xf]
          %v864 = vld [vmem:[%s581 + $0x6c] sm:$0xf]
          %v865 = vld [vmem:[%s581 + $0x70] sm:$0xf]
          %v866 = vld [vmem:[%s581 + $0x74] sm:$0xf]
          %v867 = vld [vmem:[%s581 + $0x78] sm:$0xf]
          %v868 = vld [vmem:[%s581 + $0x7c] sm:$0xf]
          %v869 = vld [vmem:[%s586] sm:$0x1]
          %v871 = vlaneseq
          %v872 = vshrl.u32 %v871, 7
          %v873 = vsub.s32 0, %v872
          %v874 = vrot.slane %v869, %v873
          %v908 = vunpack.c.l.b16 %v837
          %v909 = vunpack.c.l.b16 %v838
          %v910 = vunpack.c.l.b16 %v839
          %v911 = vunpack.c.l.b16 %v840
          %v912 = vunpack.c.l.b16 %v841
          %v913 = vunpack.c.l.b16 %v842
          %v914 = vunpack.c.l.b16 %v843
          %v915 = vunpack.c.l.b16 %v844
          %v916 = vunpack.c.l.b16 %v845
          %v917 = vunpack.c.l.b16 %v846
          %v918 = vunpack.c.l.b16 %v847
          %v919 = vunpack.c.l.b16 %v848
          %v920 = vunpack.c.l.b16 %v849
          %v921 = vunpack.c.l.b16 %v850
          %v922 = vunpack.c.l.b16 %v851
          %v923 = vunpack.c.l.b16 %v852
          %v924 = vunpack.c.l.b16 %v853
          %v925 = vunpack.c.l.b16 %v854
          %v926 = vunpack.c.l.b16 %v855
          %v927 = vunpack.c.l.b16 %v856
          %v928 = vunpack.c.l.b16 %v857
          %v929 = vunpack.c.l.b16 %v858
          %v930 = vunpack.c.l.b16 %v859
          %v931 = vunpack.c.l.b16 %v860
          %v932 = vunpack.c.l.b16 %v861
          %v933 = vunpack.c.l.b16 %v862
          %v934 = vunpack.c.l.b16 %v863
          %v935 = vunpack.c.l.b16 %v864
          %v936 = vunpack.c.l.b16 %v865
          %v937 = vunpack.c.l.b16 %v866
          %v938 = vunpack.c.l.b16 %v867
          %v939 = vunpack.c.l.b16 %v868
          %v940 = vpack.c.b16 %v909, %v908
          %v941 = vpack.c.b16 %v911, %v910
          %v942 = vpack.c.b16 %v913, %v912
          %v943 = vpack.c.b16 %v915, %v914
          %v944 = vpack.c.b16 %v917, %v916
          %v945 = vpack.c.b16 %v919, %v918
          %v946 = vpack.c.b16 %v921, %v920
          %v947 = vpack.c.b16 %v923, %v922
          %v948 = vpack.c.b16 %v925, %v924
          %v949 = vpack.c.b16 %v927, %v926
          %v950 = vpack.c.b16 %v929, %v928
          %v951 = vpack.c.b16 %v931, %v930
          %v952 = vpack.c.b16 %v933, %v932
          %v953 = vpack.c.b16 %v935, %v934
          %v954 = vpack.c.b16 %v937, %v936
          %v955 = vpack.c.b16 %v939, %v938
          %972 = vmatprep.subr.bf16.mxu0 0
          %973 = vmatpush1.bf16.msra.mxu0 %v947
          %974 = vmatprep.subr.bf16.mxu0 0
          %975 = vmatpush1.bf16.msra.mxu0 %v946
          %976 = vmatprep.subr.bf16.mxu0 0
          %977 = vmatpush1.bf16.msra.mxu0 %v945
          %978 = vmatprep.subr.bf16.mxu0 0
          %979 = vmatpush1.bf16.msra.mxu0 %v944
          %980 = vmatprep.subr.bf16.mxu0 0
          %981 = vmatpush1.bf16.msra.mxu0 %v943
          %982 = vmatprep.subr.bf16.mxu0 0
          %983 = vmatpush1.bf16.msra.mxu0 %v942
          %984 = vmatprep.subr.bf16.mxu0 0
          %985 = vmatpush1.bf16.msra.mxu0 %v941
          %986 = vmatprep.subr.bf16.mxu0 0
          %987 = vmatpush1.bf16.msra.mxu0 %v940
          %988 = vmatprep.subr.bf16.mxu0 0
          %989 = vmatpush2.bf16.msra.mxu0 %v955
          %990 = vmatprep.subr.bf16.mxu0 0
          %991 = vmatpush2.bf16.msra.mxu0 %v954
          %992 = vmatprep.subr.bf16.mxu0 0
          %993 = vmatpush2.bf16.msra.mxu0 %v953
          %994 = vmatprep.subr.bf16.mxu0 0
          %995 = vmatpush2.bf16.msra.mxu0 %v952
          %996 = vmatprep.subr.bf16.mxu0 0
          %997 = vmatpush2.bf16.msra.mxu0 %v951
          %998 = vmatprep.subr.bf16.mxu0 0
          %999 = vmatpush2.bf16.msra.mxu0 %v950
          %1000 = vmatprep.subr.bf16.mxu0 0
          %1001 = vmatpush2.bf16.msra.mxu0 %v949
          %1002 = vmatprep.subr.bf16.mxu0 0
          %1003 = vmatpush2.bf16.msra.mxu0 %v948
          %1004 = vmatprep.mubr.bf16.mxu0 %v836
          %1005 = vmatmul.mubr.bf16.gmra.mxu0 %v835
          %v1006 = vpop.f32.mrf.mxu0
          %v1007 = vadd.f32 %v874, %v1006
          %v1008 = vpop.f32.mrf.mxu0
          %v1009 = vpop.f32.mrf.mxu0
          %v1010 = vpop.f32.mrf.mxu0
          %1011 = vdwg.mxu0
          %v1012 = vmax.f32 %v1007, 0.0
          %v1013 = vpack.c.bf16 %v1012, %v1012
          %v1014 = vld [vmem:[%s593] sm:$0xff]
          %v1015 = vld [vmem:[%s593 + $0x8] sm:$0xff]
          %v1016 = vld [vmem:[%s593 + $0x10] sm:$0xff]
          %v1017 = vld [vmem:[%s593 + $0x18] sm:$0xff]
          %v1018 = vld [vmem:[%s593 + $0x20] sm:$0xff]
          %v1019 = vld [vmem:[%s593 + $0x28] sm:$0xff]
          %v1020 = vld [vmem:[%s593 + $0x30] sm:$0xff]
          %v1021 = vld [vmem:[%s593 + $0x38] sm:$0xff]
          %v1022 = vld [vmem:[%s593 + $0x40] sm:$0xff]
          %v1023 = vld [vmem:[%s593 + $0x48] sm:$0xff]
          %v1024 = vld [vmem:[%s593 + $0x50] sm:$0xff]
          %v1025 = vld [vmem:[%s593 + $0x58] sm:$0xff]
          %v1026 = vld [vmem:[%s593 + $0x60] sm:$0xff]
          %v1027 = vld [vmem:[%s593 + $0x68] sm:$0xff]
          %v1028 = vld [vmem:[%s593 + $0x70] sm:$0xff]
          %v1029 = vld [vmem:[%s593 + $0x78] sm:$0xff]
          %v1030 = vld [vmem:[%s599] sm:$0x3]
          %v1032 = vlaneseq
          %v1033 = vshrl.u32 %v1032, 7
          %v1034 = vsub.s32 0, %v1033
          %v1035 = vrot.slane %v1030, %v1034
          %v1036 = vlaneseq
          %v1037 = vshrl.u32 %v1036, 7
          %v1038 = vsub.s32 1, %v1037
          %v1039 = vrot.slane %v1030, %v1038
          %v1058 = vunpack.c.l.b16 %v1014
          %v1059 = vunpack.c.h.b16 %v1014
          %v1060 = vunpack.c.l.b16 %v1015
          %v1061 = vunpack.c.h.b16 %v1015
          %v1062 = vunpack.c.l.b16 %v1016
          %v1063 = vunpack.c.h.b16 %v1016
          %v1064 = vunpack.c.l.b16 %v1017
          %v1065 = vunpack.c.h.b16 %v1017
          %v1066 = vunpack.c.l.b16 %v1018
          %v1067 = vunpack.c.h.b16 %v1018
          %v1068 = vunpack.c.l.b16 %v1019
          %v1069 = vunpack.c.h.b16 %v1019
          %v1070 = vunpack.c.l.b16 %v1020
          %v1071 = vunpack.c.h.b16 %v1020
          %v1072 = vunpack.c.l.b16 %v1021
          %v1073 = vunpack.c.h.b16 %v1021
          %v1074 = vunpack.c.l.b16 %v1022
          %v1075 = vunpack.c.h.b16 %v1022
          %v1076 = vunpack.c.l.b16 %v1023
          %v1077 = vunpack.c.h.b16 %v1023
          %v1078 = vunpack.c.l.b16 %v1024
          %v1079 = vunpack.c.h.b16 %v1024
          %v1080 = vunpack.c.l.b16 %v1025
          %v1081 = vunpack.c.h.b16 %v1025
          %v1082 = vunpack.c.l.b16 %v1026
          %v1083 = vunpack.c.h.b16 %v1026
          %v1084 = vunpack.c.l.b16 %v1027
          %v1085 = vunpack.c.h.b16 %v1027
          %v1086 = vunpack.c.l.b16 %v1028
          %v1087 = vunpack.c.h.b16 %v1028
          %v1088 = vunpack.c.l.b16 %v1029
          %v1089 = vunpack.c.h.b16 %v1029
          %v1090 = vpack.c.b16 %v1060, %v1058
          %v1091 = vpack.c.b16 %v1061, %v1059
          %v1092 = vpack.c.b16 %v1064, %v1062
          %v1093 = vpack.c.b16 %v1065, %v1063
          %v1094 = vpack.c.b16 %v1068, %v1066
          %v1095 = vpack.c.b16 %v1069, %v1067
          %v1096 = vpack.c.b16 %v1072, %v1070
          %v1097 = vpack.c.b16 %v1073, %v1071
          %v1098 = vpack.c.b16 %v1076, %v1074
          %v1099 = vpack.c.b16 %v1077, %v1075
          %v1100 = vpack.c.b16 %v1080, %v1078
          %v1101 = vpack.c.b16 %v1081, %v1079
          %v1102 = vpack.c.b16 %v1084, %v1082
          %v1103 = vpack.c.b16 %v1085, %v1083
          %v1104 = vpack.c.b16 %v1088, %v1086
          %v1105 = vpack.c.b16 %v1089, %v1087
          %1122 = vmatprep.subr.bf16.mxu0 %v1105
          %1123 = vmatpush1.bf16.msra.mxu0 %v1104
          %1124 = vmatprep.subr.bf16.mxu0 %v1103
          %1125 = vmatpush1.bf16.msra.mxu0 %v1102
          %1126 = vmatprep.subr.bf16.mxu0 %v1101
          %1127 = vmatpush1.bf16.msra.mxu0 %v1100
          %1128 = vmatprep.subr.bf16.mxu0 %v1099
          %1129 = vmatpush1.bf16.msra.mxu0 %v1098
          %1130 = vmatprep.subr.bf16.mxu0 %v1097
          %1131 = vmatpush1.bf16.msra.mxu0 %v1096
          %1132 = vmatprep.subr.bf16.mxu0 %v1095
          %1133 = vmatpush1.bf16.msra.mxu0 %v1094
          %1134 = vmatprep.subr.bf16.mxu0 %v1093
          %1135 = vmatpush1.bf16.msra.mxu0 %v1092
          %1136 = vmatprep.subr.bf16.mxu0 %v1091
          %1137 = vmatpush1.bf16.msra.mxu0 %v1090
          %1138 = vmatprep.subr.bf16.mxu0 0
          %1139 = vmatpush2.bf16.msra.mxu0 0
          %1140 = vmatprep.subr.bf16.mxu0 0
          %1141 = vmatpush2.bf16.msra.mxu0 0
          %1142 = vmatprep.subr.bf16.mxu0 0
          %1143 = vmatpush2.bf16.msra.mxu0 0
          %1144 = vmatprep.subr.bf16.mxu0 0
          %1145 = vmatpush2.bf16.msra.mxu0 0
          %1146 = vmatprep.subr.bf16.mxu0 0
          %1147 = vmatpush2.bf16.msra.mxu0 0
          %1148 = vmatprep.subr.bf16.mxu0 0
          %1149 = vmatpush2.bf16.msra.mxu0 0
          %1150 = vmatprep.subr.bf16.mxu0 0
          %1151 = vmatpush2.bf16.msra.mxu0 0
          %1152 = vmatprep.subr.bf16.mxu0 0
          %1153 = vmatpush2.bf16.msra.mxu0 0
          %1154 = vmatprep.mubr.bf16.mxu0 0
          %1155 = vmatmul.mubr.bf16.gmra.mxu0 %v1013
          %v1156 = vpop.f32.mrf.mxu0
          %v1157 = vadd.f32 %v1035, %v1156
          %v1158 = vpop.f32.mrf.mxu0
          %v1159 = vadd.f32 %v1039, %v1158
          %v1160 = vpop.f32.mrf.mxu0
          %v1161 = vpop.f32.mrf.mxu0
          %1162 = vdwg.mxu0
          %v1163 = vadd.f32 %v833, %v1157
          %v1164 = vadd.f32 %v834, %v1159
          %v1165 = vpack.c.bf16 %v1163, %v1163
          %v1166 = vpack.c.bf16 %v1164, %v1164
          %v1169 = vunpack.c.l.b16 %v1165
          %v1170 = vunpack.c.l.b16 %v1166
          %v1171 = vpack.c.b16 %v1170, %v1169
          %1173 = vst [vmem:[%s532] sm:$0xff] %v1171
        $region64: #{fmri_encoder_cross_forward.12} parent=55 // pred_fallthru
          _
        %s1174 = sand.u32 %s315, 1
        %s1175 = scalar_lea.sflag [#allocation6], %s1174
        %s1176 = sand.u32 %s315, 1
        %s1177 = smul.addr %s1176, 8
        %s1178 = scalar_lea.vmem [#allocation5], %s1177
        // Predicated region
        $region65: #{fmri_encoder_cross_forward.12} parent=55 // pred_check
          %p1179 = pneg %p325
        $region66: #{fmri_encoder_cross_forward.12} parent=55 // pred_check_branch
          %1181 = sbr.rel (%p1179) target = $region68
        $region67: #{fmri_encoder_cross_forward.12} parent=55 // pred_region
          %s1183 = ssub.s32 128, 128
          %1184 = vsyncadd %s1175, %s1183
          %s1185 = smul.addr %s36, 2
          %s1186 = smul.addr %s35, 2
          %s1187 = sadd.s32 %s1185, %s1186
          %s1188 = smul.addr %s1187, 64
          %s1189 = scalar_lea.hbm %s10, %s1188
          %s1191 = sshll.u32 %s1178, 4
          %s1192 = int_to_ptr.vmem [resolvable:$true] %s1191
          %1194 = dma.vmem_to_hbm [thread:$0]  %s1192, 128, %s1189, %s1175
        $region68: #{fmri_encoder_cross_forward.12} parent=55 // pred_fallthru
          _
      $region56: #{fmri_encoder_cross_forward.12} parent=5 // pred_fallthru
        _
      %p1195 = scmp.le.s32.totalorder 2, %s25
      // Predicated region
      $region69: #{fmri_encoder_cross_forward.12} parent=5 // pred_check
        %p1196 = pneg %p1195
      $region70: #{fmri_encoder_cross_forward.12} parent=5 // pred_check_branch
        %1198 = sbr.rel (%p1196) target = $region72
      $region71: #{fmri_encoder_cross_forward.12} parent=5 // pred_region
        %s1199 = ssub.s32 %s25, 2
        // Predicated region
        $region73: #{fmri_encoder_cross_forward.12} parent=71 // pred_check
          %p1200 = pneg %p331
        $region74: #{fmri_encoder_cross_forward.12} parent=71 // pred_check_branch
          %1202 = sbr.rel (%p1200) target = $region76
        $region75: #{fmri_encoder_cross_forward.12} parent=71 // pred_region
          %s1203 = sand.u32 %s316, 1
          %s1204 = scalar_lea.sflag [#allocation6], %s1203
          %s1205 = sand.u32 %s316, 1
          %s1206 = smul.addr %s1205, 8
          %s1207 = scalar_lea.vmem [#allocation5], %s1206
          %1208 = dma.done %s1204, 128
        $region76: #{fmri_encoder_cross_forward.12} parent=71 // pred_fallthru
          _
      $region72: #{fmri_encoder_cross_forward.12} parent=5 // pred_fallthru
        _
    $region6: #{fmri_encoder_cross_forward.12} parent=1 // loop_footer
      %s29 = sadd.s32 1, %s25
    $region7: #{fmri_encoder_cross_forward.12} parent=1 // loop_footer_branch
      %24 = sbr.rel target = $region3
    $region8: #{fmri_encoder_cross_forward.12} parent=1 // loop_exit
      _
    %1209 = vsyncpa [#allocation6], 1
    %s1210 = scalar_lea.sflag [#allocation6], 1
    %1211 = vsyncpa %s1210, 1

// kernel: fmri_encoder_cross_forward.19
$region0: #{fmri_encoder_cross_forward.19}
  #allocation0 [shape = 'u32[]', space=smem, size = 0x4, offset = 0x4, fixed_abs, tag = 'smem constant byte address 0x4 - core index']
  #allocation1 [shape = 'u32[144,128]{1,0:T(1,128)}', space=vmem, size = 0x12000, scoped, tag = 'internal scratch']
  #allocation2 [shape = 'f32[16,256]{1,0:T(8,128)}', space=vmem, size = 0x4000, scoped, tag = 'scratch operand']
  %s0 = inlined_call_operand.vmem [shape: bf16[16,256], index: 0, kind: input, shape index: {}]
  %s1 = inlined_call_operand.vmem [shape: bf16[256,256], index: 1, kind: input, shape index: {}]
  %s2 = inlined_call_operand.vmem [shape: f32[1,256], index: 2, kind: input, shape index: {}]
  %s3 = inlined_call_operand.hbm [shape: f32[16,128], index: 3, kind: output, shape index: {0}]
  %s4 = inlined_call_operand.hbm [shape: f32[16,128], index: 4, kind: output, shape index: {1}]
  %5 = xla_tuple %s3, %s4
  %s6 = sld [smem:[#allocation0]]
  $region102: #{fmri_encoder_cross_forward.19} parent=0
    _
  %s8 = ssub.s32 1, %s6
  %s9 = scalar_select 0, %s8, %s6
  $region1: #{fmri_encoder_cross_forward.19} parent=0
    #allocation3 [shape = 'u8[8192]{0}', space=vmem, size = 0x2000, scoped, tag = 'input window, operand 0']
    #allocation4 [shape = 'u8[8192]{0}', space=vmem, size = 0x2000, scoped, tag = 'output window, operand 0, single buffered']
    #allocation5 [shape = 's32[2]{0}', space=sflag, size = 0x8, scoped, tag = 'scoped memory for fmri_encoder_cross_forward.19']
    #allocation6 [shape = 'u8[8192]{0}', space=vmem, size = 0x2000, scoped, tag = 'output window, operand 1, single buffered']
    #allocation7 [shape = 's32[1]{0}', space=sflag, size = 0x4, scoped, tag = 'scoped memory for fmri_encoder_cross_forward.19']
    %10 = vsyncpa [#allocation5], 0
    %11 = vsyncpa [#allocation7], 0
    loop: start=0, step=1, limit=4
    $region2: #{fmri_encoder_cross_forward.19} parent=1 // loop_pre_header
      _
    $region3: #{fmri_encoder_cross_forward.19} parent=1 // loop_header
      %s13 = sphi 0, %s17
      %p14 = scmp.ge.s32.totalorder %s13, 4
      %s20 = sphi 0, %s32
      %s21 = sphi 0, %s28
      %s22 = sphi 0, %s20
      %s23 = sphi 0, %s21
      %s24 = sphi 0, %s22
      %s25 = sphi 0, %s23
      %s37 = sphi 0, %s39
      %s40 = sphi 0, %s37
      %s41 = sphi 0, %s40
      %s57 = sphi 0, %s41
      %s63 = sphi 0, %s65
      %s66 = sphi 0, %s63
      %s67 = sphi 0, %s66
      %s83 = sphi 0, %s67
      %s87 = sphi 0, %s87
      %s89 = sphi 0, %s87
      %s90 = sphi 0, %s89
      %s104 = sphi 0, %s90
      %s110 = sphi 0, %s112
      %s113 = sphi 0, %s110
      %s114 = sphi 0, %s113
      %s130 = sphi 0, %s114
      %s136 = sphi 0, %s138
      %s139 = sphi 0, %s136
      %s140 = sphi 0, %s139
      %s156 = sphi 0, %s140
    $region4: #{fmri_encoder_cross_forward.19} parent=1 // loop_header_branch
      %16 = sbr.rel (%p14) target = $region8
    $region5: #{fmri_encoder_cross_forward.19} parent=1 // loop_body
      %s18 = ssub.s32 %s13, 1
      %s19 = ssub.s32 %s13, 2
      %s26 = sadd.s32 1, %s21
      %p27 = scmp.ge.s32.totalorder %s26, 2
      %s28 = scalar_select %p27, 0, %s26
      %s29 = sadd.s32 1, %s20
      %s30 = scalar_select %p27, %s29, %s20
      %p31 = scmp.ge.s32.totalorder %s30, 1
      %s32 = scalar_select %p31, 0, %s30
      %s33 = ssub.s32 %s20, %s32
      %s34 = ssub.s32 %s21, %s28
      %s35 = sor.u32 %s33, %s34
      %p36 = scmp.eq.s32.totalorder %s35, 0
      %s38 = sadd.s32 %s37, 1
      %s39 = scalar_select %p36, %s37, %s38
      %p42 = pneg %p36
      %p43 = scmp.eq.s32.totalorder %s13, 1
      %p44 = por %p42, %p43
      %p45 = scmp.ne.s32.totalorder %s37, %s40
      %p46 = scmp.eq.s32.totalorder %s13, 0
      %p47 = por %p45, %p46
      %p48 = scmp.ne.s32.totalorder %s37, %s40
      %p49 = scmp.eq.s32.totalorder %s18, 1
      %p50 = por %p48, %p49
      %p51 = scmp.ne.s32.totalorder %s40, %s41
      %p52 = scmp.eq.s32.totalorder %s18, 0
      %p53 = por %p51, %p52
      %p54 = scmp.ne.s32.totalorder %s40, %s41
      %p55 = scmp.eq.s32.totalorder %s19, 1
      %p56 = por %p54, %p55
      %p58 = scmp.ne.s32.totalorder %s41, %s57
      %p59 = scmp.eq.s32.totalorder %s19, 0
      %p60 = por %p58, %p59
      %s61 = ssub.s32 %s21, %s28
      %p62 = scmp.eq.s32.totalorder %s61, 0
      %s64 = sadd.s32 %s63, 1
      %s65 = scalar_select %p62, %s63, %s64
      %p68 = pneg %p62
      %p69 = scmp.eq.s32.totalorder %s13, 1
      %p70 = por %p68, %p69
      %p71 = scmp.ne.s32.totalorder %s63, %s66
      %p72 = scmp.eq.s32.totalorder %s13, 0
      %p73 = por %p71, %p72
      %p74 = scmp.ne.s32.totalorder %s63, %s66
      %p75 = scmp.eq.s32.totalorder %s18, 1
      %p76 = por %p74, %p75
      %p77 = scmp.ne.s32.totalorder %s66, %s67
      %p78 = scmp.eq.s32.totalorder %s18, 0
      %p79 = por %p77, %p78
      %p80 = scmp.ne.s32.totalorder %s66, %s67
      %p81 = scmp.eq.s32.totalorder %s19, 1
      %p82 = por %p80, %p81
      %p84 = scmp.ne.s32.totalorder %s67, %s83
      %p85 = scmp.eq.s32.totalorder %s19, 0
      %p86 = por %p84, %p85
      %s88 = sadd.s32 %s87, 1
      %p91 = scmp.eq.s32.totalorder %s13, 1
      %p92 = scmp.ne.s32.totalorder %s87, %s89
      %p93 = scmp.eq.s32.totalorder %s13, 0
      %p94 = por %p92, %p93
      %p95 = scmp.ne.s32.totalorder %s87, %s89
      %p96 = scmp.eq.s32.totalorder %s18, 1
      %p97 = por %p95, %p96
      %p98 = scmp.ne.s32.totalorder %s89, %s90
      %p99 = scmp.eq.s32.totalorder %s18, 0
      %p100 = por %p98, %p99
      %p101 = scmp.ne.s32.totalorder %s89, %s90
      %p102 = scmp.eq.s32.totalorder %s19, 1
      %p103 = por %p101, %p102
      %p105 = scmp.ne.s32.totalorder %s90, %s104
      %p106 = scmp.eq.s32.totalorder %s19, 0
      %p107 = por %p105, %p106
      %s108 = ssub.s32 %s20, %s32
      %p109 = scmp.eq.s32.totalorder %s108, 0
      %s111 = sadd.s32 %s110, 1
      %s112 = scalar_select %p109, %s110, %s111
      %p115 = pneg %p109
      %p116 = scmp.eq.s32.totalorder %s13, 1
      %p117 = por %p115, %p116
      %p118 = scmp.ne.s32.totalorder %s110, %s113
      %p119 = scmp.eq.s32.totalorder %s13, 0
      %p120 = por %p118, %p119
      %p121 = scmp.ne.s32.totalorder %s110, %s113
      %p122 = scmp.eq.s32.totalorder %s18, 1
      %p123 = por %p121, %p122
      %p124 = scmp.ne.s32.totalorder %s113, %s114
      %p125 = scmp.eq.s32.totalorder %s18, 0
      %p126 = por %p124, %p125
      %p127 = scmp.ne.s32.totalorder %s113, %s114
      %p128 = scmp.eq.s32.totalorder %s19, 1
      %p129 = por %p127, %p128
      %p131 = scmp.ne.s32.totalorder %s114, %s130
      %p132 = scmp.eq.s32.totalorder %s19, 0
      %p133 = por %p131, %p132
      %s134 = ssub.s32 %s20, %s32
      %p135 = scmp.eq.s32.totalorder %s134, 0
      %s137 = sadd.s32 %s136, 1
      %s138 = scalar_select %p135, %s136, %s137
      %p141 = pneg %p135
      %p142 = scmp.eq.s32.totalorder %s13, 1
      %p143 = por %p141, %p142
      %p144 = scmp.ne.s32.totalorder %s136, %s139
      %p145 = scmp.eq.s32.totalorder %s13, 0
      %p146 = por %p144, %p145
      %p147 = scmp.ne.s32.totalorder %s136, %s139
      %p148 = scmp.eq.s32.totalorder %s18, 1
      %p149 = por %p147, %p148
      %p150 = scmp.ne.s32.totalorder %s139, %s140
      %p151 = scmp.eq.s32.totalorder %s18, 0
      %p152 = por %p150, %p151
      %p153 = scmp.ne.s32.totalorder %s139, %s140
      %p154 = scmp.eq.s32.totalorder %s19, 1
      %p155 = por %p153, %p154
      %p157 = scmp.ne.s32.totalorder %s140, %s156
      %p158 = scmp.eq.s32.totalorder %s19, 0
      %p159 = por %p157, %p158
      %p160 = scmp.le.s32.totalorder 1, %s13
      %p161 = scmp.lt.s32.totalorder %s13, 3
      %p162 = pnand %p160, %p161
      %p163 = pneg %p162
      // Predicated region
      $region9: #{fmri_encoder_cross_forward.19} parent=5 // pred_check
        _
      $region10: #{fmri_encoder_cross_forward.19} parent=5 // pred_check_branch
        %165 = sbr.rel (%p162) target = $region12
      $region11: #{fmri_encoder_cross_forward.19} parent=5 // pred_region
        %s166 = ssub.s32 %s13, 1
        // Predicated region
        $region13: #{fmri_encoder_cross_forward.19} parent=11 // pred_check
          %p167 = pneg %p100
        $region14: #{fmri_encoder_cross_forward.19} parent=11 // pred_check_branch
          %169 = sbr.rel (%p167) target = $region16
        $region15: #{fmri_encoder_cross_forward.19} parent=11 // pred_region
          _
        $region16: #{fmri_encoder_cross_forward.19} parent=11 // pred_fallthru
          _
      $region12: #{fmri_encoder_cross_forward.19} parent=5 // pred_fallthru
        _
      %p170 = scmp.lt.s32.totalorder %s13, 2
      // Predicated region
      $region17: #{fmri_encoder_cross_forward.19} parent=5 // pred_check
        %p171 = pneg %p170
      $region18: #{fmri_encoder_cross_forward.19} parent=5 // pred_check_branch
        %173 = sbr.rel (%p171) target = $region20
      $region19: #{fmri_encoder_cross_forward.19} parent=5 // pred_region
        // Predicated region
        $region21: #{fmri_encoder_cross_forward.19} parent=19 // pred_check
          %p174 = pneg %p47
        $region22: #{fmri_encoder_cross_forward.19} parent=19 // pred_check_branch
          %176 = sbr.rel (%p174) target = $region24
        $region23: #{fmri_encoder_cross_forward.19} parent=19 // pred_region
          %s177 = sand.u32 %s37, 1
          %s178 = sand.u32 %s37, 1
          %s179 = smul.addr %s178, 8
          %s180 = scalar_lea.vmem [#allocation3], %s179
          %s181 = smul.u32 2, %s20
          %s182 = smul.addr %s181, 2
          %s183 = sadd.s32 %s21, %s182
          %s184 = smul.addr %s183, 4
          %s185 = scalar_lea.vmem %s0, %s184
          // Predicated region
          $region25: #{fmri_encoder_cross_forward.19} parent=23 // pred_check
            _
          $region26: #{fmri_encoder_cross_forward.19} parent=23 // pred_check_branch
            %187 = sbr.rel (0) target = $region28
          $region27: #{fmri_encoder_cross_forward.19} parent=23 // pred_region
            // Predicated region
            $region29: #{fmri_encoder_cross_forward.19} parent=27 // pred_check
              _
            $region30: #{fmri_encoder_cross_forward.19} parent=27 // pred_check_branch
              %189 = sbr.rel target = $region32
            $region31: #{fmri_encoder_cross_forward.19} parent=27 // pred_region
              // Predicated region
              $region44: #{fmri_encoder_cross_forward.19} parent=31 // pred_check
                _
              $region45: #{fmri_encoder_cross_forward.19} parent=31 // pred_check_branch
                %207 = sbr.rel (0) target = $region47
              $region46: #{fmri_encoder_cross_forward.19} parent=31 // pred_region
                loop: start=0, step=1, limit=1
                $region48: #{fmri_encoder_cross_forward.19} parent=46 // loop_pre_header
                  _
                $region49: #{fmri_encoder_cross_forward.19} parent=46 // loop_header
                  %s209 = sphi 0, %s213
                  %p210 = scmp.ge.s32.totalorder %s209, 1
                  %s214 = sphi %s185, %s185
                  %s215 = sphi %s180, %s180
                $region50: #{fmri_encoder_cross_forward.19} parent=46 // loop_header_branch
                  %212 = sbr.rel (%p210) target = $region54
                $region51: #{fmri_encoder_cross_forward.19} parent=46 // loop_body
                  _
                $region52: #{fmri_encoder_cross_forward.19} parent=46 // loop_footer
                  %s213 = sadd.s32 1, %s209
                $region53: #{fmri_encoder_cross_forward.19} parent=46 // loop_footer_branch
                  %208 = sbr.rel target = $region49
                $region54: #{fmri_encoder_cross_forward.19} parent=46 // loop_exit
                  _
                %s217 = ssub.s32 16, 1
                loop: start=0, step=1, limit=1
                $region55: #{fmri_encoder_cross_forward.19} parent=46 // loop_pre_header
                  _
                $region56: #{fmri_encoder_cross_forward.19} parent=46 // loop_header
                  %s219 = sphi 0, %s223
                  %p220 = scmp.ge.s32.totalorder %s219, 1
                  %s224 = sphi %s185, %s185
                  %s225 = sphi %s180, %s180
                $region57: #{fmri_encoder_cross_forward.19} parent=46 // loop_header_branch
                  %222 = sbr.rel (%p220) target = $region61
                $region58: #{fmri_encoder_cross_forward.19} parent=46 // loop_body
                  %v226 = vld [vmem:[%s224] sm:%s217]
                  %227 = vst [vmem:[%s225] sm:%s217] %v226
                  %v228 = vld [vmem:[%s224 + $0x8] sm:%s217]
                  %229 = vst [vmem:[%s225 + $0x4] sm:%s217] %v228
                $region59: #{fmri_encoder_cross_forward.19} parent=46 // loop_footer
                  %s223 = sadd.s32 1, %s219
                $region60: #{fmri_encoder_cross_forward.19} parent=46 // loop_footer_branch
                  %218 = sbr.rel target = $region56
                $region61: #{fmri_encoder_cross_forward.19} parent=46 // loop_exit
                  _
              $region47: #{fmri_encoder_cross_forward.19} parent=31 // pred_fallthru
                _
            $region32: #{fmri_encoder_cross_forward.19} parent=27 // pred_fallthru
              _
            // Predicated region
            $region33: #{fmri_encoder_cross_forward.19} parent=27 // pred_check
              _
            $region34: #{fmri_encoder_cross_forward.19} parent=27 // pred_check_branch
              %191 = sbr.rel (0) target = $region36
            $region35: #{fmri_encoder_cross_forward.19} parent=27 // pred_region
              %s193 = ssub.s32 16, 1
              loop: start=0, step=1, limit=1
              $region37: #{fmri_encoder_cross_forward.19} parent=35 // loop_pre_header
                _
              $region38: #{fmri_encoder_cross_forward.19} parent=35 // loop_header
                %s195 = sphi 0, %s199
                %p196 = scmp.ge.s32.totalorder %s195, 1
                %s200 = sphi %s185, %s185
                %s201 = sphi %s180, %s180
              $region39: #{fmri_encoder_cross_forward.19} parent=35 // loop_header_branch
                %198 = sbr.rel (%p196) target = $region43
              $region40: #{fmri_encoder_cross_forward.19} parent=35 // loop_body
                %v202 = vld [vmem:[%s200] sm:%s193]
                %203 = vst [vmem:[%s201] sm:%s193] %v202
                %v204 = vld [vmem:[%s200 + $0x8] sm:%s193]
                %205 = vst [vmem:[%s201 + $0x4] sm:%s193] %v204
              $region41: #{fmri_encoder_cross_forward.19} parent=35 // loop_footer
                %s199 = sadd.s32 1, %s195
              $region42: #{fmri_encoder_cross_forward.19} parent=35 // loop_footer_branch
                %194 = sbr.rel target = $region38
              $region43: #{fmri_encoder_cross_forward.19} parent=35 // loop_exit
                _
            $region36: #{fmri_encoder_cross_forward.19} parent=27 // pred_fallthru
              _
          $region28: #{fmri_encoder_cross_forward.19} parent=23 // pred_fallthru
            _
          %230 = vnop
        $region24: #{fmri_encoder_cross_forward.19} parent=19 // pred_fallthru
          _
        // Predicated region
        $region62: #{fmri_encoder_cross_forward.19} parent=19 // pred_check
          %p231 = pneg %p73
        $region63: #{fmri_encoder_cross_forward.19} parent=19 // pred_check_branch
          %233 = sbr.rel (%p231) target = $region65
        $region64: #{fmri_encoder_cross_forward.19} parent=19 // pred_region
          %s234 = smul.u32 16, %s21
          %p235 = scmp.lt.s32.totalorder %s234, 31
          %s236 = scalar_select %p235, %s234, 31
          %s237 = smul.addr %s236, 2
          %s238 = smul.addr %s237, 4
          %s239 = scalar_lea.vmem %s1, %s238
          %s240 = smul.u32 16, %s21
        $region65: #{fmri_encoder_cross_forward.19} parent=19 // pred_fallthru
          _
      $region20: #{fmri_encoder_cross_forward.19} parent=5 // pred_fallthru
        _
      %p241 = scmp.le.s32.totalorder 1, %s13
      %p242 = scmp.lt.s32.totalorder %s13, 3
      %p243 = pnand %p241, %p242
      %p244 = pneg %p243
      // Predicated region
      $region66: #{fmri_encoder_cross_forward.19} parent=5 // pred_check
        _
      $region67: #{fmri_encoder_cross_forward.19} parent=5 // pred_check_branch
        %246 = sbr.rel (%p243) target = $region69
      $region68: #{fmri_encoder_cross_forward.19} parent=5 // pred_region
        %s247 = ssub.s32 %s13, 1
        %s248 = sand.u32 %s40, 1
        %s249 = sand.u32 %s40, 1
        %s250 = smul.addr %s249, 8
        %s251 = scalar_lea.vmem [#allocation3], %s250
        // Predicated region
        $region70: #{fmri_encoder_cross_forward.19} parent=68 // pred_check
          %p252 = pneg %p53
        $region71: #{fmri_encoder_cross_forward.19} parent=68 // pred_check_branch
          %254 = sbr.rel (%p252) target = $region73
        $region72: #{fmri_encoder_cross_forward.19} parent=68 // pred_region
          _
        $region73: #{fmri_encoder_cross_forward.19} parent=68 // pred_fallthru
          _
        %s255 = sand.u32 %s40, 1
        %s256 = sand.u32 %s40, 1
        %s257 = smul.addr %s256, 8
        %s258 = scalar_lea.vmem [#allocation3], %s257
        %p259 = pneg %p53
        %p260 = pneg %p50
        %s261 = smul.u32 16, %s23
        %p262 = scmp.lt.s32.totalorder %s261, 31
        %s263 = scalar_select %p262, %s261, 31
        %s264 = smul.addr %s263, 2
        %s265 = smul.addr %s264, 4
        %s266 = scalar_lea.vmem %s1, %s265
        %p267 = pneg %p79
        %p268 = pneg %p76
        %p269 = pneg %p100
        %p270 = pneg %p97
        %p271 = pneg %p126
        %p272 = pneg %p123
        %p273 = pneg %p152
        %p274 = pneg %p149
        %s275 = smul.u32 2, %s22
        %s276 = smul.u32 16, %s23
        %p277 = scmp.lt.s32.totalorder %s276, 31
        %s278 = scalar_select %p277, %s276, 31
        %s279 = smul.addr %s278, 2
        %s280 = smul.addr %s279, 4
        %s281 = scalar_lea.vmem %s1, %s280
        %s282 = smul.u32 16, %s23
        %s283 = smul.u32 2, %s22
        %s284 = smul.u32 2, %s22
        %p286 = scmp.eq.s32.totalorder %s23, 0
        // Predicated region
        $region74: #{fmri_encoder_cross_forward.19} parent=68 // pred_check
          %p287 = pneg %p286
        $region75: #{fmri_encoder_cross_forward.19} parent=68 // pred_check_branch
          %289 = sbr.rel (%p287) target = $region77
        $region76: #{fmri_encoder_cross_forward.19} parent=68 // pred_region
          %290 = vst [vmem:[#allocation2] sm:$0xff] 0.0
          %291 = vst [vmem:[#allocation2 + $0x8] sm:$0xff] 0.0
          %292 = vst [vmem:[#allocation2 + $0x10] sm:$0xff] 0.0
          %293 = vst [vmem:[#allocation2 + $0x18] sm:$0xff] 0.0
        $region77: #{fmri_encoder_cross_forward.19} parent=68 // pred_fallthru
          _
        %v294 = vld [vmem:[#allocation2] sm:$0xff]
        %v295 = vld [vmem:[#allocation2 + $0x8] sm:$0xff]
        %v296 = vld [vmem:[#allocation2 + $0x10] sm:$0xff]
        %v297 = vld [vmem:[#allocation2 + $0x18] sm:$0xff]
        %v298 = vld [vmem:[%s251] sm:$0xf]
        %v299 = vld [vmem:[%s251 + $0x4] sm:$0xf]
        %v300 = vld [vmem:[%s281] sm:$0xff]
        %v301 = vld [vmem:[%s281 + $0x8] sm:$0xff]
        %v302 = vld [vmem:[%s281 + $0x10] sm:$0xff]
        %v303 = vld [vmem:[%s281 + $0x18] sm:$0xff]
        %v304 = vld [vmem:[%s281 + $0x20] sm:$0xff]
        %v305 = vld [vmem:[%s281 + $0x28] sm:$0xff]
        %v306 = vld [vmem:[%s281 + $0x30] sm:$0xff]
        %v307 = vld [vmem:[%s281 + $0x38] sm:$0xff]
        %v308 = vld [vmem:[%s281 + $0x40] sm:$0xff]
        %v309 = vld [vmem:[%s281 + $0x48] sm:$0xff]
        %v310 = vld [vmem:[%s281 + $0x50] sm:$0xff]
        %v311 = vld [vmem:[%s281 + $0x58] sm:$0xff]
        %v312 = vld [vmem:[%s281 + $0x60] sm:$0xff]
        %v313 = vld [vmem:[%s281 + $0x68] sm:$0xff]
        %v314 = vld [vmem:[%s281 + $0x70] sm:$0xff]
        %v315 = vld [vmem:[%s281 + $0x78] sm:$0xff]
        %v318 = vunpack.c.l.b16 %v298
        %v319 = vunpack.c.l.b16 %v299
        %v320 = vpack.c.b16 %v319, %v318
        %v338 = vunpack.c.l.b16 %v300
        %v339 = vunpack.c.h.b16 %v300
        %v340 = vunpack.c.l.b16 %v301
        %v341 = vunpack.c.h.b16 %v301
        %v342 = vunpack.c.l.b16 %v302
        %v343 = vunpack.c.h.b16 %v302
        %v344 = vunpack.c.l.b16 %v303
        %v345 = vunpack.c.h.b16 %v303
        %v346 = vunpack.c.l.b16 %v304
        %v347 = vunpack.c.h.b16 %v304
        %v348 = vunpack.c.l.b16 %v305
        %v349 = vunpack.c.h.b16 %v305
        %v350 = vunpack.c.l.b16 %v306
        %v351 = vunpack.c.h.b16 %v306
        %v352 = vunpack.c.l.b16 %v307
        %v353 = vunpack.c.h.b16 %v307
        %v354 = vunpack.c.l.b16 %v308
        %v355 = vunpack.c.h.b16 %v308
        %v356 = vunpack.c.l.b16 %v309
        %v357 = vunpack.c.h.b16 %v309
        %v358 = vunpack.c.l.b16 %v310
        %v359 = vunpack.c.h.b16 %v310
        %v360 = vunpack.c.l.b16 %v311
        %v361 = vunpack.c.h.b16 %v311
        %v362 = vunpack.c.l.b16 %v312
        %v363 = vunpack.c.h.b16 %v312
        %v364 = vunpack.c.l.b16 %v313
        %v365 = vunpack.c.h.b16 %v313
        %v366 = vunpack.c.l.b16 %v314
        %v367 = vunpack.c.h.b16 %v314
        %v368 = vunpack.c.l.b16 %v315
        %v369 = vunpack.c.h.b16 %v315
        %v370 = vpack.c.b16 %v340, %v338
        %v371 = vpack.c.b16 %v341, %v339
        %v372 = vpack.c.b16 %v344, %v342
        %v373 = vpack.c.b16 %v345, %v343
        %v374 = vpack.c.b16 %v348, %v346
        %v375 = vpack.c.b16 %v349, %v347
        %v376 = vpack.c.b16 %v352, %v350
        %v377 = vpack.c.b16 %v353, %v351
        %v378 = vpack.c.b16 %v356, %v354
        %v379 = vpack.c.b16 %v357, %v355
        %v380 = vpack.c.b16 %v360, %v358
        %v381 = vpack.c.b16 %v361, %v359
        %v382 = vpack.c.b16 %v364, %v362
        %v383 = vpack.c.b16 %v365, %v363
        %v384 = vpack.c.b16 %v368, %v366
        %v385 = vpack.c.b16 %v369, %v367
        %402 = vmatprep.subr.bf16.mxu0 %v385
        %403 = vmatpush1.bf16.msra.mxu0 %v384
        %404 = vmatprep.subr.bf16.mxu0 %v383
        %405 = vmatpush1.bf16.msra.mxu0 %v382
        %406 = vmatprep.subr.bf16.mxu0 %v381
        %407 = vmatpush1.bf16.msra.mxu0 %v380
        %408 = vmatprep.subr.bf16.mxu0 %v379
        %409 = vmatpush1.bf16.msra.mxu0 %v378
        %410 = vmatprep.subr.bf16.mxu0 %v377
        %411 = vmatpush1.bf16.msra.mxu0 %v376
        %412 = vmatprep.subr.bf16.mxu0 %v375
        %413 = vmatpush1.bf16.msra.mxu0 %v374
        %414 = vmatprep.subr.bf16.mxu0 %v373
        %415 = vmatpush1.bf16.msra.mxu0 %v372
        %416 = vmatprep.subr.bf16.mxu0 %v371
        %417 = vmatpush1.bf16.msra.mxu0 %v370
        %418 = vmatprep.subr.bf16.mxu0 0
        %419 = vmatpush2.bf16.msra.mxu0 0
        %420 = vmatprep.subr.bf16.mxu0 0
        %421 = vmatpush2.bf16.msra.mxu0 0
        %422 = vmatprep.subr.bf16.mxu0 0
        %423 = vmatpush2.bf16.msra.mxu0 0
        %424 = vmatprep.subr.bf16.mxu0 0
        %425 = vmatpush2.bf16.msra.mxu0 0
        %426 = vmatprep.subr.bf16.mxu0 0
        %427 = vmatpush2.bf16.msra.mxu0 0
        %428 = vmatprep.subr.bf16.mxu0 0
        %429 = vmatpush2.bf16.msra.mxu0 0
        %430 = vmatprep.subr.bf16.mxu0 0
        %431 = vmatpush2.bf16.msra.mxu0 0
        %432 = vmatprep.subr.bf16.mxu0 0
        %433 = vmatpush2.bf16.msra.mxu0 0
        %434 = vmatprep.mubr.bf16.mxu0 0
        %435 = vmatmul.mubr.bf16.gmra.mxu0 %v320
        %v436 = vpop.f32.mrf.mxu0
        %v437 = vadd.f32 0.0, %v436
        %v438 = vpop.f32.mrf.mxu0
        %v439 = vadd.f32 0.0, %v438
        %v440 = vpop.f32.mrf.mxu0
        %v441 = vadd.f32 0.0, %v440
        %v442 = vpop.f32.mrf.mxu0
        %v443 = vadd.f32 0.0, %v442
        %444 = vdwg.mxu0
        %v445 = vadd.f32 %v294, %v437
        %v446 = vadd.f32 %v295, %v439
        %v447 = vadd.f32 %v296, %v441
        %v448 = vadd.f32 %v297, %v443
        %449 = vst [vmem:[#allocation2] sm:$0xff] %v445
        %450 = vst [vmem:[#allocation2 + $0x8] sm:$0xff] %v446
        %451 = vst [vmem:[#allocation2 + $0x10] sm:$0xff] %v447
        %452 = vst [vmem:[#allocation2 + $0x18] sm:$0xff] %v448
        %p453 = scmp.eq.s32.totalorder %s23, 1
        // Predicated region
        $region78: #{fmri_encoder_cross_forward.19} parent=68 // pred_check
          %p454 = pneg %p453
        $region79: #{fmri_encoder_cross_forward.19} parent=68 // pred_check_branch
          %456 = sbr.rel (%p454) target = $region81
        $region80: #{fmri_encoder_cross_forward.19} parent=68 // pred_region
          %v457 = vld [vmem:[#allocation2] sm:$0xff]
          %v458 = vld [vmem:[#allocation2 + $0x8] sm:$0xff]
          %v459 = vld [vmem:[#allocation2 + $0x10] sm:$0xff]
          %v460 = vld [vmem:[#allocation2 + $0x18] sm:$0xff]
          %v461 = vld [vmem:[%s2] sm:$0x3]
          %v463 = vlaneseq
          %v464 = vshrl.u32 %v463, 7
          %v465 = vsub.s32 0, %v464
          %v466 = vrot.slane %v461, %v465
          %v467 = vlaneseq
          %v468 = vshrl.u32 %v467, 7
          %v469 = vsub.s32 1, %v468
          %v470 = vrot.slane %v461, %v469
          %v473 = vadd.f32 %v457, %v466
          %v474 = vadd.f32 %v458, %v470
          %v475 = vadd.f32 %v459, %v466
          %v476 = vadd.f32 %v460, %v470
          %477 = vst [vmem:[#allocation4] sm:$0xff] %v473
          %478 = vst [vmem:[#allocation4 + $0x8] sm:$0xff] %v475
          %479 = vst [vmem:[#allocation6] sm:$0xff] %v474
          %480 = vst [vmem:[#allocation6 + $0x8] sm:$0xff] %v476
        $region81: #{fmri_encoder_cross_forward.19} parent=68 // pred_fallthru
          _
        // Predicated region
        $region82: #{fmri_encoder_cross_forward.19} parent=68 // pred_check
          %p481 = pneg %p123
        $region83: #{fmri_encoder_cross_forward.19} parent=68 // pred_check_branch
          %483 = sbr.rel (%p481) target = $region85
        $region84: #{fmri_encoder_cross_forward.19} parent=68 // pred_region
          %s484 = smul.u32 2, %s22
          %s486 = ssub.s32 256, 256
          %487 = vsyncadd [#allocation5], %s486
          %s488 = smul.addr %s484, 128
          %s489 = scalar_lea.hbm %s3, %s488
          %s490 = sshll.u32 [#allocation4], 4
          %s491 = int_to_ptr.vmem [resolvable:$true] %s490
          %496 = dma.vmem_to_hbm [thread:$0]  %s491, 256, %s489, [#allocation5], 128, 128, 8
        $region85: #{fmri_encoder_cross_forward.19} parent=68 // pred_fallthru
          _
        // Predicated region
        $region86: #{fmri_encoder_cross_forward.19} parent=68 // pred_check
          %p497 = pneg %p149
        $region87: #{fmri_encoder_cross_forward.19} parent=68 // pred_check_branch
          %499 = sbr.rel (%p497) target = $region89
        $region88: #{fmri_encoder_cross_forward.19} parent=68 // pred_region
          %s500 = smul.u32 2, %s22
          %s502 = ssub.s32 256, 256
          %503 = vsyncadd [#allocation7], %s502
          %s504 = smul.addr %s500, 128
          %s505 = scalar_lea.hbm %s4, %s504
          %s506 = sshll.u32 [#allocation6], 4
          %s507 = int_to_ptr.vmem [resolvable:$true] %s506
          %512 = dma.vmem_to_hbm [thread:$0]  %s507, 256, %s505, [#allocation7], 128, 128, 8
        $region89: #{fmri_encoder_cross_forward.19} parent=68 // pred_fallthru
          _
        // Predicated region
        $region90: #{fmri_encoder_cross_forward.19} parent=68 // pred_check
          %p513 = pneg %p123
        $region91: #{fmri_encoder_cross_forward.19} parent=68 // pred_check_branch
          %515 = sbr.rel (%p513) target = $region93
        $region92: #{fmri_encoder_cross_forward.19} parent=68 // pred_region
          %516 = dma.done [#allocation5], 256
        $region93: #{fmri_encoder_cross_forward.19} parent=68 // pred_fallthru
          _
        // Predicated region
        $region94: #{fmri_encoder_cross_forward.19} parent=68 // pred_check
          %p517 = pneg %p149
        $region95: #{fmri_encoder_cross_forward.19} parent=68 // pred_check_branch
          %519 = sbr.rel (%p517) target = $region97
        $region96: #{fmri_encoder_cross_forward.19} parent=68 // pred_region
          %520 = dma.done [#allocation7], 256
        $region97: #{fmri_encoder_cross_forward.19} parent=68 // pred_fallthru
          _
      $region69: #{fmri_encoder_cross_forward.19} parent=5 // pred_fallthru
        _
      %p521 = scmp.le.s32.totalorder 2, %s13
      // Predicated region
      $region98: #{fmri_encoder_cross_forward.19} parent=5 // pred_check
        %p522 = pneg %p521
      $region99: #{fmri_encoder_cross_forward.19} parent=5 // pred_check_branch
        %524 = sbr.rel (%p522) target = $region101
      $region100: #{fmri_encoder_cross_forward.19} parent=5 // pred_region
        %s525 = ssub.s32 %s13, 2
      $region101: #{fmri_encoder_cross_forward.19} parent=5 // pred_fallthru
        _
    $region6: #{fmri_encoder_cross_forward.19} parent=1 // loop_footer
      %s17 = sadd.s32 1, %s13
    $region7: #{fmri_encoder_cross_forward.19} parent=1 // loop_footer_branch
      %12 = sbr.rel target = $region3
    $region8: #{fmri_encoder_cross_forward.19} parent=1 // loop_exit
      _
    %526 = vsyncpa [#allocation5], 1
    %s527 = scalar_lea.sflag [#allocation5], 1
    %528 = vsyncpa %s527, 1
    %529 = vsyncpa [#allocation7], 1

</llo_original>
